<compile_context>
chip_gen: v6e
topology: v6e:2x2x1
jax: 0.10.0
libtpu: 0.0.40
codegen_flags: <defaults>
</compile_context>

<pallas_src>
import functools

import jax
import jax.numpy as jnp
from jax.experimental import pallas as pl
from jax.experimental.pallas import tpu as pltpu

EPS = 1e-5
DEPTH = 4


def _round_channels(c_true, w):
    """Smallest C >= c_true such that W*C is a multiple of 128 (full lanes)."""
    c = max(int(c_true), 1)
    while (w * c) % 128 != 0:
        c += 1
    # TODO(synk): if W does not divide 128 (e.g. W=7) this inflates C to a
    # multiple of 128; pad W*C jointly to the next multiple of 128 with a
    # masked tail lane group instead (critical for v7x's 64 MiB VMEM).
    return c


# ----------------------------------------------------------------- kernel ---
def _bottleneck_kernel(x_ref, t_ref, bias_ref, gamma_ref, beta_ref, gx_ref,
                       o_ref, act_ref, *, dims):
    """Fused 4-stage dilated conv + BN + ReLU + bottleneck sum.

    x_ref:    (N, D, H, W*C)        f32  channel-padded input
    t_ref:    (depth, 9*W*C, W*C)   bf16 block-Toeplitz weights, tap b=kh*3+kd
    bias_ref/gamma_ref/beta_ref: (depth, 1, W*C) f32
    gx_ref:   (W*C, W*C)            f32  per-channel averaging (has 1/(NDHW))
    o_ref:    (N*D*H, W*C)          f32  bottleneck sum (lane-dense output)
    act_ref:  (N, D+2P, H+2P, W*C)  f32  zero-bordered activation scratch
    """
    N, D, H, W, C, P, depth = dims
    WC = W * C
    rows = N * D * H
    Dp, Hp = D + 2 * P, H + 2 * P
    R = N * Dp * Hp

    # In-kernel "same" padding: zero only the P-wide border once; the centre
    # is overwritten immediately and the border stays zero for all stages.
    act_ref[:, :P, :, :] = jnp.zeros((N, P, Hp, WC), jnp.float32)
    act_ref[:, P + D:, :, :] = jnp.zeros((N, Dp - P - D, Hp, WC), jnp.float32)
    act_ref[:, P:P + D, :P, :] = jnp.zeros((N, D, P, WC), jnp.float32)
    act_ref[:, P:P + D, P + H:, :] = jnp.zeros((N, D, Hp - P - H, WC),
                                               jnp.float32)
    act_ref[:, P:P + D, P:P + H, :] = x_ref[...]

    gx = gx_ref[...]                              # hoisted, (WC, WC) f32

    for s in range(depth):                        # static unroll over stages
        d = 2 ** s                                # dilation of this stage

        # --- build the 9-tap lane-concatenated patch ------------------------
        # kh shift goes through pltpu.roll on the flattened sublane axis
        # (XLU); wrapped rows fall into the H padding (|shift| = d <= P), and
        # the subsequent [zs:zs+D, P:P+H] slices are sublane-aligned -> no
        # unaligned relayout copies.
        a4 = act_ref[...]                         # (N, Dp, Hp, WC) f32
        a2 = a4.reshape(R, WC)
        taps = []
        for kh in range(3):
            sh = (-(kh - 1) * d) % R
            r4 = a4 if sh == 0 else pltpu.roll(
                a2, shift=sh, axis=0).reshape(N, Dp, Hp, WC)
            for kd in range(3):
                zs = P + (kd - 1) * d
                taps.append(r4[:, zs:zs + D, P:P + H, :]
                            .reshape(rows, WC).astype(jnp.bfloat16))
        patch = jnp.concatenate(taps, axis=-1)    # (rows, 9*WC) bf16

        # --- dilated 3x3x3 conv: ONE bf16 MXU matmul, K = 9*W*C -------------
        acc = jnp.dot(patch, t_ref[s],
                      preferred_element_type=jnp.float32)   # (rows, WC) f32
        acc = acc + bias_ref[s]

        # --- BatchNorm3d (training-mode batch stats, biased var), f32 -------
        # Row (sublane) sums first, then the tiny Gx matmul folds the W lane
        # groups into per-channel stats and broadcasts them back to (1, WC).
        row_sum = jnp.sum(acc, axis=0, keepdims=True)            # (1, WC)
        row_sum2 = jnp.sum(acc * acc, axis=0, keepdims=True)     # (1, WC)
        mean = jnp.dot(row_sum, gx, preferred_element_type=jnp.float32)
        ex2 = jnp.dot(row_sum2, gx, preferred_element_type=jnp.float32)
        var = jnp.maximum(ex2 - mean * mean, 0.0)   # guard f32 cancellation
        scale = gamma_ref[s] * jax.lax.rsqrt(var + EPS)
        y = jnp.maximum((acc - mean) * scale + beta_ref[s], 0.0)

        # --- running bottleneck sum (lane-dense (rows, WC) store) -----------
        if s == 0:
            o_ref[...] = y
        else:
            o_ref[...] = o_ref[...] + y

        # --- feed the next stage: write back into the scratch centre --------
        if s + 1 < depth:
            act_ref[:, P:P + D, P:P + H, :] = y.reshape(N, D, H, WC)


# ---------------------------------------------------------------- wrapper ---
def _build_toeplitz(w_dhwio, dilation, W, C):
    """Fold the W axis of a dilated 3x3x3 conv into the contraction dim.

    w_dhwio: (3, 3, 3, C, C) channel-padded weights (DHWIO).
    Returns T of shape (3, 3, W*C, W*C), indexed [kd, kh], with
        T[kd, kh, xin*C + ci, x*C + co] = w[kd, kh, kw, ci, co],
    xin = x + (kw - 1) * dilation; out-of-range blocks stay zero (== zero
    padding along W).
    """
    WC = W * C
    t = jnp.zeros((3, 3, WC, WC), jnp.float32)
    for kw in range(3):
        for x in range(W):
            xin = x + (kw - 1) * dilation
            if 0 <= xin < W:
                t = t.at[:, :, xin * C:(xin + 1) * C,
                         x * C:(x + 1) * C].set(w_dhwio[:, :, kw])
    return t


def dilated_bottleneck_forward(x_ncdhw, params, depth=DEPTH):
    """PyTorch-semantics forward.  x_ncdhw: (N, C_in, D, H, W) float32."""
    N, n_in, D, H, W = x_ncdhw.shape
    n_out = params["w1"].shape[-1]
    C = _round_channels(max(n_in, n_out), W)     # lane-dense channel padding
    WC = W * C
    P = 2 ** (depth - 1)                         # max dilation = max padding
    rows = N * D * H

    # input: NCDHW -> channels-last, zero-pad channels to C, fuse (W, C).
    x = jnp.transpose(x_ncdhw, (0, 2, 3, 4, 1)).astype(jnp.float32)
    x = jnp.pad(x, ((0, 0),) * 4 + ((0, C - n_in),))
    x2d = x.reshape(N, D, H, WC)

    # per-stage parameters: pad channels, build block-Toeplitz weights in the
    # kernel's tap order (b = kh*3 + kd), tile per-channel vectors over W.
    ts, biases, gammas, betas = [], [], [], []
    for s in range(depth):
        i = s + 1
        w = params[f"w{i}"]                      # (3,3,3,Cin,Cout) DHWIO
        ci = w.shape[3]
        w = jnp.pad(w, ((0, 0),) * 3 + ((0, C - ci), (0, C - n_out)))
        t = _build_toeplitz(w, 2 ** s, W, C)     # (3,3,WC,WC) [kd, kh]
        ts.append(jnp.transpose(t, (1, 0, 2, 3)).reshape(9 * WC, WC))
        pad_c = (0, C - n_out)
        biases.append(jnp.tile(jnp.pad(params[f"b{i}"], pad_c), W)[None, :])
        gammas.append(jnp.tile(jnp.pad(params[f"g{i}"], pad_c), W)[None, :])
        betas.append(jnp.tile(jnp.pad(params[f"beta{i}"], pad_c), W)[None, :])
    t_all = jnp.stack(ts).astype(jnp.bfloat16)   # (depth, 9*WC, WC) bf16
    bias_all = jnp.stack(biases)                 # (depth, 1, WC) f32
    gamma_all = jnp.stack(gammas)                # (depth, 1, WC) f32
    beta_all = jnp.stack(betas)                  # (depth, 1, WC) f32

    # Block-diagonal averaging matrix: Gx[x'*C+c', x*C+c] = (c'==c)/(N*D*H*W).
    gx = jnp.kron(jnp.ones((W, W), jnp.float32),
                  jnp.eye(C, dtype=jnp.float32)) / float(rows * W)

    kernel = functools.partial(_bottleneck_kernel,
                               dims=(N, D, H, W, C, P, depth))
    vmem = pl.BlockSpec(memory_space=pltpu.MemorySpace.VMEM)
    out2d = pl.pallas_call(
        kernel,
        out_shape=jax.ShapeDtypeStruct((rows, WC), jnp.float32),
        in_specs=[vmem] * 6,
        out_specs=vmem,
        scratch_shapes=[pltpu.VMEM((N, D + 2 * P, H + 2 * P, WC), jnp.float32)],
        compiler_params=pltpu.CompilerParams(
            vmem_limit_bytes=32 * 1024 * 1024),  # fits v7x's 64 MiB budget too
    )(x2d, t_all, bias_all, gamma_all, beta_all, gx)

    # (N*D*H, W*C) -> (N, n_out, D, H, W), dropping the channel padding.
    out = out2d.reshape(N, D, H, W, C)[..., :n_out]
    return jnp.transpose(out, (0, 4, 1, 2, 3))


# -------------------------------------------------------------- reference ---
def _ref_stage(x_ndhwc, w, b, gamma, beta, dilation):
    y = jax.lax.conv_general_dilated(
        x_ndhwc, w, window_strides=(1, 1, 1),
        padding=[(dilation, dilation)] * 3,
        rhs_dilation=(dilation, dilation, dilation),
        dimension_numbers=("NDHWC", "DHWIO", "NDHWC"))
    y = y + b.reshape(1, 1, 1, 1, -1)
    mean = y.mean(axis=(0, 1, 2, 3), keepdims=True)
    var = ((y - mean) ** 2).mean(axis=(0, 1, 2, 3), keepdims=True)
    y = (y - mean) * jax.lax.rsqrt(var + EPS)
    y = y * gamma.reshape(1, 1, 1, 1, -1) + beta.reshape(1, 1, 1, 1, -1)
    return jnp.maximum(y, 0.0)


def dilated_bottleneck_reference(x_ncdhw, params, depth=DEPTH):
    x = jnp.transpose(x_ncdhw, (0, 2, 3, 4, 1))
    total = None
    for s in range(depth):
        i = s + 1
        x = _ref_stage(x, params[f"w{i}"], params[f"b{i}"],
                       params[f"g{i}"], params[f"beta{i}"], 2 ** s)
        total = x if total is None else total + x
    return jnp.transpose(total, (0, 4, 1, 2, 3))


# ------------------------------------------------------------------- main ---
def make_params(key, n_in, n_out, depth=DEPTH):
    params = {}
    ks = jax.random.split(key, 4 * depth)
    ci = n_in
    for s in range(depth):
        i = s + 1
        k0, k1, k2, k3 = ks[4 * s:4 * s + 4]
        params[f"w{i}"] = 0.1 * jax.random.normal(
            k0, (3, 3, 3, ci, n_out), jnp.float32)          # DHWIO
        params[f"b{i}"] = 0.1 * jax.random.normal(k1, (n_out,), jnp.float32)
        params[f"g{i}"] = 1.0 + 0.1 * jax.random.normal(k2, (n_out,), jnp.float32)
        params[f"beta{i}"] = 0.1 * jax.random.normal(k3, (n_out,), jnp.float32)
        ci = n_out
    return params


if __name__ == "__main__":
    key = jax.random.PRNGKey(0)
    k_x, k_p = jax.random.split(key)

    N, n_in, n_out = 2, 4, 8
    D = H = W = 8
    x = jax.random.normal(k_x, (N, n_in, D, H, W), jnp.float32)   # NCDHW
    params = make_params(k_p, n_in, n_out)

    out = jax.block_until_ready(jax.jit(dilated_bottleneck_forward)(x, params))
    ref = jax.block_until_ready(dilated_bottleneck_reference(x, params))

    assert out.shape == (N, n_out, D, H, W), out.shape
    # bf16 matmul operands (f32 accumulation) -> slightly looser tolerance.
    assert jnp.allclose(out, ref, rtol=5e-2, atol=5e-2), (
        "max |diff| = %f" % float(jnp.max(jnp.abs(out - ref))))

    print("KERNEL_OK")
</pallas_src>

<mosaic_0001>
module attributes {stable_mosaic.version = 11 : i64} {
  func.func @_bottleneck_kernel(%arg0: memref<2x8x8x128xf32, #tpu.memory_space<vmem>>, %arg1: memref<4x1152x128xbf16, #tpu.memory_space<vmem>>, %arg2: memref<4x1x128xf32, #tpu.memory_space<vmem>>, %arg3: memref<4x1x128xf32, #tpu.memory_space<vmem>>, %arg4: memref<4x1x128xf32, #tpu.memory_space<vmem>>, %arg5: memref<128x128xf32, #tpu.memory_space<vmem>>, %arg6: memref<128x128xf32, #tpu.memory_space<vmem>>, %arg7: memref<2x24x24x128xf32, #tpu.memory_space<vmem>>) attributes {dimension_semantics = [], scalar_prefetch = 0 : i64, scratch_operands = 1 : i64, tpu.core_type = #tpu.core_type<tc>} {
    %cst = arith.constant 0.000000e+00 : f32
    %0 = vector.broadcast %cst : f32 to vector<2x8x24x128xf32>
    %c0 = arith.constant 0 : index
    %c0_0 = arith.constant 0 : index
    %c0_1 = arith.constant 0 : index
    %c0_2 = arith.constant 0 : index
    %1 = vector.load %arg7[%c0, %c0_0, %c0_1, %c0_2] : memref<2x24x24x128xf32, #tpu.memory_space<vmem>>, vector<2x8x24x128xf32>
    tpu.vector_store %arg7[%c0, %c0_0, %c0_1, %c0_2], %0 {strides = array<i32>} : memref<2x24x24x128xf32, #tpu.memory_space<vmem>>, vector<2x8x24x128xf32>,
    %cst_3 = arith.constant 0.000000e+00 : f32
    %2 = vector.broadcast %cst_3 : f32 to vector<2x8x24x128xf32>
    %c0_4 = arith.constant 0 : index
    %c16 = arith.constant 16 : index
    %c0_5 = arith.constant 0 : index
    %c0_6 = arith.constant 0 : index
    %3 = vector.load %arg7[%c0_4, %c16, %c0_5, %c0_6] : memref<2x24x24x128xf32, #tpu.memory_space<vmem>>, vector<2x8x24x128xf32>
    tpu.vector_store %arg7[%c0_4, %c16, %c0_5, %c0_6], %2 {strides = array<i32>} : memref<2x24x24x128xf32, #tpu.memory_space<vmem>>, vector<2x8x24x128xf32>,
    %cst_7 = arith.constant 0.000000e+00 : f32
    %4 = vector.broadcast %cst_7 : f32 to vector<2x8x8x128xf32>
    %c0_8 = arith.constant 0 : index
    %c8 = arith.constant 8 : index
    %c0_9 = arith.constant 0 : index
    %c0_10 = arith.constant 0 : index
    %5 = vector.load %arg7[%c0_8, %c8, %c0_9, %c0_10] : memref<2x24x24x128xf32, #tpu.memory_space<vmem>>, vector<2x8x8x128xf32>
    tpu.vector_store %arg7[%c0_8, %c8, %c0_9, %c0_10], %4 {strides = array<i32>} : memref<2x24x24x128xf32, #tpu.memory_space<vmem>>, vector<2x8x8x128xf32>,
    %cst_11 = arith.constant 0.000000e+00 : f32
    %6 = vector.broadcast %cst_11 : f32 to vector<2x8x8x128xf32>
    %c0_12 = arith.constant 0 : index
    %c8_13 = arith.constant 8 : index
    %c16_14 = arith.constant 16 : index
    %c0_15 = arith.constant 0 : index
    %7 = vector.load %arg7[%c0_12, %c8_13, %c16_14, %c0_15] : memref<2x24x24x128xf32, #tpu.memory_space<vmem>>, vector<2x8x8x128xf32>
    tpu.vector_store %arg7[%c0_12, %c8_13, %c16_14, %c0_15], %6 {strides = array<i32>} : memref<2x24x24x128xf32, #tpu.memory_space<vmem>>, vector<2x8x8x128xf32>,
    %c0_16 = arith.constant 0 : index
    %c0_17 = arith.constant 0 : index
    %c0_18 = arith.constant 0 : index
    %c0_19 = arith.constant 0 : index
    %8 = vector.load %arg0[%c0_16, %c0_17, %c0_18, %c0_19] : memref<2x8x8x128xf32, #tpu.memory_space<vmem>>, vector<2x8x8x128xf32>
    %c0_20 = arith.constant 0 : index
    %c8_21 = arith.constant 8 : index
    %c8_22 = arith.constant 8 : index
    %c0_23 = arith.constant 0 : index
    %9 = vector.load %arg7[%c0_20, %c8_21, %c8_22, %c0_23] : memref<2x24x24x128xf32, #tpu.memory_space<vmem>>, vector<2x8x8x128xf32>
    tpu.vector_store %arg7[%c0_20, %c8_21, %c8_22, %c0_23], %8 {strides = array<i32>} : memref<2x24x24x128xf32, #tpu.memory_space<vmem>>, vector<2x8x8x128xf32>,
    %c0_24 = arith.constant 0 : index
    %c0_25 = arith.constant 0 : index
    %10 = vector.load %arg5[%c0_24, %c0_25] : memref<128x128xf32, #tpu.memory_space<vmem>>, vector<128x128xf32>
    %c0_26 = arith.constant 0 : index
    %c0_27 = arith.constant 0 : index
    %c0_28 = arith.constant 0 : index
    %c0_29 = arith.constant 0 : index
    %11 = vector.load %arg7[%c0_26, %c0_27, %c0_28, %c0_29] : memref<2x24x24x128xf32, #tpu.memory_space<vmem>>, vector<2x24x24x128xf32>
    %12 = vector.shape_cast %11 : vector<2x24x24x128xf32> to vector<1152x128xf32>
    %c1_i32 = arith.constant 1 : i32
    %13 = tpu.dynamic_rotate %12 by %c1_i32 dim 0 : vector<1152x128xf32>, i32 -> vector<1152x128xf32>
    %14 = vector.shape_cast %13 : vector<1152x128xf32> to vector<2x24x24x128xf32>
    %15 = vector.extract_strided_slice %14 {offsets = [0, 7, 8, 0], sizes = [2, 8, 8, 128], strides = [1, 1, 1, 1]} : vector<2x24x24x128xf32> to vector<2x8x8x128xf32>
    %16 = vector.shape_cast %15 : vector<2x8x8x128xf32> to vector<128x128xf32>
    %17 = arith.truncf %16 : vector<128x128xf32> to vector<128x128xbf16>
    %18 = vector.extract_strided_slice %14 {offsets = [0, 8, 8, 0], sizes = [2, 8, 8, 128], strides = [1, 1, 1, 1]} : vector<2x24x24x128xf32> to vector<2x8x8x128xf32>
    %19 = vector.shape_cast %18 : vector<2x8x8x128xf32> to vector<128x128xf32>
    %20 = arith.truncf %19 : vector<128x128xf32> to vector<128x128xbf16>
    %21 = vector.extract_strided_slice %14 {offsets = [0, 9, 8, 0], sizes = [2, 8, 8, 128], strides = [1, 1, 1, 1]} : vector<2x24x24x128xf32> to vector<2x8x8x128xf32>
    %22 = vector.shape_cast %21 : vector<2x8x8x128xf32> to vector<128x128xf32>
    %23 = arith.truncf %22 : vector<128x128xf32> to vector<128x128xbf16>
    %24 = vector.extract_strided_slice %11 {offsets = [0, 7, 8, 0], sizes = [2, 8, 8, 128], strides = [1, 1, 1, 1]} : vector<2x24x24x128xf32> to vector<2x8x8x128xf32>
    %25 = vector.shape_cast %24 : vector<2x8x8x128xf32> to vector<128x128xf32>
    %26 = arith.truncf %25 : vector<128x128xf32> to vector<128x128xbf16>
    %27 = vector.extract_strided_slice %11 {offsets = [0, 8, 8, 0], sizes = [2, 8, 8, 128], strides = [1, 1, 1, 1]} : vector<2x24x24x128xf32> to vector<2x8x8x128xf32>
    %28 = vector.shape_cast %27 : vector<2x8x8x128xf32> to vector<128x128xf32>
    %29 = arith.truncf %28 : vector<128x128xf32> to vector<128x128xbf16>
    %30 = vector.extract_strided_slice %11 {offsets = [0, 9, 8, 0], sizes = [2, 8, 8, 128], strides = [1, 1, 1, 1]} : vector<2x24x24x128xf32> to vector<2x8x8x128xf32>
    %31 = vector.shape_cast %30 : vector<2x8x8x128xf32> to vector<128x128xf32>
    %32 = arith.truncf %31 : vector<128x128xf32> to vector<128x128xbf16>
    %c1151_i32 = arith.constant 1151 : i32
    %33 = tpu.dynamic_rotate %12 by %c1151_i32 dim 0 : vector<1152x128xf32>, i32 -> vector<1152x128xf32>
    %34 = vector.shape_cast %33 : vector<1152x128xf32> to vector<2x24x24x128xf32>
    %35 = vector.extract_strided_slice %34 {offsets = [0, 7, 8, 0], sizes = [2, 8, 8, 128], strides = [1, 1, 1, 1]} : vector<2x24x24x128xf32> to vector<2x8x8x128xf32>
    %36 = vector.shape_cast %35 : vector<2x8x8x128xf32> to vector<128x128xf32>
    %37 = arith.truncf %36 : vector<128x128xf32> to vector<128x128xbf16>
    %38 = vector.extract_strided_slice %34 {offsets = [0, 8, 8, 0], sizes = [2, 8, 8, 128], strides = [1, 1, 1, 1]} : vector<2x24x24x128xf32> to vector<2x8x8x128xf32>
    %39 = vector.shape_cast %38 : vector<2x8x8x128xf32> to vector<128x128xf32>
    %40 = arith.truncf %39 : vector<128x128xf32> to vector<128x128xbf16>
    %41 = vector.extract_strided_slice %34 {offsets = [0, 9, 8, 0], sizes = [2, 8, 8, 128], strides = [1, 1, 1, 1]} : vector<2x24x24x128xf32> to vector<2x8x8x128xf32>
    %42 = vector.shape_cast %41 : vector<2x8x8x128xf32> to vector<128x128xf32>
    %43 = arith.truncf %42 : vector<128x128xf32> to vector<128x128xbf16>
    %44 = tpu.concatenate %17, %20, %23, %26, %29, %32, %37, %40, %43 in 1 : vector<128x128xbf16>, vector<128x128xbf16>, vector<128x128xbf16>, vector<128x128xbf16>, vector<128x128xbf16>, vector<128x128xbf16>, vector<128x128xbf16>, vector<128x128xbf16>, vector<128x128xbf16> -> vector<128x1152xbf16>
    %c0_30 = arith.constant 0 : index
    %c0_31 = arith.constant 0 : index
    %c0_32 = arith.constant 0 : index
    %45 = vector.load %arg1[%c0_30, %c0_31, %c0_32] : memref<4x1152x128xbf16, #tpu.memory_space<vmem>>, vector<1x1152x128xbf16>
    %46 = vector.shape_cast %45 : vector<1x1152x128xbf16> to vector<1152x128xbf16>
    %cst_33 = arith.constant dense<0.000000e+00> : vector<128x128xf32>
    %47 = tpu.matmul %44, %46, %cst_33 {dimension_numbers = #tpu.dot_dimension_numbers<[1], [0], [0], [1], [0, 0, 1, 1], [], []>} : vector<128x1152xbf16>, vector<1152x128xbf16>, vector<128x128xf32> -> vector<128x128xf32>
    %c0_34 = arith.constant 0 : index
    %c0_35 = arith.constant 0 : index
    %c0_36 = arith.constant 0 : index
    %48 = vector.load %arg2[%c0_34, %c0_35, %c0_36] : memref<4x1x128xf32, #tpu.memory_space<vmem>>, vector<1x1x128xf32>
    %49 = vector.shape_cast %48 : vector<1x1x128xf32> to vector<1x128xf32>
    %50 = vector.broadcast %49 : vector<1x128xf32> to vector<128x128xf32>
    %51 = arith.addf %47, %50 : vector<128x128xf32>
    %cst_37 = arith.constant dense<0.000000e+00> : vector<128xf32>
    %52 = vector.multi_reduction <add>, %51, %cst_37 [0] : vector<128x128xf32> to vector<128xf32>
    %53 = vector.shape_cast %52 : vector<128xf32> to vector<1x128xf32>
    %54 = arith.mulf %51, %51 : vector<128x128xf32>
    %cst_38 = arith.constant dense<0.000000e+00> : vector<128xf32>
    %55 = vector.multi_reduction <add>, %54, %cst_38 [0] : vector<128x128xf32> to vector<128xf32>
    %56 = vector.shape_cast %55 : vector<128xf32> to vector<1x128xf32>
    %cst_39 = arith.constant dense<0.000000e+00> : vector<1x128xf32>
    %57 = tpu.matmul %53, %10, %cst_39 {dimension_numbers = #tpu.dot_dimension_numbers<[1], [0], [0], [1], [0, 0, 1, 1], [], []>} : vector<1x128xf32>, vector<128x128xf32>, vector<1x128xf32> -> vector<1x128xf32>
    %cst_40 = arith.constant dense<0.000000e+00> : vector<1x128xf32>
    %58 = tpu.matmul %56, %10, %cst_40 {dimension_numbers = #tpu.dot_dimension_numbers<[1], [0], [0], [1], [0, 0, 1, 1], [], []>} : vector<1x128xf32>, vector<128x128xf32>, vector<1x128xf32> -> vector<1x128xf32>
    %59 = arith.mulf %57, %57 : vector<1x128xf32>
    %60 = arith.subf %58, %59 : vector<1x128xf32>
    %cst_41 = arith.constant 0.000000e+00 : f32
    %61 = vector.broadcast %cst_41 : f32 to vector<1x128xf32>
    %62 = arith.maximumf %60, %61 : vector<1x128xf32>
    %c0_42 = arith.constant 0 : index
    %c0_43 = arith.constant 0 : index
    %c0_44 = arith.constant 0 : index
    %63 = vector.load %arg3[%c0_42, %c0_43, %c0_44] : memref<4x1x128xf32, #tpu.memory_space<vmem>>, vector<1x1x128xf32>
    %64 = vector.shape_cast %63 : vector<1x1x128xf32> to vector<1x128xf32>
    %cst_45 = arith.constant 9.99999974E-6 : f32
    %65 = vector.broadcast %cst_45 : f32 to vector<1x128xf32>
    %66 = arith.addf %62, %65 : vector<1x128xf32>
    %67 = math.rsqrt %66 : vector<1x128xf32>
    %68 = arith.mulf %64, %67 : vector<1x128xf32>
    %69 = vector.broadcast %57 : vector<1x128xf32> to vector<128x128xf32>
    %70 = arith.subf %51, %69 : vector<128x128xf32>
    %71 = vector.broadcast %68 : vector<1x128xf32> to vector<128x128xf32>
    %72 = arith.mulf %70, %71 : vector<128x128xf32>
    %c0_46 = arith.constant 0 : index
    %c0_47 = arith.constant 0 : index
    %c0_48 = arith.constant 0 : index
    %73 = vector.load %arg4[%c0_46, %c0_47, %c0_48] : memref<4x1x128xf32, #tpu.memory_space<vmem>>, vector<1x1x128xf32>
    %74 = vector.shape_cast %73 : vector<1x1x128xf32> to vector<1x128xf32>
    %75 = vector.broadcast %74 : vector<1x128xf32> to vector<128x128xf32>
    %76 = arith.addf %72, %75 : vector<128x128xf32>
    %cst_49 = arith.constant 0.000000e+00 : f32
    %77 = vector.broadcast %cst_49 : f32 to vector<128x128xf32>
    %78 = arith.maximumf %76, %77 : vector<128x128xf32>
    %c0_50 = arith.constant 0 : index
    %c0_51 = arith.constant 0 : index
    %79 = vector.load %arg6[%c0_50, %c0_51] : memref<128x128xf32, #tpu.memory_space<vmem>>, vector<128x128xf32>
    tpu.vector_store %arg6[%c0_50, %c0_51], %78 {strides = array<i32>} : memref<128x128xf32, #tpu.memory_space<vmem>>, vector<128x128xf32>,
    %80 = vector.shape_cast %78 : vector<128x128xf32> to vector<2x8x8x128xf32>
    %c0_52 = arith.constant 0 : index
    %c8_53 = arith.constant 8 : index
    %c8_54 = arith.constant 8 : index
    %c0_55 = arith.constant 0 : index
    %81 = vector.load %arg7[%c0_52, %c8_53, %c8_54, %c0_55] : memref<2x24x24x128xf32, #tpu.memory_space<vmem>>, vector<2x8x8x128xf32>
    tpu.vector_store %arg7[%c0_52, %c8_53, %c8_54, %c0_55], %80 {strides = array<i32>} : memref<2x24x24x128xf32, #tpu.memory_space<vmem>>, vector<2x8x8x128xf32>,
    %c0_56 = arith.constant 0 : index
    %c0_57 = arith.constant 0 : index
    %c0_58 = arith.constant 0 : index
    %c0_59 = arith.constant 0 : index
    %82 = vector.load %arg7[%c0_56, %c0_57, %c0_58, %c0_59] : memref<2x24x24x128xf32, #tpu.memory_space<vmem>>, vector<2x24x24x128xf32>
    %83 = vector.shape_cast %82 : vector<2x24x24x128xf32> to vector<1152x128xf32>
    %c2_i32 = arith.constant 2 : i32
    %84 = tpu.dynamic_rotate %83 by %c2_i32 dim 0 : vector<1152x128xf32>, i32 -> vector<1152x128xf32>
    %85 = vector.shape_cast %84 : vector<1152x128xf32> to vector<2x24x24x128xf32>
    %86 = vector.extract_strided_slice %85 {offsets = [0, 6, 8, 0], sizes = [2, 8, 8, 128], strides = [1, 1, 1, 1]} : vector<2x24x24x128xf32> to vector<2x8x8x128xf32>
    %87 = vector.shape_cast %86 : vector<2x8x8x128xf32> to vector<128x128xf32>
    %88 = arith.truncf %87 : vector<128x128xf32> to vector<128x128xbf16>
    %89 = vector.extract_strided_slice %85 {offsets = [0, 8, 8, 0], sizes = [2, 8, 8, 128], strides = [1, 1, 1, 1]} : vector<2x24x24x128xf32> to vector<2x8x8x128xf32>
    %90 = vector.shape_cast %89 : vector<2x8x8x128xf32> to vector<128x128xf32>
    %91 = arith.truncf %90 : vector<128x128xf32> to vector<128x128xbf16>
    %92 = vector.extract_strided_slice %85 {offsets = [0, 10, 8, 0], sizes = [2, 8, 8, 128], strides = [1, 1, 1, 1]} : vector<2x24x24x128xf32> to vector<2x8x8x128xf32>
    %93 = vector.shape_cast %92 : vector<2x8x8x128xf32> to vector<128x128xf32>
    %94 = arith.truncf %93 : vector<128x128xf32> to vector<128x128xbf16>
    %95 = vector.extract_strided_slice %82 {offsets = [0, 6, 8, 0], sizes = [2, 8, 8, 128], strides = [1, 1, 1, 1]} : vector<2x24x24x128xf32> to vector<2x8x8x128xf32>
    %96 = vector.shape_cast %95 : vector<2x8x8x128xf32> to vector<128x128xf32>
    %97 = arith.truncf %96 : vector<128x128xf32> to vector<128x128xbf16>
    %98 = vector.extract_strided_slice %82 {offsets = [0, 8, 8, 0], sizes = [2, 8, 8, 128], strides = [1, 1, 1, 1]} : vector<2x24x24x128xf32> to vector<2x8x8x128xf32>
    %99 = vector.shape_cast %98 : vector<2x8x8x128xf32> to vector<128x128xf32>
    %100 = arith.truncf %99 : vector<128x128xf32> to vector<128x128xbf16>
    %101 = vector.extract_strided_slice %82 {offsets = [0, 10, 8, 0], sizes = [2, 8, 8, 128], strides = [1, 1, 1, 1]} : vector<2x24x24x128xf32> to vector<2x8x8x128xf32>
    %102 = vector.shape_cast %101 : vector<2x8x8x128xf32> to vector<128x128xf32>
    %103 = arith.truncf %102 : vector<128x128xf32> to vector<128x128xbf16>
    %c1150_i32 = arith.constant 1150 : i32
    %104 = tpu.dynamic_rotate %83 by %c1150_i32 dim 0 : vector<1152x128xf32>, i32 -> vector<1152x128xf32>
    %105 = vector.shape_cast %104 : vector<1152x128xf32> to vector<2x24x24x128xf32>
    %106 = vector.extract_strided_slice %105 {offsets = [0, 6, 8, 0], sizes = [2, 8, 8, 128], strides = [1, 1, 1, 1]} : vector<2x24x24x128xf32> to vector<2x8x8x128xf32>
    %107 = vector.shape_cast %106 : vector<2x8x8x128xf32> to vector<128x128xf32>
    %108 = arith.truncf %107 : vector<128x128xf32> to vector<128x128xbf16>
    %109 = vector.extract_strided_slice %105 {offsets = [0, 8, 8, 0], sizes = [2, 8, 8, 128], strides = [1, 1, 1, 1]} : vector<2x24x24x128xf32> to vector<2x8x8x128xf32>
    %110 = vector.shape_cast %109 : vector<2x8x8x128xf32> to vector<128x128xf32>
    %111 = arith.truncf %110 : vector<128x128xf32> to vector<128x128xbf16>
    %112 = vector.extract_strided_slice %105 {offsets = [0, 10, 8, 0], sizes = [2, 8, 8, 128], strides = [1, 1, 1, 1]} : vector<2x24x24x128xf32> to vector<2x8x8x128xf32>
    %113 = vector.shape_cast %112 : vector<2x8x8x128xf32> to vector<128x128xf32>
    %114 = arith.truncf %113 : vector<128x128xf32> to vector<128x128xbf16>
    %115 = tpu.concatenate %88, %91, %94, %97, %100, %103, %108, %111, %114 in 1 : vector<128x128xbf16>, vector<128x128xbf16>, vector<128x128xbf16>, vector<128x128xbf16>, vector<128x128xbf16>, vector<128x128xbf16>, vector<128x128xbf16>, vector<128x128xbf16>, vector<128x128xbf16> -> vector<128x1152xbf16>
    %c1 = arith.constant 1 : index
    %c0_60 = arith.constant 0 : index
    %c0_61 = arith.constant 0 : index
    %116 = vector.load %arg1[%c1, %c0_60, %c0_61] : memref<4x1152x128xbf16, #tpu.memory_space<vmem>>, vector<1x1152x128xbf16>
    %117 = vector.shape_cast %116 : vector<1x1152x128xbf16> to vector<1152x128xbf16>
    %cst_62 = arith.constant dense<0.000000e+00> : vector<128x128xf32>
    %118 = tpu.matmul %115, %117, %cst_62 {dimension_numbers = #tpu.dot_dimension_numbers<[1], [0], [0], [1], [0, 0, 1, 1], [], []>} : vector<128x1152xbf16>, vector<1152x128xbf16>, vector<128x128xf32> -> vector<128x128xf32>
    %c1_63 = arith.constant 1 : index
    %c0_64 = arith.constant 0 : index
    %c0_65 = arith.constant 0 : index
    %119 = vector.load %arg2[%c1_63, %c0_64, %c0_65] : memref<4x1x128xf32, #tpu.memory_space<vmem>>, vector<1x1x128xf32>
    %120 = vector.shape_cast %119 : vector<1x1x128xf32> to vector<1x128xf32>
    %121 = vector.broadcast %120 : vector<1x128xf32> to vector<128x128xf32>
    %122 = arith.addf %118, %121 : vector<128x128xf32>
    %cst_66 = arith.constant dense<0.000000e+00> : vector<128xf32>
    %123 = vector.multi_reduction <add>, %122, %cst_66 [0] : vector<128x128xf32> to vector<128xf32>
    %124 = vector.shape_cast %123 : vector<128xf32> to vector<1x128xf32>
    %125 = arith.mulf %122, %122 : vector<128x128xf32>
    %cst_67 = arith.constant dense<0.000000e+00> : vector<128xf32>
    %126 = vector.multi_reduction <add>, %125, %cst_67 [0] : vector<128x128xf32> to vector<128xf32>
    %127 = vector.shape_cast %126 : vector<128xf32> to vector<1x128xf32>
    %cst_68 = arith.constant dense<0.000000e+00> : vector<1x128xf32>
    %128 = tpu.matmul %124, %10, %cst_68 {dimension_numbers = #tpu.dot_dimension_numbers<[1], [0], [0], [1], [0, 0, 1, 1], [], []>} : vector<1x128xf32>, vector<128x128xf32>, vector<1x128xf32> -> vector<1x128xf32>
    %cst_69 = arith.constant dense<0.000000e+00> : vector<1x128xf32>
    %129 = tpu.matmul %127, %10, %cst_69 {dimension_numbers = #tpu.dot_dimension_numbers<[1], [0], [0], [1], [0, 0, 1, 1], [], []>} : vector<1x128xf32>, vector<128x128xf32>, vector<1x128xf32> -> vector<1x128xf32>
    %130 = arith.mulf %128, %128 : vector<1x128xf32>
    %131 = arith.subf %129, %130 : vector<1x128xf32>
    %cst_70 = arith.constant 0.000000e+00 : f32
    %132 = vector.broadcast %cst_70 : f32 to vector<1x128xf32>
    %133 = arith.maximumf %131, %132 : vector<1x128xf32>
    %c1_71 = arith.constant 1 : index
    %c0_72 = arith.constant 0 : index
    %c0_73 = arith.constant 0 : index
    %134 = vector.load %arg3[%c1_71, %c0_72, %c0_73] : memref<4x1x128xf32, #tpu.memory_space<vmem>>, vector<1x1x128xf32>
    %135 = vector.shape_cast %134 : vector<1x1x128xf32> to vector<1x128xf32>
    %cst_74 = arith.constant 9.99999974E-6 : f32
    %136 = vector.broadcast %cst_74 : f32 to vector<1x128xf32>
    %137 = arith.addf %133, %136 : vector<1x128xf32>
    %138 = math.rsqrt %137 : vector<1x128xf32>
    %139 = arith.mulf %135, %138 : vector<1x128xf32>
    %140 = vector.broadcast %128 : vector<1x128xf32> to vector<128x128xf32>
    %141 = arith.subf %122, %140 : vector<128x128xf32>
    %142 = vector.broadcast %139 : vector<1x128xf32> to vector<128x128xf32>
    %143 = arith.mulf %141, %142 : vector<128x128xf32>
    %c1_75 = arith.constant 1 : index
    %c0_76 = arith.constant 0 : index
    %c0_77 = arith.constant 0 : index
    %144 = vector.load %arg4[%c1_75, %c0_76, %c0_77] : memref<4x1x128xf32, #tpu.memory_space<vmem>>, vector<1x1x128xf32>
    %145 = vector.shape_cast %144 : vector<1x1x128xf32> to vector<1x128xf32>
    %146 = vector.broadcast %145 : vector<1x128xf32> to vector<128x128xf32>
    %147 = arith.addf %143, %146 : vector<128x128xf32>
    %cst_78 = arith.constant 0.000000e+00 : f32
    %148 = vector.broadcast %cst_78 : f32 to vector<128x128xf32>
    %149 = arith.maximumf %147, %148 : vector<128x128xf32>
    %c0_79 = arith.constant 0 : index
    %c0_80 = arith.constant 0 : index
    %150 = vector.load %arg6[%c0_79, %c0_80] : memref<128x128xf32, #tpu.memory_space<vmem>>, vector<128x128xf32>
    %151 = arith.addf %150, %149 : vector<128x128xf32>
    %c0_81 = arith.constant 0 : index
    %c0_82 = arith.constant 0 : index
    %152 = vector.load %arg6[%c0_81, %c0_82] : memref<128x128xf32, #tpu.memory_space<vmem>>, vector<128x128xf32>
    tpu.vector_store %arg6[%c0_81, %c0_82], %151 {strides = array<i32>} : memref<128x128xf32, #tpu.memory_space<vmem>>, vector<128x128xf32>,
    %153 = vector.shape_cast %149 : vector<128x128xf32> to vector<2x8x8x128xf32>
    %c0_83 = arith.constant 0 : index
    %c8_84 = arith.constant 8 : index
    %c8_85 = arith.constant 8 : index
    %c0_86 = arith.constant 0 : index
    %154 = vector.load %arg7[%c0_83, %c8_84, %c8_85, %c0_86] : memref<2x24x24x128xf32, #tpu.memory_space<vmem>>, vector<2x8x8x128xf32>
    tpu.vector_store %arg7[%c0_83, %c8_84, %c8_85, %c0_86], %153 {strides = array<i32>} : memref<2x24x24x128xf32, #tpu.memory_space<vmem>>, vector<2x8x8x128xf32>,
    %c0_87 = arith.constant 0 : index
    %c0_88 = arith.constant 0 : index
    %c0_89 = arith.constant 0 : index
    %c0_90 = arith.constant 0 : index
    %155 = vector.load %arg7[%c0_87, %c0_88, %c0_89, %c0_90] : memref<2x24x24x128xf32, #tpu.memory_space<vmem>>, vector<2x24x24x128xf32>
    %156 = vector.shape_cast %155 : vector<2x24x24x128xf32> to vector<1152x128xf32>
    %c4_i32 = arith.constant 4 : i32
    %157 = tpu.dynamic_rotate %156 by %c4_i32 dim 0 : vector<1152x128xf32>, i32 -> vector<1152x128xf32>
    %158 = vector.shape_cast %157 : vector<1152x128xf32> to vector<2x24x24x128xf32>
    %159 = vector.extract_strided_slice %158 {offsets = [0, 4, 8, 0], sizes = [2, 8, 8, 128], strides = [1, 1, 1, 1]} : vector<2x24x24x128xf32> to vector<2x8x8x128xf32>
    %160 = vector.shape_cast %159 : vector<2x8x8x128xf32> to vector<128x128xf32>
    %161 = arith.truncf %160 : vector<128x128xf32> to vector<128x128xbf16>
    %162 = vector.extract_strided_slice %158 {offsets = [0, 8, 8, 0], sizes = [2, 8, 8, 128], strides = [1, 1, 1, 1]} : vector<2x24x24x128xf32> to vector<2x8x8x128xf32>
    %163 = vector.shape_cast %162 : vector<2x8x8x128xf32> to vector<128x128xf32>
    %164 = arith.truncf %163 : vector<128x128xf32> to vector<128x128xbf16>
    %165 = vector.extract_strided_slice %158 {offsets = [0, 12, 8, 0], sizes = [2, 8, 8, 128], strides = [1, 1, 1, 1]} : vector<2x24x24x128xf32> to vector<2x8x8x128xf32>
    %166 = vector.shape_cast %165 : vector<2x8x8x128xf32> to vector<128x128xf32>
    %167 = arith.truncf %166 : vector<128x128xf32> to vector<128x128xbf16>
    %168 = vector.extract_strided_slice %155 {offsets = [0, 4, 8, 0], sizes = [2, 8, 8, 128], strides = [1, 1, 1, 1]} : vector<2x24x24x128xf32> to vector<2x8x8x128xf32>
    %169 = vector.shape_cast %168 : vector<2x8x8x128xf32> to vector<128x128xf32>
    %170 = arith.truncf %169 : vector<128x128xf32> to vector<128x128xbf16>
    %171 = vector.extract_strided_slice %155 {offsets = [0, 8, 8, 0], sizes = [2, 8, 8, 128], strides = [1, 1, 1, 1]} : vector<2x24x24x128xf32> to vector<2x8x8x128xf32>
    %172 = vector.shape_cast %171 : vector<2x8x8x128xf32> to vector<128x128xf32>
    %173 = arith.truncf %172 : vector<128x128xf32> to vector<128x128xbf16>
    %174 = vector.extract_strided_slice %155 {offsets = [0, 12, 8, 0], sizes = [2, 8, 8, 128], strides = [1, 1, 1, 1]} : vector<2x24x24x128xf32> to vector<2x8x8x128xf32>
    %175 = vector.shape_cast %174 : vector<2x8x8x128xf32> to vector<128x128xf32>
    %176 = arith.truncf %175 : vector<128x128xf32> to vector<128x128xbf16>
    %c1148_i32 = arith.constant 1148 : i32
    %177 = tpu.dynamic_rotate %156 by %c1148_i32 dim 0 : vector<1152x128xf32>, i32 -> vector<1152x128xf32>
    %178 = vector.shape_cast %177 : vector<1152x128xf32> to vector<2x24x24x128xf32>
    %179 = vector.extract_strided_slice %178 {offsets = [0, 4, 8, 0], sizes = [2, 8, 8, 128], strides = [1, 1, 1, 1]} : vector<2x24x24x128xf32> to vector<2x8x8x128xf32>
    %180 = vector.shape_cast %179 : vector<2x8x8x128xf32> to vector<128x128xf32>
    %181 = arith.truncf %180 : vector<128x128xf32> to vector<128x128xbf16>
    %182 = vector.extract_strided_slice %178 {offsets = [0, 8, 8, 0], sizes = [2, 8, 8, 128], strides = [1, 1, 1, 1]} : vector<2x24x24x128xf32> to vector<2x8x8x128xf32>
    %183 = vector.shape_cast %182 : vector<2x8x8x128xf32> to vector<128x128xf32>
    %184 = arith.truncf %183 : vector<128x128xf32> to vector<128x128xbf16>
    %185 = vector.extract_strided_slice %178 {offsets = [0, 12, 8, 0], sizes = [2, 8, 8, 128], strides = [1, 1, 1, 1]} : vector<2x24x24x128xf32> to vector<2x8x8x128xf32>
    %186 = vector.shape_cast %185 : vector<2x8x8x128xf32> to vector<128x128xf32>
    %187 = arith.truncf %186 : vector<128x128xf32> to vector<128x128xbf16>
    %188 = tpu.concatenate %161, %164, %167, %170, %173, %176, %181, %184, %187 in 1 : vector<128x128xbf16>, vector<128x128xbf16>, vector<128x128xbf16>, vector<128x128xbf16>, vector<128x128xbf16>, vector<128x128xbf16>, vector<128x128xbf16>, vector<128x128xbf16>, vector<128x128xbf16> -> vector<128x1152xbf16>
    %c2 = arith.constant 2 : index
    %c0_91 = arith.constant 0 : index
    %c0_92 = arith.constant 0 : index
    %189 = vector.load %arg1[%c2, %c0_91, %c0_92] : memref<4x1152x128xbf16, #tpu.memory_space<vmem>>, vector<1x1152x128xbf16>
    %190 = vector.shape_cast %189 : vector<1x1152x128xbf16> to vector<1152x128xbf16>
    %cst_93 = arith.constant dense<0.000000e+00> : vector<128x128xf32>
    %191 = tpu.matmul %188, %190, %cst_93 {dimension_numbers = #tpu.dot_dimension_numbers<[1], [0], [0], [1], [0, 0, 1, 1], [], []>} : vector<128x1152xbf16>, vector<1152x128xbf16>, vector<128x128xf32> -> vector<128x128xf32>
    %c2_94 = arith.constant 2 : index
    %c0_95 = arith.constant 0 : index
    %c0_96 = arith.constant 0 : index
    %192 = vector.load %arg2[%c2_94, %c0_95, %c0_96] : memref<4x1x128xf32, #tpu.memory_space<vmem>>, vector<1x1x128xf32>
    %193 = vector.shape_cast %192 : vector<1x1x128xf32> to vector<1x128xf32>
    %194 = vector.broadcast %193 : vector<1x128xf32> to vector<128x128xf32>
    %195 = arith.addf %191, %194 : vector<128x128xf32>
    %cst_97 = arith.constant dense<0.000000e+00> : vector<128xf32>
    %196 = vector.multi_reduction <add>, %195, %cst_97 [0] : vector<128x128xf32> to vector<128xf32>
    %197 = vector.shape_cast %196 : vector<128xf32> to vector<1x128xf32>
    %198 = arith.mulf %195, %195 : vector<128x128xf32>
    %cst_98 = arith.constant dense<0.000000e+00> : vector<128xf32>
    %199 = vector.multi_reduction <add>, %198, %cst_98 [0] : vector<128x128xf32> to vector<128xf32>
    %200 = vector.shape_cast %199 : vector<128xf32> to vector<1x128xf32>
    %cst_99 = arith.constant dense<0.000000e+00> : vector<1x128xf32>
    %201 = tpu.matmul %197, %10, %cst_99 {dimension_numbers = #tpu.dot_dimension_numbers<[1], [0], [0], [1], [0, 0, 1, 1], [], []>} : vector<1x128xf32>, vector<128x128xf32>, vector<1x128xf32> -> vector<1x128xf32>
    %cst_100 = arith.constant dense<0.000000e+00> : vector<1x128xf32>
    %202 = tpu.matmul %200, %10, %cst_100 {dimension_numbers = #tpu.dot_dimension_numbers<[1], [0], [0], [1], [0, 0, 1, 1], [], []>} : vector<1x128xf32>, vector<128x128xf32>, vector<1x128xf32> -> vector<1x128xf32>
    %203 = arith.mulf %201, %201 : vector<1x128xf32>
    %204 = arith.subf %202, %203 : vector<1x128xf32>
    %cst_101 = arith.constant 0.000000e+00 : f32
    %205 = vector.broadcast %cst_101 : f32 to vector<1x128xf32>
    %206 = arith.maximumf %204, %205 : vector<1x128xf32>
    %c2_102 = arith.constant 2 : index
    %c0_103 = arith.constant 0 : index
    %c0_104 = arith.constant 0 : index
    %207 = vector.load %arg3[%c2_102, %c0_103, %c0_104] : memref<4x1x128xf32, #tpu.memory_space<vmem>>, vector<1x1x128xf32>
    %208 = vector.shape_cast %207 : vector<1x1x128xf32> to vector<1x128xf32>
    %cst_105 = arith.constant 9.99999974E-6 : f32
    %209 = vector.broadcast %cst_105 : f32 to vector<1x128xf32>
    %210 = arith.addf %206, %209 : vector<1x128xf32>
    %211 = math.rsqrt %210 : vector<1x128xf32>
    %212 = arith.mulf %208, %211 : vector<1x128xf32>
    %213 = vector.broadcast %201 : vector<1x128xf32> to vector<128x128xf32>
    %214 = arith.subf %195, %213 : vector<128x128xf32>
    %215 = vector.broadcast %212 : vector<1x128xf32> to vector<128x128xf32>
    %216 = arith.mulf %214, %215 : vector<128x128xf32>
    %c2_106 = arith.constant 2 : index
    %c0_107 = arith.constant 0 : index
    %c0_108 = arith.constant 0 : index
    %217 = vector.load %arg4[%c2_106, %c0_107, %c0_108] : memref<4x1x128xf32, #tpu.memory_space<vmem>>, vector<1x1x128xf32>
    %218 = vector.shape_cast %217 : vector<1x1x128xf32> to vector<1x128xf32>
    %219 = vector.broadcast %218 : vector<1x128xf32> to vector<128x128xf32>
    %220 = arith.addf %216, %219 : vector<128x128xf32>
    %cst_109 = arith.constant 0.000000e+00 : f32
    %221 = vector.broadcast %cst_109 : f32 to vector<128x128xf32>
    %222 = arith.maximumf %220, %221 : vector<128x128xf32>
    %c0_110 = arith.constant 0 : index
    %c0_111 = arith.constant 0 : index
    %223 = vector.load %arg6[%c0_110, %c0_111] : memref<128x128xf32, #tpu.memory_space<vmem>>, vector<128x128xf32>
    %224 = arith.addf %223, %222 : vector<128x128xf32>
    %c0_112 = arith.constant 0 : index
    %c0_113 = arith.constant 0 : index
    %225 = vector.load %arg6[%c0_112, %c0_113] : memref<128x128xf32, #tpu.memory_space<vmem>>, vector<128x128xf32>
    tpu.vector_store %arg6[%c0_112, %c0_113], %224 {strides = array<i32>} : memref<128x128xf32, #tpu.memory_space<vmem>>, vector<128x128xf32>,
    %226 = vector.shape_cast %222 : vector<128x128xf32> to vector<2x8x8x128xf32>
    %c0_114 = arith.constant 0 : index
    %c8_115 = arith.constant 8 : index
    %c8_116 = arith.constant 8 : index
    %c0_117 = arith.constant 0 : index
    %227 = vector.load %arg7[%c0_114, %c8_115, %c8_116, %c0_117] : memref<2x24x24x128xf32, #tpu.memory_space<vmem>>, vector<2x8x8x128xf32>
    tpu.vector_store %arg7[%c0_114, %c8_115, %c8_116, %c0_117], %226 {strides = array<i32>} : memref<2x24x24x128xf32, #tpu.memory_space<vmem>>, vector<2x8x8x128xf32>,
    %c0_118 = arith.constant 0 : index
    %c0_119 = arith.constant 0 : index
    %c0_120 = arith.constant 0 : index
    %c0_121 = arith.constant 0 : index
    %228 = vector.load %arg7[%c0_118, %c0_119, %c0_120, %c0_121] : memref<2x24x24x128xf32, #tpu.memory_space<vmem>>, vector<2x24x24x128xf32>
    %229 = vector.shape_cast %228 : vector<2x24x24x128xf32> to vector<1152x128xf32>
    %c8_i32 = arith.constant 8 : i32
    %230 = tpu.dynamic_rotate %229 by %c8_i32 dim 0 : vector<1152x128xf32>, i32 -> vector<1152x128xf32>
    %231 = vector.shape_cast %230 : vector<1152x128xf32> to vector<2x24x24x128xf32>
    %232 = vector.extract_strided_slice %231 {offsets = [0, 0, 8, 0], sizes = [2, 8, 8, 128], strides = [1, 1, 1, 1]} : vector<2x24x24x128xf32> to vector<2x8x8x128xf32>
    %233 = vector.shape_cast %232 : vector<2x8x8x128xf32> to vector<128x128xf32>
    %234 = arith.truncf %233 : vector<128x128xf32> to vector<128x128xbf16>
    %235 = vector.extract_strided_slice %231 {offsets = [0, 8, 8, 0], sizes = [2, 8, 8, 128], strides = [1, 1, 1, 1]} : vector<2x24x24x128xf32> to vector<2x8x8x128xf32>
    %236 = vector.shape_cast %235 : vector<2x8x8x128xf32> to vector<128x128xf32>
    %237 = arith.truncf %236 : vector<128x128xf32> to vector<128x128xbf16>
    %238 = vector.extract_strided_slice %231 {offsets = [0, 16, 8, 0], sizes = [2, 8, 8, 128], strides = [1, 1, 1, 1]} : vector<2x24x24x128xf32> to vector<2x8x8x128xf32>
    %239 = vector.shape_cast %238 : vector<2x8x8x128xf32> to vector<128x128xf32>
    %240 = arith.truncf %239 : vector<128x128xf32> to vector<128x128xbf16>
    %241 = vector.extract_strided_slice %228 {offsets = [0, 0, 8, 0], sizes = [2, 8, 8, 128], strides = [1, 1, 1, 1]} : vector<2x24x24x128xf32> to vector<2x8x8x128xf32>
    %242 = vector.shape_cast %241 : vector<2x8x8x128xf32> to vector<128x128xf32>
    %243 = arith.truncf %242 : vector<128x128xf32> to vector<128x128xbf16>
    %244 = vector.extract_strided_slice %228 {offsets = [0, 8, 8, 0], sizes = [2, 8, 8, 128], strides = [1, 1, 1, 1]} : vector<2x24x24x128xf32> to vector<2x8x8x128xf32>
    %245 = vector.shape_cast %244 : vector<2x8x8x128xf32> to vector<128x128xf32>
    %246 = arith.truncf %245 : vector<128x128xf32> to vector<128x128xbf16>
    %247 = vector.extract_strided_slice %228 {offsets = [0, 16, 8, 0], sizes = [2, 8, 8, 128], strides = [1, 1, 1, 1]} : vector<2x24x24x128xf32> to vector<2x8x8x128xf32>
    %248 = vector.shape_cast %247 : vector<2x8x8x128xf32> to vector<128x128xf32>
    %249 = arith.truncf %248 : vector<128x128xf32> to vector<128x128xbf16>
    %c1144_i32 = arith.constant 1144 : i32
    %250 = tpu.dynamic_rotate %229 by %c1144_i32 dim 0 : vector<1152x128xf32>, i32 -> vector<1152x128xf32>
    %251 = vector.shape_cast %250 : vector<1152x128xf32> to vector<2x24x24x128xf32>
    %252 = vector.extract_strided_slice %251 {offsets = [0, 0, 8, 0], sizes = [2, 8, 8, 128], strides = [1, 1, 1, 1]} : vector<2x24x24x128xf32> to vector<2x8x8x128xf32>
    %253 = vector.shape_cast %252 : vector<2x8x8x128xf32> to vector<128x128xf32>
    %254 = arith.truncf %253 : vector<128x128xf32> to vector<128x128xbf16>
    %255 = vector.extract_strided_slice %251 {offsets = [0, 8, 8, 0], sizes = [2, 8, 8, 128], strides = [1, 1, 1, 1]} : vector<2x24x24x128xf32> to vector<2x8x8x128xf32>
    %256 = vector.shape_cast %255 : vector<2x8x8x128xf32> to vector<128x128xf32>
    %257 = arith.truncf %256 : vector<128x128xf32> to vector<128x128xbf16>
    %258 = vector.extract_strided_slice %251 {offsets = [0, 16, 8, 0], sizes = [2, 8, 8, 128], strides = [1, 1, 1, 1]} : vector<2x24x24x128xf32> to vector<2x8x8x128xf32>
    %259 = vector.shape_cast %258 : vector<2x8x8x128xf32> to vector<128x128xf32>
    %260 = arith.truncf %259 : vector<128x128xf32> to vector<128x128xbf16>
    %261 = tpu.concatenate %234, %237, %240, %243, %246, %249, %254, %257, %260 in 1 : vector<128x128xbf16>, vector<128x128xbf16>, vector<128x128xbf16>, vector<128x128xbf16>, vector<128x128xbf16>, vector<128x128xbf16>, vector<128x128xbf16>, vector<128x128xbf16>, vector<128x128xbf16> -> vector<128x1152xbf16>
    %c3 = arith.constant 3 : index
    %c0_122 = arith.constant 0 : index
    %c0_123 = arith.constant 0 : index
    %262 = vector.load %arg1[%c3, %c0_122, %c0_123] : memref<4x1152x128xbf16, #tpu.memory_space<vmem>>, vector<1x1152x128xbf16>
    %263 = vector.shape_cast %262 : vector<1x1152x128xbf16> to vector<1152x128xbf16>
    %cst_124 = arith.constant dense<0.000000e+00> : vector<128x128xf32>
    %264 = tpu.matmul %261, %263, %cst_124 {dimension_numbers = #tpu.dot_dimension_numbers<[1], [0], [0], [1], [0, 0, 1, 1], [], []>} : vector<128x1152xbf16>, vector<1152x128xbf16>, vector<128x128xf32> -> vector<128x128xf32>
    %c3_125 = arith.constant 3 : index
    %c0_126 = arith.constant 0 : index
    %c0_127 = arith.constant 0 : index
    %265 = vector.load %arg2[%c3_125, %c0_126, %c0_127] : memref<4x1x128xf32, #tpu.memory_space<vmem>>, vector<1x1x128xf32>
    %266 = vector.shape_cast %265 : vector<1x1x128xf32> to vector<1x128xf32>
    %267 = vector.broadcast %266 : vector<1x128xf32> to vector<128x128xf32>
    %268 = arith.addf %264, %267 : vector<128x128xf32>
    %cst_128 = arith.constant dense<0.000000e+00> : vector<128xf32>
    %269 = vector.multi_reduction <add>, %268, %cst_128 [0] : vector<128x128xf32> to vector<128xf32>
    %270 = vector.shape_cast %269 : vector<128xf32> to vector<1x128xf32>
    %271 = arith.mulf %268, %268 : vector<128x128xf32>
    %cst_129 = arith.constant dense<0.000000e+00> : vector<128xf32>
    %272 = vector.multi_reduction <add>, %271, %cst_129 [0] : vector<128x128xf32> to vector<128xf32>
    %273 = vector.shape_cast %272 : vector<128xf32> to vector<1x128xf32>
    %cst_130 = arith.constant dense<0.000000e+00> : vector<1x128xf32>
    %274 = tpu.matmul %270, %10, %cst_130 {dimension_numbers = #tpu.dot_dimension_numbers<[1], [0], [0], [1], [0, 0, 1, 1], [], []>} : vector<1x128xf32>, vector<128x128xf32>, vector<1x128xf32> -> vector<1x128xf32>
    %cst_131 = arith.constant dense<0.000000e+00> : vector<1x128xf32>
    %275 = tpu.matmul %273, %10, %cst_131 {dimension_numbers = #tpu.dot_dimension_numbers<[1], [0], [0], [1], [0, 0, 1, 1], [], []>} : vector<1x128xf32>, vector<128x128xf32>, vector<1x128xf32> -> vector<1x128xf32>
    %276 = arith.mulf %274, %274 : vector<1x128xf32>
    %277 = arith.subf %275, %276 : vector<1x128xf32>
    %cst_132 = arith.constant 0.000000e+00 : f32
    %278 = vector.broadcast %cst_132 : f32 to vector<1x128xf32>
    %279 = arith.maximumf %277, %278 : vector<1x128xf32>
    %c3_133 = arith.constant 3 : index
    %c0_134 = arith.constant 0 : index
    %c0_135 = arith.constant 0 : index
    %280 = vector.load %arg3[%c3_133, %c0_134, %c0_135] : memref<4x1x128xf32, #tpu.memory_space<vmem>>, vector<1x1x128xf32>
    %281 = vector.shape_cast %280 : vector<1x1x128xf32> to vector<1x128xf32>
    %cst_136 = arith.constant 9.99999974E-6 : f32
    %282 = vector.broadcast %cst_136 : f32 to vector<1x128xf32>
    %283 = arith.addf %279, %282 : vector<1x128xf32>
    %284 = math.rsqrt %283 : vector<1x128xf32>
    %285 = arith.mulf %281, %284 : vector<1x128xf32>
    %286 = vector.broadcast %274 : vector<1x128xf32> to vector<128x128xf32>
    %287 = arith.subf %268, %286 : vector<128x128xf32>
    %288 = vector.broadcast %285 : vector<1x128xf32> to vector<128x128xf32>
    %289 = arith.mulf %287, %288 : vector<128x128xf32>
    %c3_137 = arith.constant 3 : index
    %c0_138 = arith.constant 0 : index
    %c0_139 = arith.constant 0 : index
    %290 = vector.load %arg4[%c3_137, %c0_138, %c0_139] : memref<4x1x128xf32, #tpu.memory_space<vmem>>, vector<1x1x128xf32>
    %291 = vector.shape_cast %290 : vector<1x1x128xf32> to vector<1x128xf32>
    %292 = vector.broadcast %291 : vector<1x128xf32> to vector<128x128xf32>
    %293 = arith.addf %289, %292 : vector<128x128xf32>
    %cst_140 = arith.constant 0.000000e+00 : f32
    %294 = vector.broadcast %cst_140 : f32 to vector<128x128xf32>
    %295 = arith.maximumf %293, %294 : vector<128x128xf32>
    %c0_141 = arith.constant 0 : index
    %c0_142 = arith.constant 0 : index
    %296 = vector.load %arg6[%c0_141, %c0_142] : memref<128x128xf32, #tpu.memory_space<vmem>>, vector<128x128xf32>
    %297 = arith.addf %296, %295 : vector<128x128xf32>
    %c0_143 = arith.constant 0 : index
    %c0_144 = arith.constant 0 : index
    %298 = vector.load %arg6[%c0_143, %c0_144] : memref<128x128xf32, #tpu.memory_space<vmem>>, vector<128x128xf32>
    tpu.vector_store %arg6[%c0_143, %c0_144], %297 {strides = array<i32>} : memref<128x128xf32, #tpu.memory_space<vmem>>, vector<128x128xf32>,
    return
  }
}

</mosaic_0001>

<llo_original>
// kernel: tile.63
$region0: #{tile.63}
  #allocation0 [shape = 's32[1]{0}', space=sflag, size = 0x4, scoped, tag = 'scoped memory for tile.63']
  %s0 = inlined_call_operand.vmem [shape: f32[16], index: 0, kind: input, shape index: {}]
  %s1 = inlined_call_operand.vmem [shape: f32[8,16], index: 1, kind: output, shape index: {}]
  // Predicated region
  $region2: #{tile.63} parent=0 // pred_check
    _
  $region3: #{tile.63} parent=0 // pred_check_branch
    %3 = sbr.rel (0) target = $region5
  $region4: #{tile.63} parent=0 // pred_region
    _
  $region5: #{tile.63} parent=0 // pred_fallthru
    _
  %v4 = vld [vmem:[%s0] ss:$0 sm:$0xff]
  %5 = vst [vmem:[%s1] sm:$0xff] %v4

// kernel: tile.108
$region0: #{tile.108}
  %s0 = inlined_call_operand.vmem [shape: f32[8,16], index: 0, kind: input, shape index: {}]
  %s1 = inlined_call_operand.vmem [shape: f32[1,1,128], index: 1, kind: output, shape index: {}]
  $region1: #{tile.108} parent=0
    #allocation0 [shape = 'u8[4096]{0}', space=vmem, size = 0x1000, scoped, tag = 'scoped mem for output reshape']
    %v2 = vld [vmem:[%s0] sm:$0x1]
    %vm3 = vcmask 130048
    %4 = vst.msk [vmem:[#allocation0] sm:$0x1] %vm3, %v2
    %s5 = scalar_lea.vmem %s0, 7
    %v6 = vld [vmem:[%s5] sm:$0x1]
    %7 = vrot.lane.b32.xlu0 %v6, 112
    %v8 = vpop.permute.xlu0 %7
    %vm9 = vcmask 1048448
    %10 = vst.msk [vmem:[#allocation0] sm:$0x1] %vm9, %v8
    %s11 = scalar_lea.vmem %s0, 6
    %v12 = vld [vmem:[%s11] sm:$0x1]
    %13 = vrot.lane.b32.xlu0 %v12, 96
    %v14 = vpop.permute.xlu0 %13
    %vm15 = vcmask 917248
    %16 = vst.msk [vmem:[#allocation0] sm:$0x1] %vm15, %v14
    %s17 = scalar_lea.vmem %s0, 5
    %v18 = vld [vmem:[%s17] sm:$0x1]
    %19 = vrot.lane.b32.xlu0 %v18, 80
    %v20 = vpop.permute.xlu0 %19
    %vm21 = vcmask 786048
    %22 = vst.msk [vmem:[#allocation0] sm:$0x1] %vm21, %v20
    %s23 = scalar_lea.vmem %s0, 4
    %v24 = vld [vmem:[%s23] sm:$0x1]
    %25 = vrot.lane.b32.xlu0 %v24, 64
    %v26 = vpop.permute.xlu0 %25
    %vm27 = vcmask 654848
    %28 = vst.msk [vmem:[#allocation0] sm:$0x1] %vm27, %v26
    %s29 = scalar_lea.vmem %s0, 3
    %v30 = vld [vmem:[%s29] sm:$0x1]
    %31 = vrot.lane.b32.xlu0 %v30, 48
    %v32 = vpop.permute.xlu0 %31
    %vm33 = vcmask 523648
    %34 = vst.msk [vmem:[#allocation0] sm:$0x1] %vm33, %v32
    %s35 = scalar_lea.vmem %s0, 2
    %v36 = vld [vmem:[%s35] sm:$0x1]
    %37 = vrot.lane.b32.xlu0 %v36, 32
    %v38 = vpop.permute.xlu0 %37
    %vm39 = vcmask 392448
    %40 = vst.msk [vmem:[#allocation0] sm:$0x1] %vm39, %v38
    %s41 = scalar_lea.vmem %s0, 1
    %v42 = vld [vmem:[%s41] sm:$0x1]
    %43 = vrot.lane.b32.xlu0 %v42, 16
    %v44 = vpop.permute.xlu0 %43
    %vm45 = vcmask 261248
    %46 = vst.msk [vmem:[#allocation0] sm:$0x1] %vm45, %v44
    %s48 = sshll.u32 1, 1
    %s49 = ssub.s32 %s48, 1
    %v51 = vld [vmem:[#allocation0] sm:%s49]
    %s52 = sshll.u32 1, 1
    %s53 = ssub.s32 %s52, 1
    %54 = vst [vmem:[%s1] sm:%s53] %v51

// kernel: dilated_bottleneck_forward.1
$region0: #{dilated_bottleneck_forward.1}
  #allocation0 [shape = 'u32[]', space=smem, size = 0x4, offset = 0x4, fixed_abs, tag = 'smem constant byte address 0x4 - core index']
  #allocation1 [shape = 'u32[144,128]{1,0:T(1,128)}', space=vmem, size = 0x12000, scoped, tag = 'internal scratch']
  #allocation2 [shape = 'f32[2,24,24,128]{3,2,1,0:T(8,128)}', space=vmem, size = 0x90000, scoped, tag = 'scratch operand']
  %s0 = inlined_call_operand.vmem [shape: f32[2,8,8,128], index: 0, kind: input, shape index: {}]
  %s1 = inlined_call_operand.vmem [shape: bf16[4,1152,128], index: 1, kind: input, shape index: {}]
  %s2 = inlined_call_operand.vmem [shape: f32[4,1,128], index: 2, kind: input, shape index: {}]
  %s3 = inlined_call_operand.vmem [shape: f32[4,1,128], index: 3, kind: input, shape index: {}]
  %s4 = inlined_call_operand.vmem [shape: f32[4,1,128], index: 4, kind: input, shape index: {}]
  %s5 = inlined_call_operand.vmem [shape: f32[128,128], index: 5, kind: input, shape index: {}]
  %s6 = inlined_call_operand.vmem [shape: f32[128,128], index: 6, kind: output, shape index: {}]
  %s7 = sld [smem:[#allocation0]]
  $region34: #{dilated_bottleneck_forward.1} parent=0
    _
  %s9 = ssub.s32 1, %s7
  %s10 = scalar_select 0, %s9, %s7
  // Predicated region
  $region2: #{dilated_bottleneck_forward.1} parent=0 // pred_check
    _
  $region3: #{dilated_bottleneck_forward.1} parent=0 // pred_check_branch
    %12 = sbr.rel (0) target = $region5
  $region4: #{dilated_bottleneck_forward.1} parent=0 // pred_region
    _
  $region5: #{dilated_bottleneck_forward.1} parent=0 // pred_fallthru
    _
  // Predicated region
  $region6: #{dilated_bottleneck_forward.1} parent=0 // pred_check
    _
  $region7: #{dilated_bottleneck_forward.1} parent=0 // pred_check_branch
    %14 = sbr.rel (0) target = $region9
  $region8: #{dilated_bottleneck_forward.1} parent=0 // pred_region
    _
  $region9: #{dilated_bottleneck_forward.1} parent=0 // pred_fallthru
    _
  // Predicated region
  $region10: #{dilated_bottleneck_forward.1} parent=0 // pred_check
    _
  $region11: #{dilated_bottleneck_forward.1} parent=0 // pred_check_branch
    %16 = sbr.rel (0) target = $region13
  $region12: #{dilated_bottleneck_forward.1} parent=0 // pred_region
    _
  $region13: #{dilated_bottleneck_forward.1} parent=0 // pred_fallthru
    _
  // Predicated region
  $region14: #{dilated_bottleneck_forward.1} parent=0 // pred_check
    _
  $region15: #{dilated_bottleneck_forward.1} parent=0 // pred_check_branch
    %18 = sbr.rel (0) target = $region17
  $region16: #{dilated_bottleneck_forward.1} parent=0 // pred_region
    _
  $region17: #{dilated_bottleneck_forward.1} parent=0 // pred_fallthru
    _
  // Predicated region
  $region18: #{dilated_bottleneck_forward.1} parent=0 // pred_check
    _
  $region19: #{dilated_bottleneck_forward.1} parent=0 // pred_check_branch
    %20 = sbr.rel (0) target = $region21
  $region20: #{dilated_bottleneck_forward.1} parent=0 // pred_region
    _
  $region21: #{dilated_bottleneck_forward.1} parent=0 // pred_fallthru
    _
  // Predicated region
  $region22: #{dilated_bottleneck_forward.1} parent=0 // pred_check
    _
  $region23: #{dilated_bottleneck_forward.1} parent=0 // pred_check_branch
    %22 = sbr.rel (0) target = $region25
  $region24: #{dilated_bottleneck_forward.1} parent=0 // pred_region
    _
  $region25: #{dilated_bottleneck_forward.1} parent=0 // pred_fallthru
    _
  %24 = vst [vmem:[#allocation2] sm:$0xff] 0.0
  %25 = vst [vmem:[#allocation2 + $0x8] sm:$0xff] 0.0
  %26 = vst [vmem:[#allocation2 + $0x10] sm:$0xff] 0.0
  %27 = vst [vmem:[#allocation2 + $0x18] sm:$0xff] 0.0
  %28 = vst [vmem:[#allocation2 + $0x20] sm:$0xff] 0.0
  %29 = vst [vmem:[#allocation2 + $0x28] sm:$0xff] 0.0
  %30 = vst [vmem:[#allocation2 + $0x30] sm:$0xff] 0.0
  %31 = vst [vmem:[#allocation2 + $0x38] sm:$0xff] 0.0
  %32 = vst [vmem:[#allocation2 + $0x40] sm:$0xff] 0.0
  %33 = vst [vmem:[#allocation2 + $0x48] sm:$0xff] 0.0
  %34 = vst [vmem:[#allocation2 + $0x50] sm:$0xff] 0.0
  %35 = vst [vmem:[#allocation2 + $0x58] sm:$0xff] 0.0
  %36 = vst [vmem:[#allocation2 + $0x60] sm:$0xff] 0.0
  %37 = vst [vmem:[#allocation2 + $0x68] sm:$0xff] 0.0
  %38 = vst [vmem:[#allocation2 + $0x70] sm:$0xff] 0.0
  %39 = vst [vmem:[#allocation2 + $0x78] sm:$0xff] 0.0
  %40 = vst [vmem:[#allocation2 + $0x80] sm:$0xff] 0.0
  %41 = vst [vmem:[#allocation2 + $0x88] sm:$0xff] 0.0
  %42 = vst [vmem:[#allocation2 + $0x90] sm:$0xff] 0.0
  %43 = vst [vmem:[#allocation2 + $0x98] sm:$0xff] 0.0
  %44 = vst [vmem:[#allocation2 + $0xa0] sm:$0xff] 0.0
  %45 = vst [vmem:[#allocation2 + $0xa8] sm:$0xff] 0.0
  %46 = vst [vmem:[#allocation2 + $0xb0] sm:$0xff] 0.0
  %47 = vst [vmem:[#allocation2 + $0xb8] sm:$0xff] 0.0
  %48 = vst [vmem:[#allocation2 + $0x240] sm:$0xff] 0.0
  %49 = vst [vmem:[#allocation2 + $0x248] sm:$0xff] 0.0
  %50 = vst [vmem:[#allocation2 + $0x250] sm:$0xff] 0.0
  %51 = vst [vmem:[#allocation2 + $0x258] sm:$0xff] 0.0
  %52 = vst [vmem:[#allocation2 + $0x260] sm:$0xff] 0.0
  %53 = vst [vmem:[#allocation2 + $0x268] sm:$0xff] 0.0
  %54 = vst [vmem:[#allocation2 + $0x270] sm:$0xff] 0.0
  %55 = vst [vmem:[#allocation2 + $0x278] sm:$0xff] 0.0
  %56 = vst [vmem:[#allocation2 + $0x280] sm:$0xff] 0.0
  %57 = vst [vmem:[#allocation2 + $0x288] sm:$0xff] 0.0
  %58 = vst [vmem:[#allocation2 + $0x290] sm:$0xff] 0.0
  %59 = vst [vmem:[#allocation2 + $0x298] sm:$0xff] 0.0
  %60 = vst [vmem:[#allocation2 + $0x2a0] sm:$0xff] 0.0
  %61 = vst [vmem:[#allocation2 + $0x2a8] sm:$0xff] 0.0
  %62 = vst [vmem:[#allocation2 + $0x2b0] sm:$0xff] 0.0
  %63 = vst [vmem:[#allocation2 + $0x2b8] sm:$0xff] 0.0
  %64 = vst [vmem:[#allocation2 + $0x2c0] sm:$0xff] 0.0
  %65 = vst [vmem:[#allocation2 + $0x2c8] sm:$0xff] 0.0
  %66 = vst [vmem:[#allocation2 + $0x2d0] sm:$0xff] 0.0
  %67 = vst [vmem:[#allocation2 + $0x2d8] sm:$0xff] 0.0
  %68 = vst [vmem:[#allocation2 + $0x2e0] sm:$0xff] 0.0
  %69 = vst [vmem:[#allocation2 + $0x2e8] sm:$0xff] 0.0
  %70 = vst [vmem:[#allocation2 + $0x2f0] sm:$0xff] 0.0
  %71 = vst [vmem:[#allocation2 + $0x2f8] sm:$0xff] 0.0
  %s72 = scalar_lea.vmem [#allocation2], 384
  %73 = vst [vmem:[%s72] sm:$0xff] 0.0
  %74 = vst [vmem:[%s72 + $0x8] sm:$0xff] 0.0
  %75 = vst [vmem:[%s72 + $0x10] sm:$0xff] 0.0
  %76 = vst [vmem:[%s72 + $0x18] sm:$0xff] 0.0
  %77 = vst [vmem:[%s72 + $0x20] sm:$0xff] 0.0
  %78 = vst [vmem:[%s72 + $0x28] sm:$0xff] 0.0
  %79 = vst [vmem:[%s72 + $0x30] sm:$0xff] 0.0
  %80 = vst [vmem:[%s72 + $0x38] sm:$0xff] 0.0
  %81 = vst [vmem:[%s72 + $0x40] sm:$0xff] 0.0
  %82 = vst [vmem:[%s72 + $0x48] sm:$0xff] 0.0
  %83 = vst [vmem:[%s72 + $0x50] sm:$0xff] 0.0
  %84 = vst [vmem:[%s72 + $0x58] sm:$0xff] 0.0
  %85 = vst [vmem:[%s72 + $0x60] sm:$0xff] 0.0
  %86 = vst [vmem:[%s72 + $0x68] sm:$0xff] 0.0
  %87 = vst [vmem:[%s72 + $0x70] sm:$0xff] 0.0
  %88 = vst [vmem:[%s72 + $0x78] sm:$0xff] 0.0
  %89 = vst [vmem:[%s72 + $0x80] sm:$0xff] 0.0
  %90 = vst [vmem:[%s72 + $0x88] sm:$0xff] 0.0
  %91 = vst [vmem:[%s72 + $0x90] sm:$0xff] 0.0
  %92 = vst [vmem:[%s72 + $0x98] sm:$0xff] 0.0
  %93 = vst [vmem:[%s72 + $0xa0] sm:$0xff] 0.0
  %94 = vst [vmem:[%s72 + $0xa8] sm:$0xff] 0.0
  %95 = vst [vmem:[%s72 + $0xb0] sm:$0xff] 0.0
  %96 = vst [vmem:[%s72 + $0xb8] sm:$0xff] 0.0
  %97 = vst [vmem:[%s72 + $0x240] sm:$0xff] 0.0
  %98 = vst [vmem:[%s72 + $0x248] sm:$0xff] 0.0
  %99 = vst [vmem:[%s72 + $0x250] sm:$0xff] 0.0
  %100 = vst [vmem:[%s72 + $0x258] sm:$0xff] 0.0
  %101 = vst [vmem:[%s72 + $0x260] sm:$0xff] 0.0
  %102 = vst [vmem:[%s72 + $0x268] sm:$0xff] 0.0
  %103 = vst [vmem:[%s72 + $0x270] sm:$0xff] 0.0
  %104 = vst [vmem:[%s72 + $0x278] sm:$0xff] 0.0
  %105 = vst [vmem:[%s72 + $0x280] sm:$0xff] 0.0
  %106 = vst [vmem:[%s72 + $0x288] sm:$0xff] 0.0
  %107 = vst [vmem:[%s72 + $0x290] sm:$0xff] 0.0
  %108 = vst [vmem:[%s72 + $0x298] sm:$0xff] 0.0
  %109 = vst [vmem:[%s72 + $0x2a0] sm:$0xff] 0.0
  %110 = vst [vmem:[%s72 + $0x2a8] sm:$0xff] 0.0
  %111 = vst [vmem:[%s72 + $0x2b0] sm:$0xff] 0.0
  %112 = vst [vmem:[%s72 + $0x2b8] sm:$0xff] 0.0
  %113 = vst [vmem:[%s72 + $0x2c0] sm:$0xff] 0.0
  %114 = vst [vmem:[%s72 + $0x2c8] sm:$0xff] 0.0
  %115 = vst [vmem:[%s72 + $0x2d0] sm:$0xff] 0.0
  %116 = vst [vmem:[%s72 + $0x2d8] sm:$0xff] 0.0
  %117 = vst [vmem:[%s72 + $0x2e0] sm:$0xff] 0.0
  %118 = vst [vmem:[%s72 + $0x2e8] sm:$0xff] 0.0
  %119 = vst [vmem:[%s72 + $0x2f0] sm:$0xff] 0.0
  %120 = vst [vmem:[%s72 + $0x2f8] sm:$0xff] 0.0
  %s121 = scalar_lea.vmem [#allocation2], 192
  %122 = vst [vmem:[%s121] sm:$0xff] 0.0
  %123 = vst [vmem:[%s121 + $0x18] sm:$0xff] 0.0
  %124 = vst [vmem:[%s121 + $0x30] sm:$0xff] 0.0
  %125 = vst [vmem:[%s121 + $0x48] sm:$0xff] 0.0
  %126 = vst [vmem:[%s121 + $0x60] sm:$0xff] 0.0
  %127 = vst [vmem:[%s121 + $0x78] sm:$0xff] 0.0
  %128 = vst [vmem:[%s121 + $0x90] sm:$0xff] 0.0
  %129 = vst [vmem:[%s121 + $0xa8] sm:$0xff] 0.0
  %130 = vst [vmem:[%s121 + $0x240] sm:$0xff] 0.0
  %131 = vst [vmem:[%s121 + $0x258] sm:$0xff] 0.0
  %132 = vst [vmem:[%s121 + $0x270] sm:$0xff] 0.0
  %133 = vst [vmem:[%s121 + $0x288] sm:$0xff] 0.0
  %134 = vst [vmem:[%s121 + $0x2a0] sm:$0xff] 0.0
  %135 = vst [vmem:[%s121 + $0x2b8] sm:$0xff] 0.0
  %136 = vst [vmem:[%s121 + $0x2d0] sm:$0xff] 0.0
  %137 = vst [vmem:[%s121 + $0x2e8] sm:$0xff] 0.0
  %138 = vst [vmem:[%s121 + $0x10] sm:$0xff] 0.0
  %139 = vst [vmem:[%s121 + $0x28] sm:$0xff] 0.0
  %140 = vst [vmem:[%s121 + $0x40] sm:$0xff] 0.0
  %141 = vst [vmem:[%s121 + $0x58] sm:$0xff] 0.0
  %142 = vst [vmem:[%s121 + $0x70] sm:$0xff] 0.0
  %143 = vst [vmem:[%s121 + $0x88] sm:$0xff] 0.0
  %144 = vst [vmem:[%s121 + $0xa0] sm:$0xff] 0.0
  %145 = vst [vmem:[%s121 + $0xb8] sm:$0xff] 0.0
  %146 = vst [vmem:[%s121 + $0x250] sm:$0xff] 0.0
  %147 = vst [vmem:[%s121 + $0x268] sm:$0xff] 0.0
  %148 = vst [vmem:[%s121 + $0x280] sm:$0xff] 0.0
  %149 = vst [vmem:[%s121 + $0x298] sm:$0xff] 0.0
  %150 = vst [vmem:[%s121 + $0x2b0] sm:$0xff] 0.0
  %151 = vst [vmem:[%s121 + $0x2c8] sm:$0xff] 0.0
  %152 = vst [vmem:[%s121 + $0x2e0] sm:$0xff] 0.0
  %153 = vst [vmem:[%s121 + $0x2f8] sm:$0xff] 0.0
  %v154 = vld [vmem:[%s0] sm:$0xff]
  %v155 = vld [vmem:[%s0 + $0x8] sm:$0xff]
  %v156 = vld [vmem:[%s0 + $0x10] sm:$0xff]
  %v157 = vld [vmem:[%s0 + $0x18] sm:$0xff]
  %v158 = vld [vmem:[%s0 + $0x20] sm:$0xff]
  %v159 = vld [vmem:[%s0 + $0x28] sm:$0xff]
  %v160 = vld [vmem:[%s0 + $0x30] sm:$0xff]
  %v161 = vld [vmem:[%s0 + $0x38] sm:$0xff]
  %v162 = vld [vmem:[%s0 + $0x40] sm:$0xff]
  %v163 = vld [vmem:[%s0 + $0x48] sm:$0xff]
  %v164 = vld [vmem:[%s0 + $0x50] sm:$0xff]
  %v165 = vld [vmem:[%s0 + $0x58] sm:$0xff]
  %v166 = vld [vmem:[%s0 + $0x60] sm:$0xff]
  %v167 = vld [vmem:[%s0 + $0x68] sm:$0xff]
  %v168 = vld [vmem:[%s0 + $0x70] sm:$0xff]
  %v169 = vld [vmem:[%s0 + $0x78] sm:$0xff]
  %170 = vst [vmem:[%s121 + $0x8] sm:$0xff] %v154
  %171 = vst [vmem:[%s121 + $0x20] sm:$0xff] %v155
  %172 = vst [vmem:[%s121 + $0x38] sm:$0xff] %v156
  %173 = vst [vmem:[%s121 + $0x50] sm:$0xff] %v157
  %174 = vst [vmem:[%s121 + $0x68] sm:$0xff] %v158
  %175 = vst [vmem:[%s121 + $0x80] sm:$0xff] %v159
  %176 = vst [vmem:[%s121 + $0x98] sm:$0xff] %v160
  %177 = vst [vmem:[%s121 + $0xb0] sm:$0xff] %v161
  %178 = vst [vmem:[%s121 + $0x248] sm:$0xff] %v162
  %179 = vst [vmem:[%s121 + $0x260] sm:$0xff] %v163
  %180 = vst [vmem:[%s121 + $0x278] sm:$0xff] %v164
  %181 = vst [vmem:[%s121 + $0x290] sm:$0xff] %v165
  %182 = vst [vmem:[%s121 + $0x2a8] sm:$0xff] %v166
  %183 = vst [vmem:[%s121 + $0x2c0] sm:$0xff] %v167
  %184 = vst [vmem:[%s121 + $0x2d8] sm:$0xff] %v168
  %185 = vst [vmem:[%s121 + $0x2f0] sm:$0xff] %v169
  %v186 = vld [vmem:[%s5] sm:$0xff]
  %v187 = vld [vmem:[%s5 + $0x8] sm:$0xff]
  %v188 = vld [vmem:[%s5 + $0x10] sm:$0xff]
  %v189 = vld [vmem:[%s5 + $0x18] sm:$0xff]
  %v190 = vld [vmem:[%s5 + $0x20] sm:$0xff]
  %v191 = vld [vmem:[%s5 + $0x28] sm:$0xff]
  %v192 = vld [vmem:[%s5 + $0x30] sm:$0xff]
  %v193 = vld [vmem:[%s5 + $0x38] sm:$0xff]
  %v194 = vld [vmem:[%s5 + $0x40] sm:$0xff]
  %v195 = vld [vmem:[%s5 + $0x48] sm:$0xff]
  %v196 = vld [vmem:[%s5 + $0x50] sm:$0xff]
  %v197 = vld [vmem:[%s5 + $0x58] sm:$0xff]
  %v198 = vld [vmem:[%s5 + $0x60] sm:$0xff]
  %v199 = vld [vmem:[%s5 + $0x68] sm:$0xff]
  %v200 = vld [vmem:[%s5 + $0x70] sm:$0xff]
  %v201 = vld [vmem:[%s5 + $0x78] sm:$0xff]
  %v202 = vld [vmem:[#allocation2 + $0xa8] sm:$0xff]
  %v203 = vld [vmem:[#allocation2 + $0xb0] sm:$0xff]
  %v204 = vld [vmem:[#allocation2 + $0xb8] sm:$0xff]
  %v205 = vld [vmem:[#allocation2 + $0xc0] sm:$0xff]
  %v206 = vld [vmem:[#allocation2 + $0xc8] sm:$0xff]
  %v207 = vld [vmem:[#allocation2 + $0xd0] sm:$0xff]
  %v208 = vld [vmem:[#allocation2 + $0xd8] sm:$0xff]
  %v209 = vld [vmem:[#allocation2 + $0xe0] sm:$0xff]
  %v210 = vld [vmem:[#allocation2 + $0xe8] sm:$0xff]
  %v211 = vld [vmem:[#allocation2 + $0xf0] sm:$0xff]
  %v212 = vld [vmem:[#allocation2 + $0xf8] sm:$0xff]
  %v213 = vld [vmem:[#allocation2 + $0x100] sm:$0xff]
  %v214 = vld [vmem:[#allocation2 + $0x108] sm:$0xff]
  %v215 = vld [vmem:[#allocation2 + $0x110] sm:$0xff]
  %v216 = vld [vmem:[#allocation2 + $0x118] sm:$0xff]
  %v217 = vld [vmem:[#allocation2 + $0x120] sm:$0xff]
  %v218 = vld [vmem:[#allocation2 + $0x128] sm:$0xff]
  %v219 = vld [vmem:[#allocation2 + $0x130] sm:$0xff]
  %v220 = vld [vmem:[#allocation2 + $0x138] sm:$0xff]
  %v221 = vld [vmem:[#allocation2 + $0x140] sm:$0xff]
  %v222 = vld [vmem:[#allocation2 + $0x148] sm:$0xff]
  %v223 = vld [vmem:[#allocation2 + $0x150] sm:$0xff]
  %v224 = vld [vmem:[#allocation2 + $0x158] sm:$0xff]
  %v225 = vld [vmem:[#allocation2 + $0x160] sm:$0xff]
  %v226 = vld [vmem:[#allocation2 + $0x168] sm:$0xff]
  %v227 = vld [vmem:[#allocation2 + $0x170] sm:$0xff]
  %v228 = vld [vmem:[#allocation2 + $0x178] sm:$0xff]
  %v229 = vld [vmem:[#allocation2 + $0x180] sm:$0xff]
  %v230 = vld [vmem:[#allocation2 + $0x188] sm:$0xff]
  %v231 = vld [vmem:[#allocation2 + $0x190] sm:$0xff]
  %v232 = vld [vmem:[#allocation2 + $0x2e8] sm:$0xff]
  %v233 = vld [vmem:[#allocation2 + $0x2f0] sm:$0xff]
  %v234 = vld [vmem:[#allocation2 + $0x2f8] sm:$0xff]
  %v235 = vld [vmem:[#allocation2 + $0x300] sm:$0xff]
  %v236 = vld [vmem:[#allocation2 + $0x308] sm:$0xff]
  %v237 = vld [vmem:[#allocation2 + $0x310] sm:$0xff]
  %v238 = vld [vmem:[#allocation2 + $0x318] sm:$0xff]
  %v239 = vld [vmem:[#allocation2 + $0x320] sm:$0xff]
  %v240 = vld [vmem:[#allocation2 + $0x328] sm:$0xff]
  %v241 = vld [vmem:[#allocation2 + $0x330] sm:$0xff]
  %v242 = vld [vmem:[#allocation2 + $0x338] sm:$0xff]
  %v243 = vld [vmem:[#allocation2 + $0x340] sm:$0xff]
  %v244 = vld [vmem:[#allocation2 + $0x348] sm:$0xff]
  %v245 = vld [vmem:[#allocation2 + $0x350] sm:$0xff]
  %v246 = vld [vmem:[#allocation2 + $0x358] sm:$0xff]
  %v247 = vld [vmem:[#allocation2 + $0x360] sm:$0xff]
  %v248 = vld [vmem:[#allocation2 + $0x368] sm:$0xff]
  %v249 = vld [vmem:[#allocation2 + $0x370] sm:$0xff]
  %v250 = vld [vmem:[#allocation2 + $0x378] sm:$0xff]
  %v251 = vld [vmem:[#allocation2 + $0x380] sm:$0xff]
  %v252 = vld [vmem:[#allocation2 + $0x388] sm:$0xff]
  %v253 = vld [vmem:[#allocation2 + $0x390] sm:$0xff]
  %v254 = vld [vmem:[#allocation2 + $0x398] sm:$0xff]
  %v255 = vld [vmem:[#allocation2 + $0x3a0] sm:$0xff]
  %v256 = vld [vmem:[#allocation2 + $0x3a8] sm:$0xff]
  %v257 = vld [vmem:[#allocation2 + $0x3b0] sm:$0xff]
  %v258 = vld [vmem:[#allocation2 + $0x3b8] sm:$0xff]
  %v259 = vld [vmem:[#allocation2 + $0x3c0] sm:$0xff]
  %v260 = vld [vmem:[#allocation2 + $0x3c8] sm:$0xff]
  %v261 = vld [vmem:[#allocation2 + $0x3d0] sm:$0xff]
  %v262 = vrot.slane %v202, 7
  %v263 = vrot.slane %v203, 7
  %v264 = vrot.slane %v205, 7
  %v265 = vrot.slane %v206, 7
  %v266 = vrot.slane %v208, 7
  %v267 = vrot.slane %v209, 7
  %v268 = vrot.slane %v211, 7
  %v269 = vrot.slane %v212, 7
  %v270 = vrot.slane %v214, 7
  %v271 = vrot.slane %v215, 7
  %v272 = vrot.slane %v217, 7
  %v273 = vrot.slane %v218, 7
  %v274 = vrot.slane %v220, 7
  %v275 = vrot.slane %v221, 7
  %v276 = vrot.slane %v223, 7
  %v277 = vrot.slane %v224, 7
  %v278 = vrot.slane %v226, 7
  %v279 = vrot.slane %v227, 7
  %v280 = vrot.slane %v229, 7
  %v281 = vrot.slane %v230, 7
  %v282 = vrot.slane %v232, 7
  %v283 = vrot.slane %v233, 7
  %v284 = vrot.slane %v235, 7
  %v285 = vrot.slane %v236, 7
  %v286 = vrot.slane %v238, 7
  %v287 = vrot.slane %v239, 7
  %v288 = vrot.slane %v241, 7
  %v289 = vrot.slane %v242, 7
  %v290 = vrot.slane %v244, 7
  %v291 = vrot.slane %v245, 7
  %v292 = vrot.slane %v247, 7
  %v293 = vrot.slane %v248, 7
  %v294 = vrot.slane %v250, 7
  %v295 = vrot.slane %v251, 7
  %v296 = vrot.slane %v253, 7
  %v297 = vrot.slane %v254, 7
  %v298 = vrot.slane %v256, 7
  %v299 = vrot.slane %v257, 7
  %v300 = vrot.slane %v259, 7
  %v301 = vrot.slane %v260, 7
  %v302 = vlaneseq
  %v303 = vshrl.u32 %v302, 7
  %vm304 = vcmp.lt.s32.totalorder %v303, 1
  %v305 = vsel %vm304, %v300, %v301
  %v306 = vsel %vm304, %v298, %v299
  %v307 = vsel %vm304, %v296, %v297
  %v308 = vsel %vm304, %v294, %v295
  %v309 = vsel %vm304, %v292, %v293
  %v310 = vsel %vm304, %v290, %v291
  %v311 = vsel %vm304, %v288, %v289
  %v312 = vsel %vm304, %v286, %v287
  %v313 = vsel %vm304, %v284, %v285
  %v314 = vsel %vm304, %v282, %v283
  %v315 = vsel %vm304, %v280, %v281
  %v316 = vsel %vm304, %v278, %v279
  %v317 = vsel %vm304, %v276, %v277
  %v318 = vsel %vm304, %v274, %v275
  %v319 = vsel %vm304, %v272, %v273
  %v320 = vsel %vm304, %v270, %v271
  %v321 = vsel %vm304, %v268, %v269
  %v322 = vsel %vm304, %v266, %v267
  %v323 = vsel %vm304, %v264, %v265
  %v324 = vsel %vm304, %v262, %v263
  %v325 = vpack.c.bf16 %v323, %v324
  %v326 = vpack.c.bf16 %v321, %v322
  %v327 = vpack.c.bf16 %v319, %v320
  %v328 = vpack.c.bf16 %v317, %v318
  %v329 = vpack.c.bf16 %v313, %v314
  %v330 = vpack.c.bf16 %v311, %v312
  %v331 = vpack.c.bf16 %v309, %v310
  %v332 = vpack.c.bf16 %v307, %v308
  %v333 = vpack.c.bf16 %v322, %v323
  %v334 = vpack.c.bf16 %v320, %v321
  %v335 = vpack.c.bf16 %v318, %v319
  %v336 = vpack.c.bf16 %v316, %v317
  %v337 = vpack.c.bf16 %v312, %v313
  %v338 = vpack.c.bf16 %v310, %v311
  %v339 = vpack.c.bf16 %v308, %v309
  %v340 = vpack.c.bf16 %v306, %v307
  %v341 = vpack.c.bf16 %v315, %v316
  %v342 = vpack.c.bf16 %v305, %v306
  %v343 = vpack.c.bf16 %v206, %v203
  %v344 = vpack.c.bf16 %v212, %v209
  %v345 = vpack.c.bf16 %v218, %v215
  %v346 = vpack.c.bf16 %v224, %v221
  %v347 = vpack.c.bf16 %v236, %v233
  %v348 = vpack.c.bf16 %v242, %v239
  %v349 = vpack.c.bf16 %v248, %v245
  %v350 = vpack.c.bf16 %v254, %v251
  %v351 = vpack.c.bf16 %v209, %v206
  %v352 = vpack.c.bf16 %v215, %v212
  %v353 = vpack.c.bf16 %v221, %v218
  %v354 = vpack.c.bf16 %v227, %v224
  %v355 = vpack.c.bf16 %v239, %v236
  %v356 = vpack.c.bf16 %v245, %v242
  %v357 = vpack.c.bf16 %v251, %v248
  %v358 = vpack.c.bf16 %v257, %v254
  %v359 = vpack.c.bf16 %v230, %v227
  %v360 = vpack.c.bf16 %v260, %v257
  %v361 = vrot.slane %v203, 1
  %v362 = vrot.slane %v204, 1
  %v363 = vrot.slane %v206, 1
  %v364 = vrot.slane %v207, 1
  %v365 = vrot.slane %v209, 1
  %v366 = vrot.slane %v210, 1
  %v367 = vrot.slane %v212, 1
  %v368 = vrot.slane %v213, 1
  %v369 = vrot.slane %v215, 1
  %v370 = vrot.slane %v216, 1
  %v371 = vrot.slane %v218, 1
  %v372 = vrot.slane %v219, 1
  %v373 = vrot.slane %v221, 1
  %v374 = vrot.slane %v222, 1
  %v375 = vrot.slane %v224, 1
  %v376 = vrot.slane %v225, 1
  %v377 = vrot.slane %v227, 1
  %v378 = vrot.slane %v228, 1
  %v379 = vrot.slane %v230, 1
  %v380 = vrot.slane %v231, 1
  %v381 = vrot.slane %v233, 1
  %v382 = vrot.slane %v234, 1
  %v383 = vrot.slane %v236, 1
  %v384 = vrot.slane %v237, 1
  %v385 = vrot.slane %v239, 1
  %v386 = vrot.slane %v240, 1
  %v387 = vrot.slane %v242, 1
  %v388 = vrot.slane %v243, 1
  %v389 = vrot.slane %v245, 1
  %v390 = vrot.slane %v246, 1
  %v391 = vrot.slane %v248, 1
  %v392 = vrot.slane %v249, 1
  %v393 = vrot.slane %v251, 1
  %v394 = vrot.slane %v252, 1
  %v395 = vrot.slane %v254, 1
  %v396 = vrot.slane %v255, 1
  %v397 = vrot.slane %v257, 1
  %v398 = vrot.slane %v258, 1
  %v399 = vrot.slane %v260, 1
  %v400 = vrot.slane %v261, 1
  %vm401 = vcmp.lt.s32.totalorder %v303, 7
  %v402 = vsel %vm401, %v399, %v400
  %v403 = vsel %vm401, %v397, %v398
  %v404 = vsel %vm401, %v395, %v396
  %v405 = vsel %vm401, %v393, %v394
  %v406 = vsel %vm401, %v391, %v392
  %v407 = vsel %vm401, %v389, %v390
  %v408 = vsel %vm401, %v387, %v388
  %v409 = vsel %vm401, %v385, %v386
  %v410 = vsel %vm401, %v383, %v384
  %v411 = vsel %vm401, %v381, %v382
  %v412 = vsel %vm401, %v379, %v380
  %v413 = vsel %vm401, %v377, %v378
  %v414 = vsel %vm401, %v375, %v376
  %v415 = vsel %vm401, %v373, %v374
  %v416 = vsel %vm401, %v371, %v372
  %v417 = vsel %vm401, %v369, %v370
  %v418 = vsel %vm401, %v367, %v368
  %v419 = vsel %vm401, %v365, %v366
  %v420 = vsel %vm401, %v363, %v364
  %v421 = vsel %vm401, %v361, %v362
  %v422 = vpack.c.bf16 %v420, %v421
  %v423 = vpack.c.bf16 %v418, %v419
  %v424 = vpack.c.bf16 %v416, %v417
  %v425 = vpack.c.bf16 %v414, %v415
  %v426 = vpack.c.bf16 %v410, %v411
  %v427 = vpack.c.bf16 %v408, %v409
  %v428 = vpack.c.bf16 %v406, %v407
  %v429 = vpack.c.bf16 %v404, %v405
  %v430 = vpack.c.bf16 %v419, %v420
  %v431 = vpack.c.bf16 %v417, %v418
  %v432 = vpack.c.bf16 %v415, %v416
  %v433 = vpack.c.bf16 %v413, %v414
  %v434 = vpack.c.bf16 %v409, %v410
  %v435 = vpack.c.bf16 %v407, %v408
  %v436 = vpack.c.bf16 %v405, %v406
  %v437 = vpack.c.bf16 %v403, %v404
  %v438 = vpack.c.bf16 %v412, %v413
  %v439 = vpack.c.bf16 %v402, %v403
  %v440 = vld [vmem:[%s1] sm:$0xf]
  %v441 = vld [vmem:[%s1 + $0x4] sm:$0xf]
  %v442 = vld [vmem:[%s1 + $0x8] sm:$0xf]
  %v443 = vld [vmem:[%s1 + $0xc] sm:$0xf]
  %v444 = vld [vmem:[%s1 + $0x10] sm:$0xf]
  %v445 = vld [vmem:[%s1 + $0x14] sm:$0xf]
  %v446 = vld [vmem:[%s1 + $0x18] sm:$0xf]
  %v447 = vld [vmem:[%s1 + $0x1c] sm:$0xf]
  %v448 = vld [vmem:[%s1 + $0x20] sm:$0xf]
  %v449 = vld [vmem:[%s1 + $0x24] sm:$0xf]
  %v450 = vld [vmem:[%s1 + $0x28] sm:$0xf]
  %v451 = vld [vmem:[%s1 + $0x2c] sm:$0xf]
  %v452 = vld [vmem:[%s1 + $0x30] sm:$0xf]
  %v453 = vld [vmem:[%s1 + $0x34] sm:$0xf]
  %v454 = vld [vmem:[%s1 + $0x38] sm:$0xf]
  %v455 = vld [vmem:[%s1 + $0x3c] sm:$0xf]
  %v456 = vld [vmem:[%s1 + $0x40] sm:$0xf]
  %v457 = vld [vmem:[%s1 + $0x44] sm:$0xf]
  %v458 = vld [vmem:[%s1 + $0x48] sm:$0xf]
  %v459 = vld [vmem:[%s1 + $0x4c] sm:$0xf]
  %v460 = vld [vmem:[%s1 + $0x50] sm:$0xf]
  %v461 = vld [vmem:[%s1 + $0x54] sm:$0xf]
  %v462 = vld [vmem:[%s1 + $0x58] sm:$0xf]
  %v463 = vld [vmem:[%s1 + $0x5c] sm:$0xf]
  %v464 = vld [vmem:[%s1 + $0x60] sm:$0xf]
  %v465 = vld [vmem:[%s1 + $0x64] sm:$0xf]
  %v466 = vld [vmem:[%s1 + $0x68] sm:$0xf]
  %v467 = vld [vmem:[%s1 + $0x6c] sm:$0xf]
  %v468 = vld [vmem:[%s1 + $0x70] sm:$0xf]
  %v469 = vld [vmem:[%s1 + $0x74] sm:$0xf]
  %v470 = vld [vmem:[%s1 + $0x78] sm:$0xf]
  %v471 = vld [vmem:[%s1 + $0x7c] sm:$0xf]
  %v472 = vld [vmem:[%s1 + $0x80] sm:$0xf]
  %v473 = vld [vmem:[%s1 + $0x84] sm:$0xf]
  %v474 = vld [vmem:[%s1 + $0x88] sm:$0xf]
  %v475 = vld [vmem:[%s1 + $0x8c] sm:$0xf]
  %v476 = vld [vmem:[%s1 + $0x90] sm:$0xf]
  %v477 = vld [vmem:[%s1 + $0x94] sm:$0xf]
  %v478 = vld [vmem:[%s1 + $0x98] sm:$0xf]
  %v479 = vld [vmem:[%s1 + $0x9c] sm:$0xf]
  %v480 = vld [vmem:[%s1 + $0xa0] sm:$0xf]
  %v481 = vld [vmem:[%s1 + $0xa4] sm:$0xf]
  %v482 = vld [vmem:[%s1 + $0xa8] sm:$0xf]
  %v483 = vld [vmem:[%s1 + $0xac] sm:$0xf]
  %v484 = vld [vmem:[%s1 + $0xb0] sm:$0xf]
  %v485 = vld [vmem:[%s1 + $0xb4] sm:$0xf]
  %v486 = vld [vmem:[%s1 + $0xb8] sm:$0xf]
  %v487 = vld [vmem:[%s1 + $0xbc] sm:$0xf]
  %v488 = vld [vmem:[%s1 + $0xc0] sm:$0xf]
  %v489 = vld [vmem:[%s1 + $0xc4] sm:$0xf]
  %v490 = vld [vmem:[%s1 + $0xc8] sm:$0xf]
  %v491 = vld [vmem:[%s1 + $0xcc] sm:$0xf]
  %v492 = vld [vmem:[%s1 + $0xd0] sm:$0xf]
  %v493 = vld [vmem:[%s1 + $0xd4] sm:$0xf]
  %v494 = vld [vmem:[%s1 + $0xd8] sm:$0xf]
  %v495 = vld [vmem:[%s1 + $0xdc] sm:$0xf]
  %v496 = vld [vmem:[%s1 + $0xe0] sm:$0xf]
  %v497 = vld [vmem:[%s1 + $0xe4] sm:$0xf]
  %v498 = vld [vmem:[%s1 + $0xe8] sm:$0xf]
  %v499 = vld [vmem:[%s1 + $0xec] sm:$0xf]
  %v500 = vld [vmem:[%s1 + $0xf0] sm:$0xf]
  %v501 = vld [vmem:[%s1 + $0xf4] sm:$0xf]
  %v502 = vld [vmem:[%s1 + $0xf8] sm:$0xf]
  %v503 = vld [vmem:[%s1 + $0xfc] sm:$0xf]
  %v504 = vld [vmem:[%s1 + $0x100] sm:$0xf]
  %v505 = vld [vmem:[%s1 + $0x104] sm:$0xf]
  %v506 = vld [vmem:[%s1 + $0x108] sm:$0xf]
  %v507 = vld [vmem:[%s1 + $0x10c] sm:$0xf]
  %v508 = vld [vmem:[%s1 + $0x110] sm:$0xf]
  %v509 = vld [vmem:[%s1 + $0x114] sm:$0xf]
  %v510 = vld [vmem:[%s1 + $0x118] sm:$0xf]
  %v511 = vld [vmem:[%s1 + $0x11c] sm:$0xf]
  %v512 = vld [vmem:[%s1 + $0x120] sm:$0xf]
  %v513 = vld [vmem:[%s1 + $0x124] sm:$0xf]
  %v514 = vld [vmem:[%s1 + $0x128] sm:$0xf]
  %v515 = vld [vmem:[%s1 + $0x12c] sm:$0xf]
  %v516 = vld [vmem:[%s1 + $0x130] sm:$0xf]
  %v517 = vld [vmem:[%s1 + $0x134] sm:$0xf]
  %v518 = vld [vmem:[%s1 + $0x138] sm:$0xf]
  %v519 = vld [vmem:[%s1 + $0x13c] sm:$0xf]
  %v520 = vld [vmem:[%s1 + $0x140] sm:$0xf]
  %v521 = vld [vmem:[%s1 + $0x144] sm:$0xf]
  %v522 = vld [vmem:[%s1 + $0x148] sm:$0xf]
  %v523 = vld [vmem:[%s1 + $0x14c] sm:$0xf]
  %v524 = vld [vmem:[%s1 + $0x150] sm:$0xf]
  %v525 = vld [vmem:[%s1 + $0x154] sm:$0xf]
  %v526 = vld [vmem:[%s1 + $0x158] sm:$0xf]
  %v527 = vld [vmem:[%s1 + $0x15c] sm:$0xf]
  %v528 = vld [vmem:[%s1 + $0x160] sm:$0xf]
  %v529 = vld [vmem:[%s1 + $0x164] sm:$0xf]
  %v530 = vld [vmem:[%s1 + $0x168] sm:$0xf]
  %v531 = vld [vmem:[%s1 + $0x16c] sm:$0xf]
  %v532 = vld [vmem:[%s1 + $0x170] sm:$0xf]
  %v533 = vld [vmem:[%s1 + $0x174] sm:$0xf]
  %v534 = vld [vmem:[%s1 + $0x178] sm:$0xf]
  %v535 = vld [vmem:[%s1 + $0x17c] sm:$0xf]
  %v536 = vld [vmem:[%s1 + $0x180] sm:$0xf]
  %v537 = vld [vmem:[%s1 + $0x184] sm:$0xf]
  %v538 = vld [vmem:[%s1 + $0x188] sm:$0xf]
  %v539 = vld [vmem:[%s1 + $0x18c] sm:$0xf]
  %v540 = vld [vmem:[%s1 + $0x190] sm:$0xf]
  %v541 = vld [vmem:[%s1 + $0x194] sm:$0xf]
  %v542 = vld [vmem:[%s1 + $0x198] sm:$0xf]
  %v543 = vld [vmem:[%s1 + $0x19c] sm:$0xf]
  %v544 = vld [vmem:[%s1 + $0x1a0] sm:$0xf]
  %v545 = vld [vmem:[%s1 + $0x1a4] sm:$0xf]
  %v546 = vld [vmem:[%s1 + $0x1a8] sm:$0xf]
  %v547 = vld [vmem:[%s1 + $0x1ac] sm:$0xf]
  %v548 = vld [vmem:[%s1 + $0x1b0] sm:$0xf]
  %v549 = vld [vmem:[%s1 + $0x1b4] sm:$0xf]
  %v550 = vld [vmem:[%s1 + $0x1b8] sm:$0xf]
  %v551 = vld [vmem:[%s1 + $0x1bc] sm:$0xf]
  %v552 = vld [vmem:[%s1 + $0x1c0] sm:$0xf]
  %v553 = vld [vmem:[%s1 + $0x1c4] sm:$0xf]
  %v554 = vld [vmem:[%s1 + $0x1c8] sm:$0xf]
  %v555 = vld [vmem:[%s1 + $0x1cc] sm:$0xf]
  %v556 = vld [vmem:[%s1 + $0x1d0] sm:$0xf]
  %v557 = vld [vmem:[%s1 + $0x1d4] sm:$0xf]
  %v558 = vld [vmem:[%s1 + $0x1d8] sm:$0xf]
  %v559 = vld [vmem:[%s1 + $0x1dc] sm:$0xf]
  %v560 = vld [vmem:[%s1 + $0x1e0] sm:$0xf]
  %v561 = vld [vmem:[%s1 + $0x1e4] sm:$0xf]
  %v562 = vld [vmem:[%s1 + $0x1e8] sm:$0xf]
  %v563 = vld [vmem:[%s1 + $0x1ec] sm:$0xf]
  %v564 = vld [vmem:[%s1 + $0x1f0] sm:$0xf]
  %v565 = vld [vmem:[%s1 + $0x1f4] sm:$0xf]
  %v566 = vld [vmem:[%s1 + $0x1f8] sm:$0xf]
  %v567 = vld [vmem:[%s1 + $0x1fc] sm:$0xf]
  %v568 = vld [vmem:[%s1 + $0x200] sm:$0xf]
  %v569 = vld [vmem:[%s1 + $0x204] sm:$0xf]
  %v570 = vld [vmem:[%s1 + $0x208] sm:$0xf]
  %v571 = vld [vmem:[%s1 + $0x20c] sm:$0xf]
  %v572 = vld [vmem:[%s1 + $0x210] sm:$0xf]
  %v573 = vld [vmem:[%s1 + $0x214] sm:$0xf]
  %v574 = vld [vmem:[%s1 + $0x218] sm:$0xf]
  %v575 = vld [vmem:[%s1 + $0x21c] sm:$0xf]
  %v576 = vld [vmem:[%s1 + $0x220] sm:$0xf]
  %v577 = vld [vmem:[%s1 + $0x224] sm:$0xf]
  %v578 = vld [vmem:[%s1 + $0x228] sm:$0xf]
  %v579 = vld [vmem:[%s1 + $0x22c] sm:$0xf]
  %v580 = vld [vmem:[%s1 + $0x230] sm:$0xf]
  %v581 = vld [vmem:[%s1 + $0x234] sm:$0xf]
  %v582 = vld [vmem:[%s1 + $0x238] sm:$0xf]
  %v583 = vld [vmem:[%s1 + $0x23c] sm:$0xf]
  %v584 = vld [vmem:[%s2] sm:$0x1]
  %v586 = vlaneseq
  %v587 = vshrl.u32 %v586, 7
  %v588 = vsub.s32 0, %v587
  %v589 = vrot.slane %v584, %v588
  %v735 = vunpack.c.l.b16 %v440
  %v736 = vunpack.c.l.b16 %v441
  %v737 = vunpack.c.l.b16 %v442
  %v738 = vunpack.c.l.b16 %v443
  %v739 = vunpack.c.l.b16 %v444
  %v740 = vunpack.c.l.b16 %v445
  %v741 = vunpack.c.l.b16 %v446
  %v742 = vunpack.c.l.b16 %v447
  %v743 = vunpack.c.l.b16 %v448
  %v744 = vunpack.c.l.b16 %v449
  %v745 = vunpack.c.l.b16 %v450
  %v746 = vunpack.c.l.b16 %v451
  %v747 = vunpack.c.l.b16 %v452
  %v748 = vunpack.c.l.b16 %v453
  %v749 = vunpack.c.l.b16 %v454
  %v750 = vunpack.c.l.b16 %v455
  %v751 = vunpack.c.l.b16 %v456
  %v752 = vunpack.c.l.b16 %v457
  %v753 = vunpack.c.l.b16 %v458
  %v754 = vunpack.c.l.b16 %v459
  %v755 = vunpack.c.l.b16 %v460
  %v756 = vunpack.c.l.b16 %v461
  %v757 = vunpack.c.l.b16 %v462
  %v758 = vunpack.c.l.b16 %v463
  %v759 = vunpack.c.l.b16 %v464
  %v760 = vunpack.c.l.b16 %v465
  %v761 = vunpack.c.l.b16 %v466
  %v762 = vunpack.c.l.b16 %v467
  %v763 = vunpack.c.l.b16 %v468
  %v764 = vunpack.c.l.b16 %v469
  %v765 = vunpack.c.l.b16 %v470
  %v766 = vunpack.c.l.b16 %v471
  %v767 = vunpack.c.l.b16 %v472
  %v768 = vunpack.c.l.b16 %v473
  %v769 = vunpack.c.l.b16 %v474
  %v770 = vunpack.c.l.b16 %v475
  %v771 = vunpack.c.l.b16 %v476
  %v772 = vunpack.c.l.b16 %v477
  %v773 = vunpack.c.l.b16 %v478
  %v774 = vunpack.c.l.b16 %v479
  %v775 = vunpack.c.l.b16 %v480
  %v776 = vunpack.c.l.b16 %v481
  %v777 = vunpack.c.l.b16 %v482
  %v778 = vunpack.c.l.b16 %v483
  %v779 = vunpack.c.l.b16 %v484
  %v780 = vunpack.c.l.b16 %v485
  %v781 = vunpack.c.l.b16 %v486
  %v782 = vunpack.c.l.b16 %v487
  %v783 = vunpack.c.l.b16 %v488
  %v784 = vunpack.c.l.b16 %v489
  %v785 = vunpack.c.l.b16 %v490
  %v786 = vunpack.c.l.b16 %v491
  %v787 = vunpack.c.l.b16 %v492
  %v788 = vunpack.c.l.b16 %v493
  %v789 = vunpack.c.l.b16 %v494
  %v790 = vunpack.c.l.b16 %v495
  %v791 = vunpack.c.l.b16 %v496
  %v792 = vunpack.c.l.b16 %v497
  %v793 = vunpack.c.l.b16 %v498
  %v794 = vunpack.c.l.b16 %v499
  %v795 = vunpack.c.l.b16 %v500
  %v796 = vunpack.c.l.b16 %v501
  %v797 = vunpack.c.l.b16 %v502
  %v798 = vunpack.c.l.b16 %v503
  %v799 = vunpack.c.l.b16 %v504
  %v800 = vunpack.c.l.b16 %v505
  %v801 = vunpack.c.l.b16 %v506
  %v802 = vunpack.c.l.b16 %v507
  %v803 = vunpack.c.l.b16 %v508
  %v804 = vunpack.c.l.b16 %v509
  %v805 = vunpack.c.l.b16 %v510
  %v806 = vunpack.c.l.b16 %v511
  %v807 = vunpack.c.l.b16 %v512
  %v808 = vunpack.c.l.b16 %v513
  %v809 = vunpack.c.l.b16 %v514
  %v810 = vunpack.c.l.b16 %v515
  %v811 = vunpack.c.l.b16 %v516
  %v812 = vunpack.c.l.b16 %v517
  %v813 = vunpack.c.l.b16 %v518
  %v814 = vunpack.c.l.b16 %v519
  %v815 = vunpack.c.l.b16 %v520
  %v816 = vunpack.c.l.b16 %v521
  %v817 = vunpack.c.l.b16 %v522
  %v818 = vunpack.c.l.b16 %v523
  %v819 = vunpack.c.l.b16 %v524
  %v820 = vunpack.c.l.b16 %v525
  %v821 = vunpack.c.l.b16 %v526
  %v822 = vunpack.c.l.b16 %v527
  %v823 = vunpack.c.l.b16 %v528
  %v824 = vunpack.c.l.b16 %v529
  %v825 = vunpack.c.l.b16 %v530
  %v826 = vunpack.c.l.b16 %v531
  %v827 = vunpack.c.l.b16 %v532
  %v828 = vunpack.c.l.b16 %v533
  %v829 = vunpack.c.l.b16 %v534
  %v830 = vunpack.c.l.b16 %v535
  %v831 = vunpack.c.l.b16 %v536
  %v832 = vunpack.c.l.b16 %v537
  %v833 = vunpack.c.l.b16 %v538
  %v834 = vunpack.c.l.b16 %v539
  %v835 = vunpack.c.l.b16 %v540
  %v836 = vunpack.c.l.b16 %v541
  %v837 = vunpack.c.l.b16 %v542
  %v838 = vunpack.c.l.b16 %v543
  %v839 = vunpack.c.l.b16 %v544
  %v840 = vunpack.c.l.b16 %v545
  %v841 = vunpack.c.l.b16 %v546
  %v842 = vunpack.c.l.b16 %v547
  %v843 = vunpack.c.l.b16 %v548
  %v844 = vunpack.c.l.b16 %v549
  %v845 = vunpack.c.l.b16 %v550
  %v846 = vunpack.c.l.b16 %v551
  %v847 = vunpack.c.l.b16 %v552
  %v848 = vunpack.c.l.b16 %v553
  %v849 = vunpack.c.l.b16 %v554
  %v850 = vunpack.c.l.b16 %v555
  %v851 = vunpack.c.l.b16 %v556
  %v852 = vunpack.c.l.b16 %v557
  %v853 = vunpack.c.l.b16 %v558
  %v854 = vunpack.c.l.b16 %v559
  %v855 = vunpack.c.l.b16 %v560
  %v856 = vunpack.c.l.b16 %v561
  %v857 = vunpack.c.l.b16 %v562
  %v858 = vunpack.c.l.b16 %v563
  %v859 = vunpack.c.l.b16 %v564
  %v860 = vunpack.c.l.b16 %v565
  %v861 = vunpack.c.l.b16 %v566
  %v862 = vunpack.c.l.b16 %v567
  %v863 = vunpack.c.l.b16 %v568
  %v864 = vunpack.c.l.b16 %v569
  %v865 = vunpack.c.l.b16 %v570
  %v866 = vunpack.c.l.b16 %v571
  %v867 = vunpack.c.l.b16 %v572
  %v868 = vunpack.c.l.b16 %v573
  %v869 = vunpack.c.l.b16 %v574
  %v870 = vunpack.c.l.b16 %v575
  %v871 = vunpack.c.l.b16 %v576
  %v872 = vunpack.c.l.b16 %v577
  %v873 = vunpack.c.l.b16 %v578
  %v874 = vunpack.c.l.b16 %v579
  %v875 = vunpack.c.l.b16 %v580
  %v876 = vunpack.c.l.b16 %v581
  %v877 = vunpack.c.l.b16 %v582
  %v878 = vunpack.c.l.b16 %v583
  %v879 = vpack.c.b16 %v736, %v735
  %v880 = vpack.c.b16 %v738, %v737
  %v881 = vpack.c.b16 %v740, %v739
  %v882 = vpack.c.b16 %v742, %v741
  %v883 = vpack.c.b16 %v744, %v743
  %v884 = vpack.c.b16 %v746, %v745
  %v885 = vpack.c.b16 %v748, %v747
  %v886 = vpack.c.b16 %v750, %v749
  %v887 = vpack.c.b16 %v752, %v751
  %v888 = vpack.c.b16 %v754, %v753
  %v889 = vpack.c.b16 %v756, %v755
  %v890 = vpack.c.b16 %v758, %v757
  %v891 = vpack.c.b16 %v760, %v759
  %v892 = vpack.c.b16 %v762, %v761
  %v893 = vpack.c.b16 %v764, %v763
  %v894 = vpack.c.b16 %v766, %v765
  %v895 = vpack.c.b16 %v768, %v767
  %v896 = vpack.c.b16 %v770, %v769
  %v897 = vpack.c.b16 %v772, %v771
  %v898 = vpack.c.b16 %v774, %v773
  %v899 = vpack.c.b16 %v776, %v775
  %v900 = vpack.c.b16 %v778, %v777
  %v901 = vpack.c.b16 %v780, %v779
  %v902 = vpack.c.b16 %v782, %v781
  %v903 = vpack.c.b16 %v784, %v783
  %v904 = vpack.c.b16 %v786, %v785
  %v905 = vpack.c.b16 %v788, %v787
  %v906 = vpack.c.b16 %v790, %v789
  %v907 = vpack.c.b16 %v792, %v791
  %v908 = vpack.c.b16 %v794, %v793
  %v909 = vpack.c.b16 %v796, %v795
  %v910 = vpack.c.b16 %v798, %v797
  %v911 = vpack.c.b16 %v800, %v799
  %v912 = vpack.c.b16 %v802, %v801
  %v913 = vpack.c.b16 %v804, %v803
  %v914 = vpack.c.b16 %v806, %v805
  %v915 = vpack.c.b16 %v808, %v807
  %v916 = vpack.c.b16 %v810, %v809
  %v917 = vpack.c.b16 %v812, %v811
  %v918 = vpack.c.b16 %v814, %v813
  %v919 = vpack.c.b16 %v816, %v815
  %v920 = vpack.c.b16 %v818, %v817
  %v921 = vpack.c.b16 %v820, %v819
  %v922 = vpack.c.b16 %v822, %v821
  %v923 = vpack.c.b16 %v824, %v823
  %v924 = vpack.c.b16 %v826, %v825
  %v925 = vpack.c.b16 %v828, %v827
  %v926 = vpack.c.b16 %v830, %v829
  %v927 = vpack.c.b16 %v832, %v831
  %v928 = vpack.c.b16 %v834, %v833
  %v929 = vpack.c.b16 %v836, %v835
  %v930 = vpack.c.b16 %v838, %v837
  %v931 = vpack.c.b16 %v840, %v839
  %v932 = vpack.c.b16 %v842, %v841
  %v933 = vpack.c.b16 %v844, %v843
  %v934 = vpack.c.b16 %v846, %v845
  %v935 = vpack.c.b16 %v848, %v847
  %v936 = vpack.c.b16 %v850, %v849
  %v937 = vpack.c.b16 %v852, %v851
  %v938 = vpack.c.b16 %v854, %v853
  %v939 = vpack.c.b16 %v856, %v855
  %v940 = vpack.c.b16 %v858, %v857
  %v941 = vpack.c.b16 %v860, %v859
  %v942 = vpack.c.b16 %v862, %v861
  %v943 = vpack.c.b16 %v864, %v863
  %v944 = vpack.c.b16 %v866, %v865
  %v945 = vpack.c.b16 %v868, %v867
  %v946 = vpack.c.b16 %v870, %v869
  %v947 = vpack.c.b16 %v872, %v871
  %v948 = vpack.c.b16 %v874, %v873
  %v949 = vpack.c.b16 %v876, %v875
  %v950 = vpack.c.b16 %v878, %v877
  %1023 = vmatprep.subr.bf16.mxu0 0
  %1024 = vmatpush1.bf16.msra.mxu0 %v886
  %1025 = vmatprep.subr.bf16.mxu0 0
  %1026 = vmatpush1.bf16.msra.mxu0 %v885
  %1027 = vmatprep.subr.bf16.mxu0 0
  %1028 = vmatpush1.bf16.msra.mxu0 %v884
  %1029 = vmatprep.subr.bf16.mxu0 0
  %1030 = vmatpush1.bf16.msra.mxu0 %v883
  %1031 = vmatprep.subr.bf16.mxu0 0
  %1032 = vmatpush1.bf16.msra.mxu0 %v882
  %1033 = vmatprep.subr.bf16.mxu0 0
  %1034 = vmatpush1.bf16.msra.mxu0 %v881
  %1035 = vmatprep.subr.bf16.mxu0 0
  %1036 = vmatpush1.bf16.msra.mxu0 %v880
  %1037 = vmatprep.subr.bf16.mxu0 0
  %1038 = vmatpush1.bf16.msra.mxu0 %v879
  %1039 = vmatprep.subr.bf16.mxu0 0
  %1040 = vmatpush2.bf16.msra.mxu0 %v894
  %1041 = vmatprep.subr.bf16.mxu0 0
  %1042 = vmatpush2.bf16.msra.mxu0 %v893
  %1043 = vmatprep.subr.bf16.mxu0 0
  %1044 = vmatpush2.bf16.msra.mxu0 %v892
  %1045 = vmatprep.subr.bf16.mxu0 0
  %1046 = vmatpush2.bf16.msra.mxu0 %v891
  %1047 = vmatprep.subr.bf16.mxu0 0
  %1048 = vmatpush2.bf16.msra.mxu0 %v890
  %1049 = vmatprep.subr.bf16.mxu0 0
  %1050 = vmatpush2.bf16.msra.mxu0 %v889
  %1051 = vmatprep.subr.bf16.mxu0 0
  %1052 = vmatpush2.bf16.msra.mxu0 %v888
  %1053 = vmatprep.subr.bf16.mxu0 0
  %1054 = vmatpush2.bf16.msra.mxu0 %v887
  %1055 = vmatprep.mubr.bf16.mxu0 %v333
  %1056 = vmatmul.mubr.bf16.gmra.mxu0 %v325
  %v1057 = vpop.f32.mrf.mxu0
  %v1058 = vadd.f32 %v589, %v1057
  %v1059 = vpop.f32.mrf.mxu0
  %v1060 = vpop.f32.mrf.mxu0
  %v1061 = vadd.f32 %v589, %v1060
  %v1062 = vpop.f32.mrf.mxu0
  %1063 = vmatprep.mubr.bf16.mxu0 %v334
  %1064 = vmatmul.mubr.bf16.gmra.mxu0 %v326
  %v1065 = vpop.f32.mrf.mxu0
  %v1066 = vadd.f32 %v589, %v1065
  %v1067 = vpop.f32.mrf.mxu0
  %v1068 = vpop.f32.mrf.mxu0
  %v1069 = vadd.f32 %v589, %v1068
  %v1070 = vpop.f32.mrf.mxu0
  %1071 = vmatprep.mubr.bf16.mxu0 %v335
  %1072 = vmatmul.mubr.bf16.gmra.mxu0 %v327
  %v1073 = vpop.f32.mrf.mxu0
  %v1074 = vadd.f32 %v589, %v1073
  %v1075 = vpop.f32.mrf.mxu0
  %v1076 = vpop.f32.mrf.mxu0
  %v1077 = vadd.f32 %v589, %v1076
  %v1078 = vpop.f32.mrf.mxu0
  %1079 = vmatprep.mubr.bf16.mxu0 %v336
  %1080 = vmatmul.mubr.bf16.gmra.mxu0 %v328
  %v1081 = vpop.f32.mrf.mxu0
  %v1082 = vadd.f32 %v589, %v1081
  %v1083 = vpop.f32.mrf.mxu0
  %v1084 = vpop.f32.mrf.mxu0
  %v1085 = vadd.f32 %v589, %v1084
  %v1086 = vpop.f32.mrf.mxu0
  %1087 = vmatprep.mubr.bf16.mxu0 %v337
  %1088 = vmatmul.mubr.bf16.gmra.mxu0 %v329
  %v1089 = vpop.f32.mrf.mxu0
  %v1090 = vadd.f32 %v589, %v1089
  %v1091 = vpop.f32.mrf.mxu0
  %v1092 = vpop.f32.mrf.mxu0
  %v1093 = vadd.f32 %v589, %v1092
  %v1094 = vpop.f32.mrf.mxu0
  %1095 = vmatprep.mubr.bf16.mxu0 %v338
  %1096 = vmatmul.mubr.bf16.gmra.mxu0 %v330
  %v1097 = vpop.f32.mrf.mxu0
  %v1098 = vadd.f32 %v589, %v1097
  %v1099 = vpop.f32.mrf.mxu0
  %v1100 = vpop.f32.mrf.mxu0
  %v1101 = vadd.f32 %v589, %v1100
  %v1102 = vpop.f32.mrf.mxu0
  %1103 = vmatprep.mubr.bf16.mxu0 %v339
  %1104 = vmatmul.mubr.bf16.gmra.mxu0 %v331
  %v1105 = vpop.f32.mrf.mxu0
  %v1106 = vadd.f32 %v589, %v1105
  %v1107 = vpop.f32.mrf.mxu0
  %v1108 = vpop.f32.mrf.mxu0
  %v1109 = vadd.f32 %v589, %v1108
  %v1110 = vpop.f32.mrf.mxu0
  %1111 = vmatprep.mubr.bf16.mxu0 %v340
  %1112 = vmatmul.mubr.bf16.gmra.mxu0 %v332
  %v1113 = vpop.f32.mrf.mxu0
  %v1114 = vadd.f32 %v589, %v1113
  %v1115 = vpop.f32.mrf.mxu0
  %v1116 = vpop.f32.mrf.mxu0
  %v1117 = vadd.f32 %v589, %v1116
  %v1118 = vpop.f32.mrf.mxu0
  %1119 = vdwg.mxu0
  %1120 = vmatprep.subr.bf16.mxu0 0
  %1121 = vmatpush1.bf16.msra.mxu0 %v902
  %1122 = vmatprep.subr.bf16.mxu0 0
  %1123 = vmatpush1.bf16.msra.mxu0 %v901
  %1124 = vmatprep.subr.bf16.mxu0 0
  %1125 = vmatpush1.bf16.msra.mxu0 %v900
  %1126 = vmatprep.subr.bf16.mxu0 0
  %1127 = vmatpush1.bf16.msra.mxu0 %v899
  %1128 = vmatprep.subr.bf16.mxu0 0
  %1129 = vmatpush1.bf16.msra.mxu0 %v898
  %1130 = vmatprep.subr.bf16.mxu0 0
  %1131 = vmatpush1.bf16.msra.mxu0 %v897
  %1132 = vmatprep.subr.bf16.mxu0 0
  %1133 = vmatpush1.bf16.msra.mxu0 %v896
  %1134 = vmatprep.subr.bf16.mxu0 0
  %1135 = vmatpush1.bf16.msra.mxu0 %v895
  %1136 = vmatprep.subr.bf16.mxu0 0
  %1137 = vmatpush2.bf16.msra.mxu0 %v910
  %1138 = vmatprep.subr.bf16.mxu0 0
  %1139 = vmatpush2.bf16.msra.mxu0 %v909
  %1140 = vmatprep.subr.bf16.mxu0 0
  %1141 = vmatpush2.bf16.msra.mxu0 %v908
  %1142 = vmatprep.subr.bf16.mxu0 0
  %1143 = vmatpush2.bf16.msra.mxu0 %v907
  %1144 = vmatprep.subr.bf16.mxu0 0
  %1145 = vmatpush2.bf16.msra.mxu0 %v906
  %1146 = vmatprep.subr.bf16.mxu0 0
  %1147 = vmatpush2.bf16.msra.mxu0 %v905
  %1148 = vmatprep.subr.bf16.mxu0 0
  %1149 = vmatpush2.bf16.msra.mxu0 %v904
  %1150 = vmatprep.subr.bf16.mxu0 0
  %1151 = vmatpush2.bf16.msra.mxu0 %v903
  %1152 = vmatprep.mubr.bf16.mxu0 %v343
  %1153 = vmatmul.mubr.bf16.gmra.mxu0 %v326
  %v1154 = vpop.f32.mrf.mxu0
  %v1155 = vadd.f32 %v1058, %v1154
  %v1156 = vpop.f32.mrf.mxu0
  %v1157 = vpop.f32.mrf.mxu0
  %v1158 = vadd.f32 %v1061, %v1157
  %v1159 = vpop.f32.mrf.mxu0
  %1160 = vmatprep.mubr.bf16.mxu0 %v344
  %1161 = vmatmul.mubr.bf16.gmra.mxu0 %v327
  %v1162 = vpop.f32.mrf.mxu0
  %v1163 = vadd.f32 %v1066, %v1162
  %v1164 = vpop.f32.mrf.mxu0
  %v1165 = vpop.f32.mrf.mxu0
  %v1166 = vadd.f32 %v1069, %v1165
  %v1167 = vpop.f32.mrf.mxu0
  %1168 = vmatprep.mubr.bf16.mxu0 %v345
  %1169 = vmatmul.mubr.bf16.gmra.mxu0 %v328
  %v1170 = vpop.f32.mrf.mxu0
  %v1171 = vadd.f32 %v1074, %v1170
  %v1172 = vpop.f32.mrf.mxu0
  %v1173 = vpop.f32.mrf.mxu0
  %v1174 = vadd.f32 %v1077, %v1173
  %v1175 = vpop.f32.mrf.mxu0
  %1176 = vmatprep.mubr.bf16.mxu0 %v346
  %1177 = vmatmul.mubr.bf16.gmra.mxu0 %v341
  %v1178 = vpop.f32.mrf.mxu0
  %v1179 = vadd.f32 %v1082, %v1178
  %v1180 = vpop.f32.mrf.mxu0
  %v1181 = vpop.f32.mrf.mxu0
  %v1182 = vadd.f32 %v1085, %v1181
  %v1183 = vpop.f32.mrf.mxu0
  %1184 = vmatprep.mubr.bf16.mxu0 %v347
  %1185 = vmatmul.mubr.bf16.gmra.mxu0 %v330
  %v1186 = vpop.f32.mrf.mxu0
  %v1187 = vadd.f32 %v1090, %v1186
  %v1188 = vpop.f32.mrf.mxu0
  %v1189 = vpop.f32.mrf.mxu0
  %v1190 = vadd.f32 %v1093, %v1189
  %v1191 = vpop.f32.mrf.mxu0
  %1192 = vmatprep.mubr.bf16.mxu0 %v348
  %1193 = vmatmul.mubr.bf16.gmra.mxu0 %v331
  %v1194 = vpop.f32.mrf.mxu0
  %v1195 = vadd.f32 %v1098, %v1194
  %v1196 = vpop.f32.mrf.mxu0
  %v1197 = vpop.f32.mrf.mxu0
  %v1198 = vadd.f32 %v1101, %v1197
  %v1199 = vpop.f32.mrf.mxu0
  %1200 = vmatprep.mubr.bf16.mxu0 %v349
  %1201 = vmatmul.mubr.bf16.gmra.mxu0 %v332
  %v1202 = vpop.f32.mrf.mxu0
  %v1203 = vadd.f32 %v1106, %v1202
  %v1204 = vpop.f32.mrf.mxu0
  %v1205 = vpop.f32.mrf.mxu0
  %v1206 = vadd.f32 %v1109, %v1205
  %v1207 = vpop.f32.mrf.mxu0
  %1208 = vmatprep.mubr.bf16.mxu0 %v350
  %1209 = vmatmul.mubr.bf16.gmra.mxu0 %v342
  %v1210 = vpop.f32.mrf.mxu0
  %v1211 = vadd.f32 %v1114, %v1210
  %v1212 = vpop.f32.mrf.mxu0
  %v1213 = vpop.f32.mrf.mxu0
  %v1214 = vadd.f32 %v1117, %v1213
  %v1215 = vpop.f32.mrf.mxu0
  %1216 = vdwg.mxu0
  %1217 = vmatprep.subr.bf16.mxu0 0
  %1218 = vmatpush1.bf16.msra.mxu0 %v918
  %1219 = vmatprep.subr.bf16.mxu0 0
  %1220 = vmatpush1.bf16.msra.mxu0 %v917
  %1221 = vmatprep.subr.bf16.mxu0 0
  %1222 = vmatpush1.bf16.msra.mxu0 %v916
  %1223 = vmatprep.subr.bf16.mxu0 0
  %1224 = vmatpush1.bf16.msra.mxu0 %v915
  %1225 = vmatprep.subr.bf16.mxu0 0
  %1226 = vmatpush1.bf16.msra.mxu0 %v914
  %1227 = vmatprep.subr.bf16.mxu0 0
  %1228 = vmatpush1.bf16.msra.mxu0 %v913
  %1229 = vmatprep.subr.bf16.mxu0 0
  %1230 = vmatpush1.bf16.msra.mxu0 %v912
  %1231 = vmatprep.subr.bf16.mxu0 0
  %1232 = vmatpush1.bf16.msra.mxu0 %v911
  %1233 = vmatprep.subr.bf16.mxu0 0
  %1234 = vmatpush2.bf16.msra.mxu0 %v926
  %1235 = vmatprep.subr.bf16.mxu0 0
  %1236 = vmatpush2.bf16.msra.mxu0 %v925
  %1237 = vmatprep.subr.bf16.mxu0 0
  %1238 = vmatpush2.bf16.msra.mxu0 %v924
  %1239 = vmatprep.subr.bf16.mxu0 0
  %1240 = vmatpush2.bf16.msra.mxu0 %v923
  %1241 = vmatprep.subr.bf16.mxu0 0
  %1242 = vmatpush2.bf16.msra.mxu0 %v922
  %1243 = vmatprep.subr.bf16.mxu0 0
  %1244 = vmatpush2.bf16.msra.mxu0 %v921
  %1245 = vmatprep.subr.bf16.mxu0 0
  %1246 = vmatpush2.bf16.msra.mxu0 %v920
  %1247 = vmatprep.subr.bf16.mxu0 0
  %1248 = vmatpush2.bf16.msra.mxu0 %v919
  %1249 = vmatprep.mubr.bf16.mxu0 %v344
  %1250 = vmatmul.mubr.bf16.gmra.mxu0 %v351
  %v1251 = vpop.f32.mrf.mxu0
  %v1252 = vadd.f32 %v1155, %v1251
  %v1253 = vpop.f32.mrf.mxu0
  %v1254 = vpop.f32.mrf.mxu0
  %v1255 = vadd.f32 %v1158, %v1254
  %v1256 = vpop.f32.mrf.mxu0
  %1257 = vmatprep.mubr.bf16.mxu0 %v345
  %1258 = vmatmul.mubr.bf16.gmra.mxu0 %v352
  %v1259 = vpop.f32.mrf.mxu0
  %v1260 = vadd.f32 %v1163, %v1259
  %v1261 = vpop.f32.mrf.mxu0
  %v1262 = vpop.f32.mrf.mxu0
  %v1263 = vadd.f32 %v1166, %v1262
  %v1264 = vpop.f32.mrf.mxu0
  %1265 = vmatprep.mubr.bf16.mxu0 %v346
  %1266 = vmatmul.mubr.bf16.gmra.mxu0 %v353
  %v1267 = vpop.f32.mrf.mxu0
  %v1268 = vadd.f32 %v1171, %v1267
  %v1269 = vpop.f32.mrf.mxu0
  %v1270 = vpop.f32.mrf.mxu0
  %v1271 = vadd.f32 %v1174, %v1270
  %v1272 = vpop.f32.mrf.mxu0
  %1273 = vmatprep.mubr.bf16.mxu0 %v359
  %1274 = vmatmul.mubr.bf16.gmra.mxu0 %v354
  %v1275 = vpop.f32.mrf.mxu0
  %v1276 = vadd.f32 %v1179, %v1275
  %v1277 = vpop.f32.mrf.mxu0
  %v1278 = vpop.f32.mrf.mxu0
  %v1279 = vadd.f32 %v1182, %v1278
  %v1280 = vpop.f32.mrf.mxu0
  %1281 = vmatprep.mubr.bf16.mxu0 %v348
  %1282 = vmatmul.mubr.bf16.gmra.mxu0 %v355
  %v1283 = vpop.f32.mrf.mxu0
  %v1284 = vadd.f32 %v1187, %v1283
  %v1285 = vpop.f32.mrf.mxu0
  %v1286 = vpop.f32.mrf.mxu0
  %v1287 = vadd.f32 %v1190, %v1286
  %v1288 = vpop.f32.mrf.mxu0
  %1289 = vmatprep.mubr.bf16.mxu0 %v349
  %1290 = vmatmul.mubr.bf16.gmra.mxu0 %v356
  %v1291 = vpop.f32.mrf.mxu0
  %v1292 = vadd.f32 %v1195, %v1291
  %v1293 = vpop.f32.mrf.mxu0
  %v1294 = vpop.f32.mrf.mxu0
  %v1295 = vadd.f32 %v1198, %v1294
  %v1296 = vpop.f32.mrf.mxu0
  %1297 = vmatprep.mubr.bf16.mxu0 %v350
  %1298 = vmatmul.mubr.bf16.gmra.mxu0 %v357
  %v1299 = vpop.f32.mrf.mxu0
  %v1300 = vadd.f32 %v1203, %v1299
  %v1301 = vpop.f32.mrf.mxu0
  %v1302 = vpop.f32.mrf.mxu0
  %v1303 = vadd.f32 %v1206, %v1302
  %v1304 = vpop.f32.mrf.mxu0
  %1305 = vmatprep.mubr.bf16.mxu0 %v360
  %1306 = vmatmul.mubr.bf16.gmra.mxu0 %v358
  %v1307 = vpop.f32.mrf.mxu0
  %v1308 = vadd.f32 %v1211, %v1307
  %v1309 = vpop.f32.mrf.mxu0
  %v1310 = vpop.f32.mrf.mxu0
  %v1311 = vadd.f32 %v1214, %v1310
  %v1312 = vpop.f32.mrf.mxu0
  %1313 = vdwg.mxu0
  %1314 = vmatprep.subr.bf16.mxu0 0
  %1315 = vmatpush1.bf16.msra.mxu0 %v934
  %1316 = vmatprep.subr.bf16.mxu0 0
  %1317 = vmatpush1.bf16.msra.mxu0 %v933
  %1318 = vmatprep.subr.bf16.mxu0 0
  %1319 = vmatpush1.bf16.msra.mxu0 %v932
  %1320 = vmatprep.subr.bf16.mxu0 0
  %1321 = vmatpush1.bf16.msra.mxu0 %v931
  %1322 = vmatprep.subr.bf16.mxu0 0
  %1323 = vmatpush1.bf16.msra.mxu0 %v930
  %1324 = vmatprep.subr.bf16.mxu0 0
  %1325 = vmatpush1.bf16.msra.mxu0 %v929
  %1326 = vmatprep.subr.bf16.mxu0 0
  %1327 = vmatpush1.bf16.msra.mxu0 %v928
  %1328 = vmatprep.subr.bf16.mxu0 0
  %1329 = vmatpush1.bf16.msra.mxu0 %v927
  %1330 = vmatprep.subr.bf16.mxu0 0
  %1331 = vmatpush2.bf16.msra.mxu0 %v942
  %1332 = vmatprep.subr.bf16.mxu0 0
  %1333 = vmatpush2.bf16.msra.mxu0 %v941
  %1334 = vmatprep.subr.bf16.mxu0 0
  %1335 = vmatpush2.bf16.msra.mxu0 %v940
  %1336 = vmatprep.subr.bf16.mxu0 0
  %1337 = vmatpush2.bf16.msra.mxu0 %v939
  %1338 = vmatprep.subr.bf16.mxu0 0
  %1339 = vmatpush2.bf16.msra.mxu0 %v938
  %1340 = vmatprep.subr.bf16.mxu0 0
  %1341 = vmatpush2.bf16.msra.mxu0 %v937
  %1342 = vmatprep.subr.bf16.mxu0 0
  %1343 = vmatpush2.bf16.msra.mxu0 %v936
  %1344 = vmatprep.subr.bf16.mxu0 0
  %1345 = vmatpush2.bf16.msra.mxu0 %v935
  %1346 = vmatprep.mubr.bf16.mxu0 %v430
  %1347 = vmatmul.mubr.bf16.gmra.mxu0 %v422
  %v1348 = vpop.f32.mrf.mxu0
  %v1349 = vadd.f32 %v1252, %v1348
  %v1350 = vpop.f32.mrf.mxu0
  %v1351 = vpop.f32.mrf.mxu0
  %v1352 = vadd.f32 %v1255, %v1351
  %v1353 = vpop.f32.mrf.mxu0
  %1354 = vmatprep.mubr.bf16.mxu0 %v431
  %1355 = vmatmul.mubr.bf16.gmra.mxu0 %v423
  %v1356 = vpop.f32.mrf.mxu0
  %v1357 = vadd.f32 %v1260, %v1356
  %v1358 = vpop.f32.mrf.mxu0
  %v1359 = vpop.f32.mrf.mxu0
  %v1360 = vadd.f32 %v1263, %v1359
  %v1361 = vpop.f32.mrf.mxu0
  %1362 = vmatprep.mubr.bf16.mxu0 %v432
  %1363 = vmatmul.mubr.bf16.gmra.mxu0 %v424
  %v1364 = vpop.f32.mrf.mxu0
  %v1365 = vadd.f32 %v1268, %v1364
  %v1366 = vpop.f32.mrf.mxu0
  %v1367 = vpop.f32.mrf.mxu0
  %v1368 = vadd.f32 %v1271, %v1367
  %v1369 = vpop.f32.mrf.mxu0
  %1370 = vmatprep.mubr.bf16.mxu0 %v433
  %1371 = vmatmul.mubr.bf16.gmra.mxu0 %v425
  %v1372 = vpop.f32.mrf.mxu0
  %v1373 = vadd.f32 %v1276, %v1372
  %v1374 = vpop.f32.mrf.mxu0
  %v1375 = vpop.f32.mrf.mxu0
  %v1376 = vadd.f32 %v1279, %v1375
  %v1377 = vpop.f32.mrf.mxu0
  %1378 = vmatprep.mubr.bf16.mxu0 %v434
  %1379 = vmatmul.mubr.bf16.gmra.mxu0 %v426
  %v1380 = vpop.f32.mrf.mxu0
  %v1381 = vadd.f32 %v1284, %v1380
  %v1382 = vpop.f32.mrf.mxu0
  %v1383 = vpop.f32.mrf.mxu0
  %v1384 = vadd.f32 %v1287, %v1383
  %v1385 = vpop.f32.mrf.mxu0
  %1386 = vmatprep.mubr.bf16.mxu0 %v435
  %1387 = vmatmul.mubr.bf16.gmra.mxu0 %v427
  %v1388 = vpop.f32.mrf.mxu0
  %v1389 = vadd.f32 %v1292, %v1388
  %v1390 = vpop.f32.mrf.mxu0
  %v1391 = vpop.f32.mrf.mxu0
  %v1392 = vadd.f32 %v1295, %v1391
  %v1393 = vpop.f32.mrf.mxu0
  %1394 = vmatprep.mubr.bf16.mxu0 %v436
  %1395 = vmatmul.mubr.bf16.gmra.mxu0 %v428
  %v1396 = vpop.f32.mrf.mxu0
  %v1397 = vadd.f32 %v1300, %v1396
  %v1398 = vpop.f32.mrf.mxu0
  %v1399 = vpop.f32.mrf.mxu0
  %v1400 = vadd.f32 %v1303, %v1399
  %v1401 = vpop.f32.mrf.mxu0
  %1402 = vmatprep.mubr.bf16.mxu0 %v437
  %1403 = vmatmul.mubr.bf16.gmra.mxu0 %v429
  %v1404 = vpop.f32.mrf.mxu0
  %v1405 = vadd.f32 %v1308, %v1404
  %v1406 = vpop.f32.mrf.mxu0
  %v1407 = vpop.f32.mrf.mxu0
  %v1408 = vadd.f32 %v1311, %v1407
  %v1409 = vpop.f32.mrf.mxu0
  %1410 = vdwg.mxu0
  %1411 = vmatprep.subr.bf16.mxu0 0
  %1412 = vmatpush1.bf16.msra.mxu0 %v950
  %1413 = vmatprep.subr.bf16.mxu0 0
  %1414 = vmatpush1.bf16.msra.mxu0 %v949
  %1415 = vmatprep.subr.bf16.mxu0 0
  %1416 = vmatpush1.bf16.msra.mxu0 %v948
  %1417 = vmatprep.subr.bf16.mxu0 0
  %1418 = vmatpush1.bf16.msra.mxu0 %v947
  %1419 = vmatprep.subr.bf16.mxu0 0
  %1420 = vmatpush1.bf16.msra.mxu0 %v946
  %1421 = vmatprep.subr.bf16.mxu0 0
  %1422 = vmatpush1.bf16.msra.mxu0 %v945
  %1423 = vmatprep.subr.bf16.mxu0 0
  %1424 = vmatpush1.bf16.msra.mxu0 %v944
  %1425 = vmatprep.subr.bf16.mxu0 0
  %1426 = vmatpush1.bf16.msra.mxu0 %v943
  %1427 = vmatprep.subr.bf16.mxu0 0
  %1428 = vmatpush2.bf16.msra.mxu0 0
  %1429 = vmatprep.subr.bf16.mxu0 0
  %1430 = vmatpush2.bf16.msra.mxu0 0
  %1431 = vmatprep.subr.bf16.mxu0 0
  %1432 = vmatpush2.bf16.msra.mxu0 0
  %1433 = vmatprep.subr.bf16.mxu0 0
  %1434 = vmatpush2.bf16.msra.mxu0 0
  %1435 = vmatprep.subr.bf16.mxu0 0
  %1436 = vmatpush2.bf16.msra.mxu0 0
  %1437 = vmatprep.subr.bf16.mxu0 0
  %1438 = vmatpush2.bf16.msra.mxu0 0
  %1439 = vmatprep.subr.bf16.mxu0 0
  %1440 = vmatpush2.bf16.msra.mxu0 0
  %1441 = vmatprep.subr.bf16.mxu0 0
  %1442 = vmatpush2.bf16.msra.mxu0 0
  %1443 = vmatprep.mubr.bf16.mxu0 0
  %1444 = vmatmul.mubr.bf16.gmra.mxu0 %v423
  %v1445 = vpop.f32.mrf.mxu0
  %v1446 = vadd.f32 %v1349, %v1445
  %v1447 = vpop.f32.mrf.mxu0
  %v1448 = vpop.f32.mrf.mxu0
  %v1449 = vadd.f32 %v1352, %v1448
  %v1450 = vpop.f32.mrf.mxu0
  %1451 = vmatprep.mubr.bf16.mxu0 0
  %1452 = vmatmul.mubr.bf16.gmra.mxu0 %v424
  %v1453 = vpop.f32.mrf.mxu0
  %v1454 = vadd.f32 %v1357, %v1453
  %v1455 = vpop.f32.mrf.mxu0
  %v1456 = vpop.f32.mrf.mxu0
  %v1457 = vadd.f32 %v1360, %v1456
  %v1458 = vpop.f32.mrf.mxu0
  %1459 = vmatprep.mubr.bf16.mxu0 0
  %1460 = vmatmul.mubr.bf16.gmra.mxu0 %v425
  %v1461 = vpop.f32.mrf.mxu0
  %v1462 = vadd.f32 %v1365, %v1461
  %v1463 = vpop.f32.mrf.mxu0
  %v1464 = vpop.f32.mrf.mxu0
  %v1465 = vadd.f32 %v1368, %v1464
  %v1466 = vpop.f32.mrf.mxu0
  %1467 = vmatprep.mubr.bf16.mxu0 0
  %1468 = vmatmul.mubr.bf16.gmra.mxu0 %v438
  %v1469 = vpop.f32.mrf.mxu0
  %v1470 = vadd.f32 %v1373, %v1469
  %v1471 = vpop.f32.mrf.mxu0
  %v1472 = vpop.f32.mrf.mxu0
  %v1473 = vadd.f32 %v1376, %v1472
  %v1474 = vpop.f32.mrf.mxu0
  %1475 = vmatprep.mubr.bf16.mxu0 0
  %1476 = vmatmul.mubr.bf16.gmra.mxu0 %v427
  %v1477 = vpop.f32.mrf.mxu0
  %v1478 = vadd.f32 %v1381, %v1477
  %v1479 = vpop.f32.mrf.mxu0
  %v1480 = vpop.f32.mrf.mxu0
  %v1481 = vadd.f32 %v1384, %v1480
  %v1482 = vpop.f32.mrf.mxu0
  %1483 = vmatprep.mubr.bf16.mxu0 0
  %1484 = vmatmul.mubr.bf16.gmra.mxu0 %v428
  %v1485 = vpop.f32.mrf.mxu0
  %v1486 = vadd.f32 %v1389, %v1485
  %v1487 = vpop.f32.mrf.mxu0
  %v1488 = vpop.f32.mrf.mxu0
  %v1489 = vadd.f32 %v1392, %v1488
  %v1490 = vpop.f32.mrf.mxu0
  %1491 = vmatprep.mubr.bf16.mxu0 0
  %1492 = vmatmul.mubr.bf16.gmra.mxu0 %v429
  %v1493 = vpop.f32.mrf.mxu0
  %v1494 = vadd.f32 %v1397, %v1493
  %v1495 = vpop.f32.mrf.mxu0
  %v1496 = vpop.f32.mrf.mxu0
  %v1497 = vadd.f32 %v1400, %v1496
  %v1498 = vpop.f32.mrf.mxu0
  %1499 = vmatprep.mubr.bf16.mxu0 0
  %1500 = vmatmul.mubr.bf16.gmra.mxu0 %v439
  %v1501 = vpop.f32.mrf.mxu0
  %v1502 = vadd.f32 %v1405, %v1501
  %v1503 = vpop.f32.mrf.mxu0
  %v1504 = vpop.f32.mrf.mxu0
  %v1505 = vadd.f32 %v1408, %v1504
  %v1506 = vpop.f32.mrf.mxu0
  %1507 = vdwg.mxu0
  %v1508 = vadd.f32 %v1446, %v1449
  %v1509 = vadd.f32 %v1508, %v1454
  %v1510 = vadd.f32 %v1509, %v1457
  %v1511 = vadd.f32 %v1510, %v1462
  %v1512 = vadd.f32 %v1511, %v1465
  %v1513 = vadd.f32 %v1512, %v1470
  %v1514 = vadd.f32 %v1513, %v1473
  %v1515 = vadd.f32 %v1514, %v1478
  %v1516 = vadd.f32 %v1515, %v1481
  %v1517 = vadd.f32 %v1516, %v1486
  %v1518 = vadd.f32 %v1517, %v1489
  %v1519 = vadd.f32 %v1518, %v1494
  %v1520 = vadd.f32 %v1519, %v1497
  %v1521 = vadd.f32 %v1520, %v1502
  %v1522 = vadd.f32 %v1521, %v1505
  %v1523 = vrot.slane %v1522, 4
  %v1524 = vadd.f32 %v1522, %v1523
  %v1525 = vrot.slane %v1524, 2
  %v1526 = vadd.f32 %v1524, %v1525
  %v1527 = vrot.slane %v1526, 1
  %v1528 = vadd.f32 %v1526, %v1527
  %v1529 = vmul.f32 %v1446, %v1446
  %v1530 = vmul.f32 %v1449, %v1449
  %v1531 = vmul.f32 %v1454, %v1454
  %v1532 = vmul.f32 %v1457, %v1457
  %v1533 = vmul.f32 %v1462, %v1462
  %v1534 = vmul.f32 %v1465, %v1465
  %v1535 = vmul.f32 %v1470, %v1470
  %v1536 = vmul.f32 %v1473, %v1473
  %v1537 = vmul.f32 %v1478, %v1478
  %v1538 = vmul.f32 %v1481, %v1481
  %v1539 = vmul.f32 %v1486, %v1486
  %v1540 = vmul.f32 %v1489, %v1489
  %v1541 = vmul.f32 %v1494, %v1494
  %v1542 = vmul.f32 %v1497, %v1497
  %v1543 = vmul.f32 %v1502, %v1502
  %v1544 = vmul.f32 %v1505, %v1505
  %v1545 = vadd.f32 %v1529, %v1530
  %v1546 = vadd.f32 %v1545, %v1531
  %v1547 = vadd.f32 %v1546, %v1532
  %v1548 = vadd.f32 %v1547, %v1533
  %v1549 = vadd.f32 %v1548, %v1534
  %v1550 = vadd.f32 %v1549, %v1535
  %v1551 = vadd.f32 %v1550, %v1536
  %v1552 = vadd.f32 %v1551, %v1537
  %v1553 = vadd.f32 %v1552, %v1538
  %v1554 = vadd.f32 %v1553, %v1539
  %v1555 = vadd.f32 %v1554, %v1540
  %v1556 = vadd.f32 %v1555, %v1541
  %v1557 = vadd.f32 %v1556, %v1542
  %v1558 = vadd.f32 %v1557, %v1543
  %v1559 = vadd.f32 %v1558, %v1544
  %v1560 = vrot.slane %v1559, 4
  %v1561 = vadd.f32 %v1559, %v1560
  %v1562 = vrot.slane %v1561, 2
  %v1563 = vadd.f32 %v1561, %v1562
  %v1564 = vrot.slane %v1563, 1
  %v1565 = vadd.f32 %v1563, %v1564
  %1566 = vmatprep.subr.mxu0 0.0
  %1567 = vmatpush1.msra.mxu0 %v201
  %1568 = vmatprep.subr.mxu0 0.0
  %1569 = vmatpush1.msra.mxu0 %v200
  %1570 = vmatprep.subr.mxu0 0.0
  %1571 = vmatpush1.msra.mxu0 %v199
  %1572 = vmatprep.subr.mxu0 0.0
  %1573 = vmatpush1.msra.mxu0 %v198
  %1574 = vmatprep.subr.mxu0 0.0
  %1575 = vmatpush1.msra.mxu0 %v197
  %1576 = vmatprep.subr.mxu0 0.0
  %1577 = vmatpush1.msra.mxu0 %v196
  %1578 = vmatprep.subr.mxu0 0.0
  %1579 = vmatpush1.msra.mxu0 %v195
  %1580 = vmatprep.subr.mxu0 0.0
  %1581 = vmatpush1.msra.mxu0 %v194
  %1582 = vmatprep.subr.mxu0 0.0
  %1583 = vmatpush1.msra.mxu0 %v193
  %1584 = vmatprep.subr.mxu0 0.0
  %1585 = vmatpush1.msra.mxu0 %v192
  %1586 = vmatprep.subr.mxu0 0.0
  %1587 = vmatpush1.msra.mxu0 %v191
  %1588 = vmatprep.subr.mxu0 0.0
  %1589 = vmatpush1.msra.mxu0 %v190
  %1590 = vmatprep.subr.mxu0 0.0
  %1591 = vmatpush1.msra.mxu0 %v189
  %1592 = vmatprep.subr.mxu0 0.0
  %1593 = vmatpush1.msra.mxu0 %v188
  %1594 = vmatprep.subr.mxu0 0.0
  %1595 = vmatpush1.msra.mxu0 %v187
  %1596 = vmatprep.subr.mxu0 0.0
  %1597 = vmatpush1.msra.mxu0 %v186
  %1598 = vmatprep.subr.mxu0 0.0
  %1599 = vmatpush2.msra.mxu0 0.0
  %1600 = vmatprep.subr.mxu0 0.0
  %1601 = vmatpush2.msra.mxu0 0.0
  %1602 = vmatprep.subr.mxu0 0.0
  %1603 = vmatpush2.msra.mxu0 0.0
  %1604 = vmatprep.subr.mxu0 0.0
  %1605 = vmatpush2.msra.mxu0 0.0
  %1606 = vmatprep.subr.mxu0 0.0
  %1607 = vmatpush2.msra.mxu0 0.0
  %1608 = vmatprep.subr.mxu0 0.0
  %1609 = vmatpush2.msra.mxu0 0.0
  %1610 = vmatprep.subr.mxu0 0.0
  %1611 = vmatpush2.msra.mxu0 0.0
  %1612 = vmatprep.subr.mxu0 0.0
  %1613 = vmatpush2.msra.mxu0 0.0
  %1614 = vmatprep.subr.mxu0 0.0
  %1615 = vmatpush2.msra.mxu0 0.0
  %1616 = vmatprep.subr.mxu0 0.0
  %1617 = vmatpush2.msra.mxu0 0.0
  %1618 = vmatprep.subr.mxu0 0.0
  %1619 = vmatpush2.msra.mxu0 0.0
  %1620 = vmatprep.subr.mxu0 0.0
  %1621 = vmatpush2.msra.mxu0 0.0
  %1622 = vmatprep.subr.mxu0 0.0
  %1623 = vmatpush2.msra.mxu0 0.0
  %1624 = vmatprep.subr.mxu0 0.0
  %1625 = vmatpush2.msra.mxu0 0.0
  %1626 = vmatprep.subr.mxu0 0.0
  %1627 = vmatpush2.msra.mxu0 0.0
  %1628 = vmatprep.subr.mxu0 0.0
  %1629 = vmatpush2.msra.mxu0 0.0
  %1630 = vmatprep.mubr.f32.mxu0 0.0
  %1631 = vmatmul.mubr.f32.gmra.mxu0 %v1528
  %v1632 = vpop.f32.mrf.mxu0
  %v1633 = vadd.f32 0.0, %v1632
  %v1634 = vpop.f32.mrf.mxu0
  %1635 = vdwg.mxu0
  %1636 = vmatprep.subr.mxu0 0.0
  %1637 = vmatpush1.msra.mxu0 %v201
  %1638 = vmatprep.subr.mxu0 0.0
  %1639 = vmatpush1.msra.mxu0 %v200
  %1640 = vmatprep.subr.mxu0 0.0
  %1641 = vmatpush1.msra.mxu0 %v199
  %1642 = vmatprep.subr.mxu0 0.0
  %1643 = vmatpush1.msra.mxu0 %v198
  %1644 = vmatprep.subr.mxu0 0.0
  %1645 = vmatpush1.msra.mxu0 %v197
  %1646 = vmatprep.subr.mxu0 0.0
  %1647 = vmatpush1.msra.mxu0 %v196
  %1648 = vmatprep.subr.mxu0 0.0
  %1649 = vmatpush1.msra.mxu0 %v195
  %1650 = vmatprep.subr.mxu0 0.0
  %1651 = vmatpush1.msra.mxu0 %v194
  %1652 = vmatprep.subr.mxu0 0.0
  %1653 = vmatpush1.msra.mxu0 %v193
  %1654 = vmatprep.subr.mxu0 0.0
  %1655 = vmatpush1.msra.mxu0 %v192
  %1656 = vmatprep.subr.mxu0 0.0
  %1657 = vmatpush1.msra.mxu0 %v191
  %1658 = vmatprep.subr.mxu0 0.0
  %1659 = vmatpush1.msra.mxu0 %v190
  %1660 = vmatprep.subr.mxu0 0.0
  %1661 = vmatpush1.msra.mxu0 %v189
  %1662 = vmatprep.subr.mxu0 0.0
  %1663 = vmatpush1.msra.mxu0 %v188
  %1664 = vmatprep.subr.mxu0 0.0
  %1665 = vmatpush1.msra.mxu0 %v187
  %1666 = vmatprep.subr.mxu0 0.0
  %1667 = vmatpush1.msra.mxu0 %v186
  %1668 = vmatprep.subr.mxu0 0.0
  %1669 = vmatpush2.msra.mxu0 0.0
  %1670 = vmatprep.subr.mxu0 0.0
  %1671 = vmatpush2.msra.mxu0 0.0
  %1672 = vmatprep.subr.mxu0 0.0
  %1673 = vmatpush2.msra.mxu0 0.0
  %1674 = vmatprep.subr.mxu0 0.0
  %1675 = vmatpush2.msra.mxu0 0.0
  %1676 = vmatprep.subr.mxu0 0.0
  %1677 = vmatpush2.msra.mxu0 0.0
  %1678 = vmatprep.subr.mxu0 0.0
  %1679 = vmatpush2.msra.mxu0 0.0
  %1680 = vmatprep.subr.mxu0 0.0
  %1681 = vmatpush2.msra.mxu0 0.0
  %1682 = vmatprep.subr.mxu0 0.0
  %1683 = vmatpush2.msra.mxu0 0.0
  %1684 = vmatprep.subr.mxu0 0.0
  %1685 = vmatpush2.msra.mxu0 0.0
  %1686 = vmatprep.subr.mxu0 0.0
  %1687 = vmatpush2.msra.mxu0 0.0
  %1688 = vmatprep.subr.mxu0 0.0
  %1689 = vmatpush2.msra.mxu0 0.0
  %1690 = vmatprep.subr.mxu0 0.0
  %1691 = vmatpush2.msra.mxu0 0.0
  %1692 = vmatprep.subr.mxu0 0.0
  %1693 = vmatpush2.msra.mxu0 0.0
  %1694 = vmatprep.subr.mxu0 0.0
  %1695 = vmatpush2.msra.mxu0 0.0
  %1696 = vmatprep.subr.mxu0 0.0
  %1697 = vmatpush2.msra.mxu0 0.0
  %1698 = vmatprep.subr.mxu0 0.0
  %1699 = vmatpush2.msra.mxu0 0.0
  %1700 = vmatprep.mubr.f32.mxu0 0.0
  %1701 = vmatmul.mubr.f32.gmra.mxu0 %v1565
  %v1702 = vpop.f32.mrf.mxu0
  %v1703 = vadd.f32 0.0, %v1702
  %v1704 = vpop.f32.mrf.mxu0
  %1705 = vdwg.mxu0
  %v1706 = vmul.f32 %v1633, %v1633
  %v1707 = vsub.f32 %v1703, %v1706
  %v1708 = vmax.f32 %v1707, 0.0
  %v1709 = vld [vmem:[%s3] sm:$0x1]
  %v1710 = vadd.f32 %v1708, 1e-05
  %v1711 = vrsqrt.pop %v1710
  %v1712 = vmul.f32 %v1709, %v1711
  %v1713 = vlaneseq
  %v1714 = vshrl.u32 %v1713, 7
  %v1715 = vsub.s32 0, %v1714
  %v1716 = vrot.slane %v1633, %v1715
  %v1717 = vsub.f32 %v1446, %v1716
  %v1718 = vsub.f32 %v1449, %v1716
  %v1719 = vsub.f32 %v1454, %v1716
  %v1720 = vsub.f32 %v1457, %v1716
  %v1721 = vsub.f32 %v1462, %v1716
  %v1722 = vsub.f32 %v1465, %v1716
  %v1723 = vsub.f32 %v1470, %v1716
  %v1724 = vsub.f32 %v1473, %v1716
  %v1725 = vsub.f32 %v1478, %v1716
  %v1726 = vsub.f32 %v1481, %v1716
  %v1727 = vsub.f32 %v1486, %v1716
  %v1728 = vsub.f32 %v1489, %v1716
  %v1729 = vsub.f32 %v1494, %v1716
  %v1730 = vsub.f32 %v1497, %v1716
  %v1731 = vsub.f32 %v1502, %v1716
  %v1732 = vsub.f32 %v1505, %v1716
  %v1734 = vlaneseq
  %v1735 = vshrl.u32 %v1734, 7
  %v1736 = vsub.s32 0, %v1735
  %v1737 = vrot.slane %v1712, %v1736
  %v1739 = vmul.f32 %v1717, %v1737
  %v1740 = vmul.f32 %v1718, %v1737
  %v1741 = vmul.f32 %v1719, %v1737
  %v1742 = vmul.f32 %v1720, %v1737
  %v1743 = vmul.f32 %v1721, %v1737
  %v1744 = vmul.f32 %v1722, %v1737
  %v1745 = vmul.f32 %v1723, %v1737
  %v1746 = vmul.f32 %v1724, %v1737
  %v1747 = vmul.f32 %v1725, %v1737
  %v1748 = vmul.f32 %v1726, %v1737
  %v1749 = vmul.f32 %v1727, %v1737
  %v1750 = vmul.f32 %v1728, %v1737
  %v1751 = vmul.f32 %v1729, %v1737
  %v1752 = vmul.f32 %v1730, %v1737
  %v1753 = vmul.f32 %v1731, %v1737
  %v1754 = vmul.f32 %v1732, %v1737
  %v1755 = vld [vmem:[%s4] sm:$0x1]
  %v1757 = vlaneseq
  %v1758 = vshrl.u32 %v1757, 7
  %v1759 = vsub.s32 0, %v1758
  %v1760 = vrot.slane %v1755, %v1759
  %v1762 = vadd.f32 %v1739, %v1760
  %v1763 = vadd.f32 %v1740, %v1760
  %v1764 = vadd.f32 %v1741, %v1760
  %v1765 = vadd.f32 %v1742, %v1760
  %v1766 = vadd.f32 %v1743, %v1760
  %v1767 = vadd.f32 %v1744, %v1760
  %v1768 = vadd.f32 %v1745, %v1760
  %v1769 = vadd.f32 %v1746, %v1760
  %v1770 = vadd.f32 %v1747, %v1760
  %v1771 = vadd.f32 %v1748, %v1760
  %v1772 = vadd.f32 %v1749, %v1760
  %v1773 = vadd.f32 %v1750, %v1760
  %v1774 = vadd.f32 %v1751, %v1760
  %v1775 = vadd.f32 %v1752, %v1760
  %v1776 = vadd.f32 %v1753, %v1760
  %v1777 = vadd.f32 %v1754, %v1760
  %v1778 = vmax.f32 %v1762, 0.0
  %v1779 = vmax.f32 %v1763, 0.0
  %v1780 = vmax.f32 %v1764, 0.0
  %v1781 = vmax.f32 %v1765, 0.0
  %v1782 = vmax.f32 %v1766, 0.0
  %v1783 = vmax.f32 %v1767, 0.0
  %v1784 = vmax.f32 %v1768, 0.0
  %v1785 = vmax.f32 %v1769, 0.0
  %v1786 = vmax.f32 %v1770, 0.0
  %v1787 = vmax.f32 %v1771, 0.0
  %v1788 = vmax.f32 %v1772, 0.0
  %v1789 = vmax.f32 %v1773, 0.0
  %v1790 = vmax.f32 %v1774, 0.0
  %v1791 = vmax.f32 %v1775, 0.0
  %v1792 = vmax.f32 %v1776, 0.0
  %v1793 = vmax.f32 %v1777, 0.0
  %1794 = vst [vmem:[%s6] sm:$0xff] %v1778
  %1795 = vst [vmem:[%s6 + $0x8] sm:$0xff] %v1779
  %1796 = vst [vmem:[%s6 + $0x10] sm:$0xff] %v1780
  %1797 = vst [vmem:[%s6 + $0x18] sm:$0xff] %v1781
  %1798 = vst [vmem:[%s6 + $0x20] sm:$0xff] %v1782
  %1799 = vst [vmem:[%s6 + $0x28] sm:$0xff] %v1783
  %1800 = vst [vmem:[%s6 + $0x30] sm:$0xff] %v1784
  %1801 = vst [vmem:[%s6 + $0x38] sm:$0xff] %v1785
  %1802 = vst [vmem:[%s6 + $0x40] sm:$0xff] %v1786
  %1803 = vst [vmem:[%s6 + $0x48] sm:$0xff] %v1787
  %1804 = vst [vmem:[%s6 + $0x50] sm:$0xff] %v1788
  %1805 = vst [vmem:[%s6 + $0x58] sm:$0xff] %v1789
  %1806 = vst [vmem:[%s6 + $0x60] sm:$0xff] %v1790
  %1807 = vst [vmem:[%s6 + $0x68] sm:$0xff] %v1791
  %1808 = vst [vmem:[%s6 + $0x70] sm:$0xff] %v1792
  %1809 = vst [vmem:[%s6 + $0x78] sm:$0xff] %v1793
  %1810 = vst [vmem:[%s121 + $0x8] sm:$0xff] %v1778
  %1811 = vst [vmem:[%s121 + $0x20] sm:$0xff] %v1779
  %1812 = vst [vmem:[%s121 + $0x38] sm:$0xff] %v1780
  %1813 = vst [vmem:[%s121 + $0x50] sm:$0xff] %v1781
  %1814 = vst [vmem:[%s121 + $0x68] sm:$0xff] %v1782
  %1815 = vst [vmem:[%s121 + $0x80] sm:$0xff] %v1783
  %1816 = vst [vmem:[%s121 + $0x98] sm:$0xff] %v1784
  %1817 = vst [vmem:[%s121 + $0xb0] sm:$0xff] %v1785
  %1818 = vst [vmem:[%s121 + $0x248] sm:$0xff] %v1786
  %1819 = vst [vmem:[%s121 + $0x260] sm:$0xff] %v1787
  %1820 = vst [vmem:[%s121 + $0x278] sm:$0xff] %v1788
  %1821 = vst [vmem:[%s121 + $0x290] sm:$0xff] %v1789
  %1822 = vst [vmem:[%s121 + $0x2a8] sm:$0xff] %v1790
  %1823 = vst [vmem:[%s121 + $0x2c0] sm:$0xff] %v1791
  %1824 = vst [vmem:[%s121 + $0x2d8] sm:$0xff] %v1792
  %1825 = vst [vmem:[%s121 + $0x2f0] sm:$0xff] %v1793
  %v1826 = vld [vmem:[#allocation2 + $0x90] sm:$0xff]
  %v1827 = vld [vmem:[#allocation2 + $0x98] sm:$0xff]
  %v1828 = vld [vmem:[#allocation2 + $0xa0] sm:$0xff]
  %v1829 = vld [vmem:[#allocation2 + $0xa8] sm:$0xff]
  %v1830 = vld [vmem:[#allocation2 + $0xb0] sm:$0xff]
  %v1831 = vld [vmem:[#allocation2 + $0xb8] sm:$0xff]
  %v1832 = vld [vmem:[#allocation2 + $0xc0] sm:$0xff]
  %v1833 = vld [vmem:[#allocation2 + $0xc8] sm:$0xff]
  %v1834 = vld [vmem:[#allocation2 + $0xd0] sm:$0xff]
  %v1835 = vld [vmem:[#allocation2 + $0xd8] sm:$0xff]
  %v1836 = vld [vmem:[#allocation2 + $0xe0] sm:$0xff]
  %v1837 = vld [vmem:[#allocation2 + $0xe8] sm:$0xff]
  %v1838 = vld [vmem:[#allocation2 + $0xf0] sm:$0xff]
  %v1839 = vld [vmem:[#allocation2 + $0xf8] sm:$0xff]
  %v1840 = vld [vmem:[#allocation2 + $0x100] sm:$0xff]
  %v1841 = vld [vmem:[#allocation2 + $0x108] sm:$0xff]
  %v1842 = vld [vmem:[#allocation2 + $0x110] sm:$0xff]
  %v1843 = vld [vmem:[#allocation2 + $0x118] sm:$0xff]
  %v1844 = vld [vmem:[#allocation2 + $0x120] sm:$0xff]
  %v1845 = vld [vmem:[#allocation2 + $0x128] sm:$0xff]
  %v1846 = vld [vmem:[#allocation2 + $0x130] sm:$0xff]
  %v1847 = vld [vmem:[#allocation2 + $0x138] sm:$0xff]
  %v1848 = vld [vmem:[#allocation2 + $0x140] sm:$0xff]
  %v1849 = vld [vmem:[#allocation2 + $0x148] sm:$0xff]
  %v1850 = vld [vmem:[#allocation2 + $0x150] sm:$0xff]
  %v1851 = vld [vmem:[#allocation2 + $0x158] sm:$0xff]
  %v1852 = vld [vmem:[#allocation2 + $0x160] sm:$0xff]
  %v1853 = vld [vmem:[#allocation2 + $0x168] sm:$0xff]
  %v1854 = vld [vmem:[#allocation2 + $0x170] sm:$0xff]
  %v1855 = vld [vmem:[#allocation2 + $0x178] sm:$0xff]
  %v1856 = vld [vmem:[#allocation2 + $0x180] sm:$0xff]
  %v1857 = vld [vmem:[#allocation2 + $0x188] sm:$0xff]
  %v1858 = vld [vmem:[#allocation2 + $0x190] sm:$0xff]
  %v1859 = vld [vmem:[#allocation2 + $0x198] sm:$0xff]
  %v1860 = vld [vmem:[#allocation2 + $0x1a0] sm:$0xff]
  %v1861 = vld [vmem:[#allocation2 + $0x1a8] sm:$0xff]
  %v1862 = vld [vmem:[#allocation2 + $0x2d0] sm:$0xff]
  %v1863 = vld [vmem:[#allocation2 + $0x2d8] sm:$0xff]
  %v1864 = vld [vmem:[#allocation2 + $0x2e0] sm:$0xff]
  %v1865 = vld [vmem:[#allocation2 + $0x2e8] sm:$0xff]
  %v1866 = vld [vmem:[#allocation2 + $0x2f0] sm:$0xff]
  %v1867 = vld [vmem:[#allocation2 + $0x2f8] sm:$0xff]
  %v1868 = vld [vmem:[#allocation2 + $0x300] sm:$0xff]
  %v1869 = vld [vmem:[#allocation2 + $0x308] sm:$0xff]
  %v1870 = vld [vmem:[#allocation2 + $0x310] sm:$0xff]
  %v1871 = vld [vmem:[#allocation2 + $0x318] sm:$0xff]
  %v1872 = vld [vmem:[#allocation2 + $0x320] sm:$0xff]
  %v1873 = vld [vmem:[#allocation2 + $0x328] sm:$0xff]
  %v1874 = vld [vmem:[#allocation2 + $0x330] sm:$0xff]
  %v1875 = vld [vmem:[#allocation2 + $0x338] sm:$0xff]
  %v1876 = vld [vmem:[#allocation2 + $0x340] sm:$0xff]
  %v1877 = vld [vmem:[#allocation2 + $0x348] sm:$0xff]
  %v1878 = vld [vmem:[#allocation2 + $0x350] sm:$0xff]
  %v1879 = vld [vmem:[#allocation2 + $0x358] sm:$0xff]
  %v1880 = vld [vmem:[#allocation2 + $0x360] sm:$0xff]
  %v1881 = vld [vmem:[#allocation2 + $0x368] sm:$0xff]
  %v1882 = vld [vmem:[#allocation2 + $0x370] sm:$0xff]
  %v1883 = vld [vmem:[#allocation2 + $0x378] sm:$0xff]
  %v1884 = vld [vmem:[#allocation2 + $0x380] sm:$0xff]
  %v1885 = vld [vmem:[#allocation2 + $0x388] sm:$0xff]
  %v1886 = vld [vmem:[#allocation2 + $0x390] sm:$0xff]
  %v1887 = vld [vmem:[#allocation2 + $0x398] sm:$0xff]
  %v1888 = vld [vmem:[#allocation2 + $0x3a0] sm:$0xff]
  %v1889 = vld [vmem:[#allocation2 + $0x3a8] sm:$0xff]
  %v1890 = vld [vmem:[#allocation2 + $0x3b0] sm:$0xff]
  %v1891 = vld [vmem:[#allocation2 + $0x3b8] sm:$0xff]
  %v1892 = vld [vmem:[#allocation2 + $0x3c0] sm:$0xff]
  %v1893 = vld [vmem:[#allocation2 + $0x3c8] sm:$0xff]
  %v1894 = vld [vmem:[#allocation2 + $0x3d0] sm:$0xff]
  %v1895 = vld [vmem:[#allocation2 + $0x3d8] sm:$0xff]
  %v1896 = vld [vmem:[#allocation2 + $0x3e0] sm:$0xff]
  %v1897 = vld [vmem:[#allocation2 + $0x3e8] sm:$0xff]
  %v1898 = vrot.slane %v1826, 6
  %v1899 = vrot.slane %v1827, 6
  %v1900 = vrot.slane %v1829, 6
  %v1901 = vrot.slane %v1830, 6
  %v1902 = vrot.slane %v1832, 6
  %v1903 = vrot.slane %v1833, 6
  %v1904 = vrot.slane %v1835, 6
  %v1905 = vrot.slane %v1836, 6
  %v1906 = vrot.slane %v1838, 6
  %v1907 = vrot.slane %v1839, 6
  %v1908 = vrot.slane %v1841, 6
  %v1909 = vrot.slane %v1842, 6
  %v1910 = vrot.slane %v1844, 6
  %v1911 = vrot.slane %v1845, 6
  %v1912 = vrot.slane %v1847, 6
  %v1913 = vrot.slane %v1848, 6
  %v1914 = vrot.slane %v1850, 6
  %v1915 = vrot.slane %v1851, 6
  %v1916 = vrot.slane %v1853, 6
  %v1917 = vrot.slane %v1854, 6
  %v1918 = vrot.slane %v1856, 6
  %v1919 = vrot.slane %v1857, 6
  %v1920 = vrot.slane %v1859, 6
  %v1921 = vrot.slane %v1860, 6
  %v1922 = vrot.slane %v1862, 6
  %v1923 = vrot.slane %v1863, 6
  %v1924 = vrot.slane %v1865, 6
  %v1925 = vrot.slane %v1866, 6
  %v1926 = vrot.slane %v1868, 6
  %v1927 = vrot.slane %v1869, 6
  %v1928 = vrot.slane %v1871, 6
  %v1929 = vrot.slane %v1872, 6
  %v1930 = vrot.slane %v1874, 6
  %v1931 = vrot.slane %v1875, 6
  %v1932 = vrot.slane %v1877, 6
  %v1933 = vrot.slane %v1878, 6
  %v1934 = vrot.slane %v1880, 6
  %v1935 = vrot.slane %v1881, 6
  %v1936 = vrot.slane %v1883, 6
  %v1937 = vrot.slane %v1884, 6
  %v1938 = vrot.slane %v1886, 6
  %v1939 = vrot.slane %v1887, 6
  %v1940 = vrot.slane %v1889, 6
  %v1941 = vrot.slane %v1890, 6
  %v1942 = vrot.slane %v1892, 6
  %v1943 = vrot.slane %v1893, 6
  %v1944 = vrot.slane %v1895, 6
  %v1945 = vrot.slane %v1896, 6
  %vm1946 = vcmp.lt.s32.totalorder %v303, 2
  %v1947 = vsel %vm1946, %v1944, %v1945
  %v1948 = vsel %vm1946, %v1942, %v1943
  %v1949 = vsel %vm1946, %v1940, %v1941
  %v1950 = vsel %vm1946, %v1938, %v1939
  %v1951 = vsel %vm1946, %v1936, %v1937
  %v1952 = vsel %vm1946, %v1934, %v1935
  %v1953 = vsel %vm1946, %v1932, %v1933
  %v1954 = vsel %vm1946, %v1930, %v1931
  %v1955 = vsel %vm1946, %v1928, %v1929
  %v1956 = vsel %vm1946, %v1926, %v1927
  %v1957 = vsel %vm1946, %v1924, %v1925
  %v1958 = vsel %vm1946, %v1922, %v1923
  %v1959 = vsel %vm1946, %v1920, %v1921
  %v1960 = vsel %vm1946, %v1918, %v1919
  %v1961 = vsel %vm1946, %v1916, %v1917
  %v1962 = vsel %vm1946, %v1914, %v1915
  %v1963 = vsel %vm1946, %v1912, %v1913
  %v1964 = vsel %vm1946, %v1910, %v1911
  %v1965 = vsel %vm1946, %v1908, %v1909
  %v1966 = vsel %vm1946, %v1906, %v1907
  %v1967 = vsel %vm1946, %v1904, %v1905
  %v1968 = vsel %vm1946, %v1902, %v1903
  %v1969 = vsel %vm1946, %v1900, %v1901
  %v1970 = vsel %vm1946, %v1898, %v1899
  %v1971 = vpack.c.bf16 %v1969, %v1970
  %v1972 = vpack.c.bf16 %v1967, %v1968
  %v1973 = vpack.c.bf16 %v1965, %v1966
  %v1974 = vpack.c.bf16 %v1963, %v1964
  %v1975 = vpack.c.bf16 %v1957, %v1958
  %v1976 = vpack.c.bf16 %v1955, %v1956
  %v1977 = vpack.c.bf16 %v1953, %v1954
  %v1978 = vpack.c.bf16 %v1951, %v1952
  %v1979 = vpack.c.bf16 %v1961, %v1962
  %v1980 = vpack.c.bf16 %v1949, %v1950
  %v1981 = vpack.c.bf16 %v1959, %v1960
  %v1982 = vpack.c.bf16 %v1947, %v1948
  %v1983 = vpack.c.bf16 %v1830, %v1827
  %v1984 = vpack.c.bf16 %v1836, %v1833
  %v1985 = vpack.c.bf16 %v1842, %v1839
  %v1986 = vpack.c.bf16 %v1848, %v1845
  %v1987 = vpack.c.bf16 %v1866, %v1863
  %v1988 = vpack.c.bf16 %v1872, %v1869
  %v1989 = vpack.c.bf16 %v1878, %v1875
  %v1990 = vpack.c.bf16 %v1884, %v1881
  %v1991 = vpack.c.bf16 %v1854, %v1851
  %v1992 = vpack.c.bf16 %v1890, %v1887
  %v1993 = vpack.c.bf16 %v1860, %v1857
  %v1994 = vpack.c.bf16 %v1896, %v1893
  %v1995 = vrot.slane %v1827, 2
  %v1996 = vrot.slane %v1828, 2
  %v1997 = vrot.slane %v1830, 2
  %v1998 = vrot.slane %v1831, 2
  %v1999 = vrot.slane %v1833, 2
  %v2000 = vrot.slane %v1834, 2
  %v2001 = vrot.slane %v1836, 2
  %v2002 = vrot.slane %v1837, 2
  %v2003 = vrot.slane %v1839, 2
  %v2004 = vrot.slane %v1840, 2
  %v2005 = vrot.slane %v1842, 2
  %v2006 = vrot.slane %v1843, 2
  %v2007 = vrot.slane %v1845, 2
  %v2008 = vrot.slane %v1846, 2
  %v2009 = vrot.slane %v1848, 2
  %v2010 = vrot.slane %v1849, 2
  %v2011 = vrot.slane %v1851, 2
  %v2012 = vrot.slane %v1852, 2
  %v2013 = vrot.slane %v1854, 2
  %v2014 = vrot.slane %v1855, 2
  %v2015 = vrot.slane %v1857, 2
  %v2016 = vrot.slane %v1858, 2
  %v2017 = vrot.slane %v1860, 2
  %v2018 = vrot.slane %v1861, 2
  %v2019 = vrot.slane %v1863, 2
  %v2020 = vrot.slane %v1864, 2
  %v2021 = vrot.slane %v1866, 2
  %v2022 = vrot.slane %v1867, 2
  %v2023 = vrot.slane %v1869, 2
  %v2024 = vrot.slane %v1870, 2
  %v2025 = vrot.slane %v1872, 2
  %v2026 = vrot.slane %v1873, 2
  %v2027 = vrot.slane %v1875, 2
  %v2028 = vrot.slane %v1876, 2
  %v2029 = vrot.slane %v1878, 2
  %v2030 = vrot.slane %v1879, 2
  %v2031 = vrot.slane %v1881, 2
  %v2032 = vrot.slane %v1882, 2
  %v2033 = vrot.slane %v1884, 2
  %v2034 = vrot.slane %v1885, 2
  %v2035 = vrot.slane %v1887, 2
  %v2036 = vrot.slane %v1888, 2
  %v2037 = vrot.slane %v1890, 2
  %v2038 = vrot.slane %v1891, 2
  %v2039 = vrot.slane %v1893, 2
  %v2040 = vrot.slane %v1894, 2
  %v2041 = vrot.slane %v1896, 2
  %v2042 = vrot.slane %v1897, 2
  %vm2043 = vcmp.lt.s32.totalorder %v303, 6
  %v2044 = vsel %vm2043, %v2041, %v2042
  %v2045 = vsel %vm2043, %v2039, %v2040
  %v2046 = vsel %vm2043, %v2037, %v2038
  %v2047 = vsel %vm2043, %v2035, %v2036
  %v2048 = vsel %vm2043, %v2033, %v2034
  %v2049 = vsel %vm2043, %v2031, %v2032
  %v2050 = vsel %vm2043, %v2029, %v2030
  %v2051 = vsel %vm2043, %v2027, %v2028
  %v2052 = vsel %vm2043, %v2025, %v2026
  %v2053 = vsel %vm2043, %v2023, %v2024
  %v2054 = vsel %vm2043, %v2021, %v2022
  %v2055 = vsel %vm2043, %v2019, %v2020
  %v2056 = vsel %vm2043, %v2017, %v2018
  %v2057 = vsel %vm2043, %v2015, %v2016
  %v2058 = vsel %vm2043, %v2013, %v2014
  %v2059 = vsel %vm2043, %v2011, %v2012
  %v2060 = vsel %vm2043, %v2009, %v2010
  %v2061 = vsel %vm2043, %v2007, %v2008
  %v2062 = vsel %vm2043, %v2005, %v2006
  %v2063 = vsel %vm2043, %v2003, %v2004
  %v2064 = vsel %vm2043, %v2001, %v2002
  %v2065 = vsel %vm2043, %v1999, %v2000
  %v2066 = vsel %vm2043, %v1997, %v1998
  %v2067 = vsel %vm2043, %v1995, %v1996
  %v2068 = vpack.c.bf16 %v2066, %v2067
  %v2069 = vpack.c.bf16 %v2064, %v2065
  %v2070 = vpack.c.bf16 %v2062, %v2063
  %v2071 = vpack.c.bf16 %v2060, %v2061
  %v2072 = vpack.c.bf16 %v2054, %v2055
  %v2073 = vpack.c.bf16 %v2052, %v2053
  %v2074 = vpack.c.bf16 %v2050, %v2051
  %v2075 = vpack.c.bf16 %v2048, %v2049
  %v2076 = vpack.c.bf16 %v2058, %v2059
  %v2077 = vpack.c.bf16 %v2046, %v2047
  %v2078 = vpack.c.bf16 %v2056, %v2057
  %v2079 = vpack.c.bf16 %v2044, %v2045
  %s2080 = scalar_lea.vmem %s1, 576
  %v2081 = vld [vmem:[%s2080] sm:$0xf]
  %v2082 = vld [vmem:[%s2080 + $0x4] sm:$0xf]
  %v2083 = vld [vmem:[%s2080 + $0x8] sm:$0xf]
  %v2084 = vld [vmem:[%s2080 + $0xc] sm:$0xf]
  %v2085 = vld [vmem:[%s2080 + $0x10] sm:$0xf]
  %v2086 = vld [vmem:[%s2080 + $0x14] sm:$0xf]
  %v2087 = vld [vmem:[%s2080 + $0x18] sm:$0xf]
  %v2088 = vld [vmem:[%s2080 + $0x1c] sm:$0xf]
  %v2089 = vld [vmem:[%s2080 + $0x20] sm:$0xf]
  %v2090 = vld [vmem:[%s2080 + $0x24] sm:$0xf]
  %v2091 = vld [vmem:[%s2080 + $0x28] sm:$0xf]
  %v2092 = vld [vmem:[%s2080 + $0x2c] sm:$0xf]
  %v2093 = vld [vmem:[%s2080 + $0x30] sm:$0xf]
  %v2094 = vld [vmem:[%s2080 + $0x34] sm:$0xf]
  %v2095 = vld [vmem:[%s2080 + $0x38] sm:$0xf]
  %v2096 = vld [vmem:[%s2080 + $0x3c] sm:$0xf]
  %v2097 = vld [vmem:[%s2080 + $0x40] sm:$0xf]
  %v2098 = vld [vmem:[%s2080 + $0x44] sm:$0xf]
  %v2099 = vld [vmem:[%s2080 + $0x48] sm:$0xf]
  %v2100 = vld [vmem:[%s2080 + $0x4c] sm:$0xf]
  %v2101 = vld [vmem:[%s2080 + $0x50] sm:$0xf]
  %v2102 = vld [vmem:[%s2080 + $0x54] sm:$0xf]
  %v2103 = vld [vmem:[%s2080 + $0x58] sm:$0xf]
  %v2104 = vld [vmem:[%s2080 + $0x5c] sm:$0xf]
  %v2105 = vld [vmem:[%s2080 + $0x60] sm:$0xf]
  %v2106 = vld [vmem:[%s2080 + $0x64] sm:$0xf]
  %v2107 = vld [vmem:[%s2080 + $0x68] sm:$0xf]
  %v2108 = vld [vmem:[%s2080 + $0x6c] sm:$0xf]
  %v2109 = vld [vmem:[%s2080 + $0x70] sm:$0xf]
  %v2110 = vld [vmem:[%s2080 + $0x74] sm:$0xf]
  %v2111 = vld [vmem:[%s2080 + $0x78] sm:$0xf]
  %v2112 = vld [vmem:[%s2080 + $0x7c] sm:$0xf]
  %v2113 = vld [vmem:[%s2080 + $0x80] sm:$0xf]
  %v2114 = vld [vmem:[%s2080 + $0x84] sm:$0xf]
  %v2115 = vld [vmem:[%s2080 + $0x88] sm:$0xf]
  %v2116 = vld [vmem:[%s2080 + $0x8c] sm:$0xf]
  %v2117 = vld [vmem:[%s2080 + $0x90] sm:$0xf]
  %v2118 = vld [vmem:[%s2080 + $0x94] sm:$0xf]
  %v2119 = vld [vmem:[%s2080 + $0x98] sm:$0xf]
  %v2120 = vld [vmem:[%s2080 + $0x9c] sm:$0xf]
  %v2121 = vld [vmem:[%s2080 + $0xa0] sm:$0xf]
  %v2122 = vld [vmem:[%s2080 + $0xa4] sm:$0xf]
  %v2123 = vld [vmem:[%s2080 + $0xa8] sm:$0xf]
  %v2124 = vld [vmem:[%s2080 + $0xac] sm:$0xf]
  %v2125 = vld [vmem:[%s2080 + $0xb0] sm:$0xf]
  %v2126 = vld [vmem:[%s2080 + $0xb4] sm:$0xf]
  %v2127 = vld [vmem:[%s2080 + $0xb8] sm:$0xf]
  %v2128 = vld [vmem:[%s2080 + $0xbc] sm:$0xf]
  %v2129 = vld [vmem:[%s2080 + $0xc0] sm:$0xf]
  %v2130 = vld [vmem:[%s2080 + $0xc4] sm:$0xf]
  %v2131 = vld [vmem:[%s2080 + $0xc8] sm:$0xf]
  %v2132 = vld [vmem:[%s2080 + $0xcc] sm:$0xf]
  %v2133 = vld [vmem:[%s2080 + $0xd0] sm:$0xf]
  %v2134 = vld [vmem:[%s2080 + $0xd4] sm:$0xf]
  %v2135 = vld [vmem:[%s2080 + $0xd8] sm:$0xf]
  %v2136 = vld [vmem:[%s2080 + $0xdc] sm:$0xf]
  %v2137 = vld [vmem:[%s2080 + $0xe0] sm:$0xf]
  %v2138 = vld [vmem:[%s2080 + $0xe4] sm:$0xf]
  %v2139 = vld [vmem:[%s2080 + $0xe8] sm:$0xf]
  %v2140 = vld [vmem:[%s2080 + $0xec] sm:$0xf]
  %v2141 = vld [vmem:[%s2080 + $0xf0] sm:$0xf]
  %v2142 = vld [vmem:[%s2080 + $0xf4] sm:$0xf]
  %v2143 = vld [vmem:[%s2080 + $0xf8] sm:$0xf]
  %v2144 = vld [vmem:[%s2080 + $0xfc] sm:$0xf]
  %v2145 = vld [vmem:[%s2080 + $0x100] sm:$0xf]
  %v2146 = vld [vmem:[%s2080 + $0x104] sm:$0xf]
  %v2147 = vld [vmem:[%s2080 + $0x108] sm:$0xf]
  %v2148 = vld [vmem:[%s2080 + $0x10c] sm:$0xf]
  %v2149 = vld [vmem:[%s2080 + $0x110] sm:$0xf]
  %v2150 = vld [vmem:[%s2080 + $0x114] sm:$0xf]
  %v2151 = vld [vmem:[%s2080 + $0x118] sm:$0xf]
  %v2152 = vld [vmem:[%s2080 + $0x11c] sm:$0xf]
  %v2153 = vld [vmem:[%s2080 + $0x120] sm:$0xf]
  %v2154 = vld [vmem:[%s2080 + $0x124] sm:$0xf]
  %v2155 = vld [vmem:[%s2080 + $0x128] sm:$0xf]
  %v2156 = vld [vmem:[%s2080 + $0x12c] sm:$0xf]
  %v2157 = vld [vmem:[%s2080 + $0x130] sm:$0xf]
  %v2158 = vld [vmem:[%s2080 + $0x134] sm:$0xf]
  %v2159 = vld [vmem:[%s2080 + $0x138] sm:$0xf]
  %v2160 = vld [vmem:[%s2080 + $0x13c] sm:$0xf]
  %v2161 = vld [vmem:[%s2080 + $0x140] sm:$0xf]
  %v2162 = vld [vmem:[%s2080 + $0x144] sm:$0xf]
  %v2163 = vld [vmem:[%s2080 + $0x148] sm:$0xf]
  %v2164 = vld [vmem:[%s2080 + $0x14c] sm:$0xf]
  %v2165 = vld [vmem:[%s2080 + $0x150] sm:$0xf]
  %v2166 = vld [vmem:[%s2080 + $0x154] sm:$0xf]
  %v2167 = vld [vmem:[%s2080 + $0x158] sm:$0xf]
  %v2168 = vld [vmem:[%s2080 + $0x15c] sm:$0xf]
  %v2169 = vld [vmem:[%s2080 + $0x160] sm:$0xf]
  %v2170 = vld [vmem:[%s2080 + $0x164] sm:$0xf]
  %v2171 = vld [vmem:[%s2080 + $0x168] sm:$0xf]
  %v2172 = vld [vmem:[%s2080 + $0x16c] sm:$0xf]
  %v2173 = vld [vmem:[%s2080 + $0x170] sm:$0xf]
  %v2174 = vld [vmem:[%s2080 + $0x174] sm:$0xf]
  %v2175 = vld [vmem:[%s2080 + $0x178] sm:$0xf]
  %v2176 = vld [vmem:[%s2080 + $0x17c] sm:$0xf]
  %v2177 = vld [vmem:[%s2080 + $0x180] sm:$0xf]
  %v2178 = vld [vmem:[%s2080 + $0x184] sm:$0xf]
  %v2179 = vld [vmem:[%s2080 + $0x188] sm:$0xf]
  %v2180 = vld [vmem:[%s2080 + $0x18c] sm:$0xf]
  %v2181 = vld [vmem:[%s2080 + $0x190] sm:$0xf]
  %v2182 = vld [vmem:[%s2080 + $0x194] sm:$0xf]
  %v2183 = vld [vmem:[%s2080 + $0x198] sm:$0xf]
  %v2184 = vld [vmem:[%s2080 + $0x19c] sm:$0xf]
  %v2185 = vld [vmem:[%s2080 + $0x1a0] sm:$0xf]
  %v2186 = vld [vmem:[%s2080 + $0x1a4] sm:$0xf]
  %v2187 = vld [vmem:[%s2080 + $0x1a8] sm:$0xf]
  %v2188 = vld [vmem:[%s2080 + $0x1ac] sm:$0xf]
  %v2189 = vld [vmem:[%s2080 + $0x1b0] sm:$0xf]
  %v2190 = vld [vmem:[%s2080 + $0x1b4] sm:$0xf]
  %v2191 = vld [vmem:[%s2080 + $0x1b8] sm:$0xf]
  %v2192 = vld [vmem:[%s2080 + $0x1bc] sm:$0xf]
  %v2193 = vld [vmem:[%s2080 + $0x1c0] sm:$0xf]
  %v2194 = vld [vmem:[%s2080 + $0x1c4] sm:$0xf]
  %v2195 = vld [vmem:[%s2080 + $0x1c8] sm:$0xf]
  %v2196 = vld [vmem:[%s2080 + $0x1cc] sm:$0xf]
  %v2197 = vld [vmem:[%s2080 + $0x1d0] sm:$0xf]
  %v2198 = vld [vmem:[%s2080 + $0x1d4] sm:$0xf]
  %v2199 = vld [vmem:[%s2080 + $0x1d8] sm:$0xf]
  %v2200 = vld [vmem:[%s2080 + $0x1dc] sm:$0xf]
  %v2201 = vld [vmem:[%s2080 + $0x1e0] sm:$0xf]
  %v2202 = vld [vmem:[%s2080 + $0x1e4] sm:$0xf]
  %v2203 = vld [vmem:[%s2080 + $0x1e8] sm:$0xf]
  %v2204 = vld [vmem:[%s2080 + $0x1ec] sm:$0xf]
  %v2205 = vld [vmem:[%s2080 + $0x1f0] sm:$0xf]
  %v2206 = vld [vmem:[%s2080 + $0x1f4] sm:$0xf]
  %v2207 = vld [vmem:[%s2080 + $0x1f8] sm:$0xf]
  %v2208 = vld [vmem:[%s2080 + $0x1fc] sm:$0xf]
  %v2209 = vld [vmem:[%s2080 + $0x200] sm:$0xf]
  %v2210 = vld [vmem:[%s2080 + $0x204] sm:$0xf]
  %v2211 = vld [vmem:[%s2080 + $0x208] sm:$0xf]
  %v2212 = vld [vmem:[%s2080 + $0x20c] sm:$0xf]
  %v2213 = vld [vmem:[%s2080 + $0x210] sm:$0xf]
  %v2214 = vld [vmem:[%s2080 + $0x214] sm:$0xf]
  %v2215 = vld [vmem:[%s2080 + $0x218] sm:$0xf]
  %v2216 = vld [vmem:[%s2080 + $0x21c] sm:$0xf]
  %v2217 = vld [vmem:[%s2080 + $0x220] sm:$0xf]
  %v2218 = vld [vmem:[%s2080 + $0x224] sm:$0xf]
  %v2219 = vld [vmem:[%s2080 + $0x228] sm:$0xf]
  %v2220 = vld [vmem:[%s2080 + $0x22c] sm:$0xf]
  %v2221 = vld [vmem:[%s2080 + $0x230] sm:$0xf]
  %v2222 = vld [vmem:[%s2080 + $0x234] sm:$0xf]
  %v2223 = vld [vmem:[%s2080 + $0x238] sm:$0xf]
  %v2224 = vld [vmem:[%s2080 + $0x23c] sm:$0xf]
  %s2225 = scalar_lea.vmem %s2, 1
  %v2226 = vld [vmem:[%s2225] sm:$0x1]
  %v2228 = vlaneseq
  %v2229 = vshrl.u32 %v2228, 7
  %v2230 = vsub.s32 0, %v2229
  %v2231 = vrot.slane %v2226, %v2230
  %v2377 = vunpack.c.l.b16 %v2081
  %v2378 = vunpack.c.l.b16 %v2082
  %v2379 = vunpack.c.l.b16 %v2083
  %v2380 = vunpack.c.l.b16 %v2084
  %v2381 = vunpack.c.l.b16 %v2085
  %v2382 = vunpack.c.l.b16 %v2086
  %v2383 = vunpack.c.l.b16 %v2087
  %v2384 = vunpack.c.l.b16 %v2088
  %v2385 = vunpack.c.l.b16 %v2089
  %v2386 = vunpack.c.l.b16 %v2090
  %v2387 = vunpack.c.l.b16 %v2091
  %v2388 = vunpack.c.l.b16 %v2092
  %v2389 = vunpack.c.l.b16 %v2093
  %v2390 = vunpack.c.l.b16 %v2094
  %v2391 = vunpack.c.l.b16 %v2095
  %v2392 = vunpack.c.l.b16 %v2096
  %v2393 = vunpack.c.l.b16 %v2097
  %v2394 = vunpack.c.l.b16 %v2098
  %v2395 = vunpack.c.l.b16 %v2099
  %v2396 = vunpack.c.l.b16 %v2100
  %v2397 = vunpack.c.l.b16 %v2101
  %v2398 = vunpack.c.l.b16 %v2102
  %v2399 = vunpack.c.l.b16 %v2103
  %v2400 = vunpack.c.l.b16 %v2104
  %v2401 = vunpack.c.l.b16 %v2105
  %v2402 = vunpack.c.l.b16 %v2106
  %v2403 = vunpack.c.l.b16 %v2107
  %v2404 = vunpack.c.l.b16 %v2108
  %v2405 = vunpack.c.l.b16 %v2109
  %v2406 = vunpack.c.l.b16 %v2110
  %v2407 = vunpack.c.l.b16 %v2111
  %v2408 = vunpack.c.l.b16 %v2112
  %v2409 = vunpack.c.l.b16 %v2113
  %v2410 = vunpack.c.l.b16 %v2114
  %v2411 = vunpack.c.l.b16 %v2115
  %v2412 = vunpack.c.l.b16 %v2116
  %v2413 = vunpack.c.l.b16 %v2117
  %v2414 = vunpack.c.l.b16 %v2118
  %v2415 = vunpack.c.l.b16 %v2119
  %v2416 = vunpack.c.l.b16 %v2120
  %v2417 = vunpack.c.l.b16 %v2121
  %v2418 = vunpack.c.l.b16 %v2122
  %v2419 = vunpack.c.l.b16 %v2123
  %v2420 = vunpack.c.l.b16 %v2124
  %v2421 = vunpack.c.l.b16 %v2125
  %v2422 = vunpack.c.l.b16 %v2126
  %v2423 = vunpack.c.l.b16 %v2127
  %v2424 = vunpack.c.l.b16 %v2128
  %v2425 = vunpack.c.l.b16 %v2129
  %v2426 = vunpack.c.l.b16 %v2130
  %v2427 = vunpack.c.l.b16 %v2131
  %v2428 = vunpack.c.l.b16 %v2132
  %v2429 = vunpack.c.l.b16 %v2133
  %v2430 = vunpack.c.l.b16 %v2134
  %v2431 = vunpack.c.l.b16 %v2135
  %v2432 = vunpack.c.l.b16 %v2136
  %v2433 = vunpack.c.l.b16 %v2137
  %v2434 = vunpack.c.l.b16 %v2138
  %v2435 = vunpack.c.l.b16 %v2139
  %v2436 = vunpack.c.l.b16 %v2140
  %v2437 = vunpack.c.l.b16 %v2141
  %v2438 = vunpack.c.l.b16 %v2142
  %v2439 = vunpack.c.l.b16 %v2143
  %v2440 = vunpack.c.l.b16 %v2144
  %v2441 = vunpack.c.l.b16 %v2145
  %v2442 = vunpack.c.l.b16 %v2146
  %v2443 = vunpack.c.l.b16 %v2147
  %v2444 = vunpack.c.l.b16 %v2148
  %v2445 = vunpack.c.l.b16 %v2149
  %v2446 = vunpack.c.l.b16 %v2150
  %v2447 = vunpack.c.l.b16 %v2151
  %v2448 = vunpack.c.l.b16 %v2152
  %v2449 = vunpack.c.l.b16 %v2153
  %v2450 = vunpack.c.l.b16 %v2154
  %v2451 = vunpack.c.l.b16 %v2155
  %v2452 = vunpack.c.l.b16 %v2156
  %v2453 = vunpack.c.l.b16 %v2157
  %v2454 = vunpack.c.l.b16 %v2158
  %v2455 = vunpack.c.l.b16 %v2159
  %v2456 = vunpack.c.l.b16 %v2160
  %v2457 = vunpack.c.l.b16 %v2161
  %v2458 = vunpack.c.l.b16 %v2162
  %v2459 = vunpack.c.l.b16 %v2163
  %v2460 = vunpack.c.l.b16 %v2164
  %v2461 = vunpack.c.l.b16 %v2165
  %v2462 = vunpack.c.l.b16 %v2166
  %v2463 = vunpack.c.l.b16 %v2167
  %v2464 = vunpack.c.l.b16 %v2168
  %v2465 = vunpack.c.l.b16 %v2169
  %v2466 = vunpack.c.l.b16 %v2170
  %v2467 = vunpack.c.l.b16 %v2171
  %v2468 = vunpack.c.l.b16 %v2172
  %v2469 = vunpack.c.l.b16 %v2173
  %v2470 = vunpack.c.l.b16 %v2174
  %v2471 = vunpack.c.l.b16 %v2175
  %v2472 = vunpack.c.l.b16 %v2176
  %v2473 = vunpack.c.l.b16 %v2177
  %v2474 = vunpack.c.l.b16 %v2178
  %v2475 = vunpack.c.l.b16 %v2179
  %v2476 = vunpack.c.l.b16 %v2180
  %v2477 = vunpack.c.l.b16 %v2181
  %v2478 = vunpack.c.l.b16 %v2182
  %v2479 = vunpack.c.l.b16 %v2183
  %v2480 = vunpack.c.l.b16 %v2184
  %v2481 = vunpack.c.l.b16 %v2185
  %v2482 = vunpack.c.l.b16 %v2186
  %v2483 = vunpack.c.l.b16 %v2187
  %v2484 = vunpack.c.l.b16 %v2188
  %v2485 = vunpack.c.l.b16 %v2189
  %v2486 = vunpack.c.l.b16 %v2190
  %v2487 = vunpack.c.l.b16 %v2191
  %v2488 = vunpack.c.l.b16 %v2192
  %v2489 = vunpack.c.l.b16 %v2193
  %v2490 = vunpack.c.l.b16 %v2194
  %v2491 = vunpack.c.l.b16 %v2195
  %v2492 = vunpack.c.l.b16 %v2196
  %v2493 = vunpack.c.l.b16 %v2197
  %v2494 = vunpack.c.l.b16 %v2198
  %v2495 = vunpack.c.l.b16 %v2199
  %v2496 = vunpack.c.l.b16 %v2200
  %v2497 = vunpack.c.l.b16 %v2201
  %v2498 = vunpack.c.l.b16 %v2202
  %v2499 = vunpack.c.l.b16 %v2203
  %v2500 = vunpack.c.l.b16 %v2204
  %v2501 = vunpack.c.l.b16 %v2205
  %v2502 = vunpack.c.l.b16 %v2206
  %v2503 = vunpack.c.l.b16 %v2207
  %v2504 = vunpack.c.l.b16 %v2208
  %v2505 = vunpack.c.l.b16 %v2209
  %v2506 = vunpack.c.l.b16 %v2210
  %v2507 = vunpack.c.l.b16 %v2211
  %v2508 = vunpack.c.l.b16 %v2212
  %v2509 = vunpack.c.l.b16 %v2213
  %v2510 = vunpack.c.l.b16 %v2214
  %v2511 = vunpack.c.l.b16 %v2215
  %v2512 = vunpack.c.l.b16 %v2216
  %v2513 = vunpack.c.l.b16 %v2217
  %v2514 = vunpack.c.l.b16 %v2218
  %v2515 = vunpack.c.l.b16 %v2219
  %v2516 = vunpack.c.l.b16 %v2220
  %v2517 = vunpack.c.l.b16 %v2221
  %v2518 = vunpack.c.l.b16 %v2222
  %v2519 = vunpack.c.l.b16 %v2223
  %v2520 = vunpack.c.l.b16 %v2224
  %v2521 = vpack.c.b16 %v2378, %v2377
  %v2522 = vpack.c.b16 %v2380, %v2379
  %v2523 = vpack.c.b16 %v2382, %v2381
  %v2524 = vpack.c.b16 %v2384, %v2383
  %v2525 = vpack.c.b16 %v2386, %v2385
  %v2526 = vpack.c.b16 %v2388, %v2387
  %v2527 = vpack.c.b16 %v2390, %v2389
  %v2528 = vpack.c.b16 %v2392, %v2391
  %v2529 = vpack.c.b16 %v2394, %v2393
  %v2530 = vpack.c.b16 %v2396, %v2395
  %v2531 = vpack.c.b16 %v2398, %v2397
  %v2532 = vpack.c.b16 %v2400, %v2399
  %v2533 = vpack.c.b16 %v2402, %v2401
  %v2534 = vpack.c.b16 %v2404, %v2403
  %v2535 = vpack.c.b16 %v2406, %v2405
  %v2536 = vpack.c.b16 %v2408, %v2407
  %v2537 = vpack.c.b16 %v2410, %v2409
  %v2538 = vpack.c.b16 %v2412, %v2411
  %v2539 = vpack.c.b16 %v2414, %v2413
  %v2540 = vpack.c.b16 %v2416, %v2415
  %v2541 = vpack.c.b16 %v2418, %v2417
  %v2542 = vpack.c.b16 %v2420, %v2419
  %v2543 = vpack.c.b16 %v2422, %v2421
  %v2544 = vpack.c.b16 %v2424, %v2423
  %v2545 = vpack.c.b16 %v2426, %v2425
  %v2546 = vpack.c.b16 %v2428, %v2427
  %v2547 = vpack.c.b16 %v2430, %v2429
  %v2548 = vpack.c.b16 %v2432, %v2431
  %v2549 = vpack.c.b16 %v2434, %v2433
  %v2550 = vpack.c.b16 %v2436, %v2435
  %v2551 = vpack.c.b16 %v2438, %v2437
  %v2552 = vpack.c.b16 %v2440, %v2439
  %v2553 = vpack.c.b16 %v2442, %v2441
  %v2554 = vpack.c.b16 %v2444, %v2443
  %v2555 = vpack.c.b16 %v2446, %v2445
  %v2556 = vpack.c.b16 %v2448, %v2447
  %v2557 = vpack.c.b16 %v2450, %v2449
  %v2558 = vpack.c.b16 %v2452, %v2451
  %v2559 = vpack.c.b16 %v2454, %v2453
  %v2560 = vpack.c.b16 %v2456, %v2455
  %v2561 = vpack.c.b16 %v2458, %v2457
  %v2562 = vpack.c.b16 %v2460, %v2459
  %v2563 = vpack.c.b16 %v2462, %v2461
  %v2564 = vpack.c.b16 %v2464, %v2463
  %v2565 = vpack.c.b16 %v2466, %v2465
  %v2566 = vpack.c.b16 %v2468, %v2467
  %v2567 = vpack.c.b16 %v2470, %v2469
  %v2568 = vpack.c.b16 %v2472, %v2471
  %v2569 = vpack.c.b16 %v2474, %v2473
  %v2570 = vpack.c.b16 %v2476, %v2475
  %v2571 = vpack.c.b16 %v2478, %v2477
  %v2572 = vpack.c.b16 %v2480, %v2479
  %v2573 = vpack.c.b16 %v2482, %v2481
  %v2574 = vpack.c.b16 %v2484, %v2483
  %v2575 = vpack.c.b16 %v2486, %v2485
  %v2576 = vpack.c.b16 %v2488, %v2487
  %v2577 = vpack.c.b16 %v2490, %v2489
  %v2578 = vpack.c.b16 %v2492, %v2491
  %v2579 = vpack.c.b16 %v2494, %v2493
  %v2580 = vpack.c.b16 %v2496, %v2495
  %v2581 = vpack.c.b16 %v2498, %v2497
  %v2582 = vpack.c.b16 %v2500, %v2499
  %v2583 = vpack.c.b16 %v2502, %v2501
  %v2584 = vpack.c.b16 %v2504, %v2503
  %v2585 = vpack.c.b16 %v2506, %v2505
  %v2586 = vpack.c.b16 %v2508, %v2507
  %v2587 = vpack.c.b16 %v2510, %v2509
  %v2588 = vpack.c.b16 %v2512, %v2511
  %v2589 = vpack.c.b16 %v2514, %v2513
  %v2590 = vpack.c.b16 %v2516, %v2515
  %v2591 = vpack.c.b16 %v2518, %v2517
  %v2592 = vpack.c.b16 %v2520, %v2519
  %2665 = vmatprep.subr.bf16.mxu0 0
  %2666 = vmatpush1.bf16.msra.mxu0 %v2528
  %2667 = vmatprep.subr.bf16.mxu0 0
  %2668 = vmatpush1.bf16.msra.mxu0 %v2527
  %2669 = vmatprep.subr.bf16.mxu0 0
  %2670 = vmatpush1.bf16.msra.mxu0 %v2526
  %2671 = vmatprep.subr.bf16.mxu0 0
  %2672 = vmatpush1.bf16.msra.mxu0 %v2525
  %2673 = vmatprep.subr.bf16.mxu0 0
  %2674 = vmatpush1.bf16.msra.mxu0 %v2524
  %2675 = vmatprep.subr.bf16.mxu0 0
  %2676 = vmatpush1.bf16.msra.mxu0 %v2523
  %2677 = vmatprep.subr.bf16.mxu0 0
  %2678 = vmatpush1.bf16.msra.mxu0 %v2522
  %2679 = vmatprep.subr.bf16.mxu0 0
  %2680 = vmatpush1.bf16.msra.mxu0 %v2521
  %2681 = vmatprep.subr.bf16.mxu0 0
  %2682 = vmatpush2.bf16.msra.mxu0 %v2536
  %2683 = vmatprep.subr.bf16.mxu0 0
  %2684 = vmatpush2.bf16.msra.mxu0 %v2535
  %2685 = vmatprep.subr.bf16.mxu0 0
  %2686 = vmatpush2.bf16.msra.mxu0 %v2534
  %2687 = vmatprep.subr.bf16.mxu0 0
  %2688 = vmatpush2.bf16.msra.mxu0 %v2533
  %2689 = vmatprep.subr.bf16.mxu0 0
  %2690 = vmatpush2.bf16.msra.mxu0 %v2532
  %2691 = vmatprep.subr.bf16.mxu0 0
  %2692 = vmatpush2.bf16.msra.mxu0 %v2531
  %2693 = vmatprep.subr.bf16.mxu0 0
  %2694 = vmatpush2.bf16.msra.mxu0 %v2530
  %2695 = vmatprep.subr.bf16.mxu0 0
  %2696 = vmatpush2.bf16.msra.mxu0 %v2529
  %2697 = vmatprep.mubr.bf16.mxu0 %v1972
  %2698 = vmatmul.mubr.bf16.gmra.mxu0 %v1971
  %v2699 = vpop.f32.mrf.mxu0
  %v2700 = vadd.f32 %v2231, %v2699
  %v2701 = vpop.f32.mrf.mxu0
  %v2702 = vpop.f32.mrf.mxu0
  %v2703 = vadd.f32 %v2231, %v2702
  %v2704 = vpop.f32.mrf.mxu0
  %2705 = vmatprep.mubr.bf16.mxu0 %v1973
  %2706 = vmatmul.mubr.bf16.gmra.mxu0 %v1972
  %v2707 = vpop.f32.mrf.mxu0
  %v2708 = vadd.f32 %v2231, %v2707
  %v2709 = vpop.f32.mrf.mxu0
  %v2710 = vpop.f32.mrf.mxu0
  %v2711 = vadd.f32 %v2231, %v2710
  %v2712 = vpop.f32.mrf.mxu0
  %2713 = vmatprep.mubr.bf16.mxu0 %v1974
  %2714 = vmatmul.mubr.bf16.gmra.mxu0 %v1973
  %v2715 = vpop.f32.mrf.mxu0
  %v2716 = vadd.f32 %v2231, %v2715
  %v2717 = vpop.f32.mrf.mxu0
  %v2718 = vpop.f32.mrf.mxu0
  %v2719 = vadd.f32 %v2231, %v2718
  %v2720 = vpop.f32.mrf.mxu0
  %2721 = vmatprep.mubr.bf16.mxu0 %v1979
  %2722 = vmatmul.mubr.bf16.gmra.mxu0 %v1974
  %v2723 = vpop.f32.mrf.mxu0
  %v2724 = vadd.f32 %v2231, %v2723
  %v2725 = vpop.f32.mrf.mxu0
  %v2726 = vpop.f32.mrf.mxu0
  %v2727 = vadd.f32 %v2231, %v2726
  %v2728 = vpop.f32.mrf.mxu0
  %2729 = vmatprep.mubr.bf16.mxu0 %v1976
  %2730 = vmatmul.mubr.bf16.gmra.mxu0 %v1975
  %v2731 = vpop.f32.mrf.mxu0
  %v2732 = vadd.f32 %v2231, %v2731
  %v2733 = vpop.f32.mrf.mxu0
  %v2734 = vpop.f32.mrf.mxu0
  %v2735 = vadd.f32 %v2231, %v2734
  %v2736 = vpop.f32.mrf.mxu0
  %2737 = vmatprep.mubr.bf16.mxu0 %v1977
  %2738 = vmatmul.mubr.bf16.gmra.mxu0 %v1976
  %v2739 = vpop.f32.mrf.mxu0
  %v2740 = vadd.f32 %v2231, %v2739
  %v2741 = vpop.f32.mrf.mxu0
  %v2742 = vpop.f32.mrf.mxu0
  %v2743 = vadd.f32 %v2231, %v2742
  %v2744 = vpop.f32.mrf.mxu0
  %2745 = vmatprep.mubr.bf16.mxu0 %v1978
  %2746 = vmatmul.mubr.bf16.gmra.mxu0 %v1977
  %v2747 = vpop.f32.mrf.mxu0
  %v2748 = vadd.f32 %v2231, %v2747
  %v2749 = vpop.f32.mrf.mxu0
  %v2750 = vpop.f32.mrf.mxu0
  %v2751 = vadd.f32 %v2231, %v2750
  %v2752 = vpop.f32.mrf.mxu0
  %2753 = vmatprep.mubr.bf16.mxu0 %v1980
  %2754 = vmatmul.mubr.bf16.gmra.mxu0 %v1978
  %v2755 = vpop.f32.mrf.mxu0
  %v2756 = vadd.f32 %v2231, %v2755
  %v2757 = vpop.f32.mrf.mxu0
  %v2758 = vpop.f32.mrf.mxu0
  %v2759 = vadd.f32 %v2231, %v2758
  %v2760 = vpop.f32.mrf.mxu0
  %2761 = vdwg.mxu0
  %2762 = vmatprep.subr.bf16.mxu0 0
  %2763 = vmatpush1.bf16.msra.mxu0 %v2544
  %2764 = vmatprep.subr.bf16.mxu0 0
  %2765 = vmatpush1.bf16.msra.mxu0 %v2543
  %2766 = vmatprep.subr.bf16.mxu0 0
  %2767 = vmatpush1.bf16.msra.mxu0 %v2542
  %2768 = vmatprep.subr.bf16.mxu0 0
  %2769 = vmatpush1.bf16.msra.mxu0 %v2541
  %2770 = vmatprep.subr.bf16.mxu0 0
  %2771 = vmatpush1.bf16.msra.mxu0 %v2540
  %2772 = vmatprep.subr.bf16.mxu0 0
  %2773 = vmatpush1.bf16.msra.mxu0 %v2539
  %2774 = vmatprep.subr.bf16.mxu0 0
  %2775 = vmatpush1.bf16.msra.mxu0 %v2538
  %2776 = vmatprep.subr.bf16.mxu0 0
  %2777 = vmatpush1.bf16.msra.mxu0 %v2537
  %2778 = vmatprep.subr.bf16.mxu0 0
  %2779 = vmatpush2.bf16.msra.mxu0 %v2552
  %2780 = vmatprep.subr.bf16.mxu0 0
  %2781 = vmatpush2.bf16.msra.mxu0 %v2551
  %2782 = vmatprep.subr.bf16.mxu0 0
  %2783 = vmatpush2.bf16.msra.mxu0 %v2550
  %2784 = vmatprep.subr.bf16.mxu0 0
  %2785 = vmatpush2.bf16.msra.mxu0 %v2549
  %2786 = vmatprep.subr.bf16.mxu0 0
  %2787 = vmatpush2.bf16.msra.mxu0 %v2548
  %2788 = vmatprep.subr.bf16.mxu0 0
  %2789 = vmatpush2.bf16.msra.mxu0 %v2547
  %2790 = vmatprep.subr.bf16.mxu0 0
  %2791 = vmatpush2.bf16.msra.mxu0 %v2546
  %2792 = vmatprep.subr.bf16.mxu0 0
  %2793 = vmatpush2.bf16.msra.mxu0 %v2545
  %2794 = vmatprep.mubr.bf16.mxu0 %v1983
  %2795 = vmatmul.mubr.bf16.gmra.mxu0 %v1973
  %v2796 = vpop.f32.mrf.mxu0
  %v2797 = vadd.f32 %v2700, %v2796
  %v2798 = vpop.f32.mrf.mxu0
  %v2799 = vpop.f32.mrf.mxu0
  %v2800 = vadd.f32 %v2703, %v2799
  %v2801 = vpop.f32.mrf.mxu0
  %2802 = vmatprep.mubr.bf16.mxu0 %v1984
  %2803 = vmatmul.mubr.bf16.gmra.mxu0 %v1974
  %v2804 = vpop.f32.mrf.mxu0
  %v2805 = vadd.f32 %v2708, %v2804
  %v2806 = vpop.f32.mrf.mxu0
  %v2807 = vpop.f32.mrf.mxu0
  %v2808 = vadd.f32 %v2711, %v2807
  %v2809 = vpop.f32.mrf.mxu0
  %2810 = vmatprep.mubr.bf16.mxu0 %v1985
  %2811 = vmatmul.mubr.bf16.gmra.mxu0 %v1979
  %v2812 = vpop.f32.mrf.mxu0
  %v2813 = vadd.f32 %v2716, %v2812
  %v2814 = vpop.f32.mrf.mxu0
  %v2815 = vpop.f32.mrf.mxu0
  %v2816 = vadd.f32 %v2719, %v2815
  %v2817 = vpop.f32.mrf.mxu0
  %2818 = vmatprep.mubr.bf16.mxu0 %v1986
  %2819 = vmatmul.mubr.bf16.gmra.mxu0 %v1981
  %v2820 = vpop.f32.mrf.mxu0
  %v2821 = vadd.f32 %v2724, %v2820
  %v2822 = vpop.f32.mrf.mxu0
  %v2823 = vpop.f32.mrf.mxu0
  %v2824 = vadd.f32 %v2727, %v2823
  %v2825 = vpop.f32.mrf.mxu0
  %2826 = vmatprep.mubr.bf16.mxu0 %v1987
  %2827 = vmatmul.mubr.bf16.gmra.mxu0 %v1977
  %v2828 = vpop.f32.mrf.mxu0
  %v2829 = vadd.f32 %v2732, %v2828
  %v2830 = vpop.f32.mrf.mxu0
  %v2831 = vpop.f32.mrf.mxu0
  %v2832 = vadd.f32 %v2735, %v2831
  %v2833 = vpop.f32.mrf.mxu0
  %2834 = vmatprep.mubr.bf16.mxu0 %v1988
  %2835 = vmatmul.mubr.bf16.gmra.mxu0 %v1978
  %v2836 = vpop.f32.mrf.mxu0
  %v2837 = vadd.f32 %v2740, %v2836
  %v2838 = vpop.f32.mrf.mxu0
  %v2839 = vpop.f32.mrf.mxu0
  %v2840 = vadd.f32 %v2743, %v2839
  %v2841 = vpop.f32.mrf.mxu0
  %2842 = vmatprep.mubr.bf16.mxu0 %v1989
  %2843 = vmatmul.mubr.bf16.gmra.mxu0 %v1980
  %v2844 = vpop.f32.mrf.mxu0
  %v2845 = vadd.f32 %v2748, %v2844
  %v2846 = vpop.f32.mrf.mxu0
  %v2847 = vpop.f32.mrf.mxu0
  %v2848 = vadd.f32 %v2751, %v2847
  %v2849 = vpop.f32.mrf.mxu0
  %2850 = vmatprep.mubr.bf16.mxu0 %v1990
  %2851 = vmatmul.mubr.bf16.gmra.mxu0 %v1982
  %v2852 = vpop.f32.mrf.mxu0
  %v2853 = vadd.f32 %v2756, %v2852
  %v2854 = vpop.f32.mrf.mxu0
  %v2855 = vpop.f32.mrf.mxu0
  %v2856 = vadd.f32 %v2759, %v2855
  %v2857 = vpop.f32.mrf.mxu0
  %2858 = vdwg.mxu0
  %2859 = vmatprep.subr.bf16.mxu0 0
  %2860 = vmatpush1.bf16.msra.mxu0 %v2560
  %2861 = vmatprep.subr.bf16.mxu0 0
  %2862 = vmatpush1.bf16.msra.mxu0 %v2559
  %2863 = vmatprep.subr.bf16.mxu0 0
  %2864 = vmatpush1.bf16.msra.mxu0 %v2558
  %2865 = vmatprep.subr.bf16.mxu0 0
  %2866 = vmatpush1.bf16.msra.mxu0 %v2557
  %2867 = vmatprep.subr.bf16.mxu0 0
  %2868 = vmatpush1.bf16.msra.mxu0 %v2556
  %2869 = vmatprep.subr.bf16.mxu0 0
  %2870 = vmatpush1.bf16.msra.mxu0 %v2555
  %2871 = vmatprep.subr.bf16.mxu0 0
  %2872 = vmatpush1.bf16.msra.mxu0 %v2554
  %2873 = vmatprep.subr.bf16.mxu0 0
  %2874 = vmatpush1.bf16.msra.mxu0 %v2553
  %2875 = vmatprep.subr.bf16.mxu0 0
  %2876 = vmatpush2.bf16.msra.mxu0 %v2568
  %2877 = vmatprep.subr.bf16.mxu0 0
  %2878 = vmatpush2.bf16.msra.mxu0 %v2567
  %2879 = vmatprep.subr.bf16.mxu0 0
  %2880 = vmatpush2.bf16.msra.mxu0 %v2566
  %2881 = vmatprep.subr.bf16.mxu0 0
  %2882 = vmatpush2.bf16.msra.mxu0 %v2565
  %2883 = vmatprep.subr.bf16.mxu0 0
  %2884 = vmatpush2.bf16.msra.mxu0 %v2564
  %2885 = vmatprep.subr.bf16.mxu0 0
  %2886 = vmatpush2.bf16.msra.mxu0 %v2563
  %2887 = vmatprep.subr.bf16.mxu0 0
  %2888 = vmatpush2.bf16.msra.mxu0 %v2562
  %2889 = vmatprep.subr.bf16.mxu0 0
  %2890 = vmatpush2.bf16.msra.mxu0 %v2561
  %2891 = vmatprep.mubr.bf16.mxu0 %v1985
  %2892 = vmatmul.mubr.bf16.gmra.mxu0 %v1984
  %v2893 = vpop.f32.mrf.mxu0
  %v2894 = vadd.f32 %v2797, %v2893
  %v2895 = vpop.f32.mrf.mxu0
  %v2896 = vpop.f32.mrf.mxu0
  %v2897 = vadd.f32 %v2800, %v2896
  %v2898 = vpop.f32.mrf.mxu0
  %2899 = vmatprep.mubr.bf16.mxu0 %v1986
  %2900 = vmatmul.mubr.bf16.gmra.mxu0 %v1985
  %v2901 = vpop.f32.mrf.mxu0
  %v2902 = vadd.f32 %v2805, %v2901
  %v2903 = vpop.f32.mrf.mxu0
  %v2904 = vpop.f32.mrf.mxu0
  %v2905 = vadd.f32 %v2808, %v2904
  %v2906 = vpop.f32.mrf.mxu0
  %2907 = vmatprep.mubr.bf16.mxu0 %v1991
  %2908 = vmatmul.mubr.bf16.gmra.mxu0 %v1986
  %v2909 = vpop.f32.mrf.mxu0
  %v2910 = vadd.f32 %v2813, %v2909
  %v2911 = vpop.f32.mrf.mxu0
  %v2912 = vpop.f32.mrf.mxu0
  %v2913 = vadd.f32 %v2816, %v2912
  %v2914 = vpop.f32.mrf.mxu0
  %2915 = vmatprep.mubr.bf16.mxu0 %v1993
  %2916 = vmatmul.mubr.bf16.gmra.mxu0 %v1991
  %v2917 = vpop.f32.mrf.mxu0
  %v2918 = vadd.f32 %v2821, %v2917
  %v2919 = vpop.f32.mrf.mxu0
  %v2920 = vpop.f32.mrf.mxu0
  %v2921 = vadd.f32 %v2824, %v2920
  %v2922 = vpop.f32.mrf.mxu0
  %2923 = vmatprep.mubr.bf16.mxu0 %v1989
  %2924 = vmatmul.mubr.bf16.gmra.mxu0 %v1988
  %v2925 = vpop.f32.mrf.mxu0
  %v2926 = vadd.f32 %v2829, %v2925
  %v2927 = vpop.f32.mrf.mxu0
  %v2928 = vpop.f32.mrf.mxu0
  %v2929 = vadd.f32 %v2832, %v2928
  %v2930 = vpop.f32.mrf.mxu0
  %2931 = vmatprep.mubr.bf16.mxu0 %v1990
  %2932 = vmatmul.mubr.bf16.gmra.mxu0 %v1989
  %v2933 = vpop.f32.mrf.mxu0
  %v2934 = vadd.f32 %v2837, %v2933
  %v2935 = vpop.f32.mrf.mxu0
  %v2936 = vpop.f32.mrf.mxu0
  %v2937 = vadd.f32 %v2840, %v2936
  %v2938 = vpop.f32.mrf.mxu0
  %2939 = vmatprep.mubr.bf16.mxu0 %v1992
  %2940 = vmatmul.mubr.bf16.gmra.mxu0 %v1990
  %v2941 = vpop.f32.mrf.mxu0
  %v2942 = vadd.f32 %v2845, %v2941
  %v2943 = vpop.f32.mrf.mxu0
  %v2944 = vpop.f32.mrf.mxu0
  %v2945 = vadd.f32 %v2848, %v2944
  %v2946 = vpop.f32.mrf.mxu0
  %2947 = vmatprep.mubr.bf16.mxu0 %v1994
  %2948 = vmatmul.mubr.bf16.gmra.mxu0 %v1992
  %v2949 = vpop.f32.mrf.mxu0
  %v2950 = vadd.f32 %v2853, %v2949
  %v2951 = vpop.f32.mrf.mxu0
  %v2952 = vpop.f32.mrf.mxu0
  %v2953 = vadd.f32 %v2856, %v2952
  %v2954 = vpop.f32.mrf.mxu0
  %2955 = vdwg.mxu0
  %2956 = vmatprep.subr.bf16.mxu0 0
  %2957 = vmatpush1.bf16.msra.mxu0 %v2576
  %2958 = vmatprep.subr.bf16.mxu0 0
  %2959 = vmatpush1.bf16.msra.mxu0 %v2575
  %2960 = vmatprep.subr.bf16.mxu0 0
  %2961 = vmatpush1.bf16.msra.mxu0 %v2574
  %2962 = vmatprep.subr.bf16.mxu0 0
  %2963 = vmatpush1.bf16.msra.mxu0 %v2573
  %2964 = vmatprep.subr.bf16.mxu0 0
  %2965 = vmatpush1.bf16.msra.mxu0 %v2572
  %2966 = vmatprep.subr.bf16.mxu0 0
  %2967 = vmatpush1.bf16.msra.mxu0 %v2571
  %2968 = vmatprep.subr.bf16.mxu0 0
  %2969 = vmatpush1.bf16.msra.mxu0 %v2570
  %2970 = vmatprep.subr.bf16.mxu0 0
  %2971 = vmatpush1.bf16.msra.mxu0 %v2569
  %2972 = vmatprep.subr.bf16.mxu0 0
  %2973 = vmatpush2.bf16.msra.mxu0 %v2584
  %2974 = vmatprep.subr.bf16.mxu0 0
  %2975 = vmatpush2.bf16.msra.mxu0 %v2583
  %2976 = vmatprep.subr.bf16.mxu0 0
  %2977 = vmatpush2.bf16.msra.mxu0 %v2582
  %2978 = vmatprep.subr.bf16.mxu0 0
  %2979 = vmatpush2.bf16.msra.mxu0 %v2581
  %2980 = vmatprep.subr.bf16.mxu0 0
  %2981 = vmatpush2.bf16.msra.mxu0 %v2580
  %2982 = vmatprep.subr.bf16.mxu0 0
  %2983 = vmatpush2.bf16.msra.mxu0 %v2579
  %2984 = vmatprep.subr.bf16.mxu0 0
  %2985 = vmatpush2.bf16.msra.mxu0 %v2578
  %2986 = vmatprep.subr.bf16.mxu0 0
  %2987 = vmatpush2.bf16.msra.mxu0 %v2577
  %2988 = vmatprep.mubr.bf16.mxu0 %v2069
  %2989 = vmatmul.mubr.bf16.gmra.mxu0 %v2068
  %v2990 = vpop.f32.mrf.mxu0
  %v2991 = vadd.f32 %v2894, %v2990
  %v2992 = vpop.f32.mrf.mxu0
  %v2993 = vpop.f32.mrf.mxu0
  %v2994 = vadd.f32 %v2897, %v2993
  %v2995 = vpop.f32.mrf.mxu0
  %2996 = vmatprep.mubr.bf16.mxu0 %v2070
  %2997 = vmatmul.mubr.bf16.gmra.mxu0 %v2069
  %v2998 = vpop.f32.mrf.mxu0
  %v2999 = vadd.f32 %v2902, %v2998
  %v3000 = vpop.f32.mrf.mxu0
  %v3001 = vpop.f32.mrf.mxu0
  %v3002 = vadd.f32 %v2905, %v3001
  %v3003 = vpop.f32.mrf.mxu0
  %3004 = vmatprep.mubr.bf16.mxu0 %v2071
  %3005 = vmatmul.mubr.bf16.gmra.mxu0 %v2070
  %v3006 = vpop.f32.mrf.mxu0
  %v3007 = vadd.f32 %v2910, %v3006
  %v3008 = vpop.f32.mrf.mxu0
  %v3009 = vpop.f32.mrf.mxu0
  %v3010 = vadd.f32 %v2913, %v3009
  %v3011 = vpop.f32.mrf.mxu0
  %3012 = vmatprep.mubr.bf16.mxu0 %v2076
  %3013 = vmatmul.mubr.bf16.gmra.mxu0 %v2071
  %v3014 = vpop.f32.mrf.mxu0
  %v3015 = vadd.f32 %v2918, %v3014
  %v3016 = vpop.f32.mrf.mxu0
  %v3017 = vpop.f32.mrf.mxu0
  %v3018 = vadd.f32 %v2921, %v3017
  %v3019 = vpop.f32.mrf.mxu0
  %3020 = vmatprep.mubr.bf16.mxu0 %v2073
  %3021 = vmatmul.mubr.bf16.gmra.mxu0 %v2072
  %v3022 = vpop.f32.mrf.mxu0
  %v3023 = vadd.f32 %v2926, %v3022
  %v3024 = vpop.f32.mrf.mxu0
  %v3025 = vpop.f32.mrf.mxu0
  %v3026 = vadd.f32 %v2929, %v3025
  %v3027 = vpop.f32.mrf.mxu0
  %3028 = vmatprep.mubr.bf16.mxu0 %v2074
  %3029 = vmatmul.mubr.bf16.gmra.mxu0 %v2073
  %v3030 = vpop.f32.mrf.mxu0
  %v3031 = vadd.f32 %v2934, %v3030
  %v3032 = vpop.f32.mrf.mxu0
  %v3033 = vpop.f32.mrf.mxu0
  %v3034 = vadd.f32 %v2937, %v3033
  %v3035 = vpop.f32.mrf.mxu0
  %3036 = vmatprep.mubr.bf16.mxu0 %v2075
  %3037 = vmatmul.mubr.bf16.gmra.mxu0 %v2074
  %v3038 = vpop.f32.mrf.mxu0
  %v3039 = vadd.f32 %v2942, %v3038
  %v3040 = vpop.f32.mrf.mxu0
  %v3041 = vpop.f32.mrf.mxu0
  %v3042 = vadd.f32 %v2945, %v3041
  %v3043 = vpop.f32.mrf.mxu0
  %3044 = vmatprep.mubr.bf16.mxu0 %v2077
  %3045 = vmatmul.mubr.bf16.gmra.mxu0 %v2075
  %v3046 = vpop.f32.mrf.mxu0
  %v3047 = vadd.f32 %v2950, %v3046
  %v3048 = vpop.f32.mrf.mxu0
  %v3049 = vpop.f32.mrf.mxu0
  %v3050 = vadd.f32 %v2953, %v3049
  %v3051 = vpop.f32.mrf.mxu0
  %3052 = vdwg.mxu0
  %3053 = vmatprep.subr.bf16.mxu0 0
  %3054 = vmatpush1.bf16.msra.mxu0 %v2592
  %3055 = vmatprep.subr.bf16.mxu0 0
  %3056 = vmatpush1.bf16.msra.mxu0 %v2591
  %3057 = vmatprep.subr.bf16.mxu0 0
  %3058 = vmatpush1.bf16.msra.mxu0 %v2590
  %3059 = vmatprep.subr.bf16.mxu0 0
  %3060 = vmatpush1.bf16.msra.mxu0 %v2589
  %3061 = vmatprep.subr.bf16.mxu0 0
  %3062 = vmatpush1.bf16.msra.mxu0 %v2588
  %3063 = vmatprep.subr.bf16.mxu0 0
  %3064 = vmatpush1.bf16.msra.mxu0 %v2587
  %3065 = vmatprep.subr.bf16.mxu0 0
  %3066 = vmatpush1.bf16.msra.mxu0 %v2586
  %3067 = vmatprep.subr.bf16.mxu0 0
  %3068 = vmatpush1.bf16.msra.mxu0 %v2585
  %3069 = vmatprep.subr.bf16.mxu0 0
  %3070 = vmatpush2.bf16.msra.mxu0 0
  %3071 = vmatprep.subr.bf16.mxu0 0
  %3072 = vmatpush2.bf16.msra.mxu0 0
  %3073 = vmatprep.subr.bf16.mxu0 0
  %3074 = vmatpush2.bf16.msra.mxu0 0
  %3075 = vmatprep.subr.bf16.mxu0 0
  %3076 = vmatpush2.bf16.msra.mxu0 0
  %3077 = vmatprep.subr.bf16.mxu0 0
  %3078 = vmatpush2.bf16.msra.mxu0 0
  %3079 = vmatprep.subr.bf16.mxu0 0
  %3080 = vmatpush2.bf16.msra.mxu0 0
  %3081 = vmatprep.subr.bf16.mxu0 0
  %3082 = vmatpush2.bf16.msra.mxu0 0
  %3083 = vmatprep.subr.bf16.mxu0 0
  %3084 = vmatpush2.bf16.msra.mxu0 0
  %3085 = vmatprep.mubr.bf16.mxu0 0
  %3086 = vmatmul.mubr.bf16.gmra.mxu0 %v2070
  %v3087 = vpop.f32.mrf.mxu0
  %v3088 = vadd.f32 %v2991, %v3087
  %v3089 = vpop.f32.mrf.mxu0
  %v3090 = vpop.f32.mrf.mxu0
  %v3091 = vadd.f32 %v2994, %v3090
  %v3092 = vpop.f32.mrf.mxu0
  %3093 = vmatprep.mubr.bf16.mxu0 0
  %3094 = vmatmul.mubr.bf16.gmra.mxu0 %v2071
  %v3095 = vpop.f32.mrf.mxu0
  %v3096 = vadd.f32 %v2999, %v3095
  %v3097 = vpop.f32.mrf.mxu0
  %v3098 = vpop.f32.mrf.mxu0
  %v3099 = vadd.f32 %v3002, %v3098
  %v3100 = vpop.f32.mrf.mxu0
  %3101 = vmatprep.mubr.bf16.mxu0 0
  %3102 = vmatmul.mubr.bf16.gmra.mxu0 %v2076
  %v3103 = vpop.f32.mrf.mxu0
  %v3104 = vadd.f32 %v3007, %v3103
  %v3105 = vpop.f32.mrf.mxu0
  %v3106 = vpop.f32.mrf.mxu0
  %v3107 = vadd.f32 %v3010, %v3106
  %v3108 = vpop.f32.mrf.mxu0
  %3109 = vmatprep.mubr.bf16.mxu0 0
  %3110 = vmatmul.mubr.bf16.gmra.mxu0 %v2078
  %v3111 = vpop.f32.mrf.mxu0
  %v3112 = vadd.f32 %v3015, %v3111
  %v3113 = vpop.f32.mrf.mxu0
  %v3114 = vpop.f32.mrf.mxu0
  %v3115 = vadd.f32 %v3018, %v3114
  %v3116 = vpop.f32.mrf.mxu0
  %3117 = vmatprep.mubr.bf16.mxu0 0
  %3118 = vmatmul.mubr.bf16.gmra.mxu0 %v2074
  %v3119 = vpop.f32.mrf.mxu0
  %v3120 = vadd.f32 %v3023, %v3119
  %v3121 = vpop.f32.mrf.mxu0
  %v3122 = vpop.f32.mrf.mxu0
  %v3123 = vadd.f32 %v3026, %v3122
  %v3124 = vpop.f32.mrf.mxu0
  %3125 = vmatprep.mubr.bf16.mxu0 0
  %3126 = vmatmul.mubr.bf16.gmra.mxu0 %v2075
  %v3127 = vpop.f32.mrf.mxu0
  %v3128 = vadd.f32 %v3031, %v3127
  %v3129 = vpop.f32.mrf.mxu0
  %v3130 = vpop.f32.mrf.mxu0
  %v3131 = vadd.f32 %v3034, %v3130
  %v3132 = vpop.f32.mrf.mxu0
  %3133 = vmatprep.mubr.bf16.mxu0 0
  %3134 = vmatmul.mubr.bf16.gmra.mxu0 %v2077
  %v3135 = vpop.f32.mrf.mxu0
  %v3136 = vadd.f32 %v3039, %v3135
  %v3137 = vpop.f32.mrf.mxu0
  %v3138 = vpop.f32.mrf.mxu0
  %v3139 = vadd.f32 %v3042, %v3138
  %v3140 = vpop.f32.mrf.mxu0
  %3141 = vmatprep.mubr.bf16.mxu0 0
  %3142 = vmatmul.mubr.bf16.gmra.mxu0 %v2079
  %v3143 = vpop.f32.mrf.mxu0
  %v3144 = vadd.f32 %v3047, %v3143
  %v3145 = vpop.f32.mrf.mxu0
  %v3146 = vpop.f32.mrf.mxu0
  %v3147 = vadd.f32 %v3050, %v3146
  %v3148 = vpop.f32.mrf.mxu0
  %3149 = vdwg.mxu0
  %v3150 = vadd.f32 %v3088, %v3091
  %v3151 = vadd.f32 %v3150, %v3096
  %v3152 = vadd.f32 %v3151, %v3099
  %v3153 = vadd.f32 %v3152, %v3104
  %v3154 = vadd.f32 %v3153, %v3107
  %v3155 = vadd.f32 %v3154, %v3112
  %v3156 = vadd.f32 %v3155, %v3115
  %v3157 = vadd.f32 %v3156, %v3120
  %v3158 = vadd.f32 %v3157, %v3123
  %v3159 = vadd.f32 %v3158, %v3128
  %v3160 = vadd.f32 %v3159, %v3131
  %v3161 = vadd.f32 %v3160, %v3136
  %v3162 = vadd.f32 %v3161, %v3139
  %v3163 = vadd.f32 %v3162, %v3144
  %v3164 = vadd.f32 %v3163, %v3147
  %v3165 = vrot.slane %v3164, 4
  %v3166 = vadd.f32 %v3164, %v3165
  %v3167 = vrot.slane %v3166, 2
  %v3168 = vadd.f32 %v3166, %v3167
  %v3169 = vrot.slane %v3168, 1
  %v3170 = vadd.f32 %v3168, %v3169
  %v3171 = vmul.f32 %v3088, %v3088
  %v3172 = vmul.f32 %v3091, %v3091
  %v3173 = vmul.f32 %v3096, %v3096
  %v3174 = vmul.f32 %v3099, %v3099
  %v3175 = vmul.f32 %v3104, %v3104
  %v3176 = vmul.f32 %v3107, %v3107
  %v3177 = vmul.f32 %v3112, %v3112
  %v3178 = vmul.f32 %v3115, %v3115
  %v3179 = vmul.f32 %v3120, %v3120
  %v3180 = vmul.f32 %v3123, %v3123
  %v3181 = vmul.f32 %v3128, %v3128
  %v3182 = vmul.f32 %v3131, %v3131
  %v3183 = vmul.f32 %v3136, %v3136
  %v3184 = vmul.f32 %v3139, %v3139
  %v3185 = vmul.f32 %v3144, %v3144
  %v3186 = vmul.f32 %v3147, %v3147
  %v3187 = vadd.f32 %v3171, %v3172
  %v3188 = vadd.f32 %v3187, %v3173
  %v3189 = vadd.f32 %v3188, %v3174
  %v3190 = vadd.f32 %v3189, %v3175
  %v3191 = vadd.f32 %v3190, %v3176
  %v3192 = vadd.f32 %v3191, %v3177
  %v3193 = vadd.f32 %v3192, %v3178
  %v3194 = vadd.f32 %v3193, %v3179
  %v3195 = vadd.f32 %v3194, %v3180
  %v3196 = vadd.f32 %v3195, %v3181
  %v3197 = vadd.f32 %v3196, %v3182
  %v3198 = vadd.f32 %v3197, %v3183
  %v3199 = vadd.f32 %v3198, %v3184
  %v3200 = vadd.f32 %v3199, %v3185
  %v3201 = vadd.f32 %v3200, %v3186
  %v3202 = vrot.slane %v3201, 4
  %v3203 = vadd.f32 %v3201, %v3202
  %v3204 = vrot.slane %v3203, 2
  %v3205 = vadd.f32 %v3203, %v3204
  %v3206 = vrot.slane %v3205, 1
  %v3207 = vadd.f32 %v3205, %v3206
  %3208 = vmatprep.subr.mxu0 0.0
  %3209 = vmatpush1.msra.mxu0 %v201
  %3210 = vmatprep.subr.mxu0 0.0
  %3211 = vmatpush1.msra.mxu0 %v200
  %3212 = vmatprep.subr.mxu0 0.0
  %3213 = vmatpush1.msra.mxu0 %v199
  %3214 = vmatprep.subr.mxu0 0.0
  %3215 = vmatpush1.msra.mxu0 %v198
  %3216 = vmatprep.subr.mxu0 0.0
  %3217 = vmatpush1.msra.mxu0 %v197
  %3218 = vmatprep.subr.mxu0 0.0
  %3219 = vmatpush1.msra.mxu0 %v196
  %3220 = vmatprep.subr.mxu0 0.0
  %3221 = vmatpush1.msra.mxu0 %v195
  %3222 = vmatprep.subr.mxu0 0.0
  %3223 = vmatpush1.msra.mxu0 %v194
  %3224 = vmatprep.subr.mxu0 0.0
  %3225 = vmatpush1.msra.mxu0 %v193
  %3226 = vmatprep.subr.mxu0 0.0
  %3227 = vmatpush1.msra.mxu0 %v192
  %3228 = vmatprep.subr.mxu0 0.0
  %3229 = vmatpush1.msra.mxu0 %v191
  %3230 = vmatprep.subr.mxu0 0.0
  %3231 = vmatpush1.msra.mxu0 %v190
  %3232 = vmatprep.subr.mxu0 0.0
  %3233 = vmatpush1.msra.mxu0 %v189
  %3234 = vmatprep.subr.mxu0 0.0
  %3235 = vmatpush1.msra.mxu0 %v188
  %3236 = vmatprep.subr.mxu0 0.0
  %3237 = vmatpush1.msra.mxu0 %v187
  %3238 = vmatprep.subr.mxu0 0.0
  %3239 = vmatpush1.msra.mxu0 %v186
  %3240 = vmatprep.subr.mxu0 0.0
  %3241 = vmatpush2.msra.mxu0 0.0
  %3242 = vmatprep.subr.mxu0 0.0
  %3243 = vmatpush2.msra.mxu0 0.0
  %3244 = vmatprep.subr.mxu0 0.0
  %3245 = vmatpush2.msra.mxu0 0.0
  %3246 = vmatprep.subr.mxu0 0.0
  %3247 = vmatpush2.msra.mxu0 0.0
  %3248 = vmatprep.subr.mxu0 0.0
  %3249 = vmatpush2.msra.mxu0 0.0
  %3250 = vmatprep.subr.mxu0 0.0
  %3251 = vmatpush2.msra.mxu0 0.0
  %3252 = vmatprep.subr.mxu0 0.0
  %3253 = vmatpush2.msra.mxu0 0.0
  %3254 = vmatprep.subr.mxu0 0.0
  %3255 = vmatpush2.msra.mxu0 0.0
  %3256 = vmatprep.subr.mxu0 0.0
  %3257 = vmatpush2.msra.mxu0 0.0
  %3258 = vmatprep.subr.mxu0 0.0
  %3259 = vmatpush2.msra.mxu0 0.0
  %3260 = vmatprep.subr.mxu0 0.0
  %3261 = vmatpush2.msra.mxu0 0.0
  %3262 = vmatprep.subr.mxu0 0.0
  %3263 = vmatpush2.msra.mxu0 0.0
  %3264 = vmatprep.subr.mxu0 0.0
  %3265 = vmatpush2.msra.mxu0 0.0
  %3266 = vmatprep.subr.mxu0 0.0
  %3267 = vmatpush2.msra.mxu0 0.0
  %3268 = vmatprep.subr.mxu0 0.0
  %3269 = vmatpush2.msra.mxu0 0.0
  %3270 = vmatprep.subr.mxu0 0.0
  %3271 = vmatpush2.msra.mxu0 0.0
  %3272 = vmatprep.mubr.f32.mxu0 0.0
  %3273 = vmatmul.mubr.f32.gmra.mxu0 %v3170
  %v3274 = vpop.f32.mrf.mxu0
  %v3275 = vadd.f32 0.0, %v3274
  %v3276 = vpop.f32.mrf.mxu0
  %3277 = vdwg.mxu0
  %3278 = vmatprep.subr.mxu0 0.0
  %3279 = vmatpush1.msra.mxu0 %v201
  %3280 = vmatprep.subr.mxu0 0.0
  %3281 = vmatpush1.msra.mxu0 %v200
  %3282 = vmatprep.subr.mxu0 0.0
  %3283 = vmatpush1.msra.mxu0 %v199
  %3284 = vmatprep.subr.mxu0 0.0
  %3285 = vmatpush1.msra.mxu0 %v198
  %3286 = vmatprep.subr.mxu0 0.0
  %3287 = vmatpush1.msra.mxu0 %v197
  %3288 = vmatprep.subr.mxu0 0.0
  %3289 = vmatpush1.msra.mxu0 %v196
  %3290 = vmatprep.subr.mxu0 0.0
  %3291 = vmatpush1.msra.mxu0 %v195
  %3292 = vmatprep.subr.mxu0 0.0
  %3293 = vmatpush1.msra.mxu0 %v194
  %3294 = vmatprep.subr.mxu0 0.0
  %3295 = vmatpush1.msra.mxu0 %v193
  %3296 = vmatprep.subr.mxu0 0.0
  %3297 = vmatpush1.msra.mxu0 %v192
  %3298 = vmatprep.subr.mxu0 0.0
  %3299 = vmatpush1.msra.mxu0 %v191
  %3300 = vmatprep.subr.mxu0 0.0
  %3301 = vmatpush1.msra.mxu0 %v190
  %3302 = vmatprep.subr.mxu0 0.0
  %3303 = vmatpush1.msra.mxu0 %v189
  %3304 = vmatprep.subr.mxu0 0.0
  %3305 = vmatpush1.msra.mxu0 %v188
  %3306 = vmatprep.subr.mxu0 0.0
  %3307 = vmatpush1.msra.mxu0 %v187
  %3308 = vmatprep.subr.mxu0 0.0
  %3309 = vmatpush1.msra.mxu0 %v186
  %3310 = vmatprep.subr.mxu0 0.0
  %3311 = vmatpush2.msra.mxu0 0.0
  %3312 = vmatprep.subr.mxu0 0.0
  %3313 = vmatpush2.msra.mxu0 0.0
  %3314 = vmatprep.subr.mxu0 0.0
  %3315 = vmatpush2.msra.mxu0 0.0
  %3316 = vmatprep.subr.mxu0 0.0
  %3317 = vmatpush2.msra.mxu0 0.0
  %3318 = vmatprep.subr.mxu0 0.0
  %3319 = vmatpush2.msra.mxu0 0.0
  %3320 = vmatprep.subr.mxu0 0.0
  %3321 = vmatpush2.msra.mxu0 0.0
  %3322 = vmatprep.subr.mxu0 0.0
  %3323 = vmatpush2.msra.mxu0 0.0
  %3324 = vmatprep.subr.mxu0 0.0
  %3325 = vmatpush2.msra.mxu0 0.0
  %3326 = vmatprep.subr.mxu0 0.0
  %3327 = vmatpush2.msra.mxu0 0.0
  %3328 = vmatprep.subr.mxu0 0.0
  %3329 = vmatpush2.msra.mxu0 0.0
  %3330 = vmatprep.subr.mxu0 0.0
  %3331 = vmatpush2.msra.mxu0 0.0
  %3332 = vmatprep.subr.mxu0 0.0
  %3333 = vmatpush2.msra.mxu0 0.0
  %3334 = vmatprep.subr.mxu0 0.0
  %3335 = vmatpush2.msra.mxu0 0.0
  %3336 = vmatprep.subr.mxu0 0.0
  %3337 = vmatpush2.msra.mxu0 0.0
  %3338 = vmatprep.subr.mxu0 0.0
  %3339 = vmatpush2.msra.mxu0 0.0
  %3340 = vmatprep.subr.mxu0 0.0
  %3341 = vmatpush2.msra.mxu0 0.0
  %3342 = vmatprep.mubr.f32.mxu0 0.0
  %3343 = vmatmul.mubr.f32.gmra.mxu0 %v3207
  %v3344 = vpop.f32.mrf.mxu0
  %v3345 = vadd.f32 0.0, %v3344
  %v3346 = vpop.f32.mrf.mxu0
  %3347 = vdwg.mxu0
  %v3348 = vmul.f32 %v3275, %v3275
  %v3349 = vsub.f32 %v3345, %v3348
  %v3350 = vmax.f32 %v3349, 0.0
  %s3351 = scalar_lea.vmem %s3, 1
  %v3352 = vld [vmem:[%s3351] sm:$0x1]
  %v3353 = vadd.f32 %v3350, 1e-05
  %v3354 = vrsqrt.pop %v3353
  %v3355 = vmul.f32 %v3352, %v3354
  %v3356 = vlaneseq
  %v3357 = vshrl.u32 %v3356, 7
  %v3358 = vsub.s32 0, %v3357
  %v3359 = vrot.slane %v3275, %v3358
  %v3360 = vsub.f32 %v3088, %v3359
  %v3361 = vsub.f32 %v3091, %v3359
  %v3362 = vsub.f32 %v3096, %v3359
  %v3363 = vsub.f32 %v3099, %v3359
  %v3364 = vsub.f32 %v3104, %v3359
  %v3365 = vsub.f32 %v3107, %v3359
  %v3366 = vsub.f32 %v3112, %v3359
  %v3367 = vsub.f32 %v3115, %v3359
  %v3368 = vsub.f32 %v3120, %v3359
  %v3369 = vsub.f32 %v3123, %v3359
  %v3370 = vsub.f32 %v3128, %v3359
  %v3371 = vsub.f32 %v3131, %v3359
  %v3372 = vsub.f32 %v3136, %v3359
  %v3373 = vsub.f32 %v3139, %v3359
  %v3374 = vsub.f32 %v3144, %v3359
  %v3375 = vsub.f32 %v3147, %v3359
  %v3377 = vlaneseq
  %v3378 = vshrl.u32 %v3377, 7
  %v3379 = vsub.s32 0, %v3378
  %v3380 = vrot.slane %v3355, %v3379
  %v3382 = vmul.f32 %v3360, %v3380
  %v3383 = vmul.f32 %v3361, %v3380
  %v3384 = vmul.f32 %v3362, %v3380
  %v3385 = vmul.f32 %v3363, %v3380
  %v3386 = vmul.f32 %v3364, %v3380
  %v3387 = vmul.f32 %v3365, %v3380
  %v3388 = vmul.f32 %v3366, %v3380
  %v3389 = vmul.f32 %v3367, %v3380
  %v3390 = vmul.f32 %v3368, %v3380
  %v3391 = vmul.f32 %v3369, %v3380
  %v3392 = vmul.f32 %v3370, %v3380
  %v3393 = vmul.f32 %v3371, %v3380
  %v3394 = vmul.f32 %v3372, %v3380
  %v3395 = vmul.f32 %v3373, %v3380
  %v3396 = vmul.f32 %v3374, %v3380
  %v3397 = vmul.f32 %v3375, %v3380
  %s3398 = scalar_lea.vmem %s4, 1
  %v3399 = vld [vmem:[%s3398] sm:$0x1]
  %v3401 = vlaneseq
  %v3402 = vshrl.u32 %v3401, 7
  %v3403 = vsub.s32 0, %v3402
  %v3404 = vrot.slane %v3399, %v3403
  %v3406 = vadd.f32 %v3382, %v3404
  %v3407 = vadd.f32 %v3383, %v3404
  %v3408 = vadd.f32 %v3384, %v3404
  %v3409 = vadd.f32 %v3385, %v3404
  %v3410 = vadd.f32 %v3386, %v3404
  %v3411 = vadd.f32 %v3387, %v3404
  %v3412 = vadd.f32 %v3388, %v3404
  %v3413 = vadd.f32 %v3389, %v3404
  %v3414 = vadd.f32 %v3390, %v3404
  %v3415 = vadd.f32 %v3391, %v3404
  %v3416 = vadd.f32 %v3392, %v3404
  %v3417 = vadd.f32 %v3393, %v3404
  %v3418 = vadd.f32 %v3394, %v3404
  %v3419 = vadd.f32 %v3395, %v3404
  %v3420 = vadd.f32 %v3396, %v3404
  %v3421 = vadd.f32 %v3397, %v3404
  %v3422 = vmax.f32 %v3406, 0.0
  %v3423 = vmax.f32 %v3407, 0.0
  %v3424 = vmax.f32 %v3408, 0.0
  %v3425 = vmax.f32 %v3409, 0.0
  %v3426 = vmax.f32 %v3410, 0.0
  %v3427 = vmax.f32 %v3411, 0.0
  %v3428 = vmax.f32 %v3412, 0.0
  %v3429 = vmax.f32 %v3413, 0.0
  %v3430 = vmax.f32 %v3414, 0.0
  %v3431 = vmax.f32 %v3415, 0.0
  %v3432 = vmax.f32 %v3416, 0.0
  %v3433 = vmax.f32 %v3417, 0.0
  %v3434 = vmax.f32 %v3418, 0.0
  %v3435 = vmax.f32 %v3419, 0.0
  %v3436 = vmax.f32 %v3420, 0.0
  %v3437 = vmax.f32 %v3421, 0.0
  %v3438 = vld [vmem:[%s6] sm:$0xff]
  %v3439 = vld [vmem:[%s6 + $0x8] sm:$0xff]
  %v3440 = vld [vmem:[%s6 + $0x10] sm:$0xff]
  %v3441 = vld [vmem:[%s6 + $0x18] sm:$0xff]
  %v3442 = vld [vmem:[%s6 + $0x20] sm:$0xff]
  %v3443 = vld [vmem:[%s6 + $0x28] sm:$0xff]
  %v3444 = vld [vmem:[%s6 + $0x30] sm:$0xff]
  %v3445 = vld [vmem:[%s6 + $0x38] sm:$0xff]
  %v3446 = vld [vmem:[%s6 + $0x40] sm:$0xff]
  %v3447 = vld [vmem:[%s6 + $0x48] sm:$0xff]
  %v3448 = vld [vmem:[%s6 + $0x50] sm:$0xff]
  %v3449 = vld [vmem:[%s6 + $0x58] sm:$0xff]
  %v3450 = vld [vmem:[%s6 + $0x60] sm:$0xff]
  %v3451 = vld [vmem:[%s6 + $0x68] sm:$0xff]
  %v3452 = vld [vmem:[%s6 + $0x70] sm:$0xff]
  %v3453 = vld [vmem:[%s6 + $0x78] sm:$0xff]
  %v3454 = vadd.f32 %v3438, %v3422
  %v3455 = vadd.f32 %v3439, %v3423
  %v3456 = vadd.f32 %v3440, %v3424
  %v3457 = vadd.f32 %v3441, %v3425
  %v3458 = vadd.f32 %v3442, %v3426
  %v3459 = vadd.f32 %v3443, %v3427
  %v3460 = vadd.f32 %v3444, %v3428
  %v3461 = vadd.f32 %v3445, %v3429
  %v3462 = vadd.f32 %v3446, %v3430
  %v3463 = vadd.f32 %v3447, %v3431
  %v3464 = vadd.f32 %v3448, %v3432
  %v3465 = vadd.f32 %v3449, %v3433
  %v3466 = vadd.f32 %v3450, %v3434
  %v3467 = vadd.f32 %v3451, %v3435
  %v3468 = vadd.f32 %v3452, %v3436
  %v3469 = vadd.f32 %v3453, %v3437
  %3470 = vst [vmem:[%s6] sm:$0xff] %v3454
  %3471 = vst [vmem:[%s6 + $0x8] sm:$0xff] %v3455
  %3472 = vst [vmem:[%s6 + $0x10] sm:$0xff] %v3456
  %3473 = vst [vmem:[%s6 + $0x18] sm:$0xff] %v3457
  %3474 = vst [vmem:[%s6 + $0x20] sm:$0xff] %v3458
  %3475 = vst [vmem:[%s6 + $0x28] sm:$0xff] %v3459
  %3476 = vst [vmem:[%s6 + $0x30] sm:$0xff] %v3460
  %3477 = vst [vmem:[%s6 + $0x38] sm:$0xff] %v3461
  %3478 = vst [vmem:[%s6 + $0x40] sm:$0xff] %v3462
  %3479 = vst [vmem:[%s6 + $0x48] sm:$0xff] %v3463
  %3480 = vst [vmem:[%s6 + $0x50] sm:$0xff] %v3464
  %3481 = vst [vmem:[%s6 + $0x58] sm:$0xff] %v3465
  %3482 = vst [vmem:[%s6 + $0x60] sm:$0xff] %v3466
  %3483 = vst [vmem:[%s6 + $0x68] sm:$0xff] %v3467
  %3484 = vst [vmem:[%s6 + $0x70] sm:$0xff] %v3468
  %3485 = vst [vmem:[%s6 + $0x78] sm:$0xff] %v3469
  %3486 = vst [vmem:[%s121 + $0x8] sm:$0xff] %v3422
  %3487 = vst [vmem:[%s121 + $0x20] sm:$0xff] %v3423
  %3488 = vst [vmem:[%s121 + $0x38] sm:$0xff] %v3424
  %3489 = vst [vmem:[%s121 + $0x50] sm:$0xff] %v3425
  %3490 = vst [vmem:[%s121 + $0x68] sm:$0xff] %v3426
  %3491 = vst [vmem:[%s121 + $0x80] sm:$0xff] %v3427
  %3492 = vst [vmem:[%s121 + $0x98] sm:$0xff] %v3428
  %3493 = vst [vmem:[%s121 + $0xb0] sm:$0xff] %v3429
  %3494 = vst [vmem:[%s121 + $0x248] sm:$0xff] %v3430
  %3495 = vst [vmem:[%s121 + $0x260] sm:$0xff] %v3431
  %3496 = vst [vmem:[%s121 + $0x278] sm:$0xff] %v3432
  %3497 = vst [vmem:[%s121 + $0x290] sm:$0xff] %v3433
  %3498 = vst [vmem:[%s121 + $0x2a8] sm:$0xff] %v3434
  %3499 = vst [vmem:[%s121 + $0x2c0] sm:$0xff] %v3435
  %3500 = vst [vmem:[%s121 + $0x2d8] sm:$0xff] %v3436
  %3501 = vst [vmem:[%s121 + $0x2f0] sm:$0xff] %v3437
  %v3502 = vld [vmem:[#allocation2 + $0x60] sm:$0xff]
  %v3503 = vld [vmem:[#allocation2 + $0x68] sm:$0xff]
  %v3504 = vld [vmem:[#allocation2 + $0x70] sm:$0xff]
  %v3505 = vld [vmem:[#allocation2 + $0x78] sm:$0xff]
  %v3506 = vld [vmem:[#allocation2 + $0x80] sm:$0xff]
  %v3507 = vld [vmem:[#allocation2 + $0x88] sm:$0xff]
  %v3508 = vld [vmem:[#allocation2 + $0x90] sm:$0xff]
  %v3509 = vld [vmem:[#allocation2 + $0x98] sm:$0xff]
  %v3510 = vld [vmem:[#allocation2 + $0xa0] sm:$0xff]
  %v3511 = vld [vmem:[#allocation2 + $0xa8] sm:$0xff]
  %v3512 = vld [vmem:[#allocation2 + $0xb0] sm:$0xff]
  %v3513 = vld [vmem:[#allocation2 + $0xb8] sm:$0xff]
  %v3514 = vld [vmem:[#allocation2 + $0xc0] sm:$0xff]
  %v3515 = vld [vmem:[#allocation2 + $0xc8] sm:$0xff]
  %v3516 = vld [vmem:[#allocation2 + $0xd0] sm:$0xff]
  %v3517 = vld [vmem:[#allocation2 + $0xd8] sm:$0xff]
  %v3518 = vld [vmem:[#allocation2 + $0xe0] sm:$0xff]
  %v3519 = vld [vmem:[#allocation2 + $0xe8] sm:$0xff]
  %v3520 = vld [vmem:[#allocation2 + $0xf0] sm:$0xff]
  %v3521 = vld [vmem:[#allocation2 + $0xf8] sm:$0xff]
  %v3522 = vld [vmem:[#allocation2 + $0x100] sm:$0xff]
  %v3523 = vld [vmem:[#allocation2 + $0x108] sm:$0xff]
  %v3524 = vld [vmem:[#allocation2 + $0x110] sm:$0xff]
  %v3525 = vld [vmem:[#allocation2 + $0x118] sm:$0xff]
  %v3526 = vld [vmem:[#allocation2 + $0x120] sm:$0xff]
  %v3527 = vld [vmem:[#allocation2 + $0x128] sm:$0xff]
  %v3528 = vld [vmem:[#allocation2 + $0x130] sm:$0xff]
  %v3529 = vld [vmem:[#allocation2 + $0x138] sm:$0xff]
  %v3530 = vld [vmem:[#allocation2 + $0x140] sm:$0xff]
  %v3531 = vld [vmem:[#allocation2 + $0x148] sm:$0xff]
  %v3532 = vld [vmem:[#allocation2 + $0x150] sm:$0xff]
  %v3533 = vld [vmem:[#allocation2 + $0x158] sm:$0xff]
  %v3534 = vld [vmem:[#allocation2 + $0x160] sm:$0xff]
  %v3535 = vld [vmem:[#allocation2 + $0x168] sm:$0xff]
  %v3536 = vld [vmem:[#allocation2 + $0x170] sm:$0xff]
  %v3537 = vld [vmem:[#allocation2 + $0x178] sm:$0xff]
  %v3538 = vld [vmem:[#allocation2 + $0x180] sm:$0xff]
  %v3539 = vld [vmem:[#allocation2 + $0x188] sm:$0xff]
  %v3540 = vld [vmem:[#allocation2 + $0x190] sm:$0xff]
  %v3541 = vld [vmem:[#allocation2 + $0x198] sm:$0xff]
  %v3542 = vld [vmem:[#allocation2 + $0x1a0] sm:$0xff]
  %v3543 = vld [vmem:[#allocation2 + $0x1a8] sm:$0xff]
  %v3544 = vld [vmem:[#allocation2 + $0x1b0] sm:$0xff]
  %v3545 = vld [vmem:[#allocation2 + $0x1b8] sm:$0xff]
  %v3546 = vld [vmem:[#allocation2 + $0x1c0] sm:$0xff]
  %v3547 = vld [vmem:[#allocation2 + $0x1c8] sm:$0xff]
  %v3548 = vld [vmem:[#allocation2 + $0x1d0] sm:$0xff]
  %v3549 = vld [vmem:[#allocation2 + $0x1d8] sm:$0xff]
  %v3550 = vld [vmem:[#allocation2 + $0x2a0] sm:$0xff]
  %v3551 = vld [vmem:[#allocation2 + $0x2a8] sm:$0xff]
  %v3552 = vld [vmem:[#allocation2 + $0x2b0] sm:$0xff]
  %v3553 = vld [vmem:[#allocation2 + $0x2b8] sm:$0xff]
  %v3554 = vld [vmem:[#allocation2 + $0x2c0] sm:$0xff]
  %v3555 = vld [vmem:[#allocation2 + $0x2c8] sm:$0xff]
  %v3556 = vld [vmem:[#allocation2 + $0x2d0] sm:$0xff]
  %v3557 = vld [vmem:[#allocation2 + $0x2d8] sm:$0xff]
  %v3558 = vld [vmem:[#allocation2 + $0x2e0] sm:$0xff]
  %v3559 = vld [vmem:[#allocation2 + $0x2e8] sm:$0xff]
  %v3560 = vld [vmem:[#allocation2 + $0x2f0] sm:$0xff]
  %v3561 = vld [vmem:[#allocation2 + $0x2f8] sm:$0xff]
  %v3562 = vld [vmem:[#allocation2 + $0x300] sm:$0xff]
  %v3563 = vld [vmem:[#allocation2 + $0x308] sm:$0xff]
  %v3564 = vld [vmem:[#allocation2 + $0x310] sm:$0xff]
  %v3565 = vld [vmem:[#allocation2 + $0x318] sm:$0xff]
  %v3566 = vld [vmem:[#allocation2 + $0x320] sm:$0xff]
  %v3567 = vld [vmem:[#allocation2 + $0x328] sm:$0xff]
  %v3568 = vld [vmem:[#allocation2 + $0x330] sm:$0xff]
  %v3569 = vld [vmem:[#allocation2 + $0x338] sm:$0xff]
  %v3570 = vld [vmem:[#allocation2 + $0x340] sm:$0xff]
  %v3571 = vld [vmem:[#allocation2 + $0x348] sm:$0xff]
  %v3572 = vld [vmem:[#allocation2 + $0x350] sm:$0xff]
  %v3573 = vld [vmem:[#allocation2 + $0x358] sm:$0xff]
  %v3574 = vld [vmem:[#allocation2 + $0x360] sm:$0xff]
  %v3575 = vld [vmem:[#allocation2 + $0x368] sm:$0xff]
  %v3576 = vld [vmem:[#allocation2 + $0x370] sm:$0xff]
  %v3577 = vld [vmem:[#allocation2 + $0x378] sm:$0xff]
  %v3578 = vld [vmem:[#allocation2 + $0x380] sm:$0xff]
  %v3579 = vld [vmem:[#allocation2 + $0x388] sm:$0xff]
  %v3580 = vld [vmem:[#allocation2 + $0x390] sm:$0xff]
  %v3581 = vld [vmem:[#allocation2 + $0x398] sm:$0xff]
  %v3582 = vld [vmem:[#allocation2 + $0x3a0] sm:$0xff]
  %v3583 = vld [vmem:[#allocation2 + $0x3a8] sm:$0xff]
  %v3584 = vld [vmem:[#allocation2 + $0x3b0] sm:$0xff]
  %v3585 = vld [vmem:[#allocation2 + $0x3b8] sm:$0xff]
  %v3586 = vld [vmem:[#allocation2 + $0x3c0] sm:$0xff]
  %v3587 = vld [vmem:[#allocation2 + $0x3c8] sm:$0xff]
  %v3588 = vld [vmem:[#allocation2 + $0x3d0] sm:$0xff]
  %v3589 = vld [vmem:[#allocation2 + $0x3d8] sm:$0xff]
  %v3590 = vld [vmem:[#allocation2 + $0x3e0] sm:$0xff]
  %v3591 = vld [vmem:[#allocation2 + $0x3e8] sm:$0xff]
  %v3592 = vld [vmem:[#allocation2 + $0x3f0] sm:$0xff]
  %v3593 = vld [vmem:[#allocation2 + $0x3f8] sm:$0xff]
  %v3594 = vld [vmem:[#allocation2 + $0x400] sm:$0xff]
  %v3595 = vld [vmem:[#allocation2 + $0x408] sm:$0xff]
  %v3596 = vld [vmem:[#allocation2 + $0x410] sm:$0xff]
  %v3597 = vld [vmem:[#allocation2 + $0x418] sm:$0xff]
  %v3598 = vrot.slane %v3502, 4
  %v3599 = vrot.slane %v3503, 4
  %v3600 = vrot.slane %v3505, 4
  %v3601 = vrot.slane %v3506, 4
  %v3602 = vrot.slane %v3508, 4
  %v3603 = vrot.slane %v3509, 4
  %v3604 = vrot.slane %v3511, 4
  %v3605 = vrot.slane %v3512, 4
  %v3606 = vrot.slane %v3514, 4
  %v3607 = vrot.slane %v3515, 4
  %v3608 = vrot.slane %v3517, 4
  %v3609 = vrot.slane %v3518, 4
  %v3610 = vrot.slane %v3520, 4
  %v3611 = vrot.slane %v3521, 4
  %v3612 = vrot.slane %v3523, 4
  %v3613 = vrot.slane %v3524, 4
  %v3614 = vrot.slane %v3526, 4
  %v3615 = vrot.slane %v3527, 4
  %v3616 = vrot.slane %v3529, 4
  %v3617 = vrot.slane %v3530, 4
  %v3618 = vrot.slane %v3532, 4
  %v3619 = vrot.slane %v3533, 4
  %v3620 = vrot.slane %v3535, 4
  %v3621 = vrot.slane %v3536, 4
  %v3622 = vrot.slane %v3538, 4
  %v3623 = vrot.slane %v3539, 4
  %v3624 = vrot.slane %v3541, 4
  %v3625 = vrot.slane %v3542, 4
  %v3626 = vrot.slane %v3544, 4
  %v3627 = vrot.slane %v3545, 4
  %v3628 = vrot.slane %v3547, 4
  %v3629 = vrot.slane %v3548, 4
  %v3630 = vrot.slane %v3550, 4
  %v3631 = vrot.slane %v3551, 4
  %v3632 = vrot.slane %v3553, 4
  %v3633 = vrot.slane %v3554, 4
  %v3634 = vrot.slane %v3556, 4
  %v3635 = vrot.slane %v3557, 4
  %v3636 = vrot.slane %v3559, 4
  %v3637 = vrot.slane %v3560, 4
  %v3638 = vrot.slane %v3562, 4
  %v3639 = vrot.slane %v3563, 4
  %v3640 = vrot.slane %v3565, 4
  %v3641 = vrot.slane %v3566, 4
  %v3642 = vrot.slane %v3568, 4
  %v3643 = vrot.slane %v3569, 4
  %v3644 = vrot.slane %v3571, 4
  %v3645 = vrot.slane %v3572, 4
  %v3646 = vrot.slane %v3574, 4
  %v3647 = vrot.slane %v3575, 4
  %v3648 = vrot.slane %v3577, 4
  %v3649 = vrot.slane %v3578, 4
  %v3650 = vrot.slane %v3580, 4
  %v3651 = vrot.slane %v3581, 4
  %v3652 = vrot.slane %v3583, 4
  %v3653 = vrot.slane %v3584, 4
  %v3654 = vrot.slane %v3586, 4
  %v3655 = vrot.slane %v3587, 4
  %v3656 = vrot.slane %v3589, 4
  %v3657 = vrot.slane %v3590, 4
  %v3658 = vrot.slane %v3592, 4
  %v3659 = vrot.slane %v3593, 4
  %v3660 = vrot.slane %v3595, 4
  %v3661 = vrot.slane %v3596, 4
  %vm3662 = vcmp.lt.s32.totalorder %v303, 4
  %v3663 = vsel %vm3662, %v3660, %v3661
  %v3664 = vsel %vm3662, %v3658, %v3659
  %v3665 = vsel %vm3662, %v3656, %v3657
  %v3666 = vsel %vm3662, %v3654, %v3655
  %v3667 = vsel %vm3662, %v3652, %v3653
  %v3668 = vsel %vm3662, %v3650, %v3651
  %v3669 = vsel %vm3662, %v3648, %v3649
  %v3670 = vsel %vm3662, %v3646, %v3647
  %v3671 = vsel %vm3662, %v3644, %v3645
  %v3672 = vsel %vm3662, %v3642, %v3643
  %v3673 = vsel %vm3662, %v3640, %v3641
  %v3674 = vsel %vm3662, %v3638, %v3639
  %v3675 = vsel %vm3662, %v3636, %v3637
  %v3676 = vsel %vm3662, %v3634, %v3635
  %v3677 = vsel %vm3662, %v3632, %v3633
  %v3678 = vsel %vm3662, %v3630, %v3631
  %v3679 = vsel %vm3662, %v3628, %v3629
  %v3680 = vsel %vm3662, %v3626, %v3627
  %v3681 = vsel %vm3662, %v3624, %v3625
  %v3682 = vsel %vm3662, %v3622, %v3623
  %v3683 = vsel %vm3662, %v3620, %v3621
  %v3684 = vsel %vm3662, %v3618, %v3619
  %v3685 = vsel %vm3662, %v3616, %v3617
  %v3686 = vsel %vm3662, %v3614, %v3615
  %v3687 = vsel %vm3662, %v3612, %v3613
  %v3688 = vsel %vm3662, %v3610, %v3611
  %v3689 = vsel %vm3662, %v3608, %v3609
  %v3690 = vsel %vm3662, %v3606, %v3607
  %v3691 = vsel %vm3662, %v3604, %v3605
  %v3692 = vsel %vm3662, %v3602, %v3603
  %v3693 = vsel %vm3662, %v3600, %v3601
  %v3694 = vsel %vm3662, %v3598, %v3599
  %v3695 = vpack.c.bf16 %v3693, %v3694
  %v3696 = vpack.c.bf16 %v3691, %v3692
  %v3697 = vpack.c.bf16 %v3689, %v3690
  %v3698 = vpack.c.bf16 %v3687, %v3688
  %v3699 = vpack.c.bf16 %v3677, %v3678
  %v3700 = vpack.c.bf16 %v3675, %v3676
  %v3701 = vpack.c.bf16 %v3673, %v3674
  %v3702 = vpack.c.bf16 %v3671, %v3672
  %v3703 = vpack.c.bf16 %v3685, %v3686
  %v3704 = vpack.c.bf16 %v3683, %v3684
  %v3705 = vpack.c.bf16 %v3669, %v3670
  %v3706 = vpack.c.bf16 %v3667, %v3668
  %v3707 = vpack.c.bf16 %v3681, %v3682
  %v3708 = vpack.c.bf16 %v3679, %v3680
  %v3709 = vpack.c.bf16 %v3665, %v3666
  %v3710 = vpack.c.bf16 %v3663, %v3664
  %v3711 = vpack.c.bf16 %v3506, %v3503
  %v3712 = vpack.c.bf16 %v3512, %v3509
  %v3713 = vpack.c.bf16 %v3518, %v3515
  %v3714 = vpack.c.bf16 %v3524, %v3521
  %v3715 = vpack.c.bf16 %v3554, %v3551
  %v3716 = vpack.c.bf16 %v3560, %v3557
  %v3717 = vpack.c.bf16 %v3566, %v3563
  %v3718 = vpack.c.bf16 %v3572, %v3569
  %v3719 = vpack.c.bf16 %v3530, %v3527
  %v3720 = vpack.c.bf16 %v3536, %v3533
  %v3721 = vpack.c.bf16 %v3578, %v3575
  %v3722 = vpack.c.bf16 %v3584, %v3581
  %v3723 = vpack.c.bf16 %v3542, %v3539
  %v3724 = vpack.c.bf16 %v3548, %v3545
  %v3725 = vpack.c.bf16 %v3590, %v3587
  %v3726 = vpack.c.bf16 %v3596, %v3593
  %v3727 = vrot.slane %v3504, 4
  %v3728 = vrot.slane %v3507, 4
  %v3729 = vrot.slane %v3510, 4
  %v3730 = vrot.slane %v3513, 4
  %v3731 = vrot.slane %v3516, 4
  %v3732 = vrot.slane %v3519, 4
  %v3733 = vrot.slane %v3522, 4
  %v3734 = vrot.slane %v3525, 4
  %v3735 = vrot.slane %v3528, 4
  %v3736 = vrot.slane %v3531, 4
  %v3737 = vrot.slane %v3534, 4
  %v3738 = vrot.slane %v3537, 4
  %v3739 = vrot.slane %v3540, 4
  %v3740 = vrot.slane %v3543, 4
  %v3741 = vrot.slane %v3546, 4
  %v3742 = vrot.slane %v3549, 4
  %v3743 = vrot.slane %v3552, 4
  %v3744 = vrot.slane %v3555, 4
  %v3745 = vrot.slane %v3558, 4
  %v3746 = vrot.slane %v3561, 4
  %v3747 = vrot.slane %v3564, 4
  %v3748 = vrot.slane %v3567, 4
  %v3749 = vrot.slane %v3570, 4
  %v3750 = vrot.slane %v3573, 4
  %v3751 = vrot.slane %v3576, 4
  %v3752 = vrot.slane %v3579, 4
  %v3753 = vrot.slane %v3582, 4
  %v3754 = vrot.slane %v3585, 4
  %v3755 = vrot.slane %v3588, 4
  %v3756 = vrot.slane %v3591, 4
  %v3757 = vrot.slane %v3594, 4
  %v3758 = vrot.slane %v3597, 4
  %v3759 = vsel %vm3662, %v3661, %v3758
  %v3760 = vsel %vm3662, %v3659, %v3757
  %v3761 = vsel %vm3662, %v3657, %v3756
  %v3762 = vsel %vm3662, %v3655, %v3755
  %v3763 = vsel %vm3662, %v3653, %v3754
  %v3764 = vsel %vm3662, %v3651, %v3753
  %v3765 = vsel %vm3662, %v3649, %v3752
  %v3766 = vsel %vm3662, %v3647, %v3751
  %v3767 = vsel %vm3662, %v3645, %v3750
  %v3768 = vsel %vm3662, %v3643, %v3749
  %v3769 = vsel %vm3662, %v3641, %v3748
  %v3770 = vsel %vm3662, %v3639, %v3747
  %v3771 = vsel %vm3662, %v3637, %v3746
  %v3772 = vsel %vm3662, %v3635, %v3745
  %v3773 = vsel %vm3662, %v3633, %v3744
  %v3774 = vsel %vm3662, %v3631, %v3743
  %v3775 = vsel %vm3662, %v3629, %v3742
  %v3776 = vsel %vm3662, %v3627, %v3741
  %v3777 = vsel %vm3662, %v3625, %v3740
  %v3778 = vsel %vm3662, %v3623, %v3739
  %v3779 = vsel %vm3662, %v3621, %v3738
  %v3780 = vsel %vm3662, %v3619, %v3737
  %v3781 = vsel %vm3662, %v3617, %v3736
  %v3782 = vsel %vm3662, %v3615, %v3735
  %v3783 = vsel %vm3662, %v3613, %v3734
  %v3784 = vsel %vm3662, %v3611, %v3733
  %v3785 = vsel %vm3662, %v3609, %v3732
  %v3786 = vsel %vm3662, %v3607, %v3731
  %v3787 = vsel %vm3662, %v3605, %v3730
  %v3788 = vsel %vm3662, %v3603, %v3729
  %v3789 = vsel %vm3662, %v3601, %v3728
  %v3790 = vsel %vm3662, %v3599, %v3727
  %v3791 = vpack.c.bf16 %v3789, %v3790
  %v3792 = vpack.c.bf16 %v3787, %v3788
  %v3793 = vpack.c.bf16 %v3785, %v3786
  %v3794 = vpack.c.bf16 %v3783, %v3784
  %v3795 = vpack.c.bf16 %v3773, %v3774
  %v3796 = vpack.c.bf16 %v3771, %v3772
  %v3797 = vpack.c.bf16 %v3769, %v3770
  %v3798 = vpack.c.bf16 %v3767, %v3768
  %v3799 = vpack.c.bf16 %v3781, %v3782
  %v3800 = vpack.c.bf16 %v3779, %v3780
  %v3801 = vpack.c.bf16 %v3765, %v3766
  %v3802 = vpack.c.bf16 %v3763, %v3764
  %v3803 = vpack.c.bf16 %v3777, %v3778
  %v3804 = vpack.c.bf16 %v3775, %v3776
  %v3805 = vpack.c.bf16 %v3761, %v3762
  %v3806 = vpack.c.bf16 %v3759, %v3760
  %s3807 = scalar_lea.vmem %s1, 1152
  %v3808 = vld [vmem:[%s3807] sm:$0xf]
  %v3809 = vld [vmem:[%s3807 + $0x4] sm:$0xf]
  %v3810 = vld [vmem:[%s3807 + $0x8] sm:$0xf]
  %v3811 = vld [vmem:[%s3807 + $0xc] sm:$0xf]
  %v3812 = vld [vmem:[%s3807 + $0x10] sm:$0xf]
  %v3813 = vld [vmem:[%s3807 + $0x14] sm:$0xf]
  %v3814 = vld [vmem:[%s3807 + $0x18] sm:$0xf]
  %v3815 = vld [vmem:[%s3807 + $0x1c] sm:$0xf]
  %v3816 = vld [vmem:[%s3807 + $0x20] sm:$0xf]
  %v3817 = vld [vmem:[%s3807 + $0x24] sm:$0xf]
  %v3818 = vld [vmem:[%s3807 + $0x28] sm:$0xf]
  %v3819 = vld [vmem:[%s3807 + $0x2c] sm:$0xf]
  %v3820 = vld [vmem:[%s3807 + $0x30] sm:$0xf]
  %v3821 = vld [vmem:[%s3807 + $0x34] sm:$0xf]
  %v3822 = vld [vmem:[%s3807 + $0x38] sm:$0xf]
  %v3823 = vld [vmem:[%s3807 + $0x3c] sm:$0xf]
  %v3824 = vld [vmem:[%s3807 + $0x40] sm:$0xf]
  %v3825 = vld [vmem:[%s3807 + $0x44] sm:$0xf]
  %v3826 = vld [vmem:[%s3807 + $0x48] sm:$0xf]
  %v3827 = vld [vmem:[%s3807 + $0x4c] sm:$0xf]
  %v3828 = vld [vmem:[%s3807 + $0x50] sm:$0xf]
  %v3829 = vld [vmem:[%s3807 + $0x54] sm:$0xf]
  %v3830 = vld [vmem:[%s3807 + $0x58] sm:$0xf]
  %v3831 = vld [vmem:[%s3807 + $0x5c] sm:$0xf]
  %v3832 = vld [vmem:[%s3807 + $0x60] sm:$0xf]
  %v3833 = vld [vmem:[%s3807 + $0x64] sm:$0xf]
  %v3834 = vld [vmem:[%s3807 + $0x68] sm:$0xf]
  %v3835 = vld [vmem:[%s3807 + $0x6c] sm:$0xf]
  %v3836 = vld [vmem:[%s3807 + $0x70] sm:$0xf]
  %v3837 = vld [vmem:[%s3807 + $0x74] sm:$0xf]
  %v3838 = vld [vmem:[%s3807 + $0x78] sm:$0xf]
  %v3839 = vld [vmem:[%s3807 + $0x7c] sm:$0xf]
  %v3840 = vld [vmem:[%s3807 + $0x80] sm:$0xf]
  %v3841 = vld [vmem:[%s3807 + $0x84] sm:$0xf]
  %v3842 = vld [vmem:[%s3807 + $0x88] sm:$0xf]
  %v3843 = vld [vmem:[%s3807 + $0x8c] sm:$0xf]
  %v3844 = vld [vmem:[%s3807 + $0x90] sm:$0xf]
  %v3845 = vld [vmem:[%s3807 + $0x94] sm:$0xf]
  %v3846 = vld [vmem:[%s3807 + $0x98] sm:$0xf]
  %v3847 = vld [vmem:[%s3807 + $0x9c] sm:$0xf]
  %v3848 = vld [vmem:[%s3807 + $0xa0] sm:$0xf]
  %v3849 = vld [vmem:[%s3807 + $0xa4] sm:$0xf]
  %v3850 = vld [vmem:[%s3807 + $0xa8] sm:$0xf]
  %v3851 = vld [vmem:[%s3807 + $0xac] sm:$0xf]
  %v3852 = vld [vmem:[%s3807 + $0xb0] sm:$0xf]
  %v3853 = vld [vmem:[%s3807 + $0xb4] sm:$0xf]
  %v3854 = vld [vmem:[%s3807 + $0xb8] sm:$0xf]
  %v3855 = vld [vmem:[%s3807 + $0xbc] sm:$0xf]
  %v3856 = vld [vmem:[%s3807 + $0xc0] sm:$0xf]
  %v3857 = vld [vmem:[%s3807 + $0xc4] sm:$0xf]
  %v3858 = vld [vmem:[%s3807 + $0xc8] sm:$0xf]
  %v3859 = vld [vmem:[%s3807 + $0xcc] sm:$0xf]
  %v3860 = vld [vmem:[%s3807 + $0xd0] sm:$0xf]
  %v3861 = vld [vmem:[%s3807 + $0xd4] sm:$0xf]
  %v3862 = vld [vmem:[%s3807 + $0xd8] sm:$0xf]
  %v3863 = vld [vmem:[%s3807 + $0xdc] sm:$0xf]
  %v3864 = vld [vmem:[%s3807 + $0xe0] sm:$0xf]
  %v3865 = vld [vmem:[%s3807 + $0xe4] sm:$0xf]
  %v3866 = vld [vmem:[%s3807 + $0xe8] sm:$0xf]
  %v3867 = vld [vmem:[%s3807 + $0xec] sm:$0xf]
  %v3868 = vld [vmem:[%s3807 + $0xf0] sm:$0xf]
  %v3869 = vld [vmem:[%s3807 + $0xf4] sm:$0xf]
  %v3870 = vld [vmem:[%s3807 + $0xf8] sm:$0xf]
  %v3871 = vld [vmem:[%s3807 + $0xfc] sm:$0xf]
  %v3872 = vld [vmem:[%s3807 + $0x100] sm:$0xf]
  %v3873 = vld [vmem:[%s3807 + $0x104] sm:$0xf]
  %v3874 = vld [vmem:[%s3807 + $0x108] sm:$0xf]
  %v3875 = vld [vmem:[%s3807 + $0x10c] sm:$0xf]
  %v3876 = vld [vmem:[%s3807 + $0x110] sm:$0xf]
  %v3877 = vld [vmem:[%s3807 + $0x114] sm:$0xf]
  %v3878 = vld [vmem:[%s3807 + $0x118] sm:$0xf]
  %v3879 = vld [vmem:[%s3807 + $0x11c] sm:$0xf]
  %v3880 = vld [vmem:[%s3807 + $0x120] sm:$0xf]
  %v3881 = vld [vmem:[%s3807 + $0x124] sm:$0xf]
  %v3882 = vld [vmem:[%s3807 + $0x128] sm:$0xf]
  %v3883 = vld [vmem:[%s3807 + $0x12c] sm:$0xf]
  %v3884 = vld [vmem:[%s3807 + $0x130] sm:$0xf]
  %v3885 = vld [vmem:[%s3807 + $0x134] sm:$0xf]
  %v3886 = vld [vmem:[%s3807 + $0x138] sm:$0xf]
  %v3887 = vld [vmem:[%s3807 + $0x13c] sm:$0xf]
  %v3888 = vld [vmem:[%s3807 + $0x140] sm:$0xf]
  %v3889 = vld [vmem:[%s3807 + $0x144] sm:$0xf]
  %v3890 = vld [vmem:[%s3807 + $0x148] sm:$0xf]
  %v3891 = vld [vmem:[%s3807 + $0x14c] sm:$0xf]
  %v3892 = vld [vmem:[%s3807 + $0x150] sm:$0xf]
  %v3893 = vld [vmem:[%s3807 + $0x154] sm:$0xf]
  %v3894 = vld [vmem:[%s3807 + $0x158] sm:$0xf]
  %v3895 = vld [vmem:[%s3807 + $0x15c] sm:$0xf]
  %v3896 = vld [vmem:[%s3807 + $0x160] sm:$0xf]
  %v3897 = vld [vmem:[%s3807 + $0x164] sm:$0xf]
  %v3898 = vld [vmem:[%s3807 + $0x168] sm:$0xf]
  %v3899 = vld [vmem:[%s3807 + $0x16c] sm:$0xf]
  %v3900 = vld [vmem:[%s3807 + $0x170] sm:$0xf]
  %v3901 = vld [vmem:[%s3807 + $0x174] sm:$0xf]
  %v3902 = vld [vmem:[%s3807 + $0x178] sm:$0xf]
  %v3903 = vld [vmem:[%s3807 + $0x17c] sm:$0xf]
  %v3904 = vld [vmem:[%s3807 + $0x180] sm:$0xf]
  %v3905 = vld [vmem:[%s3807 + $0x184] sm:$0xf]
  %v3906 = vld [vmem:[%s3807 + $0x188] sm:$0xf]
  %v3907 = vld [vmem:[%s3807 + $0x18c] sm:$0xf]
  %v3908 = vld [vmem:[%s3807 + $0x190] sm:$0xf]
  %v3909 = vld [vmem:[%s3807 + $0x194] sm:$0xf]
  %v3910 = vld [vmem:[%s3807 + $0x198] sm:$0xf]
  %v3911 = vld [vmem:[%s3807 + $0x19c] sm:$0xf]
  %v3912 = vld [vmem:[%s3807 + $0x1a0] sm:$0xf]
  %v3913 = vld [vmem:[%s3807 + $0x1a4] sm:$0xf]
  %v3914 = vld [vmem:[%s3807 + $0x1a8] sm:$0xf]
  %v3915 = vld [vmem:[%s3807 + $0x1ac] sm:$0xf]
  %v3916 = vld [vmem:[%s3807 + $0x1b0] sm:$0xf]
  %v3917 = vld [vmem:[%s3807 + $0x1b4] sm:$0xf]
  %v3918 = vld [vmem:[%s3807 + $0x1b8] sm:$0xf]
  %v3919 = vld [vmem:[%s3807 + $0x1bc] sm:$0xf]
  %v3920 = vld [vmem:[%s3807 + $0x1c0] sm:$0xf]
  %v3921 = vld [vmem:[%s3807 + $0x1c4] sm:$0xf]
  %v3922 = vld [vmem:[%s3807 + $0x1c8] sm:$0xf]
  %v3923 = vld [vmem:[%s3807 + $0x1cc] sm:$0xf]
  %v3924 = vld [vmem:[%s3807 + $0x1d0] sm:$0xf]
  %v3925 = vld [vmem:[%s3807 + $0x1d4] sm:$0xf]
  %v3926 = vld [vmem:[%s3807 + $0x1d8] sm:$0xf]
  %v3927 = vld [vmem:[%s3807 + $0x1dc] sm:$0xf]
  %v3928 = vld [vmem:[%s3807 + $0x1e0] sm:$0xf]
  %v3929 = vld [vmem:[%s3807 + $0x1e4] sm:$0xf]
  %v3930 = vld [vmem:[%s3807 + $0x1e8] sm:$0xf]
  %v3931 = vld [vmem:[%s3807 + $0x1ec] sm:$0xf]
  %v3932 = vld [vmem:[%s3807 + $0x1f0] sm:$0xf]
  %v3933 = vld [vmem:[%s3807 + $0x1f4] sm:$0xf]
  %v3934 = vld [vmem:[%s3807 + $0x1f8] sm:$0xf]
  %v3935 = vld [vmem:[%s3807 + $0x1fc] sm:$0xf]
  %v3936 = vld [vmem:[%s3807 + $0x200] sm:$0xf]
  %v3937 = vld [vmem:[%s3807 + $0x204] sm:$0xf]
  %v3938 = vld [vmem:[%s3807 + $0x208] sm:$0xf]
  %v3939 = vld [vmem:[%s3807 + $0x20c] sm:$0xf]
  %v3940 = vld [vmem:[%s3807 + $0x210] sm:$0xf]
  %v3941 = vld [vmem:[%s3807 + $0x214] sm:$0xf]
  %v3942 = vld [vmem:[%s3807 + $0x218] sm:$0xf]
  %v3943 = vld [vmem:[%s3807 + $0x21c] sm:$0xf]
  %v3944 = vld [vmem:[%s3807 + $0x220] sm:$0xf]
  %v3945 = vld [vmem:[%s3807 + $0x224] sm:$0xf]
  %v3946 = vld [vmem:[%s3807 + $0x228] sm:$0xf]
  %v3947 = vld [vmem:[%s3807 + $0x22c] sm:$0xf]
  %v3948 = vld [vmem:[%s3807 + $0x230] sm:$0xf]
  %v3949 = vld [vmem:[%s3807 + $0x234] sm:$0xf]
  %v3950 = vld [vmem:[%s3807 + $0x238] sm:$0xf]
  %v3951 = vld [vmem:[%s3807 + $0x23c] sm:$0xf]
  %s3952 = scalar_lea.vmem %s2, 2
  %v3953 = vld [vmem:[%s3952] sm:$0x1]
  %v3955 = vlaneseq
  %v3956 = vshrl.u32 %v3955, 7
  %v3957 = vsub.s32 0, %v3956
  %v3958 = vrot.slane %v3953, %v3957
  %v4104 = vunpack.c.l.b16 %v3808
  %v4105 = vunpack.c.l.b16 %v3809
  %v4106 = vunpack.c.l.b16 %v3810
  %v4107 = vunpack.c.l.b16 %v3811
  %v4108 = vunpack.c.l.b16 %v3812
  %v4109 = vunpack.c.l.b16 %v3813
  %v4110 = vunpack.c.l.b16 %v3814
  %v4111 = vunpack.c.l.b16 %v3815
  %v4112 = vunpack.c.l.b16 %v3816
  %v4113 = vunpack.c.l.b16 %v3817
  %v4114 = vunpack.c.l.b16 %v3818
  %v4115 = vunpack.c.l.b16 %v3819
  %v4116 = vunpack.c.l.b16 %v3820
  %v4117 = vunpack.c.l.b16 %v3821
  %v4118 = vunpack.c.l.b16 %v3822
  %v4119 = vunpack.c.l.b16 %v3823
  %v4120 = vunpack.c.l.b16 %v3824
  %v4121 = vunpack.c.l.b16 %v3825
  %v4122 = vunpack.c.l.b16 %v3826
  %v4123 = vunpack.c.l.b16 %v3827
  %v4124 = vunpack.c.l.b16 %v3828
  %v4125 = vunpack.c.l.b16 %v3829
  %v4126 = vunpack.c.l.b16 %v3830
  %v4127 = vunpack.c.l.b16 %v3831
  %v4128 = vunpack.c.l.b16 %v3832
  %v4129 = vunpack.c.l.b16 %v3833
  %v4130 = vunpack.c.l.b16 %v3834
  %v4131 = vunpack.c.l.b16 %v3835
  %v4132 = vunpack.c.l.b16 %v3836
  %v4133 = vunpack.c.l.b16 %v3837
  %v4134 = vunpack.c.l.b16 %v3838
  %v4135 = vunpack.c.l.b16 %v3839
  %v4136 = vunpack.c.l.b16 %v3840
  %v4137 = vunpack.c.l.b16 %v3841
  %v4138 = vunpack.c.l.b16 %v3842
  %v4139 = vunpack.c.l.b16 %v3843
  %v4140 = vunpack.c.l.b16 %v3844
  %v4141 = vunpack.c.l.b16 %v3845
  %v4142 = vunpack.c.l.b16 %v3846
  %v4143 = vunpack.c.l.b16 %v3847
  %v4144 = vunpack.c.l.b16 %v3848
  %v4145 = vunpack.c.l.b16 %v3849
  %v4146 = vunpack.c.l.b16 %v3850
  %v4147 = vunpack.c.l.b16 %v3851
  %v4148 = vunpack.c.l.b16 %v3852
  %v4149 = vunpack.c.l.b16 %v3853
  %v4150 = vunpack.c.l.b16 %v3854
  %v4151 = vunpack.c.l.b16 %v3855
  %v4152 = vunpack.c.l.b16 %v3856
  %v4153 = vunpack.c.l.b16 %v3857
  %v4154 = vunpack.c.l.b16 %v3858
  %v4155 = vunpack.c.l.b16 %v3859
  %v4156 = vunpack.c.l.b16 %v3860
  %v4157 = vunpack.c.l.b16 %v3861
  %v4158 = vunpack.c.l.b16 %v3862
  %v4159 = vunpack.c.l.b16 %v3863
  %v4160 = vunpack.c.l.b16 %v3864
  %v4161 = vunpack.c.l.b16 %v3865
  %v4162 = vunpack.c.l.b16 %v3866
  %v4163 = vunpack.c.l.b16 %v3867
  %v4164 = vunpack.c.l.b16 %v3868
  %v4165 = vunpack.c.l.b16 %v3869
  %v4166 = vunpack.c.l.b16 %v3870
  %v4167 = vunpack.c.l.b16 %v3871
  %v4168 = vunpack.c.l.b16 %v3872
  %v4169 = vunpack.c.l.b16 %v3873
  %v4170 = vunpack.c.l.b16 %v3874
  %v4171 = vunpack.c.l.b16 %v3875
  %v4172 = vunpack.c.l.b16 %v3876
  %v4173 = vunpack.c.l.b16 %v3877
  %v4174 = vunpack.c.l.b16 %v3878
  %v4175 = vunpack.c.l.b16 %v3879
  %v4176 = vunpack.c.l.b16 %v3880
  %v4177 = vunpack.c.l.b16 %v3881
  %v4178 = vunpack.c.l.b16 %v3882
  %v4179 = vunpack.c.l.b16 %v3883
  %v4180 = vunpack.c.l.b16 %v3884
  %v4181 = vunpack.c.l.b16 %v3885
  %v4182 = vunpack.c.l.b16 %v3886
  %v4183 = vunpack.c.l.b16 %v3887
  %v4184 = vunpack.c.l.b16 %v3888
  %v4185 = vunpack.c.l.b16 %v3889
  %v4186 = vunpack.c.l.b16 %v3890
  %v4187 = vunpack.c.l.b16 %v3891
  %v4188 = vunpack.c.l.b16 %v3892
  %v4189 = vunpack.c.l.b16 %v3893
  %v4190 = vunpack.c.l.b16 %v3894
  %v4191 = vunpack.c.l.b16 %v3895
  %v4192 = vunpack.c.l.b16 %v3896
  %v4193 = vunpack.c.l.b16 %v3897
  %v4194 = vunpack.c.l.b16 %v3898
  %v4195 = vunpack.c.l.b16 %v3899
  %v4196 = vunpack.c.l.b16 %v3900
  %v4197 = vunpack.c.l.b16 %v3901
  %v4198 = vunpack.c.l.b16 %v3902
  %v4199 = vunpack.c.l.b16 %v3903
  %v4200 = vunpack.c.l.b16 %v3904
  %v4201 = vunpack.c.l.b16 %v3905
  %v4202 = vunpack.c.l.b16 %v3906
  %v4203 = vunpack.c.l.b16 %v3907
  %v4204 = vunpack.c.l.b16 %v3908
  %v4205 = vunpack.c.l.b16 %v3909
  %v4206 = vunpack.c.l.b16 %v3910
  %v4207 = vunpack.c.l.b16 %v3911
  %v4208 = vunpack.c.l.b16 %v3912
  %v4209 = vunpack.c.l.b16 %v3913
  %v4210 = vunpack.c.l.b16 %v3914
  %v4211 = vunpack.c.l.b16 %v3915
  %v4212 = vunpack.c.l.b16 %v3916
  %v4213 = vunpack.c.l.b16 %v3917
  %v4214 = vunpack.c.l.b16 %v3918
  %v4215 = vunpack.c.l.b16 %v3919
  %v4216 = vunpack.c.l.b16 %v3920
  %v4217 = vunpack.c.l.b16 %v3921
  %v4218 = vunpack.c.l.b16 %v3922
  %v4219 = vunpack.c.l.b16 %v3923
  %v4220 = vunpack.c.l.b16 %v3924
  %v4221 = vunpack.c.l.b16 %v3925
  %v4222 = vunpack.c.l.b16 %v3926
  %v4223 = vunpack.c.l.b16 %v3927
  %v4224 = vunpack.c.l.b16 %v3928
  %v4225 = vunpack.c.l.b16 %v3929
  %v4226 = vunpack.c.l.b16 %v3930
  %v4227 = vunpack.c.l.b16 %v3931
  %v4228 = vunpack.c.l.b16 %v3932
  %v4229 = vunpack.c.l.b16 %v3933
  %v4230 = vunpack.c.l.b16 %v3934
  %v4231 = vunpack.c.l.b16 %v3935
  %v4232 = vunpack.c.l.b16 %v3936
  %v4233 = vunpack.c.l.b16 %v3937
  %v4234 = vunpack.c.l.b16 %v3938
  %v4235 = vunpack.c.l.b16 %v3939
  %v4236 = vunpack.c.l.b16 %v3940
  %v4237 = vunpack.c.l.b16 %v3941
  %v4238 = vunpack.c.l.b16 %v3942
  %v4239 = vunpack.c.l.b16 %v3943
  %v4240 = vunpack.c.l.b16 %v3944
  %v4241 = vunpack.c.l.b16 %v3945
  %v4242 = vunpack.c.l.b16 %v3946
  %v4243 = vunpack.c.l.b16 %v3947
  %v4244 = vunpack.c.l.b16 %v3948
  %v4245 = vunpack.c.l.b16 %v3949
  %v4246 = vunpack.c.l.b16 %v3950
  %v4247 = vunpack.c.l.b16 %v3951
  %v4248 = vpack.c.b16 %v4105, %v4104
  %v4249 = vpack.c.b16 %v4107, %v4106
  %v4250 = vpack.c.b16 %v4109, %v4108
  %v4251 = vpack.c.b16 %v4111, %v4110
  %v4252 = vpack.c.b16 %v4113, %v4112
  %v4253 = vpack.c.b16 %v4115, %v4114
  %v4254 = vpack.c.b16 %v4117, %v4116
  %v4255 = vpack.c.b16 %v4119, %v4118
  %v4256 = vpack.c.b16 %v4121, %v4120
  %v4257 = vpack.c.b16 %v4123, %v4122
  %v4258 = vpack.c.b16 %v4125, %v4124
  %v4259 = vpack.c.b16 %v4127, %v4126
  %v4260 = vpack.c.b16 %v4129, %v4128
  %v4261 = vpack.c.b16 %v4131, %v4130
  %v4262 = vpack.c.b16 %v4133, %v4132
  %v4263 = vpack.c.b16 %v4135, %v4134
  %v4264 = vpack.c.b16 %v4137, %v4136
  %v4265 = vpack.c.b16 %v4139, %v4138
  %v4266 = vpack.c.b16 %v4141, %v4140
  %v4267 = vpack.c.b16 %v4143, %v4142
  %v4268 = vpack.c.b16 %v4145, %v4144
  %v4269 = vpack.c.b16 %v4147, %v4146
  %v4270 = vpack.c.b16 %v4149, %v4148
  %v4271 = vpack.c.b16 %v4151, %v4150
  %v4272 = vpack.c.b16 %v4153, %v4152
  %v4273 = vpack.c.b16 %v4155, %v4154
  %v4274 = vpack.c.b16 %v4157, %v4156
  %v4275 = vpack.c.b16 %v4159, %v4158
  %v4276 = vpack.c.b16 %v4161, %v4160
  %v4277 = vpack.c.b16 %v4163, %v4162
  %v4278 = vpack.c.b16 %v4165, %v4164
  %v4279 = vpack.c.b16 %v4167, %v4166
  %v4280 = vpack.c.b16 %v4169, %v4168
  %v4281 = vpack.c.b16 %v4171, %v4170
  %v4282 = vpack.c.b16 %v4173, %v4172
  %v4283 = vpack.c.b16 %v4175, %v4174
  %v4284 = vpack.c.b16 %v4177, %v4176
  %v4285 = vpack.c.b16 %v4179, %v4178
  %v4286 = vpack.c.b16 %v4181, %v4180
  %v4287 = vpack.c.b16 %v4183, %v4182
  %v4288 = vpack.c.b16 %v4185, %v4184
  %v4289 = vpack.c.b16 %v4187, %v4186
  %v4290 = vpack.c.b16 %v4189, %v4188
  %v4291 = vpack.c.b16 %v4191, %v4190
  %v4292 = vpack.c.b16 %v4193, %v4192
  %v4293 = vpack.c.b16 %v4195, %v4194
  %v4294 = vpack.c.b16 %v4197, %v4196
  %v4295 = vpack.c.b16 %v4199, %v4198
  %v4296 = vpack.c.b16 %v4201, %v4200
  %v4297 = vpack.c.b16 %v4203, %v4202
  %v4298 = vpack.c.b16 %v4205, %v4204
  %v4299 = vpack.c.b16 %v4207, %v4206
  %v4300 = vpack.c.b16 %v4209, %v4208
  %v4301 = vpack.c.b16 %v4211, %v4210
  %v4302 = vpack.c.b16 %v4213, %v4212
  %v4303 = vpack.c.b16 %v4215, %v4214
  %v4304 = vpack.c.b16 %v4217, %v4216
  %v4305 = vpack.c.b16 %v4219, %v4218
  %v4306 = vpack.c.b16 %v4221, %v4220
  %v4307 = vpack.c.b16 %v4223, %v4222
  %v4308 = vpack.c.b16 %v4225, %v4224
  %v4309 = vpack.c.b16 %v4227, %v4226
  %v4310 = vpack.c.b16 %v4229, %v4228
  %v4311 = vpack.c.b16 %v4231, %v4230
  %v4312 = vpack.c.b16 %v4233, %v4232
  %v4313 = vpack.c.b16 %v4235, %v4234
  %v4314 = vpack.c.b16 %v4237, %v4236
  %v4315 = vpack.c.b16 %v4239, %v4238
  %v4316 = vpack.c.b16 %v4241, %v4240
  %v4317 = vpack.c.b16 %v4243, %v4242
  %v4318 = vpack.c.b16 %v4245, %v4244
  %v4319 = vpack.c.b16 %v4247, %v4246
  %4392 = vmatprep.subr.bf16.mxu0 0
  %4393 = vmatpush1.bf16.msra.mxu0 %v4255
  %4394 = vmatprep.subr.bf16.mxu0 0
  %4395 = vmatpush1.bf16.msra.mxu0 %v4254
  %4396 = vmatprep.subr.bf16.mxu0 0
  %4397 = vmatpush1.bf16.msra.mxu0 %v4253
  %4398 = vmatprep.subr.bf16.mxu0 0
  %4399 = vmatpush1.bf16.msra.mxu0 %v4252
  %4400 = vmatprep.subr.bf16.mxu0 0
  %4401 = vmatpush1.bf16.msra.mxu0 %v4251
  %4402 = vmatprep.subr.bf16.mxu0 0
  %4403 = vmatpush1.bf16.msra.mxu0 %v4250
  %4404 = vmatprep.subr.bf16.mxu0 0
  %4405 = vmatpush1.bf16.msra.mxu0 %v4249
  %4406 = vmatprep.subr.bf16.mxu0 0
  %4407 = vmatpush1.bf16.msra.mxu0 %v4248
  %4408 = vmatprep.subr.bf16.mxu0 0
  %4409 = vmatpush2.bf16.msra.mxu0 %v4263
  %4410 = vmatprep.subr.bf16.mxu0 0
  %4411 = vmatpush2.bf16.msra.mxu0 %v4262
  %4412 = vmatprep.subr.bf16.mxu0 0
  %4413 = vmatpush2.bf16.msra.mxu0 %v4261
  %4414 = vmatprep.subr.bf16.mxu0 0
  %4415 = vmatpush2.bf16.msra.mxu0 %v4260
  %4416 = vmatprep.subr.bf16.mxu0 0
  %4417 = vmatpush2.bf16.msra.mxu0 %v4259
  %4418 = vmatprep.subr.bf16.mxu0 0
  %4419 = vmatpush2.bf16.msra.mxu0 %v4258
  %4420 = vmatprep.subr.bf16.mxu0 0
  %4421 = vmatpush2.bf16.msra.mxu0 %v4257
  %4422 = vmatprep.subr.bf16.mxu0 0
  %4423 = vmatpush2.bf16.msra.mxu0 %v4256
  %4424 = vmatprep.mubr.bf16.mxu0 %v3697
  %4425 = vmatmul.mubr.bf16.gmra.mxu0 %v3695
  %v4426 = vpop.f32.mrf.mxu0
  %v4427 = vadd.f32 %v3958, %v4426
  %v4428 = vpop.f32.mrf.mxu0
  %v4429 = vpop.f32.mrf.mxu0
  %v4430 = vadd.f32 %v3958, %v4429
  %v4431 = vpop.f32.mrf.mxu0
  %4432 = vmatprep.mubr.bf16.mxu0 %v3698
  %4433 = vmatmul.mubr.bf16.gmra.mxu0 %v3696
  %v4434 = vpop.f32.mrf.mxu0
  %v4435 = vadd.f32 %v3958, %v4434
  %v4436 = vpop.f32.mrf.mxu0
  %v4437 = vpop.f32.mrf.mxu0
  %v4438 = vadd.f32 %v3958, %v4437
  %v4439 = vpop.f32.mrf.mxu0
  %4440 = vmatprep.mubr.bf16.mxu0 %v3703
  %4441 = vmatmul.mubr.bf16.gmra.mxu0 %v3697
  %v4442 = vpop.f32.mrf.mxu0
  %v4443 = vadd.f32 %v3958, %v4442
  %v4444 = vpop.f32.mrf.mxu0
  %v4445 = vpop.f32.mrf.mxu0
  %v4446 = vadd.f32 %v3958, %v4445
  %v4447 = vpop.f32.mrf.mxu0
  %4448 = vmatprep.mubr.bf16.mxu0 %v3704
  %4449 = vmatmul.mubr.bf16.gmra.mxu0 %v3698
  %v4450 = vpop.f32.mrf.mxu0
  %v4451 = vadd.f32 %v3958, %v4450
  %v4452 = vpop.f32.mrf.mxu0
  %v4453 = vpop.f32.mrf.mxu0
  %v4454 = vadd.f32 %v3958, %v4453
  %v4455 = vpop.f32.mrf.mxu0
  %4456 = vmatprep.mubr.bf16.mxu0 %v3701
  %4457 = vmatmul.mubr.bf16.gmra.mxu0 %v3699
  %v4458 = vpop.f32.mrf.mxu0
  %v4459 = vadd.f32 %v3958, %v4458
  %v4460 = vpop.f32.mrf.mxu0
  %v4461 = vpop.f32.mrf.mxu0
  %v4462 = vadd.f32 %v3958, %v4461
  %v4463 = vpop.f32.mrf.mxu0
  %4464 = vmatprep.mubr.bf16.mxu0 %v3702
  %4465 = vmatmul.mubr.bf16.gmra.mxu0 %v3700
  %v4466 = vpop.f32.mrf.mxu0
  %v4467 = vadd.f32 %v3958, %v4466
  %v4468 = vpop.f32.mrf.mxu0
  %v4469 = vpop.f32.mrf.mxu0
  %v4470 = vadd.f32 %v3958, %v4469
  %v4471 = vpop.f32.mrf.mxu0
  %4472 = vmatprep.mubr.bf16.mxu0 %v3705
  %4473 = vmatmul.mubr.bf16.gmra.mxu0 %v3701
  %v4474 = vpop.f32.mrf.mxu0
  %v4475 = vadd.f32 %v3958, %v4474
  %v4476 = vpop.f32.mrf.mxu0
  %v4477 = vpop.f32.mrf.mxu0
  %v4478 = vadd.f32 %v3958, %v4477
  %v4479 = vpop.f32.mrf.mxu0
  %4480 = vmatprep.mubr.bf16.mxu0 %v3706
  %4481 = vmatmul.mubr.bf16.gmra.mxu0 %v3702
  %v4482 = vpop.f32.mrf.mxu0
  %v4483 = vadd.f32 %v3958, %v4482
  %v4484 = vpop.f32.mrf.mxu0
  %v4485 = vpop.f32.mrf.mxu0
  %v4486 = vadd.f32 %v3958, %v4485
  %v4487 = vpop.f32.mrf.mxu0
  %4488 = vdwg.mxu0
  %4489 = vmatprep.subr.bf16.mxu0 0
  %4490 = vmatpush1.bf16.msra.mxu0 %v4271
  %4491 = vmatprep.subr.bf16.mxu0 0
  %4492 = vmatpush1.bf16.msra.mxu0 %v4270
  %4493 = vmatprep.subr.bf16.mxu0 0
  %4494 = vmatpush1.bf16.msra.mxu0 %v4269
  %4495 = vmatprep.subr.bf16.mxu0 0
  %4496 = vmatpush1.bf16.msra.mxu0 %v4268
  %4497 = vmatprep.subr.bf16.mxu0 0
  %4498 = vmatpush1.bf16.msra.mxu0 %v4267
  %4499 = vmatprep.subr.bf16.mxu0 0
  %4500 = vmatpush1.bf16.msra.mxu0 %v4266
  %4501 = vmatprep.subr.bf16.mxu0 0
  %4502 = vmatpush1.bf16.msra.mxu0 %v4265
  %4503 = vmatprep.subr.bf16.mxu0 0
  %4504 = vmatpush1.bf16.msra.mxu0 %v4264
  %4505 = vmatprep.subr.bf16.mxu0 0
  %4506 = vmatpush2.bf16.msra.mxu0 %v4279
  %4507 = vmatprep.subr.bf16.mxu0 0
  %4508 = vmatpush2.bf16.msra.mxu0 %v4278
  %4509 = vmatprep.subr.bf16.mxu0 0
  %4510 = vmatpush2.bf16.msra.mxu0 %v4277
  %4511 = vmatprep.subr.bf16.mxu0 0
  %4512 = vmatpush2.bf16.msra.mxu0 %v4276
  %4513 = vmatprep.subr.bf16.mxu0 0
  %4514 = vmatpush2.bf16.msra.mxu0 %v4275
  %4515 = vmatprep.subr.bf16.mxu0 0
  %4516 = vmatpush2.bf16.msra.mxu0 %v4274
  %4517 = vmatprep.subr.bf16.mxu0 0
  %4518 = vmatpush2.bf16.msra.mxu0 %v4273
  %4519 = vmatprep.subr.bf16.mxu0 0
  %4520 = vmatpush2.bf16.msra.mxu0 %v4272
  %4521 = vmatprep.mubr.bf16.mxu0 %v3711
  %4522 = vmatmul.mubr.bf16.gmra.mxu0 %v3703
  %v4523 = vpop.f32.mrf.mxu0
  %v4524 = vadd.f32 %v4427, %v4523
  %v4525 = vpop.f32.mrf.mxu0
  %v4526 = vpop.f32.mrf.mxu0
  %v4527 = vadd.f32 %v4430, %v4526
  %v4528 = vpop.f32.mrf.mxu0
  %4529 = vmatprep.mubr.bf16.mxu0 %v3712
  %4530 = vmatmul.mubr.bf16.gmra.mxu0 %v3704
  %v4531 = vpop.f32.mrf.mxu0
  %v4532 = vadd.f32 %v4435, %v4531
  %v4533 = vpop.f32.mrf.mxu0
  %v4534 = vpop.f32.mrf.mxu0
  %v4535 = vadd.f32 %v4438, %v4534
  %v4536 = vpop.f32.mrf.mxu0
  %4537 = vmatprep.mubr.bf16.mxu0 %v3713
  %4538 = vmatmul.mubr.bf16.gmra.mxu0 %v3707
  %v4539 = vpop.f32.mrf.mxu0
  %v4540 = vadd.f32 %v4443, %v4539
  %v4541 = vpop.f32.mrf.mxu0
  %v4542 = vpop.f32.mrf.mxu0
  %v4543 = vadd.f32 %v4446, %v4542
  %v4544 = vpop.f32.mrf.mxu0
  %4545 = vmatprep.mubr.bf16.mxu0 %v3714
  %4546 = vmatmul.mubr.bf16.gmra.mxu0 %v3708
  %v4547 = vpop.f32.mrf.mxu0
  %v4548 = vadd.f32 %v4451, %v4547
  %v4549 = vpop.f32.mrf.mxu0
  %v4550 = vpop.f32.mrf.mxu0
  %v4551 = vadd.f32 %v4454, %v4550
  %v4552 = vpop.f32.mrf.mxu0
  %4553 = vmatprep.mubr.bf16.mxu0 %v3715
  %4554 = vmatmul.mubr.bf16.gmra.mxu0 %v3705
  %v4555 = vpop.f32.mrf.mxu0
  %v4556 = vadd.f32 %v4459, %v4555
  %v4557 = vpop.f32.mrf.mxu0
  %v4558 = vpop.f32.mrf.mxu0
  %v4559 = vadd.f32 %v4462, %v4558
  %v4560 = vpop.f32.mrf.mxu0
  %4561 = vmatprep.mubr.bf16.mxu0 %v3716
  %4562 = vmatmul.mubr.bf16.gmra.mxu0 %v3706
  %v4563 = vpop.f32.mrf.mxu0
  %v4564 = vadd.f32 %v4467, %v4563
  %v4565 = vpop.f32.mrf.mxu0
  %v4566 = vpop.f32.mrf.mxu0
  %v4567 = vadd.f32 %v4470, %v4566
  %v4568 = vpop.f32.mrf.mxu0
  %4569 = vmatprep.mubr.bf16.mxu0 %v3717
  %4570 = vmatmul.mubr.bf16.gmra.mxu0 %v3709
  %v4571 = vpop.f32.mrf.mxu0
  %v4572 = vadd.f32 %v4475, %v4571
  %v4573 = vpop.f32.mrf.mxu0
  %v4574 = vpop.f32.mrf.mxu0
  %v4575 = vadd.f32 %v4478, %v4574
  %v4576 = vpop.f32.mrf.mxu0
  %4577 = vmatprep.mubr.bf16.mxu0 %v3718
  %4578 = vmatmul.mubr.bf16.gmra.mxu0 %v3710
  %v4579 = vpop.f32.mrf.mxu0
  %v4580 = vadd.f32 %v4483, %v4579
  %v4581 = vpop.f32.mrf.mxu0
  %v4582 = vpop.f32.mrf.mxu0
  %v4583 = vadd.f32 %v4486, %v4582
  %v4584 = vpop.f32.mrf.mxu0
  %4585 = vdwg.mxu0
  %4586 = vmatprep.subr.bf16.mxu0 0
  %4587 = vmatpush1.bf16.msra.mxu0 %v4287
  %4588 = vmatprep.subr.bf16.mxu0 0
  %4589 = vmatpush1.bf16.msra.mxu0 %v4286
  %4590 = vmatprep.subr.bf16.mxu0 0
  %4591 = vmatpush1.bf16.msra.mxu0 %v4285
  %4592 = vmatprep.subr.bf16.mxu0 0
  %4593 = vmatpush1.bf16.msra.mxu0 %v4284
  %4594 = vmatprep.subr.bf16.mxu0 0
  %4595 = vmatpush1.bf16.msra.mxu0 %v4283
  %4596 = vmatprep.subr.bf16.mxu0 0
  %4597 = vmatpush1.bf16.msra.mxu0 %v4282
  %4598 = vmatprep.subr.bf16.mxu0 0
  %4599 = vmatpush1.bf16.msra.mxu0 %v4281
  %4600 = vmatprep.subr.bf16.mxu0 0
  %4601 = vmatpush1.bf16.msra.mxu0 %v4280
  %4602 = vmatprep.subr.bf16.mxu0 0
  %4603 = vmatpush2.bf16.msra.mxu0 %v4295
  %4604 = vmatprep.subr.bf16.mxu0 0
  %4605 = vmatpush2.bf16.msra.mxu0 %v4294
  %4606 = vmatprep.subr.bf16.mxu0 0
  %4607 = vmatpush2.bf16.msra.mxu0 %v4293
  %4608 = vmatprep.subr.bf16.mxu0 0
  %4609 = vmatpush2.bf16.msra.mxu0 %v4292
  %4610 = vmatprep.subr.bf16.mxu0 0
  %4611 = vmatpush2.bf16.msra.mxu0 %v4291
  %4612 = vmatprep.subr.bf16.mxu0 0
  %4613 = vmatpush2.bf16.msra.mxu0 %v4290
  %4614 = vmatprep.subr.bf16.mxu0 0
  %4615 = vmatpush2.bf16.msra.mxu0 %v4289
  %4616 = vmatprep.subr.bf16.mxu0 0
  %4617 = vmatpush2.bf16.msra.mxu0 %v4288
  %4618 = vmatprep.mubr.bf16.mxu0 %v3719
  %4619 = vmatmul.mubr.bf16.gmra.mxu0 %v3713
  %v4620 = vpop.f32.mrf.mxu0
  %v4621 = vadd.f32 %v4524, %v4620
  %v4622 = vpop.f32.mrf.mxu0
  %v4623 = vpop.f32.mrf.mxu0
  %v4624 = vadd.f32 %v4527, %v4623
  %v4625 = vpop.f32.mrf.mxu0
  %4626 = vmatprep.mubr.bf16.mxu0 %v3720
  %4627 = vmatmul.mubr.bf16.gmra.mxu0 %v3714
  %v4628 = vpop.f32.mrf.mxu0
  %v4629 = vadd.f32 %v4532, %v4628
  %v4630 = vpop.f32.mrf.mxu0
  %v4631 = vpop.f32.mrf.mxu0
  %v4632 = vadd.f32 %v4535, %v4631
  %v4633 = vpop.f32.mrf.mxu0
  %4634 = vmatprep.mubr.bf16.mxu0 %v3723
  %4635 = vmatmul.mubr.bf16.gmra.mxu0 %v3719
  %v4636 = vpop.f32.mrf.mxu0
  %v4637 = vadd.f32 %v4540, %v4636
  %v4638 = vpop.f32.mrf.mxu0
  %v4639 = vpop.f32.mrf.mxu0
  %v4640 = vadd.f32 %v4543, %v4639
  %v4641 = vpop.f32.mrf.mxu0
  %4642 = vmatprep.mubr.bf16.mxu0 %v3724
  %4643 = vmatmul.mubr.bf16.gmra.mxu0 %v3720
  %v4644 = vpop.f32.mrf.mxu0
  %v4645 = vadd.f32 %v4548, %v4644
  %v4646 = vpop.f32.mrf.mxu0
  %v4647 = vpop.f32.mrf.mxu0
  %v4648 = vadd.f32 %v4551, %v4647
  %v4649 = vpop.f32.mrf.mxu0
  %4650 = vmatprep.mubr.bf16.mxu0 %v3721
  %4651 = vmatmul.mubr.bf16.gmra.mxu0 %v3717
  %v4652 = vpop.f32.mrf.mxu0
  %v4653 = vadd.f32 %v4556, %v4652
  %v4654 = vpop.f32.mrf.mxu0
  %v4655 = vpop.f32.mrf.mxu0
  %v4656 = vadd.f32 %v4559, %v4655
  %v4657 = vpop.f32.mrf.mxu0
  %4658 = vmatprep.mubr.bf16.mxu0 %v3722
  %4659 = vmatmul.mubr.bf16.gmra.mxu0 %v3718
  %v4660 = vpop.f32.mrf.mxu0
  %v4661 = vadd.f32 %v4564, %v4660
  %v4662 = vpop.f32.mrf.mxu0
  %v4663 = vpop.f32.mrf.mxu0
  %v4664 = vadd.f32 %v4567, %v4663
  %v4665 = vpop.f32.mrf.mxu0
  %4666 = vmatprep.mubr.bf16.mxu0 %v3725
  %4667 = vmatmul.mubr.bf16.gmra.mxu0 %v3721
  %v4668 = vpop.f32.mrf.mxu0
  %v4669 = vadd.f32 %v4572, %v4668
  %v4670 = vpop.f32.mrf.mxu0
  %v4671 = vpop.f32.mrf.mxu0
  %v4672 = vadd.f32 %v4575, %v4671
  %v4673 = vpop.f32.mrf.mxu0
  %4674 = vmatprep.mubr.bf16.mxu0 %v3726
  %4675 = vmatmul.mubr.bf16.gmra.mxu0 %v3722
  %v4676 = vpop.f32.mrf.mxu0
  %v4677 = vadd.f32 %v4580, %v4676
  %v4678 = vpop.f32.mrf.mxu0
  %v4679 = vpop.f32.mrf.mxu0
  %v4680 = vadd.f32 %v4583, %v4679
  %v4681 = vpop.f32.mrf.mxu0
  %4682 = vdwg.mxu0
  %4683 = vmatprep.subr.bf16.mxu0 0
  %4684 = vmatpush1.bf16.msra.mxu0 %v4303
  %4685 = vmatprep.subr.bf16.mxu0 0
  %4686 = vmatpush1.bf16.msra.mxu0 %v4302
  %4687 = vmatprep.subr.bf16.mxu0 0
  %4688 = vmatpush1.bf16.msra.mxu0 %v4301
  %4689 = vmatprep.subr.bf16.mxu0 0
  %4690 = vmatpush1.bf16.msra.mxu0 %v4300
  %4691 = vmatprep.subr.bf16.mxu0 0
  %4692 = vmatpush1.bf16.msra.mxu0 %v4299
  %4693 = vmatprep.subr.bf16.mxu0 0
  %4694 = vmatpush1.bf16.msra.mxu0 %v4298
  %4695 = vmatprep.subr.bf16.mxu0 0
  %4696 = vmatpush1.bf16.msra.mxu0 %v4297
  %4697 = vmatprep.subr.bf16.mxu0 0
  %4698 = vmatpush1.bf16.msra.mxu0 %v4296
  %4699 = vmatprep.subr.bf16.mxu0 0
  %4700 = vmatpush2.bf16.msra.mxu0 %v4311
  %4701 = vmatprep.subr.bf16.mxu0 0
  %4702 = vmatpush2.bf16.msra.mxu0 %v4310
  %4703 = vmatprep.subr.bf16.mxu0 0
  %4704 = vmatpush2.bf16.msra.mxu0 %v4309
  %4705 = vmatprep.subr.bf16.mxu0 0
  %4706 = vmatpush2.bf16.msra.mxu0 %v4308
  %4707 = vmatprep.subr.bf16.mxu0 0
  %4708 = vmatpush2.bf16.msra.mxu0 %v4307
  %4709 = vmatprep.subr.bf16.mxu0 0
  %4710 = vmatpush2.bf16.msra.mxu0 %v4306
  %4711 = vmatprep.subr.bf16.mxu0 0
  %4712 = vmatpush2.bf16.msra.mxu0 %v4305
  %4713 = vmatprep.subr.bf16.mxu0 0
  %4714 = vmatpush2.bf16.msra.mxu0 %v4304
  %4715 = vmatprep.mubr.bf16.mxu0 %v3793
  %4716 = vmatmul.mubr.bf16.gmra.mxu0 %v3791
  %v4717 = vpop.f32.mrf.mxu0
  %v4718 = vadd.f32 %v4621, %v4717
  %v4719 = vpop.f32.mrf.mxu0
  %v4720 = vpop.f32.mrf.mxu0
  %v4721 = vadd.f32 %v4624, %v4720
  %v4722 = vpop.f32.mrf.mxu0
  %4723 = vmatprep.mubr.bf16.mxu0 %v3794
  %4724 = vmatmul.mubr.bf16.gmra.mxu0 %v3792
  %v4725 = vpop.f32.mrf.mxu0
  %v4726 = vadd.f32 %v4629, %v4725
  %v4727 = vpop.f32.mrf.mxu0
  %v4728 = vpop.f32.mrf.mxu0
  %v4729 = vadd.f32 %v4632, %v4728
  %v4730 = vpop.f32.mrf.mxu0
  %4731 = vmatprep.mubr.bf16.mxu0 %v3799
  %4732 = vmatmul.mubr.bf16.gmra.mxu0 %v3793
  %v4733 = vpop.f32.mrf.mxu0
  %v4734 = vadd.f32 %v4637, %v4733
  %v4735 = vpop.f32.mrf.mxu0
  %v4736 = vpop.f32.mrf.mxu0
  %v4737 = vadd.f32 %v4640, %v4736
  %v4738 = vpop.f32.mrf.mxu0
  %4739 = vmatprep.mubr.bf16.mxu0 %v3800
  %4740 = vmatmul.mubr.bf16.gmra.mxu0 %v3794
  %v4741 = vpop.f32.mrf.mxu0
  %v4742 = vadd.f32 %v4645, %v4741
  %v4743 = vpop.f32.mrf.mxu0
  %v4744 = vpop.f32.mrf.mxu0
  %v4745 = vadd.f32 %v4648, %v4744
  %v4746 = vpop.f32.mrf.mxu0
  %4747 = vmatprep.mubr.bf16.mxu0 %v3797
  %4748 = vmatmul.mubr.bf16.gmra.mxu0 %v3795
  %v4749 = vpop.f32.mrf.mxu0
  %v4750 = vadd.f32 %v4653, %v4749
  %v4751 = vpop.f32.mrf.mxu0
  %v4752 = vpop.f32.mrf.mxu0
  %v4753 = vadd.f32 %v4656, %v4752
  %v4754 = vpop.f32.mrf.mxu0
  %4755 = vmatprep.mubr.bf16.mxu0 %v3798
  %4756 = vmatmul.mubr.bf16.gmra.mxu0 %v3796
  %v4757 = vpop.f32.mrf.mxu0
  %v4758 = vadd.f32 %v4661, %v4757
  %v4759 = vpop.f32.mrf.mxu0
  %v4760 = vpop.f32.mrf.mxu0
  %v4761 = vadd.f32 %v4664, %v4760
  %v4762 = vpop.f32.mrf.mxu0
  %4763 = vmatprep.mubr.bf16.mxu0 %v3801
  %4764 = vmatmul.mubr.bf16.gmra.mxu0 %v3797
  %v4765 = vpop.f32.mrf.mxu0
  %v4766 = vadd.f32 %v4669, %v4765
  %v4767 = vpop.f32.mrf.mxu0
  %v4768 = vpop.f32.mrf.mxu0
  %v4769 = vadd.f32 %v4672, %v4768
  %v4770 = vpop.f32.mrf.mxu0
  %4771 = vmatprep.mubr.bf16.mxu0 %v3802
  %4772 = vmatmul.mubr.bf16.gmra.mxu0 %v3798
  %v4773 = vpop.f32.mrf.mxu0
  %v4774 = vadd.f32 %v4677, %v4773
  %v4775 = vpop.f32.mrf.mxu0
  %v4776 = vpop.f32.mrf.mxu0
  %v4777 = vadd.f32 %v4680, %v4776
  %v4778 = vpop.f32.mrf.mxu0
  %4779 = vdwg.mxu0
  %4780 = vmatprep.subr.bf16.mxu0 0
  %4781 = vmatpush1.bf16.msra.mxu0 %v4319
  %4782 = vmatprep.subr.bf16.mxu0 0
  %4783 = vmatpush1.bf16.msra.mxu0 %v4318
  %4784 = vmatprep.subr.bf16.mxu0 0
  %4785 = vmatpush1.bf16.msra.mxu0 %v4317
  %4786 = vmatprep.subr.bf16.mxu0 0
  %4787 = vmatpush1.bf16.msra.mxu0 %v4316
  %4788 = vmatprep.subr.bf16.mxu0 0
  %4789 = vmatpush1.bf16.msra.mxu0 %v4315
  %4790 = vmatprep.subr.bf16.mxu0 0
  %4791 = vmatpush1.bf16.msra.mxu0 %v4314
  %4792 = vmatprep.subr.bf16.mxu0 0
  %4793 = vmatpush1.bf16.msra.mxu0 %v4313
  %4794 = vmatprep.subr.bf16.mxu0 0
  %4795 = vmatpush1.bf16.msra.mxu0 %v4312
  %4796 = vmatprep.subr.bf16.mxu0 0
  %4797 = vmatpush2.bf16.msra.mxu0 0
  %4798 = vmatprep.subr.bf16.mxu0 0
  %4799 = vmatpush2.bf16.msra.mxu0 0
  %4800 = vmatprep.subr.bf16.mxu0 0
  %4801 = vmatpush2.bf16.msra.mxu0 0
  %4802 = vmatprep.subr.bf16.mxu0 0
  %4803 = vmatpush2.bf16.msra.mxu0 0
  %4804 = vmatprep.subr.bf16.mxu0 0
  %4805 = vmatpush2.bf16.msra.mxu0 0
  %4806 = vmatprep.subr.bf16.mxu0 0
  %4807 = vmatpush2.bf16.msra.mxu0 0
  %4808 = vmatprep.subr.bf16.mxu0 0
  %4809 = vmatpush2.bf16.msra.mxu0 0
  %4810 = vmatprep.subr.bf16.mxu0 0
  %4811 = vmatpush2.bf16.msra.mxu0 0
  %4812 = vmatprep.mubr.bf16.mxu0 0
  %4813 = vmatmul.mubr.bf16.gmra.mxu0 %v3799
  %v4814 = vpop.f32.mrf.mxu0
  %v4815 = vadd.f32 %v4718, %v4814
  %v4816 = vpop.f32.mrf.mxu0
  %v4817 = vpop.f32.mrf.mxu0
  %v4818 = vadd.f32 %v4721, %v4817
  %v4819 = vpop.f32.mrf.mxu0
  %4820 = vmatprep.mubr.bf16.mxu0 0
  %4821 = vmatmul.mubr.bf16.gmra.mxu0 %v3800
  %v4822 = vpop.f32.mrf.mxu0
  %v4823 = vadd.f32 %v4726, %v4822
  %v4824 = vpop.f32.mrf.mxu0
  %v4825 = vpop.f32.mrf.mxu0
  %v4826 = vadd.f32 %v4729, %v4825
  %v4827 = vpop.f32.mrf.mxu0
  %4828 = vmatprep.mubr.bf16.mxu0 0
  %4829 = vmatmul.mubr.bf16.gmra.mxu0 %v3803
  %v4830 = vpop.f32.mrf.mxu0
  %v4831 = vadd.f32 %v4734, %v4830
  %v4832 = vpop.f32.mrf.mxu0
  %v4833 = vpop.f32.mrf.mxu0
  %v4834 = vadd.f32 %v4737, %v4833
  %v4835 = vpop.f32.mrf.mxu0
  %4836 = vmatprep.mubr.bf16.mxu0 0
  %4837 = vmatmul.mubr.bf16.gmra.mxu0 %v3804
  %v4838 = vpop.f32.mrf.mxu0
  %v4839 = vadd.f32 %v4742, %v4838
  %v4840 = vpop.f32.mrf.mxu0
  %v4841 = vpop.f32.mrf.mxu0
  %v4842 = vadd.f32 %v4745, %v4841
  %v4843 = vpop.f32.mrf.mxu0
  %4844 = vmatprep.mubr.bf16.mxu0 0
  %4845 = vmatmul.mubr.bf16.gmra.mxu0 %v3801
  %v4846 = vpop.f32.mrf.mxu0
  %v4847 = vadd.f32 %v4750, %v4846
  %v4848 = vpop.f32.mrf.mxu0
  %v4849 = vpop.f32.mrf.mxu0
  %v4850 = vadd.f32 %v4753, %v4849
  %v4851 = vpop.f32.mrf.mxu0
  %4852 = vmatprep.mubr.bf16.mxu0 0
  %4853 = vmatmul.mubr.bf16.gmra.mxu0 %v3802
  %v4854 = vpop.f32.mrf.mxu0
  %v4855 = vadd.f32 %v4758, %v4854
  %v4856 = vpop.f32.mrf.mxu0
  %v4857 = vpop.f32.mrf.mxu0
  %v4858 = vadd.f32 %v4761, %v4857
  %v4859 = vpop.f32.mrf.mxu0
  %4860 = vmatprep.mubr.bf16.mxu0 0
  %4861 = vmatmul.mubr.bf16.gmra.mxu0 %v3805
  %v4862 = vpop.f32.mrf.mxu0
  %v4863 = vadd.f32 %v4766, %v4862
  %v4864 = vpop.f32.mrf.mxu0
  %v4865 = vpop.f32.mrf.mxu0
  %v4866 = vadd.f32 %v4769, %v4865
  %v4867 = vpop.f32.mrf.mxu0
  %4868 = vmatprep.mubr.bf16.mxu0 0
  %4869 = vmatmul.mubr.bf16.gmra.mxu0 %v3806
  %v4870 = vpop.f32.mrf.mxu0
  %v4871 = vadd.f32 %v4774, %v4870
  %v4872 = vpop.f32.mrf.mxu0
  %v4873 = vpop.f32.mrf.mxu0
  %v4874 = vadd.f32 %v4777, %v4873
  %v4875 = vpop.f32.mrf.mxu0
  %4876 = vdwg.mxu0
  %v4877 = vadd.f32 %v4815, %v4818
  %v4878 = vadd.f32 %v4877, %v4823
  %v4879 = vadd.f32 %v4878, %v4826
  %v4880 = vadd.f32 %v4879, %v4831
  %v4881 = vadd.f32 %v4880, %v4834
  %v4882 = vadd.f32 %v4881, %v4839
  %v4883 = vadd.f32 %v4882, %v4842
  %v4884 = vadd.f32 %v4883, %v4847
  %v4885 = vadd.f32 %v4884, %v4850
  %v4886 = vadd.f32 %v4885, %v4855
  %v4887 = vadd.f32 %v4886, %v4858
  %v4888 = vadd.f32 %v4887, %v4863
  %v4889 = vadd.f32 %v4888, %v4866
  %v4890 = vadd.f32 %v4889, %v4871
  %v4891 = vadd.f32 %v4890, %v4874
  %v4892 = vrot.slane %v4891, 4
  %v4893 = vadd.f32 %v4891, %v4892
  %v4894 = vrot.slane %v4893, 2
  %v4895 = vadd.f32 %v4893, %v4894
  %v4896 = vrot.slane %v4895, 1
  %v4897 = vadd.f32 %v4895, %v4896
  %v4898 = vmul.f32 %v4815, %v4815
  %v4899 = vmul.f32 %v4818, %v4818
  %v4900 = vmul.f32 %v4823, %v4823
  %v4901 = vmul.f32 %v4826, %v4826
  %v4902 = vmul.f32 %v4831, %v4831
  %v4903 = vmul.f32 %v4834, %v4834
  %v4904 = vmul.f32 %v4839, %v4839
  %v4905 = vmul.f32 %v4842, %v4842
  %v4906 = vmul.f32 %v4847, %v4847
  %v4907 = vmul.f32 %v4850, %v4850
  %v4908 = vmul.f32 %v4855, %v4855
  %v4909 = vmul.f32 %v4858, %v4858
  %v4910 = vmul.f32 %v4863, %v4863
  %v4911 = vmul.f32 %v4866, %v4866
  %v4912 = vmul.f32 %v4871, %v4871
  %v4913 = vmul.f32 %v4874, %v4874
  %v4914 = vadd.f32 %v4898, %v4899
  %v4915 = vadd.f32 %v4914, %v4900
  %v4916 = vadd.f32 %v4915, %v4901
  %v4917 = vadd.f32 %v4916, %v4902
  %v4918 = vadd.f32 %v4917, %v4903
  %v4919 = vadd.f32 %v4918, %v4904
  %v4920 = vadd.f32 %v4919, %v4905
  %v4921 = vadd.f32 %v4920, %v4906
  %v4922 = vadd.f32 %v4921, %v4907
  %v4923 = vadd.f32 %v4922, %v4908
  %v4924 = vadd.f32 %v4923, %v4909
  %v4925 = vadd.f32 %v4924, %v4910
  %v4926 = vadd.f32 %v4925, %v4911
  %v4927 = vadd.f32 %v4926, %v4912
  %v4928 = vadd.f32 %v4927, %v4913
  %v4929 = vrot.slane %v4928, 4
  %v4930 = vadd.f32 %v4928, %v4929
  %v4931 = vrot.slane %v4930, 2
  %v4932 = vadd.f32 %v4930, %v4931
  %v4933 = vrot.slane %v4932, 1
  %v4934 = vadd.f32 %v4932, %v4933
  %4935 = vmatprep.subr.mxu0 0.0
  %4936 = vmatpush1.msra.mxu0 %v201
  %4937 = vmatprep.subr.mxu0 0.0
  %4938 = vmatpush1.msra.mxu0 %v200
  %4939 = vmatprep.subr.mxu0 0.0
  %4940 = vmatpush1.msra.mxu0 %v199
  %4941 = vmatprep.subr.mxu0 0.0
  %4942 = vmatpush1.msra.mxu0 %v198
  %4943 = vmatprep.subr.mxu0 0.0
  %4944 = vmatpush1.msra.mxu0 %v197
  %4945 = vmatprep.subr.mxu0 0.0
  %4946 = vmatpush1.msra.mxu0 %v196
  %4947 = vmatprep.subr.mxu0 0.0
  %4948 = vmatpush1.msra.mxu0 %v195
  %4949 = vmatprep.subr.mxu0 0.0
  %4950 = vmatpush1.msra.mxu0 %v194
  %4951 = vmatprep.subr.mxu0 0.0
  %4952 = vmatpush1.msra.mxu0 %v193
  %4953 = vmatprep.subr.mxu0 0.0
  %4954 = vmatpush1.msra.mxu0 %v192
  %4955 = vmatprep.subr.mxu0 0.0
  %4956 = vmatpush1.msra.mxu0 %v191
  %4957 = vmatprep.subr.mxu0 0.0
  %4958 = vmatpush1.msra.mxu0 %v190
  %4959 = vmatprep.subr.mxu0 0.0
  %4960 = vmatpush1.msra.mxu0 %v189
  %4961 = vmatprep.subr.mxu0 0.0
  %4962 = vmatpush1.msra.mxu0 %v188
  %4963 = vmatprep.subr.mxu0 0.0
  %4964 = vmatpush1.msra.mxu0 %v187
  %4965 = vmatprep.subr.mxu0 0.0
  %4966 = vmatpush1.msra.mxu0 %v186
  %4967 = vmatprep.subr.mxu0 0.0
  %4968 = vmatpush2.msra.mxu0 0.0
  %4969 = vmatprep.subr.mxu0 0.0
  %4970 = vmatpush2.msra.mxu0 0.0
  %4971 = vmatprep.subr.mxu0 0.0
  %4972 = vmatpush2.msra.mxu0 0.0
  %4973 = vmatprep.subr.mxu0 0.0
  %4974 = vmatpush2.msra.mxu0 0.0
  %4975 = vmatprep.subr.mxu0 0.0
  %4976 = vmatpush2.msra.mxu0 0.0
  %4977 = vmatprep.subr.mxu0 0.0
  %4978 = vmatpush2.msra.mxu0 0.0
  %4979 = vmatprep.subr.mxu0 0.0
  %4980 = vmatpush2.msra.mxu0 0.0
  %4981 = vmatprep.subr.mxu0 0.0
  %4982 = vmatpush2.msra.mxu0 0.0
  %4983 = vmatprep.subr.mxu0 0.0
  %4984 = vmatpush2.msra.mxu0 0.0
  %4985 = vmatprep.subr.mxu0 0.0
  %4986 = vmatpush2.msra.mxu0 0.0
  %4987 = vmatprep.subr.mxu0 0.0
  %4988 = vmatpush2.msra.mxu0 0.0
  %4989 = vmatprep.subr.mxu0 0.0
  %4990 = vmatpush2.msra.mxu0 0.0
  %4991 = vmatprep.subr.mxu0 0.0
  %4992 = vmatpush2.msra.mxu0 0.0
  %4993 = vmatprep.subr.mxu0 0.0
  %4994 = vmatpush2.msra.mxu0 0.0
  %4995 = vmatprep.subr.mxu0 0.0
  %4996 = vmatpush2.msra.mxu0 0.0
  %4997 = vmatprep.subr.mxu0 0.0
  %4998 = vmatpush2.msra.mxu0 0.0
  %4999 = vmatprep.mubr.f32.mxu0 0.0
  %5000 = vmatmul.mubr.f32.gmra.mxu0 %v4897
  %v5001 = vpop.f32.mrf.mxu0
  %v5002 = vadd.f32 0.0, %v5001
  %v5003 = vpop.f32.mrf.mxu0
  %5004 = vdwg.mxu0
  %5005 = vmatprep.subr.mxu0 0.0
  %5006 = vmatpush1.msra.mxu0 %v201
  %5007 = vmatprep.subr.mxu0 0.0
  %5008 = vmatpush1.msra.mxu0 %v200
  %5009 = vmatprep.subr.mxu0 0.0
  %5010 = vmatpush1.msra.mxu0 %v199
  %5011 = vmatprep.subr.mxu0 0.0
  %5012 = vmatpush1.msra.mxu0 %v198
  %5013 = vmatprep.subr.mxu0 0.0
  %5014 = vmatpush1.msra.mxu0 %v197
  %5015 = vmatprep.subr.mxu0 0.0
  %5016 = vmatpush1.msra.mxu0 %v196
  %5017 = vmatprep.subr.mxu0 0.0
  %5018 = vmatpush1.msra.mxu0 %v195
  %5019 = vmatprep.subr.mxu0 0.0
  %5020 = vmatpush1.msra.mxu0 %v194
  %5021 = vmatprep.subr.mxu0 0.0
  %5022 = vmatpush1.msra.mxu0 %v193
  %5023 = vmatprep.subr.mxu0 0.0
  %5024 = vmatpush1.msra.mxu0 %v192
  %5025 = vmatprep.subr.mxu0 0.0
  %5026 = vmatpush1.msra.mxu0 %v191
  %5027 = vmatprep.subr.mxu0 0.0
  %5028 = vmatpush1.msra.mxu0 %v190
  %5029 = vmatprep.subr.mxu0 0.0
  %5030 = vmatpush1.msra.mxu0 %v189
  %5031 = vmatprep.subr.mxu0 0.0
  %5032 = vmatpush1.msra.mxu0 %v188
  %5033 = vmatprep.subr.mxu0 0.0
  %5034 = vmatpush1.msra.mxu0 %v187
  %5035 = vmatprep.subr.mxu0 0.0
  %5036 = vmatpush1.msra.mxu0 %v186
  %5037 = vmatprep.subr.mxu0 0.0
  %5038 = vmatpush2.msra.mxu0 0.0
  %5039 = vmatprep.subr.mxu0 0.0
  %5040 = vmatpush2.msra.mxu0 0.0
  %5041 = vmatprep.subr.mxu0 0.0
  %5042 = vmatpush2.msra.mxu0 0.0
  %5043 = vmatprep.subr.mxu0 0.0
  %5044 = vmatpush2.msra.mxu0 0.0
  %5045 = vmatprep.subr.mxu0 0.0
  %5046 = vmatpush2.msra.mxu0 0.0
  %5047 = vmatprep.subr.mxu0 0.0
  %5048 = vmatpush2.msra.mxu0 0.0
  %5049 = vmatprep.subr.mxu0 0.0
  %5050 = vmatpush2.msra.mxu0 0.0
  %5051 = vmatprep.subr.mxu0 0.0
  %5052 = vmatpush2.msra.mxu0 0.0
  %5053 = vmatprep.subr.mxu0 0.0
  %5054 = vmatpush2.msra.mxu0 0.0
  %5055 = vmatprep.subr.mxu0 0.0
  %5056 = vmatpush2.msra.mxu0 0.0
  %5057 = vmatprep.subr.mxu0 0.0
  %5058 = vmatpush2.msra.mxu0 0.0
  %5059 = vmatprep.subr.mxu0 0.0
  %5060 = vmatpush2.msra.mxu0 0.0
  %5061 = vmatprep.subr.mxu0 0.0
  %5062 = vmatpush2.msra.mxu0 0.0
  %5063 = vmatprep.subr.mxu0 0.0
  %5064 = vmatpush2.msra.mxu0 0.0
  %5065 = vmatprep.subr.mxu0 0.0
  %5066 = vmatpush2.msra.mxu0 0.0
  %5067 = vmatprep.subr.mxu0 0.0
  %5068 = vmatpush2.msra.mxu0 0.0
  %5069 = vmatprep.mubr.f32.mxu0 0.0
  %5070 = vmatmul.mubr.f32.gmra.mxu0 %v4934
  %v5071 = vpop.f32.mrf.mxu0
  %v5072 = vadd.f32 0.0, %v5071
  %v5073 = vpop.f32.mrf.mxu0
  %5074 = vdwg.mxu0
  %v5075 = vmul.f32 %v5002, %v5002
  %v5076 = vsub.f32 %v5072, %v5075
  %v5077 = vmax.f32 %v5076, 0.0
  %s5078 = scalar_lea.vmem %s3, 2
  %v5079 = vld [vmem:[%s5078] sm:$0x1]
  %v5080 = vadd.f32 %v5077, 1e-05
  %v5081 = vrsqrt.pop %v5080
  %v5082 = vmul.f32 %v5079, %v5081
  %v5083 = vlaneseq
  %v5084 = vshrl.u32 %v5083, 7
  %v5085 = vsub.s32 0, %v5084
  %v5086 = vrot.slane %v5002, %v5085
  %v5087 = vsub.f32 %v4815, %v5086
  %v5088 = vsub.f32 %v4818, %v5086
  %v5089 = vsub.f32 %v4823, %v5086
  %v5090 = vsub.f32 %v4826, %v5086
  %v5091 = vsub.f32 %v4831, %v5086
  %v5092 = vsub.f32 %v4834, %v5086
  %v5093 = vsub.f32 %v4839, %v5086
  %v5094 = vsub.f32 %v4842, %v5086
  %v5095 = vsub.f32 %v4847, %v5086
  %v5096 = vsub.f32 %v4850, %v5086
  %v5097 = vsub.f32 %v4855, %v5086
  %v5098 = vsub.f32 %v4858, %v5086
  %v5099 = vsub.f32 %v4863, %v5086
  %v5100 = vsub.f32 %v4866, %v5086
  %v5101 = vsub.f32 %v4871, %v5086
  %v5102 = vsub.f32 %v4874, %v5086
  %v5104 = vlaneseq
  %v5105 = vshrl.u32 %v5104, 7
  %v5106 = vsub.s32 0, %v5105
  %v5107 = vrot.slane %v5082, %v5106
  %v5109 = vmul.f32 %v5087, %v5107
  %v5110 = vmul.f32 %v5088, %v5107
  %v5111 = vmul.f32 %v5089, %v5107
  %v5112 = vmul.f32 %v5090, %v5107
  %v5113 = vmul.f32 %v5091, %v5107
  %v5114 = vmul.f32 %v5092, %v5107
  %v5115 = vmul.f32 %v5093, %v5107
  %v5116 = vmul.f32 %v5094, %v5107
  %v5117 = vmul.f32 %v5095, %v5107
  %v5118 = vmul.f32 %v5096, %v5107
  %v5119 = vmul.f32 %v5097, %v5107
  %v5120 = vmul.f32 %v5098, %v5107
  %v5121 = vmul.f32 %v5099, %v5107
  %v5122 = vmul.f32 %v5100, %v5107
  %v5123 = vmul.f32 %v5101, %v5107
  %v5124 = vmul.f32 %v5102, %v5107
  %s5125 = scalar_lea.vmem %s4, 2
  %v5126 = vld [vmem:[%s5125] sm:$0x1]
  %v5128 = vlaneseq
  %v5129 = vshrl.u32 %v5128, 7
  %v5130 = vsub.s32 0, %v5129
  %v5131 = vrot.slane %v5126, %v5130
  %v5133 = vadd.f32 %v5109, %v5131
  %v5134 = vadd.f32 %v5110, %v5131
  %v5135 = vadd.f32 %v5111, %v5131
  %v5136 = vadd.f32 %v5112, %v5131
  %v5137 = vadd.f32 %v5113, %v5131
  %v5138 = vadd.f32 %v5114, %v5131
  %v5139 = vadd.f32 %v5115, %v5131
  %v5140 = vadd.f32 %v5116, %v5131
  %v5141 = vadd.f32 %v5117, %v5131
  %v5142 = vadd.f32 %v5118, %v5131
  %v5143 = vadd.f32 %v5119, %v5131
  %v5144 = vadd.f32 %v5120, %v5131
  %v5145 = vadd.f32 %v5121, %v5131
  %v5146 = vadd.f32 %v5122, %v5131
  %v5147 = vadd.f32 %v5123, %v5131
  %v5148 = vadd.f32 %v5124, %v5131
  %v5149 = vmax.f32 %v5133, 0.0
  %v5150 = vmax.f32 %v5134, 0.0
  %v5151 = vmax.f32 %v5135, 0.0
  %v5152 = vmax.f32 %v5136, 0.0
  %v5153 = vmax.f32 %v5137, 0.0
  %v5154 = vmax.f32 %v5138, 0.0
  %v5155 = vmax.f32 %v5139, 0.0
  %v5156 = vmax.f32 %v5140, 0.0
  %v5157 = vmax.f32 %v5141, 0.0
  %v5158 = vmax.f32 %v5142, 0.0
  %v5159 = vmax.f32 %v5143, 0.0
  %v5160 = vmax.f32 %v5144, 0.0
  %v5161 = vmax.f32 %v5145, 0.0
  %v5162 = vmax.f32 %v5146, 0.0
  %v5163 = vmax.f32 %v5147, 0.0
  %v5164 = vmax.f32 %v5148, 0.0
  %v5165 = vld [vmem:[%s6] sm:$0xff]
  %v5166 = vld [vmem:[%s6 + $0x8] sm:$0xff]
  %v5167 = vld [vmem:[%s6 + $0x10] sm:$0xff]
  %v5168 = vld [vmem:[%s6 + $0x18] sm:$0xff]
  %v5169 = vld [vmem:[%s6 + $0x20] sm:$0xff]
  %v5170 = vld [vmem:[%s6 + $0x28] sm:$0xff]
  %v5171 = vld [vmem:[%s6 + $0x30] sm:$0xff]
  %v5172 = vld [vmem:[%s6 + $0x38] sm:$0xff]
  %v5173 = vld [vmem:[%s6 + $0x40] sm:$0xff]
  %v5174 = vld [vmem:[%s6 + $0x48] sm:$0xff]
  %v5175 = vld [vmem:[%s6 + $0x50] sm:$0xff]
  %v5176 = vld [vmem:[%s6 + $0x58] sm:$0xff]
  %v5177 = vld [vmem:[%s6 + $0x60] sm:$0xff]
  %v5178 = vld [vmem:[%s6 + $0x68] sm:$0xff]
  %v5179 = vld [vmem:[%s6 + $0x70] sm:$0xff]
  %v5180 = vld [vmem:[%s6 + $0x78] sm:$0xff]
  %v5181 = vadd.f32 %v5165, %v5149
  %v5182 = vadd.f32 %v5166, %v5150
  %v5183 = vadd.f32 %v5167, %v5151
  %v5184 = vadd.f32 %v5168, %v5152
  %v5185 = vadd.f32 %v5169, %v5153
  %v5186 = vadd.f32 %v5170, %v5154
  %v5187 = vadd.f32 %v5171, %v5155
  %v5188 = vadd.f32 %v5172, %v5156
  %v5189 = vadd.f32 %v5173, %v5157
  %v5190 = vadd.f32 %v5174, %v5158
  %v5191 = vadd.f32 %v5175, %v5159
  %v5192 = vadd.f32 %v5176, %v5160
  %v5193 = vadd.f32 %v5177, %v5161
  %v5194 = vadd.f32 %v5178, %v5162
  %v5195 = vadd.f32 %v5179, %v5163
  %v5196 = vadd.f32 %v5180, %v5164
  %5197 = vst [vmem:[%s6] sm:$0xff] %v5181
  %5198 = vst [vmem:[%s6 + $0x8] sm:$0xff] %v5182
  %5199 = vst [vmem:[%s6 + $0x10] sm:$0xff] %v5183
  %5200 = vst [vmem:[%s6 + $0x18] sm:$0xff] %v5184
  %5201 = vst [vmem:[%s6 + $0x20] sm:$0xff] %v5185
  %5202 = vst [vmem:[%s6 + $0x28] sm:$0xff] %v5186
  %5203 = vst [vmem:[%s6 + $0x30] sm:$0xff] %v5187
  %5204 = vst [vmem:[%s6 + $0x38] sm:$0xff] %v5188
  %5205 = vst [vmem:[%s6 + $0x40] sm:$0xff] %v5189
  %5206 = vst [vmem:[%s6 + $0x48] sm:$0xff] %v5190
  %5207 = vst [vmem:[%s6 + $0x50] sm:$0xff] %v5191
  %5208 = vst [vmem:[%s6 + $0x58] sm:$0xff] %v5192
  %5209 = vst [vmem:[%s6 + $0x60] sm:$0xff] %v5193
  %5210 = vst [vmem:[%s6 + $0x68] sm:$0xff] %v5194
  %5211 = vst [vmem:[%s6 + $0x70] sm:$0xff] %v5195
  %5212 = vst [vmem:[%s6 + $0x78] sm:$0xff] %v5196
  %5213 = vst [vmem:[%s121 + $0x8] sm:$0xff] %v5149
  %5214 = vst [vmem:[%s121 + $0x20] sm:$0xff] %v5150
  %5215 = vst [vmem:[%s121 + $0x38] sm:$0xff] %v5151
  %5216 = vst [vmem:[%s121 + $0x50] sm:$0xff] %v5152
  %5217 = vst [vmem:[%s121 + $0x68] sm:$0xff] %v5153
  %5218 = vst [vmem:[%s121 + $0x80] sm:$0xff] %v5154
  %5219 = vst [vmem:[%s121 + $0x98] sm:$0xff] %v5155
  %5220 = vst [vmem:[%s121 + $0xb0] sm:$0xff] %v5156
  %5221 = vst [vmem:[%s121 + $0x248] sm:$0xff] %v5157
  %5222 = vst [vmem:[%s121 + $0x260] sm:$0xff] %v5158
  %5223 = vst [vmem:[%s121 + $0x278] sm:$0xff] %v5159
  %5224 = vst [vmem:[%s121 + $0x290] sm:$0xff] %v5160
  %5225 = vst [vmem:[%s121 + $0x2a8] sm:$0xff] %v5161
  %5226 = vst [vmem:[%s121 + $0x2c0] sm:$0xff] %v5162
  %5227 = vst [vmem:[%s121 + $0x2d8] sm:$0xff] %v5163
  %5228 = vst [vmem:[%s121 + $0x2f0] sm:$0xff] %v5164
  %v5229 = vld [vmem:[#allocation2] sm:$0xff]
  %v5230 = vld [vmem:[#allocation2 + $0x8] sm:$0xff]
  %v5231 = vld [vmem:[#allocation2 + $0x10] sm:$0xff]
  %v5232 = vld [vmem:[#allocation2 + $0x18] sm:$0xff]
  %v5233 = vld [vmem:[#allocation2 + $0x20] sm:$0xff]
  %v5234 = vld [vmem:[#allocation2 + $0x28] sm:$0xff]
  %v5235 = vld [vmem:[#allocation2 + $0x30] sm:$0xff]
  %v5236 = vld [vmem:[#allocation2 + $0x38] sm:$0xff]
  %v5237 = vld [vmem:[#allocation2 + $0x40] sm:$0xff]
  %v5238 = vld [vmem:[#allocation2 + $0x48] sm:$0xff]
  %v5239 = vld [vmem:[#allocation2 + $0x50] sm:$0xff]
  %v5240 = vld [vmem:[#allocation2 + $0x58] sm:$0xff]
  %v5241 = vld [vmem:[#allocation2 + $0x60] sm:$0xff]
  %v5242 = vld [vmem:[#allocation2 + $0x68] sm:$0xff]
  %v5243 = vld [vmem:[#allocation2 + $0x70] sm:$0xff]
  %v5244 = vld [vmem:[#allocation2 + $0x78] sm:$0xff]
  %v5245 = vld [vmem:[#allocation2 + $0x80] sm:$0xff]
  %v5246 = vld [vmem:[#allocation2 + $0x88] sm:$0xff]
  %v5247 = vld [vmem:[#allocation2 + $0x90] sm:$0xff]
  %v5248 = vld [vmem:[#allocation2 + $0x98] sm:$0xff]
  %v5249 = vld [vmem:[#allocation2 + $0xa0] sm:$0xff]
  %v5250 = vld [vmem:[#allocation2 + $0xa8] sm:$0xff]
  %v5251 = vld [vmem:[#allocation2 + $0xb0] sm:$0xff]
  %v5252 = vld [vmem:[#allocation2 + $0xb8] sm:$0xff]
  %v5253 = vld [vmem:[#allocation2 + $0xc0] sm:$0xff]
  %v5254 = vld [vmem:[#allocation2 + $0xc8] sm:$0xff]
  %v5255 = vld [vmem:[#allocation2 + $0xd0] sm:$0xff]
  %v5256 = vld [vmem:[#allocation2 + $0xd8] sm:$0xff]
  %v5257 = vld [vmem:[#allocation2 + $0xe0] sm:$0xff]
  %v5258 = vld [vmem:[#allocation2 + $0xe8] sm:$0xff]
  %v5259 = vld [vmem:[#allocation2 + $0xf0] sm:$0xff]
  %v5260 = vld [vmem:[#allocation2 + $0xf8] sm:$0xff]
  %v5261 = vld [vmem:[#allocation2 + $0x100] sm:$0xff]
  %v5262 = vld [vmem:[#allocation2 + $0x108] sm:$0xff]
  %v5263 = vld [vmem:[#allocation2 + $0x110] sm:$0xff]
  %v5264 = vld [vmem:[#allocation2 + $0x118] sm:$0xff]
  %v5265 = vld [vmem:[#allocation2 + $0x120] sm:$0xff]
  %v5266 = vld [vmem:[#allocation2 + $0x128] sm:$0xff]
  %v5267 = vld [vmem:[#allocation2 + $0x130] sm:$0xff]
  %v5268 = vld [vmem:[#allocation2 + $0x138] sm:$0xff]
  %v5269 = vld [vmem:[#allocation2 + $0x140] sm:$0xff]
  %v5270 = vld [vmem:[#allocation2 + $0x148] sm:$0xff]
  %v5271 = vld [vmem:[#allocation2 + $0x150] sm:$0xff]
  %v5272 = vld [vmem:[#allocation2 + $0x158] sm:$0xff]
  %v5273 = vld [vmem:[#allocation2 + $0x160] sm:$0xff]
  %v5274 = vld [vmem:[#allocation2 + $0x168] sm:$0xff]
  %v5275 = vld [vmem:[#allocation2 + $0x170] sm:$0xff]
  %v5276 = vld [vmem:[#allocation2 + $0x178] sm:$0xff]
  %v5277 = vld [vmem:[#allocation2 + $0x180] sm:$0xff]
  %v5278 = vld [vmem:[#allocation2 + $0x188] sm:$0xff]
  %v5279 = vld [vmem:[#allocation2 + $0x190] sm:$0xff]
  %v5280 = vld [vmem:[#allocation2 + $0x198] sm:$0xff]
  %v5281 = vld [vmem:[#allocation2 + $0x1a0] sm:$0xff]
  %v5282 = vld [vmem:[#allocation2 + $0x1a8] sm:$0xff]
  %v5283 = vld [vmem:[#allocation2 + $0x1b0] sm:$0xff]
  %v5284 = vld [vmem:[#allocation2 + $0x1b8] sm:$0xff]
  %v5285 = vld [vmem:[#allocation2 + $0x1c0] sm:$0xff]
  %v5286 = vld [vmem:[#allocation2 + $0x1c8] sm:$0xff]
  %v5287 = vld [vmem:[#allocation2 + $0x1d0] sm:$0xff]
  %v5288 = vld [vmem:[#allocation2 + $0x1d8] sm:$0xff]
  %v5289 = vld [vmem:[#allocation2 + $0x1e0] sm:$0xff]
  %v5290 = vld [vmem:[#allocation2 + $0x1e8] sm:$0xff]
  %v5291 = vld [vmem:[#allocation2 + $0x1f0] sm:$0xff]
  %v5292 = vld [vmem:[#allocation2 + $0x1f8] sm:$0xff]
  %v5293 = vld [vmem:[#allocation2 + $0x200] sm:$0xff]
  %v5294 = vld [vmem:[#allocation2 + $0x208] sm:$0xff]
  %v5295 = vld [vmem:[#allocation2 + $0x210] sm:$0xff]
  %v5296 = vld [vmem:[#allocation2 + $0x218] sm:$0xff]
  %v5297 = vld [vmem:[#allocation2 + $0x220] sm:$0xff]
  %v5298 = vld [vmem:[#allocation2 + $0x228] sm:$0xff]
  %v5299 = vld [vmem:[#allocation2 + $0x230] sm:$0xff]
  %v5300 = vld [vmem:[#allocation2 + $0x238] sm:$0xff]
  %v5301 = vld [vmem:[#allocation2 + $0x240] sm:$0xff]
  %v5302 = vld [vmem:[#allocation2 + $0x248] sm:$0xff]
  %v5303 = vld [vmem:[#allocation2 + $0x250] sm:$0xff]
  %v5304 = vld [vmem:[#allocation2 + $0x258] sm:$0xff]
  %v5305 = vld [vmem:[#allocation2 + $0x260] sm:$0xff]
  %v5306 = vld [vmem:[#allocation2 + $0x268] sm:$0xff]
  %v5307 = vld [vmem:[#allocation2 + $0x270] sm:$0xff]
  %v5308 = vld [vmem:[#allocation2 + $0x278] sm:$0xff]
  %v5309 = vld [vmem:[#allocation2 + $0x280] sm:$0xff]
  %v5310 = vld [vmem:[#allocation2 + $0x288] sm:$0xff]
  %v5311 = vld [vmem:[#allocation2 + $0x290] sm:$0xff]
  %v5312 = vld [vmem:[#allocation2 + $0x298] sm:$0xff]
  %v5313 = vld [vmem:[#allocation2 + $0x2a0] sm:$0xff]
  %v5314 = vld [vmem:[#allocation2 + $0x2a8] sm:$0xff]
  %v5315 = vld [vmem:[#allocation2 + $0x2b0] sm:$0xff]
  %v5316 = vld [vmem:[#allocation2 + $0x2b8] sm:$0xff]
  %v5317 = vld [vmem:[#allocation2 + $0x2c0] sm:$0xff]
  %v5318 = vld [vmem:[#allocation2 + $0x2c8] sm:$0xff]
  %v5319 = vld [vmem:[#allocation2 + $0x2d0] sm:$0xff]
  %v5320 = vld [vmem:[#allocation2 + $0x2d8] sm:$0xff]
  %v5321 = vld [vmem:[#allocation2 + $0x2e0] sm:$0xff]
  %v5322 = vld [vmem:[#allocation2 + $0x2e8] sm:$0xff]
  %v5323 = vld [vmem:[#allocation2 + $0x2f0] sm:$0xff]
  %v5324 = vld [vmem:[#allocation2 + $0x2f8] sm:$0xff]
  %v5325 = vld [vmem:[#allocation2 + $0x300] sm:$0xff]
  %v5326 = vld [vmem:[#allocation2 + $0x308] sm:$0xff]
  %v5327 = vld [vmem:[#allocation2 + $0x310] sm:$0xff]
  %v5328 = vld [vmem:[#allocation2 + $0x318] sm:$0xff]
  %v5329 = vld [vmem:[#allocation2 + $0x320] sm:$0xff]
  %v5330 = vld [vmem:[#allocation2 + $0x328] sm:$0xff]
  %v5331 = vld [vmem:[#allocation2 + $0x330] sm:$0xff]
  %v5332 = vld [vmem:[#allocation2 + $0x338] sm:$0xff]
  %v5333 = vld [vmem:[#allocation2 + $0x340] sm:$0xff]
  %v5334 = vld [vmem:[#allocation2 + $0x348] sm:$0xff]
  %v5335 = vld [vmem:[#allocation2 + $0x350] sm:$0xff]
  %v5336 = vld [vmem:[#allocation2 + $0x358] sm:$0xff]
  %v5337 = vld [vmem:[#allocation2 + $0x360] sm:$0xff]
  %v5338 = vld [vmem:[#allocation2 + $0x368] sm:$0xff]
  %v5339 = vld [vmem:[#allocation2 + $0x370] sm:$0xff]
  %v5340 = vld [vmem:[#allocation2 + $0x378] sm:$0xff]
  %v5341 = vld [vmem:[#allocation2 + $0x380] sm:$0xff]
  %v5342 = vld [vmem:[#allocation2 + $0x388] sm:$0xff]
  %v5343 = vld [vmem:[#allocation2 + $0x390] sm:$0xff]
  %v5344 = vld [vmem:[#allocation2 + $0x398] sm:$0xff]
  %v5345 = vld [vmem:[#allocation2 + $0x3a0] sm:$0xff]
  %v5346 = vld [vmem:[#allocation2 + $0x3a8] sm:$0xff]
  %v5347 = vld [vmem:[#allocation2 + $0x3b0] sm:$0xff]
  %v5348 = vld [vmem:[#allocation2 + $0x3b8] sm:$0xff]
  %v5349 = vld [vmem:[#allocation2 + $0x3c0] sm:$0xff]
  %v5350 = vld [vmem:[#allocation2 + $0x3c8] sm:$0xff]
  %v5351 = vld [vmem:[#allocation2 + $0x3d0] sm:$0xff]
  %v5352 = vld [vmem:[#allocation2 + $0x3d8] sm:$0xff]
  %v5353 = vld [vmem:[#allocation2 + $0x3e0] sm:$0xff]
  %v5354 = vld [vmem:[#allocation2 + $0x3e8] sm:$0xff]
  %v5355 = vld [vmem:[#allocation2 + $0x3f0] sm:$0xff]
  %v5356 = vld [vmem:[#allocation2 + $0x3f8] sm:$0xff]
  %v5357 = vld [vmem:[#allocation2 + $0x400] sm:$0xff]
  %v5358 = vld [vmem:[#allocation2 + $0x408] sm:$0xff]
  %v5359 = vld [vmem:[#allocation2 + $0x410] sm:$0xff]
  %v5360 = vld [vmem:[#allocation2 + $0x418] sm:$0xff]
  %v5361 = vld [vmem:[#allocation2 + $0x420] sm:$0xff]
  %v5362 = vld [vmem:[#allocation2 + $0x428] sm:$0xff]
  %v5363 = vld [vmem:[#allocation2 + $0x430] sm:$0xff]
  %v5364 = vld [vmem:[#allocation2 + $0x438] sm:$0xff]
  %v5365 = vld [vmem:[#allocation2 + $0x440] sm:$0xff]
  %v5366 = vld [vmem:[#allocation2 + $0x448] sm:$0xff]
  %v5367 = vld [vmem:[#allocation2 + $0x450] sm:$0xff]
  %v5368 = vld [vmem:[#allocation2 + $0x458] sm:$0xff]
  %v5369 = vld [vmem:[#allocation2 + $0x460] sm:$0xff]
  %v5370 = vld [vmem:[#allocation2 + $0x468] sm:$0xff]
  %v5371 = vld [vmem:[#allocation2 + $0x470] sm:$0xff]
  %v5372 = vld [vmem:[#allocation2 + $0x478] sm:$0xff]
  %v5373 = vpack.c.bf16 %v5232, %v5229
  %v5374 = vpack.c.bf16 %v5238, %v5235
  %v5375 = vpack.c.bf16 %v5244, %v5241
  %v5376 = vpack.c.bf16 %v5250, %v5247
  %v5377 = vpack.c.bf16 %v5304, %v5301
  %v5378 = vpack.c.bf16 %v5310, %v5307
  %v5379 = vpack.c.bf16 %v5316, %v5313
  %v5380 = vpack.c.bf16 %v5322, %v5319
  %v5381 = vpack.c.bf16 %v5256, %v5253
  %v5382 = vpack.c.bf16 %v5262, %v5259
  %v5383 = vpack.c.bf16 %v5268, %v5265
  %v5384 = vpack.c.bf16 %v5274, %v5271
  %v5385 = vpack.c.bf16 %v5328, %v5325
  %v5386 = vpack.c.bf16 %v5334, %v5331
  %v5387 = vpack.c.bf16 %v5340, %v5337
  %v5388 = vpack.c.bf16 %v5346, %v5343
  %v5389 = vpack.c.bf16 %v5280, %v5277
  %v5390 = vpack.c.bf16 %v5286, %v5283
  %v5391 = vpack.c.bf16 %v5292, %v5289
  %v5392 = vpack.c.bf16 %v5298, %v5295
  %v5393 = vpack.c.bf16 %v5352, %v5349
  %v5394 = vpack.c.bf16 %v5358, %v5355
  %v5395 = vpack.c.bf16 %v5364, %v5361
  %v5396 = vpack.c.bf16 %v5370, %v5367
  %v5397 = vpack.c.bf16 %v5233, %v5230
  %v5398 = vpack.c.bf16 %v5239, %v5236
  %v5399 = vpack.c.bf16 %v5245, %v5242
  %v5400 = vpack.c.bf16 %v5251, %v5248
  %v5401 = vpack.c.bf16 %v5305, %v5302
  %v5402 = vpack.c.bf16 %v5311, %v5308
  %v5403 = vpack.c.bf16 %v5317, %v5314
  %v5404 = vpack.c.bf16 %v5323, %v5320
  %v5405 = vpack.c.bf16 %v5257, %v5254
  %v5406 = vpack.c.bf16 %v5263, %v5260
  %v5407 = vpack.c.bf16 %v5269, %v5266
  %v5408 = vpack.c.bf16 %v5275, %v5272
  %v5409 = vpack.c.bf16 %v5329, %v5326
  %v5410 = vpack.c.bf16 %v5335, %v5332
  %v5411 = vpack.c.bf16 %v5341, %v5338
  %v5412 = vpack.c.bf16 %v5347, %v5344
  %v5413 = vpack.c.bf16 %v5281, %v5278
  %v5414 = vpack.c.bf16 %v5287, %v5284
  %v5415 = vpack.c.bf16 %v5293, %v5290
  %v5416 = vpack.c.bf16 %v5299, %v5296
  %v5417 = vpack.c.bf16 %v5353, %v5350
  %v5418 = vpack.c.bf16 %v5359, %v5356
  %v5419 = vpack.c.bf16 %v5365, %v5362
  %v5420 = vpack.c.bf16 %v5371, %v5368
  %v5421 = vpack.c.bf16 %v5234, %v5231
  %v5422 = vpack.c.bf16 %v5240, %v5237
  %v5423 = vpack.c.bf16 %v5246, %v5243
  %v5424 = vpack.c.bf16 %v5252, %v5249
  %v5425 = vpack.c.bf16 %v5306, %v5303
  %v5426 = vpack.c.bf16 %v5312, %v5309
  %v5427 = vpack.c.bf16 %v5318, %v5315
  %v5428 = vpack.c.bf16 %v5324, %v5321
  %v5429 = vpack.c.bf16 %v5258, %v5255
  %v5430 = vpack.c.bf16 %v5264, %v5261
  %v5431 = vpack.c.bf16 %v5270, %v5267
  %v5432 = vpack.c.bf16 %v5276, %v5273
  %v5433 = vpack.c.bf16 %v5330, %v5327
  %v5434 = vpack.c.bf16 %v5336, %v5333
  %v5435 = vpack.c.bf16 %v5342, %v5339
  %v5436 = vpack.c.bf16 %v5348, %v5345
  %v5437 = vpack.c.bf16 %v5282, %v5279
  %v5438 = vpack.c.bf16 %v5288, %v5285
  %v5439 = vpack.c.bf16 %v5294, %v5291
  %v5440 = vpack.c.bf16 %v5300, %v5297
  %v5441 = vpack.c.bf16 %v5354, %v5351
  %v5442 = vpack.c.bf16 %v5360, %v5357
  %v5443 = vpack.c.bf16 %v5366, %v5363
  %v5444 = vpack.c.bf16 %v5372, %v5369
  %s5445 = scalar_lea.vmem %s1, 1728
  %v5446 = vld [vmem:[%s5445] sm:$0xf]
  %v5447 = vld [vmem:[%s5445 + $0x4] sm:$0xf]
  %v5448 = vld [vmem:[%s5445 + $0x8] sm:$0xf]
  %v5449 = vld [vmem:[%s5445 + $0xc] sm:$0xf]
  %v5450 = vld [vmem:[%s5445 + $0x10] sm:$0xf]
  %v5451 = vld [vmem:[%s5445 + $0x14] sm:$0xf]
  %v5452 = vld [vmem:[%s5445 + $0x18] sm:$0xf]
  %v5453 = vld [vmem:[%s5445 + $0x1c] sm:$0xf]
  %v5454 = vld [vmem:[%s5445 + $0x20] sm:$0xf]
  %v5455 = vld [vmem:[%s5445 + $0x24] sm:$0xf]
  %v5456 = vld [vmem:[%s5445 + $0x28] sm:$0xf]
  %v5457 = vld [vmem:[%s5445 + $0x2c] sm:$0xf]
  %v5458 = vld [vmem:[%s5445 + $0x30] sm:$0xf]
  %v5459 = vld [vmem:[%s5445 + $0x34] sm:$0xf]
  %v5460 = vld [vmem:[%s5445 + $0x38] sm:$0xf]
  %v5461 = vld [vmem:[%s5445 + $0x3c] sm:$0xf]
  %v5462 = vld [vmem:[%s5445 + $0x40] sm:$0xf]
  %v5463 = vld [vmem:[%s5445 + $0x44] sm:$0xf]
  %v5464 = vld [vmem:[%s5445 + $0x48] sm:$0xf]
  %v5465 = vld [vmem:[%s5445 + $0x4c] sm:$0xf]
  %v5466 = vld [vmem:[%s5445 + $0x50] sm:$0xf]
  %v5467 = vld [vmem:[%s5445 + $0x54] sm:$0xf]
  %v5468 = vld [vmem:[%s5445 + $0x58] sm:$0xf]
  %v5469 = vld [vmem:[%s5445 + $0x5c] sm:$0xf]
  %v5470 = vld [vmem:[%s5445 + $0x60] sm:$0xf]
  %v5471 = vld [vmem:[%s5445 + $0x64] sm:$0xf]
  %v5472 = vld [vmem:[%s5445 + $0x68] sm:$0xf]
  %v5473 = vld [vmem:[%s5445 + $0x6c] sm:$0xf]
  %v5474 = vld [vmem:[%s5445 + $0x70] sm:$0xf]
  %v5475 = vld [vmem:[%s5445 + $0x74] sm:$0xf]
  %v5476 = vld [vmem:[%s5445 + $0x78] sm:$0xf]
  %v5477 = vld [vmem:[%s5445 + $0x7c] sm:$0xf]
  %v5478 = vld [vmem:[%s5445 + $0x80] sm:$0xf]
  %v5479 = vld [vmem:[%s5445 + $0x84] sm:$0xf]
  %v5480 = vld [vmem:[%s5445 + $0x88] sm:$0xf]
  %v5481 = vld [vmem:[%s5445 + $0x8c] sm:$0xf]
  %v5482 = vld [vmem:[%s5445 + $0x90] sm:$0xf]
  %v5483 = vld [vmem:[%s5445 + $0x94] sm:$0xf]
  %v5484 = vld [vmem:[%s5445 + $0x98] sm:$0xf]
  %v5485 = vld [vmem:[%s5445 + $0x9c] sm:$0xf]
  %v5486 = vld [vmem:[%s5445 + $0xa0] sm:$0xf]
  %v5487 = vld [vmem:[%s5445 + $0xa4] sm:$0xf]
  %v5488 = vld [vmem:[%s5445 + $0xa8] sm:$0xf]
  %v5489 = vld [vmem:[%s5445 + $0xac] sm:$0xf]
  %v5490 = vld [vmem:[%s5445 + $0xb0] sm:$0xf]
  %v5491 = vld [vmem:[%s5445 + $0xb4] sm:$0xf]
  %v5492 = vld [vmem:[%s5445 + $0xb8] sm:$0xf]
  %v5493 = vld [vmem:[%s5445 + $0xbc] sm:$0xf]
  %v5494 = vld [vmem:[%s5445 + $0xc0] sm:$0xf]
  %v5495 = vld [vmem:[%s5445 + $0xc4] sm:$0xf]
  %v5496 = vld [vmem:[%s5445 + $0xc8] sm:$0xf]
  %v5497 = vld [vmem:[%s5445 + $0xcc] sm:$0xf]
  %v5498 = vld [vmem:[%s5445 + $0xd0] sm:$0xf]
  %v5499 = vld [vmem:[%s5445 + $0xd4] sm:$0xf]
  %v5500 = vld [vmem:[%s5445 + $0xd8] sm:$0xf]
  %v5501 = vld [vmem:[%s5445 + $0xdc] sm:$0xf]
  %v5502 = vld [vmem:[%s5445 + $0xe0] sm:$0xf]
  %v5503 = vld [vmem:[%s5445 + $0xe4] sm:$0xf]
  %v5504 = vld [vmem:[%s5445 + $0xe8] sm:$0xf]
  %v5505 = vld [vmem:[%s5445 + $0xec] sm:$0xf]
  %v5506 = vld [vmem:[%s5445 + $0xf0] sm:$0xf]
  %v5507 = vld [vmem:[%s5445 + $0xf4] sm:$0xf]
  %v5508 = vld [vmem:[%s5445 + $0xf8] sm:$0xf]
  %v5509 = vld [vmem:[%s5445 + $0xfc] sm:$0xf]
  %v5510 = vld [vmem:[%s5445 + $0x100] sm:$0xf]
  %v5511 = vld [vmem:[%s5445 + $0x104] sm:$0xf]
  %v5512 = vld [vmem:[%s5445 + $0x108] sm:$0xf]
  %v5513 = vld [vmem:[%s5445 + $0x10c] sm:$0xf]
  %v5514 = vld [vmem:[%s5445 + $0x110] sm:$0xf]
  %v5515 = vld [vmem:[%s5445 + $0x114] sm:$0xf]
  %v5516 = vld [vmem:[%s5445 + $0x118] sm:$0xf]
  %v5517 = vld [vmem:[%s5445 + $0x11c] sm:$0xf]
  %v5518 = vld [vmem:[%s5445 + $0x120] sm:$0xf]
  %v5519 = vld [vmem:[%s5445 + $0x124] sm:$0xf]
  %v5520 = vld [vmem:[%s5445 + $0x128] sm:$0xf]
  %v5521 = vld [vmem:[%s5445 + $0x12c] sm:$0xf]
  %v5522 = vld [vmem:[%s5445 + $0x130] sm:$0xf]
  %v5523 = vld [vmem:[%s5445 + $0x134] sm:$0xf]
  %v5524 = vld [vmem:[%s5445 + $0x138] sm:$0xf]
  %v5525 = vld [vmem:[%s5445 + $0x13c] sm:$0xf]
  %v5526 = vld [vmem:[%s5445 + $0x140] sm:$0xf]
  %v5527 = vld [vmem:[%s5445 + $0x144] sm:$0xf]
  %v5528 = vld [vmem:[%s5445 + $0x148] sm:$0xf]
  %v5529 = vld [vmem:[%s5445 + $0x14c] sm:$0xf]
  %v5530 = vld [vmem:[%s5445 + $0x150] sm:$0xf]
  %v5531 = vld [vmem:[%s5445 + $0x154] sm:$0xf]
  %v5532 = vld [vmem:[%s5445 + $0x158] sm:$0xf]
  %v5533 = vld [vmem:[%s5445 + $0x15c] sm:$0xf]
  %v5534 = vld [vmem:[%s5445 + $0x160] sm:$0xf]
  %v5535 = vld [vmem:[%s5445 + $0x164] sm:$0xf]
  %v5536 = vld [vmem:[%s5445 + $0x168] sm:$0xf]
  %v5537 = vld [vmem:[%s5445 + $0x16c] sm:$0xf]
  %v5538 = vld [vmem:[%s5445 + $0x170] sm:$0xf]
  %v5539 = vld [vmem:[%s5445 + $0x174] sm:$0xf]
  %v5540 = vld [vmem:[%s5445 + $0x178] sm:$0xf]
  %v5541 = vld [vmem:[%s5445 + $0x17c] sm:$0xf]
  %v5542 = vld [vmem:[%s5445 + $0x180] sm:$0xf]
  %v5543 = vld [vmem:[%s5445 + $0x184] sm:$0xf]
  %v5544 = vld [vmem:[%s5445 + $0x188] sm:$0xf]
  %v5545 = vld [vmem:[%s5445 + $0x18c] sm:$0xf]
  %v5546 = vld [vmem:[%s5445 + $0x190] sm:$0xf]
  %v5547 = vld [vmem:[%s5445 + $0x194] sm:$0xf]
  %v5548 = vld [vmem:[%s5445 + $0x198] sm:$0xf]
  %v5549 = vld [vmem:[%s5445 + $0x19c] sm:$0xf]
  %v5550 = vld [vmem:[%s5445 + $0x1a0] sm:$0xf]
  %v5551 = vld [vmem:[%s5445 + $0x1a4] sm:$0xf]
  %v5552 = vld [vmem:[%s5445 + $0x1a8] sm:$0xf]
  %v5553 = vld [vmem:[%s5445 + $0x1ac] sm:$0xf]
  %v5554 = vld [vmem:[%s5445 + $0x1b0] sm:$0xf]
  %v5555 = vld [vmem:[%s5445 + $0x1b4] sm:$0xf]
  %v5556 = vld [vmem:[%s5445 + $0x1b8] sm:$0xf]
  %v5557 = vld [vmem:[%s5445 + $0x1bc] sm:$0xf]
  %v5558 = vld [vmem:[%s5445 + $0x1c0] sm:$0xf]
  %v5559 = vld [vmem:[%s5445 + $0x1c4] sm:$0xf]
  %v5560 = vld [vmem:[%s5445 + $0x1c8] sm:$0xf]
  %v5561 = vld [vmem:[%s5445 + $0x1cc] sm:$0xf]
  %v5562 = vld [vmem:[%s5445 + $0x1d0] sm:$0xf]
  %v5563 = vld [vmem:[%s5445 + $0x1d4] sm:$0xf]
  %v5564 = vld [vmem:[%s5445 + $0x1d8] sm:$0xf]
  %v5565 = vld [vmem:[%s5445 + $0x1dc] sm:$0xf]
  %v5566 = vld [vmem:[%s5445 + $0x1e0] sm:$0xf]
  %v5567 = vld [vmem:[%s5445 + $0x1e4] sm:$0xf]
  %v5568 = vld [vmem:[%s5445 + $0x1e8] sm:$0xf]
  %v5569 = vld [vmem:[%s5445 + $0x1ec] sm:$0xf]
  %v5570 = vld [vmem:[%s5445 + $0x1f0] sm:$0xf]
  %v5571 = vld [vmem:[%s5445 + $0x1f4] sm:$0xf]
  %v5572 = vld [vmem:[%s5445 + $0x1f8] sm:$0xf]
  %v5573 = vld [vmem:[%s5445 + $0x1fc] sm:$0xf]
  %v5574 = vld [vmem:[%s5445 + $0x200] sm:$0xf]
  %v5575 = vld [vmem:[%s5445 + $0x204] sm:$0xf]
  %v5576 = vld [vmem:[%s5445 + $0x208] sm:$0xf]
  %v5577 = vld [vmem:[%s5445 + $0x20c] sm:$0xf]
  %v5578 = vld [vmem:[%s5445 + $0x210] sm:$0xf]
  %v5579 = vld [vmem:[%s5445 + $0x214] sm:$0xf]
  %v5580 = vld [vmem:[%s5445 + $0x218] sm:$0xf]
  %v5581 = vld [vmem:[%s5445 + $0x21c] sm:$0xf]
  %v5582 = vld [vmem:[%s5445 + $0x220] sm:$0xf]
  %v5583 = vld [vmem:[%s5445 + $0x224] sm:$0xf]
  %v5584 = vld [vmem:[%s5445 + $0x228] sm:$0xf]
  %v5585 = vld [vmem:[%s5445 + $0x22c] sm:$0xf]
  %v5586 = vld [vmem:[%s5445 + $0x230] sm:$0xf]
  %v5587 = vld [vmem:[%s5445 + $0x234] sm:$0xf]
  %v5588 = vld [vmem:[%s5445 + $0x238] sm:$0xf]
  %v5589 = vld [vmem:[%s5445 + $0x23c] sm:$0xf]
  %s5590 = scalar_lea.vmem %s2, 3
  %v5591 = vld [vmem:[%s5590] sm:$0x1]
  %v5593 = vlaneseq
  %v5594 = vshrl.u32 %v5593, 7
  %v5595 = vsub.s32 0, %v5594
  %v5596 = vrot.slane %v5591, %v5595
  %v5742 = vunpack.c.l.b16 %v5446
  %v5743 = vunpack.c.l.b16 %v5447
  %v5744 = vunpack.c.l.b16 %v5448
  %v5745 = vunpack.c.l.b16 %v5449
  %v5746 = vunpack.c.l.b16 %v5450
  %v5747 = vunpack.c.l.b16 %v5451
  %v5748 = vunpack.c.l.b16 %v5452
  %v5749 = vunpack.c.l.b16 %v5453
  %v5750 = vunpack.c.l.b16 %v5454
  %v5751 = vunpack.c.l.b16 %v5455
  %v5752 = vunpack.c.l.b16 %v5456
  %v5753 = vunpack.c.l.b16 %v5457
  %v5754 = vunpack.c.l.b16 %v5458
  %v5755 = vunpack.c.l.b16 %v5459
  %v5756 = vunpack.c.l.b16 %v5460
  %v5757 = vunpack.c.l.b16 %v5461
  %v5758 = vunpack.c.l.b16 %v5462
  %v5759 = vunpack.c.l.b16 %v5463
  %v5760 = vunpack.c.l.b16 %v5464
  %v5761 = vunpack.c.l.b16 %v5465
  %v5762 = vunpack.c.l.b16 %v5466
  %v5763 = vunpack.c.l.b16 %v5467
  %v5764 = vunpack.c.l.b16 %v5468
  %v5765 = vunpack.c.l.b16 %v5469
  %v5766 = vunpack.c.l.b16 %v5470
  %v5767 = vunpack.c.l.b16 %v5471
  %v5768 = vunpack.c.l.b16 %v5472
  %v5769 = vunpack.c.l.b16 %v5473
  %v5770 = vunpack.c.l.b16 %v5474
  %v5771 = vunpack.c.l.b16 %v5475
  %v5772 = vunpack.c.l.b16 %v5476
  %v5773 = vunpack.c.l.b16 %v5477
  %v5774 = vunpack.c.l.b16 %v5478
  %v5775 = vunpack.c.l.b16 %v5479
  %v5776 = vunpack.c.l.b16 %v5480
  %v5777 = vunpack.c.l.b16 %v5481
  %v5778 = vunpack.c.l.b16 %v5482
  %v5779 = vunpack.c.l.b16 %v5483
  %v5780 = vunpack.c.l.b16 %v5484
  %v5781 = vunpack.c.l.b16 %v5485
  %v5782 = vunpack.c.l.b16 %v5486
  %v5783 = vunpack.c.l.b16 %v5487
  %v5784 = vunpack.c.l.b16 %v5488
  %v5785 = vunpack.c.l.b16 %v5489
  %v5786 = vunpack.c.l.b16 %v5490
  %v5787 = vunpack.c.l.b16 %v5491
  %v5788 = vunpack.c.l.b16 %v5492
  %v5789 = vunpack.c.l.b16 %v5493
  %v5790 = vunpack.c.l.b16 %v5494
  %v5791 = vunpack.c.l.b16 %v5495
  %v5792 = vunpack.c.l.b16 %v5496
  %v5793 = vunpack.c.l.b16 %v5497
  %v5794 = vunpack.c.l.b16 %v5498
  %v5795 = vunpack.c.l.b16 %v5499
  %v5796 = vunpack.c.l.b16 %v5500
  %v5797 = vunpack.c.l.b16 %v5501
  %v5798 = vunpack.c.l.b16 %v5502
  %v5799 = vunpack.c.l.b16 %v5503
  %v5800 = vunpack.c.l.b16 %v5504
  %v5801 = vunpack.c.l.b16 %v5505
  %v5802 = vunpack.c.l.b16 %v5506
  %v5803 = vunpack.c.l.b16 %v5507
  %v5804 = vunpack.c.l.b16 %v5508
  %v5805 = vunpack.c.l.b16 %v5509
  %v5806 = vunpack.c.l.b16 %v5510
  %v5807 = vunpack.c.l.b16 %v5511
  %v5808 = vunpack.c.l.b16 %v5512
  %v5809 = vunpack.c.l.b16 %v5513
  %v5810 = vunpack.c.l.b16 %v5514
  %v5811 = vunpack.c.l.b16 %v5515
  %v5812 = vunpack.c.l.b16 %v5516
  %v5813 = vunpack.c.l.b16 %v5517
  %v5814 = vunpack.c.l.b16 %v5518
  %v5815 = vunpack.c.l.b16 %v5519
  %v5816 = vunpack.c.l.b16 %v5520
  %v5817 = vunpack.c.l.b16 %v5521
  %v5818 = vunpack.c.l.b16 %v5522
  %v5819 = vunpack.c.l.b16 %v5523
  %v5820 = vunpack.c.l.b16 %v5524
  %v5821 = vunpack.c.l.b16 %v5525
  %v5822 = vunpack.c.l.b16 %v5526
  %v5823 = vunpack.c.l.b16 %v5527
  %v5824 = vunpack.c.l.b16 %v5528
  %v5825 = vunpack.c.l.b16 %v5529
  %v5826 = vunpack.c.l.b16 %v5530
  %v5827 = vunpack.c.l.b16 %v5531
  %v5828 = vunpack.c.l.b16 %v5532
  %v5829 = vunpack.c.l.b16 %v5533
  %v5830 = vunpack.c.l.b16 %v5534
  %v5831 = vunpack.c.l.b16 %v5535
  %v5832 = vunpack.c.l.b16 %v5536
  %v5833 = vunpack.c.l.b16 %v5537
  %v5834 = vunpack.c.l.b16 %v5538
  %v5835 = vunpack.c.l.b16 %v5539
  %v5836 = vunpack.c.l.b16 %v5540
  %v5837 = vunpack.c.l.b16 %v5541
  %v5838 = vunpack.c.l.b16 %v5542
  %v5839 = vunpack.c.l.b16 %v5543
  %v5840 = vunpack.c.l.b16 %v5544
  %v5841 = vunpack.c.l.b16 %v5545
  %v5842 = vunpack.c.l.b16 %v5546
  %v5843 = vunpack.c.l.b16 %v5547
  %v5844 = vunpack.c.l.b16 %v5548
  %v5845 = vunpack.c.l.b16 %v5549
  %v5846 = vunpack.c.l.b16 %v5550
  %v5847 = vunpack.c.l.b16 %v5551
  %v5848 = vunpack.c.l.b16 %v5552
  %v5849 = vunpack.c.l.b16 %v5553
  %v5850 = vunpack.c.l.b16 %v5554
  %v5851 = vunpack.c.l.b16 %v5555
  %v5852 = vunpack.c.l.b16 %v5556
  %v5853 = vunpack.c.l.b16 %v5557
  %v5854 = vunpack.c.l.b16 %v5558
  %v5855 = vunpack.c.l.b16 %v5559
  %v5856 = vunpack.c.l.b16 %v5560
  %v5857 = vunpack.c.l.b16 %v5561
  %v5858 = vunpack.c.l.b16 %v5562
  %v5859 = vunpack.c.l.b16 %v5563
  %v5860 = vunpack.c.l.b16 %v5564
  %v5861 = vunpack.c.l.b16 %v5565
  %v5862 = vunpack.c.l.b16 %v5566
  %v5863 = vunpack.c.l.b16 %v5567
  %v5864 = vunpack.c.l.b16 %v5568
  %v5865 = vunpack.c.l.b16 %v5569
  %v5866 = vunpack.c.l.b16 %v5570
  %v5867 = vunpack.c.l.b16 %v5571
  %v5868 = vunpack.c.l.b16 %v5572
  %v5869 = vunpack.c.l.b16 %v5573
  %v5870 = vunpack.c.l.b16 %v5574
  %v5871 = vunpack.c.l.b16 %v5575
  %v5872 = vunpack.c.l.b16 %v5576
  %v5873 = vunpack.c.l.b16 %v5577
  %v5874 = vunpack.c.l.b16 %v5578
  %v5875 = vunpack.c.l.b16 %v5579
  %v5876 = vunpack.c.l.b16 %v5580
  %v5877 = vunpack.c.l.b16 %v5581
  %v5878 = vunpack.c.l.b16 %v5582
  %v5879 = vunpack.c.l.b16 %v5583
  %v5880 = vunpack.c.l.b16 %v5584
  %v5881 = vunpack.c.l.b16 %v5585
  %v5882 = vunpack.c.l.b16 %v5586
  %v5883 = vunpack.c.l.b16 %v5587
  %v5884 = vunpack.c.l.b16 %v5588
  %v5885 = vunpack.c.l.b16 %v5589
  %v5886 = vpack.c.b16 %v5743, %v5742
  %v5887 = vpack.c.b16 %v5745, %v5744
  %v5888 = vpack.c.b16 %v5747, %v5746
  %v5889 = vpack.c.b16 %v5749, %v5748
  %v5890 = vpack.c.b16 %v5751, %v5750
  %v5891 = vpack.c.b16 %v5753, %v5752
  %v5892 = vpack.c.b16 %v5755, %v5754
  %v5893 = vpack.c.b16 %v5757, %v5756
  %v5894 = vpack.c.b16 %v5759, %v5758
  %v5895 = vpack.c.b16 %v5761, %v5760
  %v5896 = vpack.c.b16 %v5763, %v5762
  %v5897 = vpack.c.b16 %v5765, %v5764
  %v5898 = vpack.c.b16 %v5767, %v5766
  %v5899 = vpack.c.b16 %v5769, %v5768
  %v5900 = vpack.c.b16 %v5771, %v5770
  %v5901 = vpack.c.b16 %v5773, %v5772
  %v5902 = vpack.c.b16 %v5775, %v5774
  %v5903 = vpack.c.b16 %v5777, %v5776
  %v5904 = vpack.c.b16 %v5779, %v5778
  %v5905 = vpack.c.b16 %v5781, %v5780
  %v5906 = vpack.c.b16 %v5783, %v5782
  %v5907 = vpack.c.b16 %v5785, %v5784
  %v5908 = vpack.c.b16 %v5787, %v5786
  %v5909 = vpack.c.b16 %v5789, %v5788
  %v5910 = vpack.c.b16 %v5791, %v5790
  %v5911 = vpack.c.b16 %v5793, %v5792
  %v5912 = vpack.c.b16 %v5795, %v5794
  %v5913 = vpack.c.b16 %v5797, %v5796
  %v5914 = vpack.c.b16 %v5799, %v5798
  %v5915 = vpack.c.b16 %v5801, %v5800
  %v5916 = vpack.c.b16 %v5803, %v5802
  %v5917 = vpack.c.b16 %v5805, %v5804
  %v5918 = vpack.c.b16 %v5807, %v5806
  %v5919 = vpack.c.b16 %v5809, %v5808
  %v5920 = vpack.c.b16 %v5811, %v5810
  %v5921 = vpack.c.b16 %v5813, %v5812
  %v5922 = vpack.c.b16 %v5815, %v5814
  %v5923 = vpack.c.b16 %v5817, %v5816
  %v5924 = vpack.c.b16 %v5819, %v5818
  %v5925 = vpack.c.b16 %v5821, %v5820
  %v5926 = vpack.c.b16 %v5823, %v5822
  %v5927 = vpack.c.b16 %v5825, %v5824
  %v5928 = vpack.c.b16 %v5827, %v5826
  %v5929 = vpack.c.b16 %v5829, %v5828
  %v5930 = vpack.c.b16 %v5831, %v5830
  %v5931 = vpack.c.b16 %v5833, %v5832
  %v5932 = vpack.c.b16 %v5835, %v5834
  %v5933 = vpack.c.b16 %v5837, %v5836
  %v5934 = vpack.c.b16 %v5839, %v5838
  %v5935 = vpack.c.b16 %v5841, %v5840
  %v5936 = vpack.c.b16 %v5843, %v5842
  %v5937 = vpack.c.b16 %v5845, %v5844
  %v5938 = vpack.c.b16 %v5847, %v5846
  %v5939 = vpack.c.b16 %v5849, %v5848
  %v5940 = vpack.c.b16 %v5851, %v5850
  %v5941 = vpack.c.b16 %v5853, %v5852
  %v5942 = vpack.c.b16 %v5855, %v5854
  %v5943 = vpack.c.b16 %v5857, %v5856
  %v5944 = vpack.c.b16 %v5859, %v5858
  %v5945 = vpack.c.b16 %v5861, %v5860
  %v5946 = vpack.c.b16 %v5863, %v5862
  %v5947 = vpack.c.b16 %v5865, %v5864
  %v5948 = vpack.c.b16 %v5867, %v5866
  %v5949 = vpack.c.b16 %v5869, %v5868
  %v5950 = vpack.c.b16 %v5871, %v5870
  %v5951 = vpack.c.b16 %v5873, %v5872
  %v5952 = vpack.c.b16 %v5875, %v5874
  %v5953 = vpack.c.b16 %v5877, %v5876
  %v5954 = vpack.c.b16 %v5879, %v5878
  %v5955 = vpack.c.b16 %v5881, %v5880
  %v5956 = vpack.c.b16 %v5883, %v5882
  %v5957 = vpack.c.b16 %v5885, %v5884
  %6030 = vmatprep.subr.bf16.mxu0 0
  %6031 = vmatpush1.bf16.msra.mxu0 %v5893
  %6032 = vmatprep.subr.bf16.mxu0 0
  %6033 = vmatpush1.bf16.msra.mxu0 %v5892
  %6034 = vmatprep.subr.bf16.mxu0 0
  %6035 = vmatpush1.bf16.msra.mxu0 %v5891
  %6036 = vmatprep.subr.bf16.mxu0 0
  %6037 = vmatpush1.bf16.msra.mxu0 %v5890
  %6038 = vmatprep.subr.bf16.mxu0 0
  %6039 = vmatpush1.bf16.msra.mxu0 %v5889
  %6040 = vmatprep.subr.bf16.mxu0 0
  %6041 = vmatpush1.bf16.msra.mxu0 %v5888
  %6042 = vmatprep.subr.bf16.mxu0 0
  %6043 = vmatpush1.bf16.msra.mxu0 %v5887
  %6044 = vmatprep.subr.bf16.mxu0 0
  %6045 = vmatpush1.bf16.msra.mxu0 %v5886
  %6046 = vmatprep.subr.bf16.mxu0 0
  %6047 = vmatpush2.bf16.msra.mxu0 %v5901
  %6048 = vmatprep.subr.bf16.mxu0 0
  %6049 = vmatpush2.bf16.msra.mxu0 %v5900
  %6050 = vmatprep.subr.bf16.mxu0 0
  %6051 = vmatpush2.bf16.msra.mxu0 %v5899
  %6052 = vmatprep.subr.bf16.mxu0 0
  %6053 = vmatpush2.bf16.msra.mxu0 %v5898
  %6054 = vmatprep.subr.bf16.mxu0 0
  %6055 = vmatpush2.bf16.msra.mxu0 %v5897
  %6056 = vmatprep.subr.bf16.mxu0 0
  %6057 = vmatpush2.bf16.msra.mxu0 %v5896
  %6058 = vmatprep.subr.bf16.mxu0 0
  %6059 = vmatpush2.bf16.msra.mxu0 %v5895
  %6060 = vmatprep.subr.bf16.mxu0 0
  %6061 = vmatpush2.bf16.msra.mxu0 %v5894
  %6062 = vmatprep.mubr.bf16.mxu0 %v5381
  %6063 = vmatmul.mubr.bf16.gmra.mxu0 %v5373
  %v6064 = vpop.f32.mrf.mxu0
  %v6065 = vadd.f32 %v5596, %v6064
  %v6066 = vpop.f32.mrf.mxu0
  %v6067 = vpop.f32.mrf.mxu0
  %v6068 = vadd.f32 %v5596, %v6067
  %v6069 = vpop.f32.mrf.mxu0
  %6070 = vmatprep.mubr.bf16.mxu0 %v5382
  %6071 = vmatmul.mubr.bf16.gmra.mxu0 %v5374
  %v6072 = vpop.f32.mrf.mxu0
  %v6073 = vadd.f32 %v5596, %v6072
  %v6074 = vpop.f32.mrf.mxu0
  %v6075 = vpop.f32.mrf.mxu0
  %v6076 = vadd.f32 %v5596, %v6075
  %v6077 = vpop.f32.mrf.mxu0
  %6078 = vmatprep.mubr.bf16.mxu0 %v5383
  %6079 = vmatmul.mubr.bf16.gmra.mxu0 %v5375
  %v6080 = vpop.f32.mrf.mxu0
  %v6081 = vadd.f32 %v5596, %v6080
  %v6082 = vpop.f32.mrf.mxu0
  %v6083 = vpop.f32.mrf.mxu0
  %v6084 = vadd.f32 %v5596, %v6083
  %v6085 = vpop.f32.mrf.mxu0
  %6086 = vmatprep.mubr.bf16.mxu0 %v5384
  %6087 = vmatmul.mubr.bf16.gmra.mxu0 %v5376
  %v6088 = vpop.f32.mrf.mxu0
  %v6089 = vadd.f32 %v5596, %v6088
  %v6090 = vpop.f32.mrf.mxu0
  %v6091 = vpop.f32.mrf.mxu0
  %v6092 = vadd.f32 %v5596, %v6091
  %v6093 = vpop.f32.mrf.mxu0
  %6094 = vmatprep.mubr.bf16.mxu0 %v5385
  %6095 = vmatmul.mubr.bf16.gmra.mxu0 %v5377
  %v6096 = vpop.f32.mrf.mxu0
  %v6097 = vadd.f32 %v5596, %v6096
  %v6098 = vpop.f32.mrf.mxu0
  %v6099 = vpop.f32.mrf.mxu0
  %v6100 = vadd.f32 %v5596, %v6099
  %v6101 = vpop.f32.mrf.mxu0
  %6102 = vmatprep.mubr.bf16.mxu0 %v5386
  %6103 = vmatmul.mubr.bf16.gmra.mxu0 %v5378
  %v6104 = vpop.f32.mrf.mxu0
  %v6105 = vadd.f32 %v5596, %v6104
  %v6106 = vpop.f32.mrf.mxu0
  %v6107 = vpop.f32.mrf.mxu0
  %v6108 = vadd.f32 %v5596, %v6107
  %v6109 = vpop.f32.mrf.mxu0
  %6110 = vmatprep.mubr.bf16.mxu0 %v5387
  %6111 = vmatmul.mubr.bf16.gmra.mxu0 %v5379
  %v6112 = vpop.f32.mrf.mxu0
  %v6113 = vadd.f32 %v5596, %v6112
  %v6114 = vpop.f32.mrf.mxu0
  %v6115 = vpop.f32.mrf.mxu0
  %v6116 = vadd.f32 %v5596, %v6115
  %v6117 = vpop.f32.mrf.mxu0
  %6118 = vmatprep.mubr.bf16.mxu0 %v5388
  %6119 = vmatmul.mubr.bf16.gmra.mxu0 %v5380
  %v6120 = vpop.f32.mrf.mxu0
  %v6121 = vadd.f32 %v5596, %v6120
  %v6122 = vpop.f32.mrf.mxu0
  %v6123 = vpop.f32.mrf.mxu0
  %v6124 = vadd.f32 %v5596, %v6123
  %v6125 = vpop.f32.mrf.mxu0
  %6126 = vdwg.mxu0
  %6127 = vmatprep.subr.bf16.mxu0 0
  %6128 = vmatpush1.bf16.msra.mxu0 %v5909
  %6129 = vmatprep.subr.bf16.mxu0 0
  %6130 = vmatpush1.bf16.msra.mxu0 %v5908
  %6131 = vmatprep.subr.bf16.mxu0 0
  %6132 = vmatpush1.bf16.msra.mxu0 %v5907
  %6133 = vmatprep.subr.bf16.mxu0 0
  %6134 = vmatpush1.bf16.msra.mxu0 %v5906
  %6135 = vmatprep.subr.bf16.mxu0 0
  %6136 = vmatpush1.bf16.msra.mxu0 %v5905
  %6137 = vmatprep.subr.bf16.mxu0 0
  %6138 = vmatpush1.bf16.msra.mxu0 %v5904
  %6139 = vmatprep.subr.bf16.mxu0 0
  %6140 = vmatpush1.bf16.msra.mxu0 %v5903
  %6141 = vmatprep.subr.bf16.mxu0 0
  %6142 = vmatpush1.bf16.msra.mxu0 %v5902
  %6143 = vmatprep.subr.bf16.mxu0 0
  %6144 = vmatpush2.bf16.msra.mxu0 %v5917
  %6145 = vmatprep.subr.bf16.mxu0 0
  %6146 = vmatpush2.bf16.msra.mxu0 %v5916
  %6147 = vmatprep.subr.bf16.mxu0 0
  %6148 = vmatpush2.bf16.msra.mxu0 %v5915
  %6149 = vmatprep.subr.bf16.mxu0 0
  %6150 = vmatpush2.bf16.msra.mxu0 %v5914
  %6151 = vmatprep.subr.bf16.mxu0 0
  %6152 = vmatpush2.bf16.msra.mxu0 %v5913
  %6153 = vmatprep.subr.bf16.mxu0 0
  %6154 = vmatpush2.bf16.msra.mxu0 %v5912
  %6155 = vmatprep.subr.bf16.mxu0 0
  %6156 = vmatpush2.bf16.msra.mxu0 %v5911
  %6157 = vmatprep.subr.bf16.mxu0 0
  %6158 = vmatpush2.bf16.msra.mxu0 %v5910
  %6159 = vmatprep.mubr.bf16.mxu0 %v5397
  %6160 = vmatmul.mubr.bf16.gmra.mxu0 %v5389
  %v6161 = vpop.f32.mrf.mxu0
  %v6162 = vadd.f32 %v6065, %v6161
  %v6163 = vpop.f32.mrf.mxu0
  %v6164 = vpop.f32.mrf.mxu0
  %v6165 = vadd.f32 %v6068, %v6164
  %v6166 = vpop.f32.mrf.mxu0
  %6167 = vmatprep.mubr.bf16.mxu0 %v5398
  %6168 = vmatmul.mubr.bf16.gmra.mxu0 %v5390
  %v6169 = vpop.f32.mrf.mxu0
  %v6170 = vadd.f32 %v6073, %v6169
  %v6171 = vpop.f32.mrf.mxu0
  %v6172 = vpop.f32.mrf.mxu0
  %v6173 = vadd.f32 %v6076, %v6172
  %v6174 = vpop.f32.mrf.mxu0
  %6175 = vmatprep.mubr.bf16.mxu0 %v5399
  %6176 = vmatmul.mubr.bf16.gmra.mxu0 %v5391
  %v6177 = vpop.f32.mrf.mxu0
  %v6178 = vadd.f32 %v6081, %v6177
  %v6179 = vpop.f32.mrf.mxu0
  %v6180 = vpop.f32.mrf.mxu0
  %v6181 = vadd.f32 %v6084, %v6180
  %v6182 = vpop.f32.mrf.mxu0
  %6183 = vmatprep.mubr.bf16.mxu0 %v5400
  %6184 = vmatmul.mubr.bf16.gmra.mxu0 %v5392
  %v6185 = vpop.f32.mrf.mxu0
  %v6186 = vadd.f32 %v6089, %v6185
  %v6187 = vpop.f32.mrf.mxu0
  %v6188 = vpop.f32.mrf.mxu0
  %v6189 = vadd.f32 %v6092, %v6188
  %v6190 = vpop.f32.mrf.mxu0
  %6191 = vmatprep.mubr.bf16.mxu0 %v5401
  %6192 = vmatmul.mubr.bf16.gmra.mxu0 %v5393
  %v6193 = vpop.f32.mrf.mxu0
  %v6194 = vadd.f32 %v6097, %v6193
  %v6195 = vpop.f32.mrf.mxu0
  %v6196 = vpop.f32.mrf.mxu0
  %v6197 = vadd.f32 %v6100, %v6196
  %v6198 = vpop.f32.mrf.mxu0
  %6199 = vmatprep.mubr.bf16.mxu0 %v5402
  %6200 = vmatmul.mubr.bf16.gmra.mxu0 %v5394
  %v6201 = vpop.f32.mrf.mxu0
  %v6202 = vadd.f32 %v6105, %v6201
  %v6203 = vpop.f32.mrf.mxu0
  %v6204 = vpop.f32.mrf.mxu0
  %v6205 = vadd.f32 %v6108, %v6204
  %v6206 = vpop.f32.mrf.mxu0
  %6207 = vmatprep.mubr.bf16.mxu0 %v5403
  %6208 = vmatmul.mubr.bf16.gmra.mxu0 %v5395
  %v6209 = vpop.f32.mrf.mxu0
  %v6210 = vadd.f32 %v6113, %v6209
  %v6211 = vpop.f32.mrf.mxu0
  %v6212 = vpop.f32.mrf.mxu0
  %v6213 = vadd.f32 %v6116, %v6212
  %v6214 = vpop.f32.mrf.mxu0
  %6215 = vmatprep.mubr.bf16.mxu0 %v5404
  %6216 = vmatmul.mubr.bf16.gmra.mxu0 %v5396
  %v6217 = vpop.f32.mrf.mxu0
  %v6218 = vadd.f32 %v6121, %v6217
  %v6219 = vpop.f32.mrf.mxu0
  %v6220 = vpop.f32.mrf.mxu0
  %v6221 = vadd.f32 %v6124, %v6220
  %v6222 = vpop.f32.mrf.mxu0
  %6223 = vdwg.mxu0
  %6224 = vmatprep.subr.bf16.mxu0 0
  %6225 = vmatpush1.bf16.msra.mxu0 %v5925
  %6226 = vmatprep.subr.bf16.mxu0 0
  %6227 = vmatpush1.bf16.msra.mxu0 %v5924
  %6228 = vmatprep.subr.bf16.mxu0 0
  %6229 = vmatpush1.bf16.msra.mxu0 %v5923
  %6230 = vmatprep.subr.bf16.mxu0 0
  %6231 = vmatpush1.bf16.msra.mxu0 %v5922
  %6232 = vmatprep.subr.bf16.mxu0 0
  %6233 = vmatpush1.bf16.msra.mxu0 %v5921
  %6234 = vmatprep.subr.bf16.mxu0 0
  %6235 = vmatpush1.bf16.msra.mxu0 %v5920
  %6236 = vmatprep.subr.bf16.mxu0 0
  %6237 = vmatpush1.bf16.msra.mxu0 %v5919
  %6238 = vmatprep.subr.bf16.mxu0 0
  %6239 = vmatpush1.bf16.msra.mxu0 %v5918
  %6240 = vmatprep.subr.bf16.mxu0 0
  %6241 = vmatpush2.bf16.msra.mxu0 %v5933
  %6242 = vmatprep.subr.bf16.mxu0 0
  %6243 = vmatpush2.bf16.msra.mxu0 %v5932
  %6244 = vmatprep.subr.bf16.mxu0 0
  %6245 = vmatpush2.bf16.msra.mxu0 %v5931
  %6246 = vmatprep.subr.bf16.mxu0 0
  %6247 = vmatpush2.bf16.msra.mxu0 %v5930
  %6248 = vmatprep.subr.bf16.mxu0 0
  %6249 = vmatpush2.bf16.msra.mxu0 %v5929
  %6250 = vmatprep.subr.bf16.mxu0 0
  %6251 = vmatpush2.bf16.msra.mxu0 %v5928
  %6252 = vmatprep.subr.bf16.mxu0 0
  %6253 = vmatpush2.bf16.msra.mxu0 %v5927
  %6254 = vmatprep.subr.bf16.mxu0 0
  %6255 = vmatpush2.bf16.msra.mxu0 %v5926
  %6256 = vmatprep.mubr.bf16.mxu0 %v5413
  %6257 = vmatmul.mubr.bf16.gmra.mxu0 %v5405
  %v6258 = vpop.f32.mrf.mxu0
  %v6259 = vadd.f32 %v6162, %v6258
  %v6260 = vpop.f32.mrf.mxu0
  %v6261 = vpop.f32.mrf.mxu0
  %v6262 = vadd.f32 %v6165, %v6261
  %v6263 = vpop.f32.mrf.mxu0
  %6264 = vmatprep.mubr.bf16.mxu0 %v5414
  %6265 = vmatmul.mubr.bf16.gmra.mxu0 %v5406
  %v6266 = vpop.f32.mrf.mxu0
  %v6267 = vadd.f32 %v6170, %v6266
  %v6268 = vpop.f32.mrf.mxu0
  %v6269 = vpop.f32.mrf.mxu0
  %v6270 = vadd.f32 %v6173, %v6269
  %v6271 = vpop.f32.mrf.mxu0
  %6272 = vmatprep.mubr.bf16.mxu0 %v5415
  %6273 = vmatmul.mubr.bf16.gmra.mxu0 %v5407
  %v6274 = vpop.f32.mrf.mxu0
  %v6275 = vadd.f32 %v6178, %v6274
  %v6276 = vpop.f32.mrf.mxu0
  %v6277 = vpop.f32.mrf.mxu0
  %v6278 = vadd.f32 %v6181, %v6277
  %v6279 = vpop.f32.mrf.mxu0
  %6280 = vmatprep.mubr.bf16.mxu0 %v5416
  %6281 = vmatmul.mubr.bf16.gmra.mxu0 %v5408
  %v6282 = vpop.f32.mrf.mxu0
  %v6283 = vadd.f32 %v6186, %v6282
  %v6284 = vpop.f32.mrf.mxu0
  %v6285 = vpop.f32.mrf.mxu0
  %v6286 = vadd.f32 %v6189, %v6285
  %v6287 = vpop.f32.mrf.mxu0
  %6288 = vmatprep.mubr.bf16.mxu0 %v5417
  %6289 = vmatmul.mubr.bf16.gmra.mxu0 %v5409
  %v6290 = vpop.f32.mrf.mxu0
  %v6291 = vadd.f32 %v6194, %v6290
  %v6292 = vpop.f32.mrf.mxu0
  %v6293 = vpop.f32.mrf.mxu0
  %v6294 = vadd.f32 %v6197, %v6293
  %v6295 = vpop.f32.mrf.mxu0
  %6296 = vmatprep.mubr.bf16.mxu0 %v5418
  %6297 = vmatmul.mubr.bf16.gmra.mxu0 %v5410
  %v6298 = vpop.f32.mrf.mxu0
  %v6299 = vadd.f32 %v6202, %v6298
  %v6300 = vpop.f32.mrf.mxu0
  %v6301 = vpop.f32.mrf.mxu0
  %v6302 = vadd.f32 %v6205, %v6301
  %v6303 = vpop.f32.mrf.mxu0
  %6304 = vmatprep.mubr.bf16.mxu0 %v5419
  %6305 = vmatmul.mubr.bf16.gmra.mxu0 %v5411
  %v6306 = vpop.f32.mrf.mxu0
  %v6307 = vadd.f32 %v6210, %v6306
  %v6308 = vpop.f32.mrf.mxu0
  %v6309 = vpop.f32.mrf.mxu0
  %v6310 = vadd.f32 %v6213, %v6309
  %v6311 = vpop.f32.mrf.mxu0
  %6312 = vmatprep.mubr.bf16.mxu0 %v5420
  %6313 = vmatmul.mubr.bf16.gmra.mxu0 %v5412
  %v6314 = vpop.f32.mrf.mxu0
  %v6315 = vadd.f32 %v6218, %v6314
  %v6316 = vpop.f32.mrf.mxu0
  %v6317 = vpop.f32.mrf.mxu0
  %v6318 = vadd.f32 %v6221, %v6317
  %v6319 = vpop.f32.mrf.mxu0
  %6320 = vdwg.mxu0
  %6321 = vmatprep.subr.bf16.mxu0 0
  %6322 = vmatpush1.bf16.msra.mxu0 %v5941
  %6323 = vmatprep.subr.bf16.mxu0 0
  %6324 = vmatpush1.bf16.msra.mxu0 %v5940
  %6325 = vmatprep.subr.bf16.mxu0 0
  %6326 = vmatpush1.bf16.msra.mxu0 %v5939
  %6327 = vmatprep.subr.bf16.mxu0 0
  %6328 = vmatpush1.bf16.msra.mxu0 %v5938
  %6329 = vmatprep.subr.bf16.mxu0 0
  %6330 = vmatpush1.bf16.msra.mxu0 %v5937
  %6331 = vmatprep.subr.bf16.mxu0 0
  %6332 = vmatpush1.bf16.msra.mxu0 %v5936
  %6333 = vmatprep.subr.bf16.mxu0 0
  %6334 = vmatpush1.bf16.msra.mxu0 %v5935
  %6335 = vmatprep.subr.bf16.mxu0 0
  %6336 = vmatpush1.bf16.msra.mxu0 %v5934
  %6337 = vmatprep.subr.bf16.mxu0 0
  %6338 = vmatpush2.bf16.msra.mxu0 %v5949
  %6339 = vmatprep.subr.bf16.mxu0 0
  %6340 = vmatpush2.bf16.msra.mxu0 %v5948
  %6341 = vmatprep.subr.bf16.mxu0 0
  %6342 = vmatpush2.bf16.msra.mxu0 %v5947
  %6343 = vmatprep.subr.bf16.mxu0 0
  %6344 = vmatpush2.bf16.msra.mxu0 %v5946
  %6345 = vmatprep.subr.bf16.mxu0 0
  %6346 = vmatpush2.bf16.msra.mxu0 %v5945
  %6347 = vmatprep.subr.bf16.mxu0 0
  %6348 = vmatpush2.bf16.msra.mxu0 %v5944
  %6349 = vmatprep.subr.bf16.mxu0 0
  %6350 = vmatpush2.bf16.msra.mxu0 %v5943
  %6351 = vmatprep.subr.bf16.mxu0 0
  %6352 = vmatpush2.bf16.msra.mxu0 %v5942
  %6353 = vmatprep.mubr.bf16.mxu0 %v5429
  %6354 = vmatmul.mubr.bf16.gmra.mxu0 %v5421
  %v6355 = vpop.f32.mrf.mxu0
  %v6356 = vadd.f32 %v6259, %v6355
  %v6357 = vpop.f32.mrf.mxu0
  %v6358 = vpop.f32.mrf.mxu0
  %v6359 = vadd.f32 %v6262, %v6358
  %v6360 = vpop.f32.mrf.mxu0
  %6361 = vmatprep.mubr.bf16.mxu0 %v5430
  %6362 = vmatmul.mubr.bf16.gmra.mxu0 %v5422
  %v6363 = vpop.f32.mrf.mxu0
  %v6364 = vadd.f32 %v6267, %v6363
  %v6365 = vpop.f32.mrf.mxu0
  %v6366 = vpop.f32.mrf.mxu0
  %v6367 = vadd.f32 %v6270, %v6366
  %v6368 = vpop.f32.mrf.mxu0
  %6369 = vmatprep.mubr.bf16.mxu0 %v5431
  %6370 = vmatmul.mubr.bf16.gmra.mxu0 %v5423
  %v6371 = vpop.f32.mrf.mxu0
  %v6372 = vadd.f32 %v6275, %v6371
  %v6373 = vpop.f32.mrf.mxu0
  %v6374 = vpop.f32.mrf.mxu0
  %v6375 = vadd.f32 %v6278, %v6374
  %v6376 = vpop.f32.mrf.mxu0
  %6377 = vmatprep.mubr.bf16.mxu0 %v5432
  %6378 = vmatmul.mubr.bf16.gmra.mxu0 %v5424
  %v6379 = vpop.f32.mrf.mxu0
  %v6380 = vadd.f32 %v6283, %v6379
  %v6381 = vpop.f32.mrf.mxu0
  %v6382 = vpop.f32.mrf.mxu0
  %v6383 = vadd.f32 %v6286, %v6382
  %v6384 = vpop.f32.mrf.mxu0
  %6385 = vmatprep.mubr.bf16.mxu0 %v5433
  %6386 = vmatmul.mubr.bf16.gmra.mxu0 %v5425
  %v6387 = vpop.f32.mrf.mxu0
  %v6388 = vadd.f32 %v6291, %v6387
  %v6389 = vpop.f32.mrf.mxu0
  %v6390 = vpop.f32.mrf.mxu0
  %v6391 = vadd.f32 %v6294, %v6390
  %v6392 = vpop.f32.mrf.mxu0
  %6393 = vmatprep.mubr.bf16.mxu0 %v5434
  %6394 = vmatmul.mubr.bf16.gmra.mxu0 %v5426
  %v6395 = vpop.f32.mrf.mxu0
  %v6396 = vadd.f32 %v6299, %v6395
  %v6397 = vpop.f32.mrf.mxu0
  %v6398 = vpop.f32.mrf.mxu0
  %v6399 = vadd.f32 %v6302, %v6398
  %v6400 = vpop.f32.mrf.mxu0
  %6401 = vmatprep.mubr.bf16.mxu0 %v5435
  %6402 = vmatmul.mubr.bf16.gmra.mxu0 %v5427
  %v6403 = vpop.f32.mrf.mxu0
  %v6404 = vadd.f32 %v6307, %v6403
  %v6405 = vpop.f32.mrf.mxu0
  %v6406 = vpop.f32.mrf.mxu0
  %v6407 = vadd.f32 %v6310, %v6406
  %v6408 = vpop.f32.mrf.mxu0
  %6409 = vmatprep.mubr.bf16.mxu0 %v5436
  %6410 = vmatmul.mubr.bf16.gmra.mxu0 %v5428
  %v6411 = vpop.f32.mrf.mxu0
  %v6412 = vadd.f32 %v6315, %v6411
  %v6413 = vpop.f32.mrf.mxu0
  %v6414 = vpop.f32.mrf.mxu0
  %v6415 = vadd.f32 %v6318, %v6414
  %v6416 = vpop.f32.mrf.mxu0
  %6417 = vdwg.mxu0
  %6418 = vmatprep.subr.bf16.mxu0 0
  %6419 = vmatpush1.bf16.msra.mxu0 %v5957
  %6420 = vmatprep.subr.bf16.mxu0 0
  %6421 = vmatpush1.bf16.msra.mxu0 %v5956
  %6422 = vmatprep.subr.bf16.mxu0 0
  %6423 = vmatpush1.bf16.msra.mxu0 %v5955
  %6424 = vmatprep.subr.bf16.mxu0 0
  %6425 = vmatpush1.bf16.msra.mxu0 %v5954
  %6426 = vmatprep.subr.bf16.mxu0 0
  %6427 = vmatpush1.bf16.msra.mxu0 %v5953
  %6428 = vmatprep.subr.bf16.mxu0 0
  %6429 = vmatpush1.bf16.msra.mxu0 %v5952
  %6430 = vmatprep.subr.bf16.mxu0 0
  %6431 = vmatpush1.bf16.msra.mxu0 %v5951
  %6432 = vmatprep.subr.bf16.mxu0 0
  %6433 = vmatpush1.bf16.msra.mxu0 %v5950
  %6434 = vmatprep.subr.bf16.mxu0 0
  %6435 = vmatpush2.bf16.msra.mxu0 0
  %6436 = vmatprep.subr.bf16.mxu0 0
  %6437 = vmatpush2.bf16.msra.mxu0 0
  %6438 = vmatprep.subr.bf16.mxu0 0
  %6439 = vmatpush2.bf16.msra.mxu0 0
  %6440 = vmatprep.subr.bf16.mxu0 0
  %6441 = vmatpush2.bf16.msra.mxu0 0
  %6442 = vmatprep.subr.bf16.mxu0 0
  %6443 = vmatpush2.bf16.msra.mxu0 0
  %6444 = vmatprep.subr.bf16.mxu0 0
  %6445 = vmatpush2.bf16.msra.mxu0 0
  %6446 = vmatprep.subr.bf16.mxu0 0
  %6447 = vmatpush2.bf16.msra.mxu0 0
  %6448 = vmatprep.subr.bf16.mxu0 0
  %6449 = vmatpush2.bf16.msra.mxu0 0
  %6450 = vmatprep.mubr.bf16.mxu0 0
  %6451 = vmatmul.mubr.bf16.gmra.mxu0 %v5437
  %v6452 = vpop.f32.mrf.mxu0
  %v6453 = vadd.f32 %v6356, %v6452
  %v6454 = vpop.f32.mrf.mxu0
  %v6455 = vpop.f32.mrf.mxu0
  %v6456 = vadd.f32 %v6359, %v6455
  %v6457 = vpop.f32.mrf.mxu0
  %6458 = vmatprep.mubr.bf16.mxu0 0
  %6459 = vmatmul.mubr.bf16.gmra.mxu0 %v5438
  %v6460 = vpop.f32.mrf.mxu0
  %v6461 = vadd.f32 %v6364, %v6460
  %v6462 = vpop.f32.mrf.mxu0
  %v6463 = vpop.f32.mrf.mxu0
  %v6464 = vadd.f32 %v6367, %v6463
  %v6465 = vpop.f32.mrf.mxu0
  %6466 = vmatprep.mubr.bf16.mxu0 0
  %6467 = vmatmul.mubr.bf16.gmra.mxu0 %v5439
  %v6468 = vpop.f32.mrf.mxu0
  %v6469 = vadd.f32 %v6372, %v6468
  %v6470 = vpop.f32.mrf.mxu0
  %v6471 = vpop.f32.mrf.mxu0
  %v6472 = vadd.f32 %v6375, %v6471
  %v6473 = vpop.f32.mrf.mxu0
  %6474 = vmatprep.mubr.bf16.mxu0 0
  %6475 = vmatmul.mubr.bf16.gmra.mxu0 %v5440
  %v6476 = vpop.f32.mrf.mxu0
  %v6477 = vadd.f32 %v6380, %v6476
  %v6478 = vpop.f32.mrf.mxu0
  %v6479 = vpop.f32.mrf.mxu0
  %v6480 = vadd.f32 %v6383, %v6479
  %v6481 = vpop.f32.mrf.mxu0
  %6482 = vmatprep.mubr.bf16.mxu0 0
  %6483 = vmatmul.mubr.bf16.gmra.mxu0 %v5441
  %v6484 = vpop.f32.mrf.mxu0
  %v6485 = vadd.f32 %v6388, %v6484
  %v6486 = vpop.f32.mrf.mxu0
  %v6487 = vpop.f32.mrf.mxu0
  %v6488 = vadd.f32 %v6391, %v6487
  %v6489 = vpop.f32.mrf.mxu0
  %6490 = vmatprep.mubr.bf16.mxu0 0
  %6491 = vmatmul.mubr.bf16.gmra.mxu0 %v5442
  %v6492 = vpop.f32.mrf.mxu0
  %v6493 = vadd.f32 %v6396, %v6492
  %v6494 = vpop.f32.mrf.mxu0
  %v6495 = vpop.f32.mrf.mxu0
  %v6496 = vadd.f32 %v6399, %v6495
  %v6497 = vpop.f32.mrf.mxu0
  %6498 = vmatprep.mubr.bf16.mxu0 0
  %6499 = vmatmul.mubr.bf16.gmra.mxu0 %v5443
  %v6500 = vpop.f32.mrf.mxu0
  %v6501 = vadd.f32 %v6404, %v6500
  %v6502 = vpop.f32.mrf.mxu0
  %v6503 = vpop.f32.mrf.mxu0
  %v6504 = vadd.f32 %v6407, %v6503
  %v6505 = vpop.f32.mrf.mxu0
  %6506 = vmatprep.mubr.bf16.mxu0 0
  %6507 = vmatmul.mubr.bf16.gmra.mxu0 %v5444
  %v6508 = vpop.f32.mrf.mxu0
  %v6509 = vadd.f32 %v6412, %v6508
  %v6510 = vpop.f32.mrf.mxu0
  %v6511 = vpop.f32.mrf.mxu0
  %v6512 = vadd.f32 %v6415, %v6511
  %v6513 = vpop.f32.mrf.mxu0
  %6514 = vdwg.mxu0
  %v6515 = vadd.f32 %v6453, %v6456
  %v6516 = vadd.f32 %v6515, %v6461
  %v6517 = vadd.f32 %v6516, %v6464
  %v6518 = vadd.f32 %v6517, %v6469
  %v6519 = vadd.f32 %v6518, %v6472
  %v6520 = vadd.f32 %v6519, %v6477
  %v6521 = vadd.f32 %v6520, %v6480
  %v6522 = vadd.f32 %v6521, %v6485
  %v6523 = vadd.f32 %v6522, %v6488
  %v6524 = vadd.f32 %v6523, %v6493
  %v6525 = vadd.f32 %v6524, %v6496
  %v6526 = vadd.f32 %v6525, %v6501
  %v6527 = vadd.f32 %v6526, %v6504
  %v6528 = vadd.f32 %v6527, %v6509
  %v6529 = vadd.f32 %v6528, %v6512
  %v6530 = vrot.slane %v6529, 4
  %v6531 = vadd.f32 %v6529, %v6530
  %v6532 = vrot.slane %v6531, 2
  %v6533 = vadd.f32 %v6531, %v6532
  %v6534 = vrot.slane %v6533, 1
  %v6535 = vadd.f32 %v6533, %v6534
  %v6536 = vmul.f32 %v6453, %v6453
  %v6537 = vmul.f32 %v6456, %v6456
  %v6538 = vmul.f32 %v6461, %v6461
  %v6539 = vmul.f32 %v6464, %v6464
  %v6540 = vmul.f32 %v6469, %v6469
  %v6541 = vmul.f32 %v6472, %v6472
  %v6542 = vmul.f32 %v6477, %v6477
  %v6543 = vmul.f32 %v6480, %v6480
  %v6544 = vmul.f32 %v6485, %v6485
  %v6545 = vmul.f32 %v6488, %v6488
  %v6546 = vmul.f32 %v6493, %v6493
  %v6547 = vmul.f32 %v6496, %v6496
  %v6548 = vmul.f32 %v6501, %v6501
  %v6549 = vmul.f32 %v6504, %v6504
  %v6550 = vmul.f32 %v6509, %v6509
  %v6551 = vmul.f32 %v6512, %v6512
  %v6552 = vadd.f32 %v6536, %v6537
  %v6553 = vadd.f32 %v6552, %v6538
  %v6554 = vadd.f32 %v6553, %v6539
  %v6555 = vadd.f32 %v6554, %v6540
  %v6556 = vadd.f32 %v6555, %v6541
  %v6557 = vadd.f32 %v6556, %v6542
  %v6558 = vadd.f32 %v6557, %v6543
  %v6559 = vadd.f32 %v6558, %v6544
  %v6560 = vadd.f32 %v6559, %v6545
  %v6561 = vadd.f32 %v6560, %v6546
  %v6562 = vadd.f32 %v6561, %v6547
  %v6563 = vadd.f32 %v6562, %v6548
  %v6564 = vadd.f32 %v6563, %v6549
  %v6565 = vadd.f32 %v6564, %v6550
  %v6566 = vadd.f32 %v6565, %v6551
  %v6567 = vrot.slane %v6566, 4
  %v6568 = vadd.f32 %v6566, %v6567
  %v6569 = vrot.slane %v6568, 2
  %v6570 = vadd.f32 %v6568, %v6569
  %v6571 = vrot.slane %v6570, 1
  %v6572 = vadd.f32 %v6570, %v6571
  %6573 = vmatprep.subr.mxu0 0.0
  %6574 = vmatpush1.msra.mxu0 %v201
  %6575 = vmatprep.subr.mxu0 0.0
  %6576 = vmatpush1.msra.mxu0 %v200
  %6577 = vmatprep.subr.mxu0 0.0
  %6578 = vmatpush1.msra.mxu0 %v199
  %6579 = vmatprep.subr.mxu0 0.0
  %6580 = vmatpush1.msra.mxu0 %v198
  %6581 = vmatprep.subr.mxu0 0.0
  %6582 = vmatpush1.msra.mxu0 %v197
  %6583 = vmatprep.subr.mxu0 0.0
  %6584 = vmatpush1.msra.mxu0 %v196
  %6585 = vmatprep.subr.mxu0 0.0
  %6586 = vmatpush1.msra.mxu0 %v195
  %6587 = vmatprep.subr.mxu0 0.0
  %6588 = vmatpush1.msra.mxu0 %v194
  %6589 = vmatprep.subr.mxu0 0.0
  %6590 = vmatpush1.msra.mxu0 %v193
  %6591 = vmatprep.subr.mxu0 0.0
  %6592 = vmatpush1.msra.mxu0 %v192
  %6593 = vmatprep.subr.mxu0 0.0
  %6594 = vmatpush1.msra.mxu0 %v191
  %6595 = vmatprep.subr.mxu0 0.0
  %6596 = vmatpush1.msra.mxu0 %v190
  %6597 = vmatprep.subr.mxu0 0.0
  %6598 = vmatpush1.msra.mxu0 %v189
  %6599 = vmatprep.subr.mxu0 0.0
  %6600 = vmatpush1.msra.mxu0 %v188
  %6601 = vmatprep.subr.mxu0 0.0
  %6602 = vmatpush1.msra.mxu0 %v187
  %6603 = vmatprep.subr.mxu0 0.0
  %6604 = vmatpush1.msra.mxu0 %v186
  %6605 = vmatprep.subr.mxu0 0.0
  %6606 = vmatpush2.msra.mxu0 0.0
  %6607 = vmatprep.subr.mxu0 0.0
  %6608 = vmatpush2.msra.mxu0 0.0
  %6609 = vmatprep.subr.mxu0 0.0
  %6610 = vmatpush2.msra.mxu0 0.0
  %6611 = vmatprep.subr.mxu0 0.0
  %6612 = vmatpush2.msra.mxu0 0.0
  %6613 = vmatprep.subr.mxu0 0.0
  %6614 = vmatpush2.msra.mxu0 0.0
  %6615 = vmatprep.subr.mxu0 0.0
  %6616 = vmatpush2.msra.mxu0 0.0
  %6617 = vmatprep.subr.mxu0 0.0
  %6618 = vmatpush2.msra.mxu0 0.0
  %6619 = vmatprep.subr.mxu0 0.0
  %6620 = vmatpush2.msra.mxu0 0.0
  %6621 = vmatprep.subr.mxu0 0.0
  %6622 = vmatpush2.msra.mxu0 0.0
  %6623 = vmatprep.subr.mxu0 0.0
  %6624 = vmatpush2.msra.mxu0 0.0
  %6625 = vmatprep.subr.mxu0 0.0
  %6626 = vmatpush2.msra.mxu0 0.0
  %6627 = vmatprep.subr.mxu0 0.0
  %6628 = vmatpush2.msra.mxu0 0.0
  %6629 = vmatprep.subr.mxu0 0.0
  %6630 = vmatpush2.msra.mxu0 0.0
  %6631 = vmatprep.subr.mxu0 0.0
  %6632 = vmatpush2.msra.mxu0 0.0
  %6633 = vmatprep.subr.mxu0 0.0
  %6634 = vmatpush2.msra.mxu0 0.0
  %6635 = vmatprep.subr.mxu0 0.0
  %6636 = vmatpush2.msra.mxu0 0.0
  %6637 = vmatprep.mubr.f32.mxu0 0.0
  %6638 = vmatmul.mubr.f32.gmra.mxu0 %v6535
  %v6639 = vpop.f32.mrf.mxu0
  %v6640 = vadd.f32 0.0, %v6639
  %v6641 = vpop.f32.mrf.mxu0
  %6642 = vdwg.mxu0
  %6643 = vmatprep.subr.mxu0 0.0
  %6644 = vmatpush1.msra.mxu0 %v201
  %6645 = vmatprep.subr.mxu0 0.0
  %6646 = vmatpush1.msra.mxu0 %v200
  %6647 = vmatprep.subr.mxu0 0.0
  %6648 = vmatpush1.msra.mxu0 %v199
  %6649 = vmatprep.subr.mxu0 0.0
  %6650 = vmatpush1.msra.mxu0 %v198
  %6651 = vmatprep.subr.mxu0 0.0
  %6652 = vmatpush1.msra.mxu0 %v197
  %6653 = vmatprep.subr.mxu0 0.0
  %6654 = vmatpush1.msra.mxu0 %v196
  %6655 = vmatprep.subr.mxu0 0.0
  %6656 = vmatpush1.msra.mxu0 %v195
  %6657 = vmatprep.subr.mxu0 0.0
  %6658 = vmatpush1.msra.mxu0 %v194
  %6659 = vmatprep.subr.mxu0 0.0
  %6660 = vmatpush1.msra.mxu0 %v193
  %6661 = vmatprep.subr.mxu0 0.0
  %6662 = vmatpush1.msra.mxu0 %v192
  %6663 = vmatprep.subr.mxu0 0.0
  %6664 = vmatpush1.msra.mxu0 %v191
  %6665 = vmatprep.subr.mxu0 0.0
  %6666 = vmatpush1.msra.mxu0 %v190
  %6667 = vmatprep.subr.mxu0 0.0
  %6668 = vmatpush1.msra.mxu0 %v189
  %6669 = vmatprep.subr.mxu0 0.0
  %6670 = vmatpush1.msra.mxu0 %v188
  %6671 = vmatprep.subr.mxu0 0.0
  %6672 = vmatpush1.msra.mxu0 %v187
  %6673 = vmatprep.subr.mxu0 0.0
  %6674 = vmatpush1.msra.mxu0 %v186
  %6675 = vmatprep.subr.mxu0 0.0
  %6676 = vmatpush2.msra.mxu0 0.0
  %6677 = vmatprep.subr.mxu0 0.0
  %6678 = vmatpush2.msra.mxu0 0.0
  %6679 = vmatprep.subr.mxu0 0.0
  %6680 = vmatpush2.msra.mxu0 0.0
  %6681 = vmatprep.subr.mxu0 0.0
  %6682 = vmatpush2.msra.mxu0 0.0
  %6683 = vmatprep.subr.mxu0 0.0
  %6684 = vmatpush2.msra.mxu0 0.0
  %6685 = vmatprep.subr.mxu0 0.0
  %6686 = vmatpush2.msra.mxu0 0.0
  %6687 = vmatprep.subr.mxu0 0.0
  %6688 = vmatpush2.msra.mxu0 0.0
  %6689 = vmatprep.subr.mxu0 0.0
  %6690 = vmatpush2.msra.mxu0 0.0
  %6691 = vmatprep.subr.mxu0 0.0
  %6692 = vmatpush2.msra.mxu0 0.0
  %6693 = vmatprep.subr.mxu0 0.0
  %6694 = vmatpush2.msra.mxu0 0.0
  %6695 = vmatprep.subr.mxu0 0.0
  %6696 = vmatpush2.msra.mxu0 0.0
  %6697 = vmatprep.subr.mxu0 0.0
  %6698 = vmatpush2.msra.mxu0 0.0
  %6699 = vmatprep.subr.mxu0 0.0
  %6700 = vmatpush2.msra.mxu0 0.0
  %6701 = vmatprep.subr.mxu0 0.0
  %6702 = vmatpush2.msra.mxu0 0.0
  %6703 = vmatprep.subr.mxu0 0.0
  %6704 = vmatpush2.msra.mxu0 0.0
  %6705 = vmatprep.subr.mxu0 0.0
  %6706 = vmatpush2.msra.mxu0 0.0
  %6707 = vmatprep.mubr.f32.mxu0 0.0
  %6708 = vmatmul.mubr.f32.gmra.mxu0 %v6572
  %v6709 = vpop.f32.mrf.mxu0
  %v6710 = vadd.f32 0.0, %v6709
  %v6711 = vpop.f32.mrf.mxu0
  %6712 = vdwg.mxu0
  %v6713 = vmul.f32 %v6640, %v6640
  %v6714 = vsub.f32 %v6710, %v6713
  %v6715 = vmax.f32 %v6714, 0.0
  %s6716 = scalar_lea.vmem %s3, 3
  %v6717 = vld [vmem:[%s6716] sm:$0x1]
  %v6718 = vadd.f32 %v6715, 1e-05
  %v6719 = vrsqrt.pop %v6718
  %v6720 = vmul.f32 %v6717, %v6719
  %v6721 = vlaneseq
  %v6722 = vshrl.u32 %v6721, 7
  %v6723 = vsub.s32 0, %v6722
  %v6724 = vrot.slane %v6640, %v6723
  %v6725 = vsub.f32 %v6453, %v6724
  %v6726 = vsub.f32 %v6456, %v6724
  %v6727 = vsub.f32 %v6461, %v6724
  %v6728 = vsub.f32 %v6464, %v6724
  %v6729 = vsub.f32 %v6469, %v6724
  %v6730 = vsub.f32 %v6472, %v6724
  %v6731 = vsub.f32 %v6477, %v6724
  %v6732 = vsub.f32 %v6480, %v6724
  %v6733 = vsub.f32 %v6485, %v6724
  %v6734 = vsub.f32 %v6488, %v6724
  %v6735 = vsub.f32 %v6493, %v6724
  %v6736 = vsub.f32 %v6496, %v6724
  %v6737 = vsub.f32 %v6501, %v6724
  %v6738 = vsub.f32 %v6504, %v6724
  %v6739 = vsub.f32 %v6509, %v6724
  %v6740 = vsub.f32 %v6512, %v6724
  %v6742 = vlaneseq
  %v6743 = vshrl.u32 %v6742, 7
  %v6744 = vsub.s32 0, %v6743
  %v6745 = vrot.slane %v6720, %v6744
  %v6747 = vmul.f32 %v6725, %v6745
  %v6748 = vmul.f32 %v6726, %v6745
  %v6749 = vmul.f32 %v6727, %v6745
  %v6750 = vmul.f32 %v6728, %v6745
  %v6751 = vmul.f32 %v6729, %v6745
  %v6752 = vmul.f32 %v6730, %v6745
  %v6753 = vmul.f32 %v6731, %v6745
  %v6754 = vmul.f32 %v6732, %v6745
  %v6755 = vmul.f32 %v6733, %v6745
  %v6756 = vmul.f32 %v6734, %v6745
  %v6757 = vmul.f32 %v6735, %v6745
  %v6758 = vmul.f32 %v6736, %v6745
  %v6759 = vmul.f32 %v6737, %v6745
  %v6760 = vmul.f32 %v6738, %v6745
  %v6761 = vmul.f32 %v6739, %v6745
  %v6762 = vmul.f32 %v6740, %v6745
  %s6763 = scalar_lea.vmem %s4, 3
  %v6764 = vld [vmem:[%s6763] sm:$0x1]
  %v6766 = vlaneseq
  %v6767 = vshrl.u32 %v6766, 7
  %v6768 = vsub.s32 0, %v6767
  %v6769 = vrot.slane %v6764, %v6768
  %v6771 = vadd.f32 %v6747, %v6769
  %v6772 = vadd.f32 %v6748, %v6769
  %v6773 = vadd.f32 %v6749, %v6769
  %v6774 = vadd.f32 %v6750, %v6769
  %v6775 = vadd.f32 %v6751, %v6769
  %v6776 = vadd.f32 %v6752, %v6769
  %v6777 = vadd.f32 %v6753, %v6769
  %v6778 = vadd.f32 %v6754, %v6769
  %v6779 = vadd.f32 %v6755, %v6769
  %v6780 = vadd.f32 %v6756, %v6769
  %v6781 = vadd.f32 %v6757, %v6769
  %v6782 = vadd.f32 %v6758, %v6769
  %v6783 = vadd.f32 %v6759, %v6769
  %v6784 = vadd.f32 %v6760, %v6769
  %v6785 = vadd.f32 %v6761, %v6769
  %v6786 = vadd.f32 %v6762, %v6769
  %v6787 = vmax.f32 %v6771, 0.0
  %v6788 = vmax.f32 %v6772, 0.0
  %v6789 = vmax.f32 %v6773, 0.0
  %v6790 = vmax.f32 %v6774, 0.0
  %v6791 = vmax.f32 %v6775, 0.0
  %v6792 = vmax.f32 %v6776, 0.0
  %v6793 = vmax.f32 %v6777, 0.0
  %v6794 = vmax.f32 %v6778, 0.0
  %v6795 = vmax.f32 %v6779, 0.0
  %v6796 = vmax.f32 %v6780, 0.0
  %v6797 = vmax.f32 %v6781, 0.0
  %v6798 = vmax.f32 %v6782, 0.0
  %v6799 = vmax.f32 %v6783, 0.0
  %v6800 = vmax.f32 %v6784, 0.0
  %v6801 = vmax.f32 %v6785, 0.0
  %v6802 = vmax.f32 %v6786, 0.0
  %v6803 = vld [vmem:[%s6] sm:$0xff]
  %v6804 = vld [vmem:[%s6 + $0x8] sm:$0xff]
  %v6805 = vld [vmem:[%s6 + $0x10] sm:$0xff]
  %v6806 = vld [vmem:[%s6 + $0x18] sm:$0xff]
  %v6807 = vld [vmem:[%s6 + $0x20] sm:$0xff]
  %v6808 = vld [vmem:[%s6 + $0x28] sm:$0xff]
  %v6809 = vld [vmem:[%s6 + $0x30] sm:$0xff]
  %v6810 = vld [vmem:[%s6 + $0x38] sm:$0xff]
  %v6811 = vld [vmem:[%s6 + $0x40] sm:$0xff]
  %v6812 = vld [vmem:[%s6 + $0x48] sm:$0xff]
  %v6813 = vld [vmem:[%s6 + $0x50] sm:$0xff]
  %v6814 = vld [vmem:[%s6 + $0x58] sm:$0xff]
  %v6815 = vld [vmem:[%s6 + $0x60] sm:$0xff]
  %v6816 = vld [vmem:[%s6 + $0x68] sm:$0xff]
  %v6817 = vld [vmem:[%s6 + $0x70] sm:$0xff]
  %v6818 = vld [vmem:[%s6 + $0x78] sm:$0xff]
  %v6819 = vadd.f32 %v6803, %v6787
  %v6820 = vadd.f32 %v6804, %v6788
  %v6821 = vadd.f32 %v6805, %v6789
  %v6822 = vadd.f32 %v6806, %v6790
  %v6823 = vadd.f32 %v6807, %v6791
  %v6824 = vadd.f32 %v6808, %v6792
  %v6825 = vadd.f32 %v6809, %v6793
  %v6826 = vadd.f32 %v6810, %v6794
  %v6827 = vadd.f32 %v6811, %v6795
  %v6828 = vadd.f32 %v6812, %v6796
  %v6829 = vadd.f32 %v6813, %v6797
  %v6830 = vadd.f32 %v6814, %v6798
  %v6831 = vadd.f32 %v6815, %v6799
  %v6832 = vadd.f32 %v6816, %v6800
  %v6833 = vadd.f32 %v6817, %v6801
  %v6834 = vadd.f32 %v6818, %v6802
  %6835 = vst [vmem:[%s6] sm:$0xff] %v6819
  %6836 = vst [vmem:[%s6 + $0x8] sm:$0xff] %v6820
  %6837 = vst [vmem:[%s6 + $0x10] sm:$0xff] %v6821
  %6838 = vst [vmem:[%s6 + $0x18] sm:$0xff] %v6822
  %6839 = vst [vmem:[%s6 + $0x20] sm:$0xff] %v6823
  %6840 = vst [vmem:[%s6 + $0x28] sm:$0xff] %v6824
  %6841 = vst [vmem:[%s6 + $0x30] sm:$0xff] %v6825
  %6842 = vst [vmem:[%s6 + $0x38] sm:$0xff] %v6826
  %6843 = vst [vmem:[%s6 + $0x40] sm:$0xff] %v6827
  %6844 = vst [vmem:[%s6 + $0x48] sm:$0xff] %v6828
  %6845 = vst [vmem:[%s6 + $0x50] sm:$0xff] %v6829
  %6846 = vst [vmem:[%s6 + $0x58] sm:$0xff] %v6830
  %6847 = vst [vmem:[%s6 + $0x60] sm:$0xff] %v6831
  %6848 = vst [vmem:[%s6 + $0x68] sm:$0xff] %v6832
  %6849 = vst [vmem:[%s6 + $0x70] sm:$0xff] %v6833
  %6850 = vst [vmem:[%s6 + $0x78] sm:$0xff] %v6834
  // Predicated region
  $region26: #{dilated_bottleneck_forward.1} parent=0 // pred_check
    _
  $region27: #{dilated_bottleneck_forward.1} parent=0 // pred_check_branch
    %6852 = sbr.rel (0) target = $region29
  $region28: #{dilated_bottleneck_forward.1} parent=0 // pred_region
    _
  $region29: #{dilated_bottleneck_forward.1} parent=0 // pred_fallthru
    _
  // Predicated region
  $region30: #{dilated_bottleneck_forward.1} parent=0 // pred_check
    _
  $region31: #{dilated_bottleneck_forward.1} parent=0 // pred_check_branch
    %6854 = sbr.rel (0) target = $region33
  $region32: #{dilated_bottleneck_forward.1} parent=0 // pred_region
    _
  $region33: #{dilated_bottleneck_forward.1} parent=0 // pred_fallthru
    _

</llo_original>
